<compile_context>
chip_gen: v6e
topology: v6e:2x2x1
jax: 0.10.0
libtpu: 0.0.40
codegen_flags: <defaults>
</compile_context>

<pallas_src>
from functools import partial

import jax
import jax.numpy as jnp
import numpy as np
from jax import lax
from jax.experimental import pallas as pl
from jax.experimental.pallas import tpu as pltpu

# Keep f32 matmuls at full precision so the Pallas kernel and the pure-JAX
# reference agree tightly.  (Production option: bf16 inputs + f32 accumulation
# to cut MXU passes; omitted here to keep the 1e-3 correctness check robust.)
jax.config.update("jax_default_matmul_precision", "highest")

EPS = 1e-5


def _sigmoid(z):
    # exp goes to the EUP; the divide is exact so we match jax.nn.sigmoid in the
    # reference to float rounding.  (pl.reciprocal(..., approx=True) is the
    # faster production variant.)
    return 1.0 / (1.0 + jnp.exp(-z))


def basic_block_kernel(x_ref,
                       w1_ref, g1_ref, b1_ref,
                       w2_ref, g2_ref, b2_ref,
                       lng_ref, lnb_ref,
                       wsp_ref, bsp_ref,
                       f1w_ref, f1b_ref,
                       f2w_ref, f2b_ref,
                       out_ref, *, batch, length):
    N, L = batch, length
    NL = N * L
    C = w1_ref.shape[0]
    Cin = x_ref.shape[0]
    K1 = w1_ref.shape[1] // Cin          # conv_block1 taps (3)
    K2 = w2_ref.shape[1] // C            # conv_block2 taps (3)
    KS = wsp_ref.shape[1]                # spatial-attention taps (7)
    inv_nl = 1.0 / NL
    inv_l = 1.0 / L

    # Within-sample position (col % L) of every lane, built without int div/mod.
    lane_l = jnp.concatenate(
        [lax.broadcasted_iota(jnp.int32, (1, L), 1)] * N, axis=1)       # (1, NL)

    def shifted_taps(y, k):
        """k views of y; tap t is y shifted by (t - p) within each sample,
        zero where the tap reads outside the sample (conv 'same' padding)."""
        p = (k - 1) // 2
        zpad = jnp.zeros((y.shape[0], p), jnp.float32)
        yp = jnp.concatenate([zpad, y, zpad], axis=1)   # one pad per block, whole batch
        taps = []
        for t in range(k):
            s = t - p
            w = yp[:, t:t + NL]                         # static lane window
            if s != 0:
                ok = jnp.logical_and(lane_l + s >= 0, lane_l + s <= L - 1)
                w = jnp.where(ok, w, 0.0)               # kill cross-sample leakage
            taps.append(w)
        return taps

    def conv_bn_relu(y, w2d, k, g, b):
        # im2col: one fat MXU dot (C, k*Cin) @ (k*Cin, N*L) instead of k small ones.
        cols = jnp.concatenate(shifted_taps(y, k), axis=0)
        z = jnp.dot(w2d, cols, preferred_element_type=jnp.float32)
        # BatchNorm1d (training mode): biased stats over (batch, length) per
        # channel == one lane reduction over the slab.
        mean = jnp.sum(z, axis=-1, keepdims=True) * inv_nl
        d = z - mean
        var = jnp.sum(d * d, axis=-1, keepdims=True) * inv_nl
        return jnp.maximum(d * lax.rsqrt(var + EPS) * g + b, 0.0)

    # --- conv_block1 / conv_block2 ---
    y = conv_bn_relu(x_ref[...], w1_ref[...], K1, g1_ref[...], b1_ref[...])
    y = conv_bn_relu(y, w2_ref[...], K2, g2_ref[...], b2_ref[...])

    # 0/1 segment matrices: reduce over L within each sample / broadcast back.
    col_i = lax.broadcasted_iota(jnp.int32, (NL, N), 0)
    n_i = lax.broadcasted_iota(jnp.int32, (NL, N), 1)
    S = jnp.where(jnp.logical_and(col_i >= n_i * L, col_i < (n_i + 1) * L),
                  1.0, 0.0)                                             # (NL, N)
    col_j = lax.broadcasted_iota(jnp.int32, (N, NL), 1)
    n_j = lax.broadcasted_iota(jnp.int32, (N, NL), 0)
    St = jnp.where(jnp.logical_and(col_j >= n_j * L, col_j < (n_j + 1) * L),
                   1.0, 0.0)                                            # (N, NL)

    def seg_mean(z):  # per-(channel, sample) mean over L, broadcast back to slab
        m = jnp.dot(z, S, preferred_element_type=jnp.float32) * inv_l   # (C, N)
        return jnp.dot(m, St, preferred_element_type=jnp.float32)       # (C, NL)

    # --- LayerNorm over the length dimension (normalized_shape = L) ---
    mu = seg_mean(y)
    d = y - mu
    var = seg_mean(d * d)
    a = d * lax.rsqrt(var + EPS) * lng_ref[...] + lnb_ref[...]

    # --- Spatial attention: depthwise conv (groups=C, k=KS) + bias, sigmoid gate ---
    wsp = wsp_ref[...]
    taps = shifted_taps(a, KS)
    acc = taps[0] * wsp[:, 0:1]
    for t in range(1, KS):
        acc = acc + taps[t] * wsp[:, t:t + 1]
    a = a * _sigmoid(acc + bsp_ref[...])

    # --- Channel (SE) attention, batched over all samples in one pair of dots ---
    p = jnp.dot(a, S, preferred_element_type=jnp.float32) * inv_l        # (C, N)
    h = jnp.maximum(
        jnp.dot(f1w_ref[...], p, preferred_element_type=jnp.float32) + f1b_ref[...],
        0.0)                                                             # (Cmid, N)
    cw = _sigmoid(
        jnp.dot(f2w_ref[...], h, preferred_element_type=jnp.float32) + f2b_ref[...])
    cw_slab = jnp.dot(cw, St, preferred_element_type=jnp.float32)        # (C, NL)

    # --- Residual add (downsample=None); x re-read late to keep live ranges short.
    # Single lane-dense store of the whole result.
    out_ref[...] = (a * cw_slab + x_ref[...]).astype(out_ref.dtype)


def basic_block_forward(x, params):
    """x: (N, C_in, L) float32 -> (N, C_out, L) float32."""
    N, Cin, L = x.shape
    C = params["w1"].shape[0]
    NL = N * L

    # Lane-batched slab (samples contiguous along the lane axis).
    x_slab = jnp.transpose(x, (1, 0, 2)).reshape(Cin, NL)

    # Tap-major im2col weight layout: w2d[co, t*Cin + ci] = w[co, ci, t].
    w1_2d = jnp.transpose(params["w1"], (0, 2, 1)).reshape(C, -1)
    w2_2d = jnp.transpose(params["w2"], (0, 2, 1)).reshape(C, -1)

    col = lambda v: v.reshape(-1, 1)
    lng = jnp.tile(params["lng"].reshape(1, L), (1, N))   # LN params tiled over samples
    lnb = jnp.tile(params["lnb"].reshape(1, L), (1, N))

    args = (x_slab,
            w1_2d, col(params["g1"]), col(params["b1"]),
            w2_2d, col(params["g2"]), col(params["b2"]),
            lng, lnb,
            params["wsp"][:, 0, :], col(params["bsp"]),
            params["f1w"][:, :, 0], col(params["f1b"]),
            params["f2w"][:, :, 0], col(params["f2b"]))

    vmem = pl.BlockSpec(memory_space=pltpu.MemorySpace.VMEM)
    out_slab = pl.pallas_call(
        partial(basic_block_kernel, batch=N, length=L),
        out_shape=jax.ShapeDtypeStruct((C, NL), jnp.float32),
        in_specs=[vmem] * len(args),
        out_specs=vmem,
    )(*args)
    return jnp.transpose(out_slab.reshape(C, N, L), (1, 0, 2))


def init_params(key, in_channels, out_channels, size, conv_ker=3, ker_size=7,
                reduction=16):
    cmid = max(out_channels // reduction, 1)
    spec = [
        ("w1", (out_channels, in_channels, conv_ker), 0.2),
        ("g1", (out_channels,), 0.1), ("b1", (out_channels,), 0.1),
        ("w2", (out_channels, out_channels, conv_ker), 0.2),
        ("g2", (out_channels,), 0.1), ("b2", (out_channels,), 0.1),
        ("lng", (size,), 0.1), ("lnb", (size,), 0.1),
        ("wsp", (out_channels, 1, ker_size), 0.2), ("bsp", (out_channels,), 0.1),
        ("f1w", (cmid, out_channels, 1), 0.2), ("f1b", (cmid,), 0.1),
        ("f2w", (out_channels, cmid, 1), 0.2), ("f2b", (out_channels,), 0.1),
    ]
    keys = jax.random.split(key, len(spec))     # exactly one key per parameter
    params = {name: jax.random.normal(k, shape, jnp.float32) * scale
              for (name, shape, scale), k in zip(spec, keys)}
    for name in ("g1", "g2", "lng"):            # scale params centred at 1
        params[name] = params[name] + 1.0
    return params


def reference(x, pr):
    """Pure-JAX reference (independent formulation via lax.conv)."""
    hp = lax.Precision.HIGHEST
    dn = ("NCH", "OIH", "NCH")

    def bn_relu(y, g, b):
        mean = y.mean(axis=(0, 2), keepdims=True)
        var = ((y - mean) ** 2).mean(axis=(0, 2), keepdims=True)
        yn = (y - mean) / jnp.sqrt(var + EPS)
        return jax.nn.relu(yn * g.reshape(1, -1, 1) + b.reshape(1, -1, 1))

    p1 = (pr["w1"].shape[2] - 1) // 2
    y = lax.conv_general_dilated(x, pr["w1"], (1,), ((p1, p1),),
                                 dimension_numbers=dn, precision=hp)
    y = bn_relu(y, pr["g1"], pr["b1"])
    p2 = (pr["w2"].shape[2] - 1) // 2
    y = lax.conv_general_dilated(y, pr["w2"], (1,), ((p2, p2),),
                                 dimension_numbers=dn, precision=hp)
    y = bn_relu(y, pr["g2"], pr["b2"])

    mu = y.mean(-1, keepdims=True)
    var = ((y - mu) ** 2).mean(-1, keepdims=True)
    y = (y - mu) / jnp.sqrt(var + EPS) * pr["lng"] + pr["lnb"]

    C = y.shape[1]
    ps = (pr["wsp"].shape[2] - 1) // 2
    sw = lax.conv_general_dilated(y, pr["wsp"], (1,), ((ps, ps),),
                                  dimension_numbers=dn, feature_group_count=C,
                                  precision=hp) + pr["bsp"].reshape(1, -1, 1)
    y = y * jax.nn.sigmoid(sw)

    p = y.mean(-1)                                        # (N, C)
    h = jax.nn.relu(p @ pr["f1w"][:, :, 0].T + pr["f1b"])
    cw = jax.nn.sigmoid(h @ pr["f2w"][:, :, 0].T + pr["f2b"])
    return y * cw[:, :, None] + x


if __name__ == "__main__":
    key = jax.random.PRNGKey(0)
    kx, kp = jax.random.split(key)

    # Small shapes consistent with the module: in_channels == out_channels = 32
    # (divisible by reduction_ratio=16), length = size = 16, stride = 1,
    # downsample = None.  N=8 so the batched slab is exactly 128 lanes wide.
    N, C, L = 8, 32, 16
    x = jax.random.normal(kx, (N, C, L), jnp.float32)
    params = init_params(kp, C, C, L)

    out = jax.block_until_ready(basic_block_forward(x, params))

    ref = reference(x, params)
    np.testing.assert_allclose(np.asarray(out), np.asarray(ref), rtol=1e-3, atol=1e-3)
    print("KERNEL_OK")
</pallas_src>

<mosaic_0001>
module attributes {stable_mosaic.version = 11 : i64} {
  func.func @basic_block_kernel(%arg0: memref<32x128xf32, #tpu.memory_space<vmem>>, %arg1: memref<32x96xf32, #tpu.memory_space<vmem>>, %arg2: memref<32x1xf32, #tpu.memory_space<vmem>>, %arg3: memref<32x1xf32, #tpu.memory_space<vmem>>, %arg4: memref<32x96xf32, #tpu.memory_space<vmem>>, %arg5: memref<32x1xf32, #tpu.memory_space<vmem>>, %arg6: memref<32x1xf32, #tpu.memory_space<vmem>>, %arg7: memref<1x128xf32, #tpu.memory_space<vmem>>, %arg8: memref<1x128xf32, #tpu.memory_space<vmem>>, %arg9: memref<32x7xf32, #tpu.memory_space<vmem>>, %arg10: memref<32x1xf32, #tpu.memory_space<vmem>>, %arg11: memref<2x32xf32, #tpu.memory_space<vmem>>, %arg12: memref<2x1xf32, #tpu.memory_space<vmem>>, %arg13: memref<32x2xf32, #tpu.memory_space<vmem>>, %arg14: memref<32x1xf32, #tpu.memory_space<vmem>>, %arg15: memref<32x128xf32, #tpu.memory_space<vmem>>) attributes {dimension_semantics = [], scalar_prefetch = 0 : i64, scratch_operands = 0 : i64, tpu.core_type = #tpu.core_type<tc>} {
    %0 = tpu.iota {dimensions = array<i32: 1>} : vector<1x16xi32>
    %1 = tpu.concatenate %0, %0, %0, %0, %0, %0, %0, %0 in 1 : vector<1x16xi32>, vector<1x16xi32>, vector<1x16xi32>, vector<1x16xi32>, vector<1x16xi32>, vector<1x16xi32>, vector<1x16xi32>, vector<1x16xi32> -> vector<1x128xi32>
    %c0 = arith.constant 0 : index
    %c0_0 = arith.constant 0 : index
    %2 = vector.load %arg0[%c0, %c0_0] : memref<32x128xf32, #tpu.memory_space<vmem>>, vector<32x128xf32>
    %c0_1 = arith.constant 0 : index
    %c0_2 = arith.constant 0 : index
    %3 = vector.load %arg1[%c0_1, %c0_2] : memref<32x96xf32, #tpu.memory_space<vmem>>, vector<32x96xf32>
    %c0_3 = arith.constant 0 : index
    %c0_4 = arith.constant 0 : index
    %4 = vector.load %arg2[%c0_3, %c0_4] : memref<32x1xf32, #tpu.memory_space<vmem>>, vector<32x1xf32>
    %c0_5 = arith.constant 0 : index
    %c0_6 = arith.constant 0 : index
    %5 = vector.load %arg3[%c0_5, %c0_6] : memref<32x1xf32, #tpu.memory_space<vmem>>, vector<32x1xf32>
    %cst = arith.constant 0.000000e+00 : f32
    %6 = vector.broadcast %cst : f32 to vector<32x1xf32>
    %7 = tpu.concatenate %6, %2, %6 in 1 : vector<32x1xf32>, vector<32x128xf32>, vector<32x1xf32> -> vector<32x130xf32>
    %8 = vector.extract_strided_slice %7 {offsets = [0, 0], sizes = [32, 128], strides = [1, 1]} : vector<32x130xf32> to vector<32x128xf32>
    %c-1_i32 = arith.constant -1 : i32
    %9 = vector.broadcast %c-1_i32 : i32 to vector<1x128xi32>
    %10 = arith.addi %1, %9 : vector<1x128xi32>
    %c0_i32 = arith.constant 0 : i32
    %11 = vector.broadcast %c0_i32 : i32 to vector<1x128xi32>
    %12 = arith.cmpi sge, %10, %11 : vector<1x128xi32>
    %c-1_i32_7 = arith.constant -1 : i32
    %13 = vector.broadcast %c-1_i32_7 : i32 to vector<1x128xi32>
    %14 = arith.addi %1, %13 : vector<1x128xi32>
    %c15_i32 = arith.constant 15 : i32
    %15 = vector.broadcast %c15_i32 : i32 to vector<1x128xi32>
    %16 = arith.cmpi sle, %14, %15 : vector<1x128xi32>
    %17 = arith.andi %12, %16 : vector<1x128xi1>
    %cst_8 = arith.constant 0.000000e+00 : f32
    %18 = vector.shape_cast %17 : vector<1x128xi1> to vector<1x128xi1>
    %19 = vector.broadcast %18 : vector<1x128xi1> to vector<32x128xi1>
    %20 = vector.broadcast %cst_8 : f32 to vector<32x128xf32>
    %21 = arith.select %19, %8, %20 : vector<32x128xi1>, vector<32x128xf32>
    %22 = vector.extract_strided_slice %7 {offsets = [0, 1], sizes = [32, 128], strides = [1, 1]} : vector<32x130xf32> to vector<32x128xf32>
    %23 = vector.extract_strided_slice %7 {offsets = [0, 2], sizes = [32, 128], strides = [1, 1]} : vector<32x130xf32> to vector<32x128xf32>
    %c1_i32 = arith.constant 1 : i32
    %24 = vector.broadcast %c1_i32 : i32 to vector<1x128xi32>
    %25 = arith.addi %1, %24 : vector<1x128xi32>
    %c0_i32_9 = arith.constant 0 : i32
    %26 = vector.broadcast %c0_i32_9 : i32 to vector<1x128xi32>
    %27 = arith.cmpi sge, %25, %26 : vector<1x128xi32>
    %c1_i32_10 = arith.constant 1 : i32
    %28 = vector.broadcast %c1_i32_10 : i32 to vector<1x128xi32>
    %29 = arith.addi %1, %28 : vector<1x128xi32>
    %c15_i32_11 = arith.constant 15 : i32
    %30 = vector.broadcast %c15_i32_11 : i32 to vector<1x128xi32>
    %31 = arith.cmpi sle, %29, %30 : vector<1x128xi32>
    %32 = arith.andi %27, %31 : vector<1x128xi1>
    %cst_12 = arith.constant 0.000000e+00 : f32
    %33 = vector.shape_cast %32 : vector<1x128xi1> to vector<1x128xi1>
    %34 = vector.broadcast %33 : vector<1x128xi1> to vector<32x128xi1>
    %35 = vector.broadcast %cst_12 : f32 to vector<32x128xf32>
    %36 = arith.select %34, %23, %35 : vector<32x128xi1>, vector<32x128xf32>
    %37 = tpu.concatenate %21, %22, %36 in 0 : vector<32x128xf32>, vector<32x128xf32>, vector<32x128xf32> -> vector<96x128xf32>
    %cst_13 = arith.constant dense<0.000000e+00> : vector<32x128xf32>
    %38 = tpu.matmul %3, %37, %cst_13 {dimension_numbers = #tpu.dot_dimension_numbers<[1], [0], [0], [1], [0, 0, 1, 1], [], []>, precision = #tpu.contract_precision<fp32>} : vector<32x96xf32>, vector<96x128xf32>, vector<32x128xf32> -> vector<32x128xf32>
    %cst_14 = arith.constant dense<0.000000e+00> : vector<32xf32>
    %39 = vector.multi_reduction <add>, %38, %cst_14 [1] : vector<32x128xf32> to vector<32xf32>
    %40 = vector.shape_cast %39 : vector<32xf32> to vector<32x1xf32>
    %cst_15 = arith.constant 7.812500e-03 : f32
    %41 = vector.broadcast %cst_15 : f32 to vector<32x1xf32>
    %42 = arith.mulf %40, %41 : vector<32x1xf32>
    %43 = vector.broadcast %42 : vector<32x1xf32> to vector<32x128xf32>
    %44 = arith.subf %38, %43 : vector<32x128xf32>
    %45 = arith.mulf %44, %44 : vector<32x128xf32>
    %cst_16 = arith.constant dense<0.000000e+00> : vector<32xf32>
    %46 = vector.multi_reduction <add>, %45, %cst_16 [1] : vector<32x128xf32> to vector<32xf32>
    %47 = vector.shape_cast %46 : vector<32xf32> to vector<32x1xf32>
    %cst_17 = arith.constant 7.812500e-03 : f32
    %48 = vector.broadcast %cst_17 : f32 to vector<32x1xf32>
    %49 = arith.mulf %47, %48 : vector<32x1xf32>
    %cst_18 = arith.constant 9.99999974E-6 : f32
    %50 = vector.broadcast %cst_18 : f32 to vector<32x1xf32>
    %51 = arith.addf %49, %50 : vector<32x1xf32>
    %52 = math.rsqrt %51 : vector<32x1xf32>
    %53 = vector.broadcast %52 : vector<32x1xf32> to vector<32x128xf32>
    %54 = arith.mulf %44, %53 : vector<32x128xf32>
    %55 = vector.broadcast %4 : vector<32x1xf32> to vector<32x128xf32>
    %56 = arith.mulf %54, %55 : vector<32x128xf32>
    %57 = vector.broadcast %5 : vector<32x1xf32> to vector<32x128xf32>
    %58 = arith.addf %56, %57 : vector<32x128xf32>
    %cst_19 = arith.constant 0.000000e+00 : f32
    %59 = vector.broadcast %cst_19 : f32 to vector<32x128xf32>
    %60 = arith.maximumf %58, %59 : vector<32x128xf32>
    %c0_20 = arith.constant 0 : index
    %c0_21 = arith.constant 0 : index
    %61 = vector.load %arg4[%c0_20, %c0_21] : memref<32x96xf32, #tpu.memory_space<vmem>>, vector<32x96xf32>
    %c0_22 = arith.constant 0 : index
    %c0_23 = arith.constant 0 : index
    %62 = vector.load %arg5[%c0_22, %c0_23] : memref<32x1xf32, #tpu.memory_space<vmem>>, vector<32x1xf32>
    %c0_24 = arith.constant 0 : index
    %c0_25 = arith.constant 0 : index
    %63 = vector.load %arg6[%c0_24, %c0_25] : memref<32x1xf32, #tpu.memory_space<vmem>>, vector<32x1xf32>
    %cst_26 = arith.constant 0.000000e+00 : f32
    %64 = vector.broadcast %cst_26 : f32 to vector<32x1xf32>
    %65 = tpu.concatenate %64, %60, %64 in 1 : vector<32x1xf32>, vector<32x128xf32>, vector<32x1xf32> -> vector<32x130xf32>
    %66 = vector.extract_strided_slice %65 {offsets = [0, 0], sizes = [32, 128], strides = [1, 1]} : vector<32x130xf32> to vector<32x128xf32>
    %c-1_i32_27 = arith.constant -1 : i32
    %67 = vector.broadcast %c-1_i32_27 : i32 to vector<1x128xi32>
    %68 = arith.addi %1, %67 : vector<1x128xi32>
    %c0_i32_28 = arith.constant 0 : i32
    %69 = vector.broadcast %c0_i32_28 : i32 to vector<1x128xi32>
    %70 = arith.cmpi sge, %68, %69 : vector<1x128xi32>
    %c-1_i32_29 = arith.constant -1 : i32
    %71 = vector.broadcast %c-1_i32_29 : i32 to vector<1x128xi32>
    %72 = arith.addi %1, %71 : vector<1x128xi32>
    %c15_i32_30 = arith.constant 15 : i32
    %73 = vector.broadcast %c15_i32_30 : i32 to vector<1x128xi32>
    %74 = arith.cmpi sle, %72, %73 : vector<1x128xi32>
    %75 = arith.andi %70, %74 : vector<1x128xi1>
    %cst_31 = arith.constant 0.000000e+00 : f32
    %76 = vector.shape_cast %75 : vector<1x128xi1> to vector<1x128xi1>
    %77 = vector.broadcast %76 : vector<1x128xi1> to vector<32x128xi1>
    %78 = vector.broadcast %cst_31 : f32 to vector<32x128xf32>
    %79 = arith.select %77, %66, %78 : vector<32x128xi1>, vector<32x128xf32>
    %80 = vector.extract_strided_slice %65 {offsets = [0, 1], sizes = [32, 128], strides = [1, 1]} : vector<32x130xf32> to vector<32x128xf32>
    %81 = vector.extract_strided_slice %65 {offsets = [0, 2], sizes = [32, 128], strides = [1, 1]} : vector<32x130xf32> to vector<32x128xf32>
    %c1_i32_32 = arith.constant 1 : i32
    %82 = vector.broadcast %c1_i32_32 : i32 to vector<1x128xi32>
    %83 = arith.addi %1, %82 : vector<1x128xi32>
    %c0_i32_33 = arith.constant 0 : i32
    %84 = vector.broadcast %c0_i32_33 : i32 to vector<1x128xi32>
    %85 = arith.cmpi sge, %83, %84 : vector<1x128xi32>
    %c1_i32_34 = arith.constant 1 : i32
    %86 = vector.broadcast %c1_i32_34 : i32 to vector<1x128xi32>
    %87 = arith.addi %1, %86 : vector<1x128xi32>
    %c15_i32_35 = arith.constant 15 : i32
    %88 = vector.broadcast %c15_i32_35 : i32 to vector<1x128xi32>
    %89 = arith.cmpi sle, %87, %88 : vector<1x128xi32>
    %90 = arith.andi %85, %89 : vector<1x128xi1>
    %cst_36 = arith.constant 0.000000e+00 : f32
    %91 = vector.shape_cast %90 : vector<1x128xi1> to vector<1x128xi1>
    %92 = vector.broadcast %91 : vector<1x128xi1> to vector<32x128xi1>
    %93 = vector.broadcast %cst_36 : f32 to vector<32x128xf32>
    %94 = arith.select %92, %81, %93 : vector<32x128xi1>, vector<32x128xf32>
    %95 = tpu.concatenate %79, %80, %94 in 0 : vector<32x128xf32>, vector<32x128xf32>, vector<32x128xf32> -> vector<96x128xf32>
    %cst_37 = arith.constant dense<0.000000e+00> : vector<32x128xf32>
    %96 = tpu.matmul %61, %95, %cst_37 {dimension_numbers = #tpu.dot_dimension_numbers<[1], [0], [0], [1], [0, 0, 1, 1], [], []>, precision = #tpu.contract_precision<fp32>} : vector<32x96xf32>, vector<96x128xf32>, vector<32x128xf32> -> vector<32x128xf32>
    %cst_38 = arith.constant dense<0.000000e+00> : vector<32xf32>
    %97 = vector.multi_reduction <add>, %96, %cst_38 [1] : vector<32x128xf32> to vector<32xf32>
    %98 = vector.shape_cast %97 : vector<32xf32> to vector<32x1xf32>
    %cst_39 = arith.constant 7.812500e-03 : f32
    %99 = vector.broadcast %cst_39 : f32 to vector<32x1xf32>
    %100 = arith.mulf %98, %99 : vector<32x1xf32>
    %101 = vector.broadcast %100 : vector<32x1xf32> to vector<32x128xf32>
    %102 = arith.subf %96, %101 : vector<32x128xf32>
    %103 = arith.mulf %102, %102 : vector<32x128xf32>
    %cst_40 = arith.constant dense<0.000000e+00> : vector<32xf32>
    %104 = vector.multi_reduction <add>, %103, %cst_40 [1] : vector<32x128xf32> to vector<32xf32>
    %105 = vector.shape_cast %104 : vector<32xf32> to vector<32x1xf32>
    %cst_41 = arith.constant 7.812500e-03 : f32
    %106 = vector.broadcast %cst_41 : f32 to vector<32x1xf32>
    %107 = arith.mulf %105, %106 : vector<32x1xf32>
    %cst_42 = arith.constant 9.99999974E-6 : f32
    %108 = vector.broadcast %cst_42 : f32 to vector<32x1xf32>
    %109 = arith.addf %107, %108 : vector<32x1xf32>
    %110 = math.rsqrt %109 : vector<32x1xf32>
    %111 = vector.broadcast %110 : vector<32x1xf32> to vector<32x128xf32>
    %112 = arith.mulf %102, %111 : vector<32x128xf32>
    %113 = vector.broadcast %62 : vector<32x1xf32> to vector<32x128xf32>
    %114 = arith.mulf %112, %113 : vector<32x128xf32>
    %115 = vector.broadcast %63 : vector<32x1xf32> to vector<32x128xf32>
    %116 = arith.addf %114, %115 : vector<32x128xf32>
    %cst_43 = arith.constant 0.000000e+00 : f32
    %117 = vector.broadcast %cst_43 : f32 to vector<32x128xf32>
    %118 = arith.maximumf %116, %117 : vector<32x128xf32>
    %119 = tpu.iota {dimensions = array<i32: 0>} : vector<128x8xi32>
    %120 = tpu.iota {dimensions = array<i32: 1>} : vector<128x8xi32>
    %c16_i32 = arith.constant 16 : i32
    %121 = vector.broadcast %c16_i32 : i32 to vector<128x8xi32>
    %122 = arith.muli %120, %121 : vector<128x8xi32>
    %123 = arith.cmpi sge, %119, %122 : vector<128x8xi32>
    %c1_i32_44 = arith.constant 1 : i32
    %124 = vector.broadcast %c1_i32_44 : i32 to vector<128x8xi32>
    %125 = arith.addi %120, %124 : vector<128x8xi32>
    %c16_i32_45 = arith.constant 16 : i32
    %126 = vector.broadcast %c16_i32_45 : i32 to vector<128x8xi32>
    %127 = arith.muli %125, %126 : vector<128x8xi32>
    %128 = arith.cmpi slt, %119, %127 : vector<128x8xi32>
    %129 = arith.andi %123, %128 : vector<128x8xi1>
    %cst_46 = arith.constant 1.000000e+00 : f32
    %cst_47 = arith.constant 0.000000e+00 : f32
    %130 = vector.broadcast %cst_46 : f32 to vector<128x8xf32>
    %131 = vector.broadcast %cst_47 : f32 to vector<128x8xf32>
    %132 = arith.select %129, %130, %131 : vector<128x8xi1>, vector<128x8xf32>
    %133 = tpu.iota {dimensions = array<i32: 1>} : vector<8x128xi32>
    %134 = tpu.iota {dimensions = array<i32: 0>} : vector<8x128xi32>
    %c16_i32_48 = arith.constant 16 : i32
    %135 = vector.broadcast %c16_i32_48 : i32 to vector<8x128xi32>
    %136 = arith.muli %134, %135 : vector<8x128xi32>
    %137 = arith.cmpi sge, %133, %136 : vector<8x128xi32>
    %c1_i32_49 = arith.constant 1 : i32
    %138 = vector.broadcast %c1_i32_49 : i32 to vector<8x128xi32>
    %139 = arith.addi %134, %138 : vector<8x128xi32>
    %c16_i32_50 = arith.constant 16 : i32
    %140 = vector.broadcast %c16_i32_50 : i32 to vector<8x128xi32>
    %141 = arith.muli %139, %140 : vector<8x128xi32>
    %142 = arith.cmpi slt, %133, %141 : vector<8x128xi32>
    %143 = arith.andi %137, %142 : vector<8x128xi1>
    %cst_51 = arith.constant 1.000000e+00 : f32
    %cst_52 = arith.constant 0.000000e+00 : f32
    %144 = vector.broadcast %cst_51 : f32 to vector<8x128xf32>
    %145 = vector.broadcast %cst_52 : f32 to vector<8x128xf32>
    %146 = arith.select %143, %144, %145 : vector<8x128xi1>, vector<8x128xf32>
    %cst_53 = arith.constant dense<0.000000e+00> : vector<32x8xf32>
    %147 = tpu.matmul %118, %132, %cst_53 {dimension_numbers = #tpu.dot_dimension_numbers<[1], [0], [0], [1], [0, 0, 1, 1], [], []>, precision = #tpu.contract_precision<fp32>} : vector<32x128xf32>, vector<128x8xf32>, vector<32x8xf32> -> vector<32x8xf32>
    %cst_54 = arith.constant 6.250000e-02 : f32
    %148 = vector.broadcast %cst_54 : f32 to vector<32x8xf32>
    %149 = arith.mulf %147, %148 : vector<32x8xf32>
    %cst_55 = arith.constant dense<0.000000e+00> : vector<32x128xf32>
    %150 = tpu.matmul %149, %146, %cst_55 {dimension_numbers = #tpu.dot_dimension_numbers<[1], [0], [0], [1], [0, 0, 1, 1], [], []>, precision = #tpu.contract_precision<fp32>} : vector<32x8xf32>, vector<8x128xf32>, vector<32x128xf32> -> vector<32x128xf32>
    %151 = arith.subf %118, %150 : vector<32x128xf32>
    %152 = arith.mulf %151, %151 : vector<32x128xf32>
    %cst_56 = arith.constant dense<0.000000e+00> : vector<32x8xf32>
    %153 = tpu.matmul %152, %132, %cst_56 {dimension_numbers = #tpu.dot_dimension_numbers<[1], [0], [0], [1], [0, 0, 1, 1], [], []>, precision = #tpu.contract_precision<fp32>} : vector<32x128xf32>, vector<128x8xf32>, vector<32x8xf32> -> vector<32x8xf32>
    %cst_57 = arith.constant 6.250000e-02 : f32
    %154 = vector.broadcast %cst_57 : f32 to vector<32x8xf32>
    %155 = arith.mulf %153, %154 : vector<32x8xf32>
    %cst_58 = arith.constant dense<0.000000e+00> : vector<32x128xf32>
    %156 = tpu.matmul %155, %146, %cst_58 {dimension_numbers = #tpu.dot_dimension_numbers<[1], [0], [0], [1], [0, 0, 1, 1], [], []>, precision = #tpu.contract_precision<fp32>} : vector<32x8xf32>, vector<8x128xf32>, vector<32x128xf32> -> vector<32x128xf32>
    %cst_59 = arith.constant 9.99999974E-6 : f32
    %157 = vector.broadcast %cst_59 : f32 to vector<32x128xf32>
    %158 = arith.addf %156, %157 : vector<32x128xf32>
    %159 = math.rsqrt %158 : vector<32x128xf32>
    %160 = arith.mulf %151, %159 : vector<32x128xf32>
    %c0_60 = arith.constant 0 : index
    %c0_61 = arith.constant 0 : index
    %161 = vector.load %arg7[%c0_60, %c0_61] : memref<1x128xf32, #tpu.memory_space<vmem>>, vector<1x128xf32>
    %162 = vector.broadcast %161 : vector<1x128xf32> to vector<32x128xf32>
    %163 = arith.mulf %160, %162 : vector<32x128xf32>
    %c0_62 = arith.constant 0 : index
    %c0_63 = arith.constant 0 : index
    %164 = vector.load %arg8[%c0_62, %c0_63] : memref<1x128xf32, #tpu.memory_space<vmem>>, vector<1x128xf32>
    %165 = vector.broadcast %164 : vector<1x128xf32> to vector<32x128xf32>
    %166 = arith.addf %163, %165 : vector<32x128xf32>
    %c0_64 = arith.constant 0 : index
    %c0_65 = arith.constant 0 : index
    %167 = vector.load %arg9[%c0_64, %c0_65] : memref<32x7xf32, #tpu.memory_space<vmem>>, vector<32x7xf32>
    %cst_66 = arith.constant 0.000000e+00 : f32
    %168 = vector.broadcast %cst_66 : f32 to vector<32x3xf32>
    %169 = tpu.concatenate %168, %166, %168 in 1 : vector<32x3xf32>, vector<32x128xf32>, vector<32x3xf32> -> vector<32x134xf32>
    %170 = vector.extract_strided_slice %169 {offsets = [0, 0], sizes = [32, 128], strides = [1, 1]} : vector<32x134xf32> to vector<32x128xf32>
    %c-3_i32 = arith.constant -3 : i32
    %171 = vector.broadcast %c-3_i32 : i32 to vector<1x128xi32>
    %172 = arith.addi %1, %171 : vector<1x128xi32>
    %c0_i32_67 = arith.constant 0 : i32
    %173 = vector.broadcast %c0_i32_67 : i32 to vector<1x128xi32>
    %174 = arith.cmpi sge, %172, %173 : vector<1x128xi32>
    %c-3_i32_68 = arith.constant -3 : i32
    %175 = vector.broadcast %c-3_i32_68 : i32 to vector<1x128xi32>
    %176 = arith.addi %1, %175 : vector<1x128xi32>
    %c15_i32_69 = arith.constant 15 : i32
    %177 = vector.broadcast %c15_i32_69 : i32 to vector<1x128xi32>
    %178 = arith.cmpi sle, %176, %177 : vector<1x128xi32>
    %179 = arith.andi %174, %178 : vector<1x128xi1>
    %cst_70 = arith.constant 0.000000e+00 : f32
    %180 = vector.shape_cast %179 : vector<1x128xi1> to vector<1x128xi1>
    %181 = vector.broadcast %180 : vector<1x128xi1> to vector<32x128xi1>
    %182 = vector.broadcast %cst_70 : f32 to vector<32x128xf32>
    %183 = arith.select %181, %170, %182 : vector<32x128xi1>, vector<32x128xf32>
    %184 = vector.extract_strided_slice %169 {offsets = [0, 1], sizes = [32, 128], strides = [1, 1]} : vector<32x134xf32> to vector<32x128xf32>
    %c-2_i32 = arith.constant -2 : i32
    %185 = vector.broadcast %c-2_i32 : i32 to vector<1x128xi32>
    %186 = arith.addi %1, %185 : vector<1x128xi32>
    %c0_i32_71 = arith.constant 0 : i32
    %187 = vector.broadcast %c0_i32_71 : i32 to vector<1x128xi32>
    %188 = arith.cmpi sge, %186, %187 : vector<1x128xi32>
    %c-2_i32_72 = arith.constant -2 : i32
    %189 = vector.broadcast %c-2_i32_72 : i32 to vector<1x128xi32>
    %190 = arith.addi %1, %189 : vector<1x128xi32>
    %c15_i32_73 = arith.constant 15 : i32
    %191 = vector.broadcast %c15_i32_73 : i32 to vector<1x128xi32>
    %192 = arith.cmpi sle, %190, %191 : vector<1x128xi32>
    %193 = arith.andi %188, %192 : vector<1x128xi1>
    %cst_74 = arith.constant 0.000000e+00 : f32
    %194 = vector.shape_cast %193 : vector<1x128xi1> to vector<1x128xi1>
    %195 = vector.broadcast %194 : vector<1x128xi1> to vector<32x128xi1>
    %196 = vector.broadcast %cst_74 : f32 to vector<32x128xf32>
    %197 = arith.select %195, %184, %196 : vector<32x128xi1>, vector<32x128xf32>
    %198 = vector.extract_strided_slice %169 {offsets = [0, 2], sizes = [32, 128], strides = [1, 1]} : vector<32x134xf32> to vector<32x128xf32>
    %c-1_i32_75 = arith.constant -1 : i32
    %199 = vector.broadcast %c-1_i32_75 : i32 to vector<1x128xi32>
    %200 = arith.addi %1, %199 : vector<1x128xi32>
    %c0_i32_76 = arith.constant 0 : i32
    %201 = vector.broadcast %c0_i32_76 : i32 to vector<1x128xi32>
    %202 = arith.cmpi sge, %200, %201 : vector<1x128xi32>
    %c-1_i32_77 = arith.constant -1 : i32
    %203 = vector.broadcast %c-1_i32_77 : i32 to vector<1x128xi32>
    %204 = arith.addi %1, %203 : vector<1x128xi32>
    %c15_i32_78 = arith.constant 15 : i32
    %205 = vector.broadcast %c15_i32_78 : i32 to vector<1x128xi32>
    %206 = arith.cmpi sle, %204, %205 : vector<1x128xi32>
    %207 = arith.andi %202, %206 : vector<1x128xi1>
    %cst_79 = arith.constant 0.000000e+00 : f32
    %208 = vector.shape_cast %207 : vector<1x128xi1> to vector<1x128xi1>
    %209 = vector.broadcast %208 : vector<1x128xi1> to vector<32x128xi1>
    %210 = vector.broadcast %cst_79 : f32 to vector<32x128xf32>
    %211 = arith.select %209, %198, %210 : vector<32x128xi1>, vector<32x128xf32>
    %212 = vector.extract_strided_slice %169 {offsets = [0, 3], sizes = [32, 128], strides = [1, 1]} : vector<32x134xf32> to vector<32x128xf32>
    %213 = vector.extract_strided_slice %169 {offsets = [0, 4], sizes = [32, 128], strides = [1, 1]} : vector<32x134xf32> to vector<32x128xf32>
    %c1_i32_80 = arith.constant 1 : i32
    %214 = vector.broadcast %c1_i32_80 : i32 to vector<1x128xi32>
    %215 = arith.addi %1, %214 : vector<1x128xi32>
    %c0_i32_81 = arith.constant 0 : i32
    %216 = vector.broadcast %c0_i32_81 : i32 to vector<1x128xi32>
    %217 = arith.cmpi sge, %215, %216 : vector<1x128xi32>
    %c1_i32_82 = arith.constant 1 : i32
    %218 = vector.broadcast %c1_i32_82 : i32 to vector<1x128xi32>
    %219 = arith.addi %1, %218 : vector<1x128xi32>
    %c15_i32_83 = arith.constant 15 : i32
    %220 = vector.broadcast %c15_i32_83 : i32 to vector<1x128xi32>
    %221 = arith.cmpi sle, %219, %220 : vector<1x128xi32>
    %222 = arith.andi %217, %221 : vector<1x128xi1>
    %cst_84 = arith.constant 0.000000e+00 : f32
    %223 = vector.shape_cast %222 : vector<1x128xi1> to vector<1x128xi1>
    %224 = vector.broadcast %223 : vector<1x128xi1> to vector<32x128xi1>
    %225 = vector.broadcast %cst_84 : f32 to vector<32x128xf32>
    %226 = arith.select %224, %213, %225 : vector<32x128xi1>, vector<32x128xf32>
    %227 = vector.extract_strided_slice %169 {offsets = [0, 5], sizes = [32, 128], strides = [1, 1]} : vector<32x134xf32> to vector<32x128xf32>
    %c2_i32 = arith.constant 2 : i32
    %228 = vector.broadcast %c2_i32 : i32 to vector<1x128xi32>
    %229 = arith.addi %1, %228 : vector<1x128xi32>
    %c0_i32_85 = arith.constant 0 : i32
    %230 = vector.broadcast %c0_i32_85 : i32 to vector<1x128xi32>
    %231 = arith.cmpi sge, %229, %230 : vector<1x128xi32>
    %c2_i32_86 = arith.constant 2 : i32
    %232 = vector.broadcast %c2_i32_86 : i32 to vector<1x128xi32>
    %233 = arith.addi %1, %232 : vector<1x128xi32>
    %c15_i32_87 = arith.constant 15 : i32
    %234 = vector.broadcast %c15_i32_87 : i32 to vector<1x128xi32>
    %235 = arith.cmpi sle, %233, %234 : vector<1x128xi32>
    %236 = arith.andi %231, %235 : vector<1x128xi1>
    %cst_88 = arith.constant 0.000000e+00 : f32
    %237 = vector.shape_cast %236 : vector<1x128xi1> to vector<1x128xi1>
    %238 = vector.broadcast %237 : vector<1x128xi1> to vector<32x128xi1>
    %239 = vector.broadcast %cst_88 : f32 to vector<32x128xf32>
    %240 = arith.select %238, %227, %239 : vector<32x128xi1>, vector<32x128xf32>
    %241 = vector.extract_strided_slice %169 {offsets = [0, 6], sizes = [32, 128], strides = [1, 1]} : vector<32x134xf32> to vector<32x128xf32>
    %c3_i32 = arith.constant 3 : i32
    %242 = vector.broadcast %c3_i32 : i32 to vector<1x128xi32>
    %243 = arith.addi %1, %242 : vector<1x128xi32>
    %c0_i32_89 = arith.constant 0 : i32
    %244 = vector.broadcast %c0_i32_89 : i32 to vector<1x128xi32>
    %245 = arith.cmpi sge, %243, %244 : vector<1x128xi32>
    %c3_i32_90 = arith.constant 3 : i32
    %246 = vector.broadcast %c3_i32_90 : i32 to vector<1x128xi32>
    %247 = arith.addi %1, %246 : vector<1x128xi32>
    %c15_i32_91 = arith.constant 15 : i32
    %248 = vector.broadcast %c15_i32_91 : i32 to vector<1x128xi32>
    %249 = arith.cmpi sle, %247, %248 : vector<1x128xi32>
    %250 = arith.andi %245, %249 : vector<1x128xi1>
    %cst_92 = arith.constant 0.000000e+00 : f32
    %251 = vector.shape_cast %250 : vector<1x128xi1> to vector<1x128xi1>
    %252 = vector.broadcast %251 : vector<1x128xi1> to vector<32x128xi1>
    %253 = vector.broadcast %cst_92 : f32 to vector<32x128xf32>
    %254 = arith.select %252, %241, %253 : vector<32x128xi1>, vector<32x128xf32>
    %255 = vector.extract_strided_slice %167 {offsets = [0, 0], sizes = [32, 1], strides = [1, 1]} : vector<32x7xf32> to vector<32x1xf32>
    %256 = vector.broadcast %255 : vector<32x1xf32> to vector<32x128xf32>
    %257 = arith.mulf %183, %256 : vector<32x128xf32>
    %258 = vector.extract_strided_slice %167 {offsets = [0, 1], sizes = [32, 1], strides = [1, 1]} : vector<32x7xf32> to vector<32x1xf32>
    %259 = vector.broadcast %258 : vector<32x1xf32> to vector<32x128xf32>
    %260 = arith.mulf %197, %259 : vector<32x128xf32>
    %261 = arith.addf %257, %260 : vector<32x128xf32>
    %262 = vector.extract_strided_slice %167 {offsets = [0, 2], sizes = [32, 1], strides = [1, 1]} : vector<32x7xf32> to vector<32x1xf32>
    %263 = vector.broadcast %262 : vector<32x1xf32> to vector<32x128xf32>
    %264 = arith.mulf %211, %263 : vector<32x128xf32>
    %265 = arith.addf %261, %264 : vector<32x128xf32>
    %266 = vector.extract_strided_slice %167 {offsets = [0, 3], sizes = [32, 1], strides = [1, 1]} : vector<32x7xf32> to vector<32x1xf32>
    %267 = vector.broadcast %266 : vector<32x1xf32> to vector<32x128xf32>
    %268 = arith.mulf %212, %267 : vector<32x128xf32>
    %269 = arith.addf %265, %268 : vector<32x128xf32>
    %270 = vector.extract_strided_slice %167 {offsets = [0, 4], sizes = [32, 1], strides = [1, 1]} : vector<32x7xf32> to vector<32x1xf32>
    %271 = vector.broadcast %270 : vector<32x1xf32> to vector<32x128xf32>
    %272 = arith.mulf %226, %271 : vector<32x128xf32>
    %273 = arith.addf %269, %272 : vector<32x128xf32>
    %274 = vector.extract_strided_slice %167 {offsets = [0, 5], sizes = [32, 1], strides = [1, 1]} : vector<32x7xf32> to vector<32x1xf32>
    %275 = vector.broadcast %274 : vector<32x1xf32> to vector<32x128xf32>
    %276 = arith.mulf %240, %275 : vector<32x128xf32>
    %277 = arith.addf %273, %276 : vector<32x128xf32>
    %278 = vector.extract_strided_slice %167 {offsets = [0, 6], sizes = [32, 1], strides = [1, 1]} : vector<32x7xf32> to vector<32x1xf32>
    %279 = vector.broadcast %278 : vector<32x1xf32> to vector<32x128xf32>
    %280 = arith.mulf %254, %279 : vector<32x128xf32>
    %281 = arith.addf %277, %280 : vector<32x128xf32>
    %c0_93 = arith.constant 0 : index
    %c0_94 = arith.constant 0 : index
    %282 = vector.load %arg10[%c0_93, %c0_94] : memref<32x1xf32, #tpu.memory_space<vmem>>, vector<32x1xf32>
    %283 = vector.broadcast %282 : vector<32x1xf32> to vector<32x128xf32>
    %284 = arith.addf %281, %283 : vector<32x128xf32>
    %cst_95 = arith.constant 0.000000e+00 : f32
    %285 = vector.broadcast %cst_95 : f32 to vector<32x128xf32>
    %286 = arith.subf %285, %284 : vector<32x128xf32>
    %287 = math.exp %286 : vector<32x128xf32>
    %cst_96 = arith.constant 1.000000e+00 : f32
    %288 = vector.broadcast %cst_96 : f32 to vector<32x128xf32>
    %289 = arith.addf %288, %287 : vector<32x128xf32>
    %cst_97 = arith.constant 1.000000e+00 : f32
    %290 = vector.broadcast %cst_97 : f32 to vector<32x128xf32>
    %291 = arith.divf %290, %289 : vector<32x128xf32>
    %292 = arith.mulf %166, %291 : vector<32x128xf32>
    %cst_98 = arith.constant dense<0.000000e+00> : vector<32x8xf32>
    %293 = tpu.matmul %292, %132, %cst_98 {dimension_numbers = #tpu.dot_dimension_numbers<[1], [0], [0], [1], [0, 0, 1, 1], [], []>, precision = #tpu.contract_precision<fp32>} : vector<32x128xf32>, vector<128x8xf32>, vector<32x8xf32> -> vector<32x8xf32>
    %cst_99 = arith.constant 6.250000e-02 : f32
    %294 = vector.broadcast %cst_99 : f32 to vector<32x8xf32>
    %295 = arith.mulf %293, %294 : vector<32x8xf32>
    %c0_100 = arith.constant 0 : index
    %c0_101 = arith.constant 0 : index
    %296 = vector.load %arg11[%c0_100, %c0_101] : memref<2x32xf32, #tpu.memory_space<vmem>>, vector<2x32xf32>
    %cst_102 = arith.constant dense<0.000000e+00> : vector<2x8xf32>
    %297 = tpu.matmul %296, %295, %cst_102 {dimension_numbers = #tpu.dot_dimension_numbers<[1], [0], [0], [1], [0, 0, 1, 1], [], []>, precision = #tpu.contract_precision<fp32>} : vector<2x32xf32>, vector<32x8xf32>, vector<2x8xf32> -> vector<2x8xf32>
    %c0_103 = arith.constant 0 : index
    %c0_104 = arith.constant 0 : index
    %298 = vector.load %arg12[%c0_103, %c0_104] : memref<2x1xf32, #tpu.memory_space<vmem>>, vector<2x1xf32>
    %299 = vector.broadcast %298 : vector<2x1xf32> to vector<2x8xf32>
    %300 = arith.addf %297, %299 : vector<2x8xf32>
    %cst_105 = arith.constant 0.000000e+00 : f32
    %301 = vector.broadcast %cst_105 : f32 to vector<2x8xf32>
    %302 = arith.maximumf %300, %301 : vector<2x8xf32>
    %c0_106 = arith.constant 0 : index
    %c0_107 = arith.constant 0 : index
    %303 = vector.load %arg13[%c0_106, %c0_107] : memref<32x2xf32, #tpu.memory_space<vmem>>, vector<32x2xf32>
    %cst_108 = arith.constant dense<0.000000e+00> : vector<32x8xf32>
    %304 = tpu.matmul %303, %302, %cst_108 {dimension_numbers = #tpu.dot_dimension_numbers<[1], [0], [0], [1], [0, 0, 1, 1], [], []>, precision = #tpu.contract_precision<fp32>} : vector<32x2xf32>, vector<2x8xf32>, vector<32x8xf32> -> vector<32x8xf32>
    %c0_109 = arith.constant 0 : index
    %c0_110 = arith.constant 0 : index
    %305 = vector.load %arg14[%c0_109, %c0_110] : memref<32x1xf32, #tpu.memory_space<vmem>>, vector<32x1xf32>
    %306 = vector.broadcast %305 : vector<32x1xf32> to vector<32x8xf32>
    %307 = arith.addf %304, %306 : vector<32x8xf32>
    %cst_111 = arith.constant 0.000000e+00 : f32
    %308 = vector.broadcast %cst_111 : f32 to vector<32x8xf32>
    %309 = arith.subf %308, %307 : vector<32x8xf32>
    %310 = math.exp %309 : vector<32x8xf32>
    %cst_112 = arith.constant 1.000000e+00 : f32
    %311 = vector.broadcast %cst_112 : f32 to vector<32x8xf32>
    %312 = arith.addf %311, %310 : vector<32x8xf32>
    %cst_113 = arith.constant 1.000000e+00 : f32
    %313 = vector.broadcast %cst_113 : f32 to vector<32x8xf32>
    %314 = arith.divf %313, %312 : vector<32x8xf32>
    %cst_114 = arith.constant dense<0.000000e+00> : vector<32x128xf32>
    %315 = tpu.matmul %314, %146, %cst_114 {dimension_numbers = #tpu.dot_dimension_numbers<[1], [0], [0], [1], [0, 0, 1, 1], [], []>, precision = #tpu.contract_precision<fp32>} : vector<32x8xf32>, vector<8x128xf32>, vector<32x128xf32> -> vector<32x128xf32>
    %316 = arith.mulf %292, %315 : vector<32x128xf32>
    %c0_115 = arith.constant 0 : index
    %c0_116 = arith.constant 0 : index
    %317 = vector.load %arg0[%c0_115, %c0_116] : memref<32x128xf32, #tpu.memory_space<vmem>>, vector<32x128xf32>
    %318 = arith.addf %316, %317 : vector<32x128xf32>
    %c0_117 = arith.constant 0 : index
    %c0_118 = arith.constant 0 : index
    %319 = vector.load %arg15[%c0_117, %c0_118] : memref<32x128xf32, #tpu.memory_space<vmem>>, vector<32x128xf32>
    tpu.vector_store %arg15[%c0_117, %c0_118], %318 {strides = array<i32>} : memref<32x128xf32, #tpu.memory_space<vmem>>, vector<32x128xf32>,
    return
  }
}

</mosaic_0001>

<llo_original>
// kernel: tpu_custom_call.1
$region0: #{tpu_custom_call.1}
  #allocation0 [shape = 'u32[]', space=smem, size = 0x4, offset = 0x4, fixed_abs, tag = 'smem constant byte address 0x4 - core index']
  #allocation1 [shape = 'u32[144,128]{1,0:T(1,128)}', space=vmem, size = 0x12000, scoped, tag = 'internal scratch']
  %s0 = inlined_call_operand.vmem [shape: f32[32,128], index: 0, kind: input, shape index: {}]
  %s1 = inlined_call_operand.vmem [shape: f32[32,96], index: 1, kind: input, shape index: {}]
  %s2 = inlined_call_operand.vmem [shape: f32[32,1], index: 2, kind: input, shape index: {}]
  %s3 = inlined_call_operand.vmem [shape: f32[32,1], index: 3, kind: input, shape index: {}]
  %s4 = inlined_call_operand.vmem [shape: f32[32,96], index: 4, kind: input, shape index: {}]
  %s5 = inlined_call_operand.vmem [shape: f32[32,1], index: 5, kind: input, shape index: {}]
  %s6 = inlined_call_operand.vmem [shape: f32[32,1], index: 6, kind: input, shape index: {}]
  %s7 = inlined_call_operand.vmem [shape: f32[1,128], index: 7, kind: input, shape index: {}]
  %s8 = inlined_call_operand.vmem [shape: f32[1,128], index: 8, kind: input, shape index: {}]
  %s9 = inlined_call_operand.vmem [shape: f32[32,7], index: 9, kind: input, shape index: {}]
  %s10 = inlined_call_operand.vmem [shape: f32[32,1], index: 10, kind: input, shape index: {}]
  %s11 = inlined_call_operand.vmem [shape: f32[2,32], index: 11, kind: input, shape index: {}]
  %s12 = inlined_call_operand.vmem [shape: f32[2,1], index: 12, kind: input, shape index: {}]
  %s13 = inlined_call_operand.vmem [shape: f32[32,2], index: 13, kind: input, shape index: {}]
  %s14 = inlined_call_operand.vmem [shape: f32[32,1], index: 14, kind: input, shape index: {}]
  %s15 = inlined_call_operand.hbm [shape: f32[32,128], index: 15, kind: output, shape index: {}]
  %s16 = sld [smem:[#allocation0]]
  $region70: #{tpu_custom_call.1} parent=0
    _
  %s18 = ssub.s32 1, %s16
  %s19 = scalar_select 0, %s18, %s16
  $region1: #{tpu_custom_call.1} parent=0
    #allocation2 [shape = 'u8[16384]{0}', space=vmem, size = 0x4000, scoped, tag = 'output window, operand 0, single buffered']
    #allocation3 [shape = 's32[1]{0}', space=sflag, size = 0x4, scoped, tag = 'scoped memory for tpu_custom_call.1']
    %20 = vsyncpa [#allocation3], 0
    // Predicated region
    $region2: #{tpu_custom_call.1} parent=1 // pred_check
      _
    $region3: #{tpu_custom_call.1} parent=1 // pred_check_branch
      %22 = sbr.rel (0) target = $region5
    $region4: #{tpu_custom_call.1} parent=1 // pred_region
      _
    $region5: #{tpu_custom_call.1} parent=1 // pred_fallthru
      _
    // Predicated region
    $region6: #{tpu_custom_call.1} parent=1 // pred_check
      _
    $region7: #{tpu_custom_call.1} parent=1 // pred_check_branch
      %24 = sbr.rel (0) target = $region9
    $region8: #{tpu_custom_call.1} parent=1 // pred_region
      _
    $region9: #{tpu_custom_call.1} parent=1 // pred_fallthru
      _
    // Predicated region
    $region10: #{tpu_custom_call.1} parent=1 // pred_check
      _
    $region11: #{tpu_custom_call.1} parent=1 // pred_check_branch
      %26 = sbr.rel (0) target = $region13
    $region12: #{tpu_custom_call.1} parent=1 // pred_region
      _
    $region13: #{tpu_custom_call.1} parent=1 // pred_fallthru
      _
    // Predicated region
    $region14: #{tpu_custom_call.1} parent=1 // pred_check
      _
    $region15: #{tpu_custom_call.1} parent=1 // pred_check_branch
      %28 = sbr.rel (0) target = $region17
    $region16: #{tpu_custom_call.1} parent=1 // pred_region
      _
    $region17: #{tpu_custom_call.1} parent=1 // pred_fallthru
      _
    // Predicated region
    $region18: #{tpu_custom_call.1} parent=1 // pred_check
      _
    $region19: #{tpu_custom_call.1} parent=1 // pred_check_branch
      %30 = sbr.rel (0) target = $region21
    $region20: #{tpu_custom_call.1} parent=1 // pred_region
      _
    $region21: #{tpu_custom_call.1} parent=1 // pred_fallthru
      _
    // Predicated region
    $region22: #{tpu_custom_call.1} parent=1 // pred_check
      _
    $region23: #{tpu_custom_call.1} parent=1 // pred_check_branch
      %32 = sbr.rel (0) target = $region25
    $region24: #{tpu_custom_call.1} parent=1 // pred_region
      _
    $region25: #{tpu_custom_call.1} parent=1 // pred_fallthru
      _
    // Predicated region
    $region26: #{tpu_custom_call.1} parent=1 // pred_check
      _
    $region27: #{tpu_custom_call.1} parent=1 // pred_check_branch
      %34 = sbr.rel (0) target = $region29
    $region28: #{tpu_custom_call.1} parent=1 // pred_region
      _
    $region29: #{tpu_custom_call.1} parent=1 // pred_fallthru
      _
    // Predicated region
    $region30: #{tpu_custom_call.1} parent=1 // pred_check
      _
    $region31: #{tpu_custom_call.1} parent=1 // pred_check_branch
      %36 = sbr.rel (0) target = $region33
    $region32: #{tpu_custom_call.1} parent=1 // pred_region
      _
    $region33: #{tpu_custom_call.1} parent=1 // pred_fallthru
      _
    // Predicated region
    $region34: #{tpu_custom_call.1} parent=1 // pred_check
      _
    $region35: #{tpu_custom_call.1} parent=1 // pred_check_branch
      %38 = sbr.rel (0) target = $region37
    $region36: #{tpu_custom_call.1} parent=1 // pred_region
      _
    $region37: #{tpu_custom_call.1} parent=1 // pred_fallthru
      _
    // Predicated region
    $region38: #{tpu_custom_call.1} parent=1 // pred_check
      _
    $region39: #{tpu_custom_call.1} parent=1 // pred_check_branch
      %40 = sbr.rel (0) target = $region41
    $region40: #{tpu_custom_call.1} parent=1 // pred_region
      _
    $region41: #{tpu_custom_call.1} parent=1 // pred_fallthru
      _
    // Predicated region
    $region42: #{tpu_custom_call.1} parent=1 // pred_check
      _
    $region43: #{tpu_custom_call.1} parent=1 // pred_check_branch
      %42 = sbr.rel (0) target = $region45
    $region44: #{tpu_custom_call.1} parent=1 // pred_region
      _
    $region45: #{tpu_custom_call.1} parent=1 // pred_fallthru
      _
    // Predicated region
    $region46: #{tpu_custom_call.1} parent=1 // pred_check
      _
    $region47: #{tpu_custom_call.1} parent=1 // pred_check_branch
      %44 = sbr.rel (0) target = $region49
    $region48: #{tpu_custom_call.1} parent=1 // pred_region
      _
    $region49: #{tpu_custom_call.1} parent=1 // pred_fallthru
      _
    // Predicated region
    $region50: #{tpu_custom_call.1} parent=1 // pred_check
      _
    $region51: #{tpu_custom_call.1} parent=1 // pred_check_branch
      %46 = sbr.rel (0) target = $region53
    $region52: #{tpu_custom_call.1} parent=1 // pred_region
      _
    $region53: #{tpu_custom_call.1} parent=1 // pred_fallthru
      _
    // Predicated region
    $region54: #{tpu_custom_call.1} parent=1 // pred_check
      _
    $region55: #{tpu_custom_call.1} parent=1 // pred_check_branch
      %48 = sbr.rel (0) target = $region57
    $region56: #{tpu_custom_call.1} parent=1 // pred_region
      _
    $region57: #{tpu_custom_call.1} parent=1 // pred_fallthru
      _
    // Predicated region
    $region58: #{tpu_custom_call.1} parent=1 // pred_check
      _
    $region59: #{tpu_custom_call.1} parent=1 // pred_check_branch
      %50 = sbr.rel (0) target = $region61
    $region60: #{tpu_custom_call.1} parent=1 // pred_region
      _
    $region61: #{tpu_custom_call.1} parent=1 // pred_fallthru
      _
    %v51 = vlaneseq
    %v52 = vand.u32 %v51, 127
    %53 = vrot.lane.b32.xlu0 %v52, 16
    %v54 = vpop.permute.xlu0 %53
    %55 = vrot.lane.b32.xlu0 %v52, 32
    %v56 = vpop.permute.xlu0 %55
    %57 = vrot.lane.b32.xlu0 %v52, 48
    %v58 = vpop.permute.xlu0 %57
    %59 = vrot.lane.b32.xlu0 %v52, 64
    %v60 = vpop.permute.xlu0 %59
    %61 = vrot.lane.b32.xlu0 %v52, 80
    %v62 = vpop.permute.xlu0 %61
    %63 = vrot.lane.b32.xlu0 %v52, 96
    %v64 = vpop.permute.xlu0 %63
    %65 = vrot.lane.b32.xlu0 %v52, 112
    %v66 = vpop.permute.xlu0 %65
    %vm67 = vcmask 130048
    %v68 = vsel %vm67, %v52, %v54
    %vm69 = vcmask 261120
    %v70 = vsel %vm69, %v68, %v56
    %vm71 = vcmask 392192
    %v72 = vsel %vm71, %v70, %v58
    %vm73 = vcmask 523264
    %v74 = vsel %vm73, %v72, %v60
    %vm75 = vcmask 654336
    %v76 = vsel %vm75, %v74, %v62
    %vm77 = vcmask 785408
    %v78 = vsel %vm77, %v76, %v64
    %vm79 = vcmask 916480
    %v80 = vsel %vm79, %v78, %v66
    %v81 = vld [vmem:[%s0] sm:$0xff]
    %v82 = vld [vmem:[%s0 + $0x8] sm:$0xff]
    %v83 = vld [vmem:[%s0 + $0x10] sm:$0xff]
    %v84 = vld [vmem:[%s0 + $0x18] sm:$0xff]
    %v85 = vld [vmem:[%s1] sm:$0xff]
    %v86 = vld [vmem:[%s1 + $0x8] sm:$0xff]
    %v87 = vld [vmem:[%s1 + $0x10] sm:$0xff]
    %v88 = vld [vmem:[%s1 + $0x18] sm:$0xff]
    %v89 = vld [vmem:[%s2] sm:$0xff]
    %v90 = vld [vmem:[%s2 + $0x8] sm:$0xff]
    %v91 = vld [vmem:[%s2 + $0x10] sm:$0xff]
    %v92 = vld [vmem:[%s2 + $0x18] sm:$0xff]
    %v93 = vld [vmem:[%s3] sm:$0xff]
    %v94 = vld [vmem:[%s3 + $0x8] sm:$0xff]
    %v95 = vld [vmem:[%s3 + $0x10] sm:$0xff]
    %v96 = vld [vmem:[%s3 + $0x18] sm:$0xff]
    %101 = vrot.lane.b32.xlu0 %v81, 1
    %v102 = vpop.permute.xlu0 %101
    %103 = vrot.lane.b32.xlu0 %v82, 1
    %v104 = vpop.permute.xlu0 %103
    %105 = vrot.lane.b32.xlu0 %v83, 1
    %v106 = vpop.permute.xlu0 %105
    %107 = vrot.lane.b32.xlu0 %v84, 1
    %v108 = vpop.permute.xlu0 %107
    %vm113 = vcmask 7168
    %v114 = vsel %vm113, 0.0, %v102
    %v115 = vsel %vm113, 0.0, %v104
    %v116 = vsel %vm113, 0.0, %v106
    %v117 = vsel %vm113, 0.0, %v108
    %v118 = vsel %vm113, %v102, 0.0
    %v119 = vsel %vm113, %v104, 0.0
    %v120 = vsel %vm113, %v106, 0.0
    %v121 = vsel %vm113, %v108, 0.0
    %v122 = vadd.s32 %v80, 4294967295
    %vm123 = vcmp.ge.s32.totalorder %v122, 0
    %vm124 = vcmp.le.s32.totalorder %v122, 15
    %vm125 = vmand %vm123, %vm124
    %v126 = vsel %vm125, 1, 0
    %v127 = vlaneseq
    %v128 = vshrl.u32 %v127, 7
    %v129 = vsub.s32 0, %v128
    %v130 = vrot.slane %v126, %v129
    %vm131 = vcmp.eq.s32.totalorder %v130, 1
    %v132 = vsel %vm131, %v114, 0.0
    %v133 = vsel %vm131, %v115, 0.0
    %v134 = vsel %vm131, %v116, 0.0
    %v135 = vsel %vm131, %v117, 0.0
    %v136 = vadd.s32 %v80, 1
    %vm137 = vcmp.ge.s32.totalorder %v136, 0
    %vm138 = vcmp.le.s32.totalorder %v136, 15
    %vm139 = vmand %vm137, %vm138
    %v140 = vsel %vm139, 1, 0
    %v141 = vlaneseq
    %v142 = vshrl.u32 %v141, 7
    %v143 = vsub.s32 0, %v142
    %v144 = vrot.slane %v140, %v143
    %vm145 = vcmp.eq.s32.totalorder %v144, 1
    %154 = vrot.lane.b32.xlu0 %v114, 126
    %v155 = vpop.permute.xlu0 %154
    %156 = vrot.lane.b32.xlu0 %v118, 126
    %v157 = vpop.permute.xlu0 %156
    %158 = vrot.lane.b32.xlu0 %v115, 126
    %v159 = vpop.permute.xlu0 %158
    %160 = vrot.lane.b32.xlu0 %v119, 126
    %v161 = vpop.permute.xlu0 %160
    %162 = vrot.lane.b32.xlu0 %v116, 126
    %v163 = vpop.permute.xlu0 %162
    %164 = vrot.lane.b32.xlu0 %v120, 126
    %v165 = vpop.permute.xlu0 %164
    %166 = vrot.lane.b32.xlu0 %v117, 126
    %v167 = vpop.permute.xlu0 %166
    %168 = vrot.lane.b32.xlu0 %v121, 126
    %v169 = vpop.permute.xlu0 %168
    %vm170 = vcmask 1031168
    %v171 = vsel %vm170, %v155, %v157
    %v172 = vsel %vm170, %v159, %v161
    %v173 = vsel %vm170, %v163, %v165
    %v174 = vsel %vm170, %v167, %v169
    %v179 = vsel %vm145, %v171, 0.0
    %v180 = vsel %vm145, %v172, 0.0
    %v181 = vsel %vm145, %v173, 0.0
    %v182 = vsel %vm145, %v174, 0.0
    %183 = vrot.lane.b32.xlu0 %v114, 127
    %v184 = vpop.permute.xlu0 %183
    %185 = vrot.lane.b32.xlu0 %v118, 127
    %v186 = vpop.permute.xlu0 %185
    %187 = vrot.lane.b32.xlu0 %v115, 127
    %v188 = vpop.permute.xlu0 %187
    %189 = vrot.lane.b32.xlu0 %v119, 127
    %v190 = vpop.permute.xlu0 %189
    %191 = vrot.lane.b32.xlu0 %v116, 127
    %v192 = vpop.permute.xlu0 %191
    %193 = vrot.lane.b32.xlu0 %v120, 127
    %v194 = vpop.permute.xlu0 %193
    %195 = vrot.lane.b32.xlu0 %v117, 127
    %v196 = vpop.permute.xlu0 %195
    %197 = vrot.lane.b32.xlu0 %v121, 127
    %v198 = vpop.permute.xlu0 %197
    %vm199 = vcmask 1039360
    %v200 = vsel %vm199, %v184, %v186
    %v201 = vsel %vm199, %v188, %v190
    %v202 = vsel %vm199, %v192, %v194
    %v203 = vsel %vm199, %v196, %v198
    %v209 = vsel %vm77, %v85, 0
    %v212 = vsel %vm77, %v86, 0
    %v215 = vsel %vm77, %v87, 0
    %v218 = vsel %vm77, %v88, 0
    %220 = vmatprep.subr.mxu0 0.0
    %221 = vmatpush1.msra.mxu0 0.0
    %222 = vmatprep.subr.mxu0 0.0
    %223 = vmatpush1.msra.mxu0 0.0
    %224 = vmatprep.subr.mxu0 0.0
    %225 = vmatpush1.msra.mxu0 0.0
    %226 = vmatprep.subr.mxu0 0.0
    %227 = vmatpush1.msra.mxu0 0.0
    %228 = vmatprep.subr.mxu0 0.0
    %v229 = vand.u32 %v182, 4294901760
    %230 = vmatpush1.msra.mxu0 %v229
    %231 = vmatprep.subr.mxu0 0.0
    %v232 = vand.u32 %v181, 4294901760
    %233 = vmatpush1.msra.mxu0 %v232
    %234 = vmatprep.subr.mxu0 0.0
    %v235 = vand.u32 %v180, 4294901760
    %236 = vmatpush1.msra.mxu0 %v235
    %237 = vmatprep.subr.mxu0 0.0
    %v238 = vand.u32 %v179, 4294901760
    %239 = vmatpush1.msra.mxu0 %v238
    %240 = vmatprep.subr.mxu0 0.0
    %v241 = vand.u32 %v203, 4294901760
    %242 = vmatpush1.msra.mxu0 %v241
    %243 = vmatprep.subr.mxu0 0.0
    %v244 = vand.u32 %v202, 4294901760
    %245 = vmatpush1.msra.mxu0 %v244
    %246 = vmatprep.subr.mxu0 0.0
    %v247 = vand.u32 %v201, 4294901760
    %248 = vmatpush1.msra.mxu0 %v247
    %249 = vmatprep.subr.mxu0 0.0
    %v250 = vand.u32 %v200, 4294901760
    %251 = vmatpush1.msra.mxu0 %v250
    %252 = vmatprep.subr.mxu0 0.0
    %v253 = vand.u32 %v135, 4294901760
    %254 = vmatpush1.msra.mxu0 %v253
    %255 = vmatprep.subr.mxu0 0.0
    %v256 = vand.u32 %v134, 4294901760
    %257 = vmatpush1.msra.mxu0 %v256
    %258 = vmatprep.subr.mxu0 0.0
    %v259 = vand.u32 %v133, 4294901760
    %260 = vmatpush1.msra.mxu0 %v259
    %261 = vmatprep.subr.mxu0 0.0
    %v262 = vand.u32 %v132, 4294901760
    %263 = vmatpush1.msra.mxu0 %v262
    %264 = vmatprep.subr.mxu0 0.0
    %265 = vmatpush2.msra.mxu0 0.0
    %266 = vmatprep.subr.mxu0 0.0
    %267 = vmatpush2.msra.mxu0 0.0
    %268 = vmatprep.subr.mxu0 0.0
    %269 = vmatpush2.msra.mxu0 0.0
    %270 = vmatprep.subr.mxu0 0.0
    %271 = vmatpush2.msra.mxu0 0.0
    %272 = vmatprep.subr.mxu0 0.0
    %273 = vmatpush2.msra.mxu0 0.0
    %274 = vmatprep.subr.mxu0 0.0
    %275 = vmatpush2.msra.mxu0 0.0
    %276 = vmatprep.subr.mxu0 0.0
    %277 = vmatpush2.msra.mxu0 0.0
    %278 = vmatprep.subr.mxu0 0.0
    %279 = vmatpush2.msra.mxu0 0.0
    %280 = vmatprep.subr.mxu0 0.0
    %281 = vmatpush2.msra.mxu0 0.0
    %282 = vmatprep.subr.mxu0 0.0
    %283 = vmatpush2.msra.mxu0 0.0
    %284 = vmatprep.subr.mxu0 0.0
    %285 = vmatpush2.msra.mxu0 0.0
    %286 = vmatprep.subr.mxu0 0.0
    %287 = vmatpush2.msra.mxu0 0.0
    %288 = vmatprep.subr.mxu0 0.0
    %289 = vmatpush2.msra.mxu0 0.0
    %290 = vmatprep.subr.mxu0 0.0
    %291 = vmatpush2.msra.mxu0 0.0
    %292 = vmatprep.subr.mxu0 0.0
    %293 = vmatpush2.msra.mxu0 0.0
    %294 = vmatprep.subr.mxu0 0.0
    %295 = vmatpush2.msra.mxu0 0.0
    %296 = vmatprep.mubr.f32.mxu0 0.0
    %v297 = vand.u32 %v209, 4294901760
    %v298 = vsub.f32 %v209, %v297
    %v299 = vand.u32 %v298, 4294901760
    %v300 = vsub.f32 %v298, %v299
    %v301 = vand.u32 %v300, 4294901760
    %302 = vmatmul.mubr.f32.gmra.mxu0 %v301
    %v303 = vpop.f32.mrf.mxu0
    %v304 = vadd.f32 0.0, %v303
    %v305 = vpop.f32.mrf.mxu0
    %306 = vmatprep.mubr.f32.mxu0 0.0
    %v307 = vand.u32 %v212, 4294901760
    %v308 = vsub.f32 %v212, %v307
    %v309 = vand.u32 %v308, 4294901760
    %v310 = vsub.f32 %v308, %v309
    %v311 = vand.u32 %v310, 4294901760
    %312 = vmatmul.mubr.f32.gmra.mxu0 %v311
    %v313 = vpop.f32.mrf.mxu0
    %v314 = vadd.f32 0.0, %v313
    %v315 = vpop.f32.mrf.mxu0
    %316 = vmatprep.mubr.f32.mxu0 0.0
    %v317 = vand.u32 %v215, 4294901760
    %v318 = vsub.f32 %v215, %v317
    %v319 = vand.u32 %v318, 4294901760
    %v320 = vsub.f32 %v318, %v319
    %v321 = vand.u32 %v320, 4294901760
    %322 = vmatmul.mubr.f32.gmra.mxu0 %v321
    %v323 = vpop.f32.mrf.mxu0
    %v324 = vadd.f32 0.0, %v323
    %v325 = vpop.f32.mrf.mxu0
    %326 = vmatprep.mubr.f32.mxu0 0.0
    %v327 = vand.u32 %v218, 4294901760
    %v328 = vsub.f32 %v218, %v327
    %v329 = vand.u32 %v328, 4294901760
    %v330 = vsub.f32 %v328, %v329
    %v331 = vand.u32 %v330, 4294901760
    %332 = vmatmul.mubr.f32.gmra.mxu0 %v331
    %v333 = vpop.f32.mrf.mxu0
    %v334 = vadd.f32 0.0, %v333
    %v335 = vpop.f32.mrf.mxu0
    %336 = vdwg.mxu0
    %337 = vmatprep.subr.mxu0 0.0
    %338 = vmatpush1.msra.mxu0 0.0
    %339 = vmatprep.subr.mxu0 0.0
    %340 = vmatpush1.msra.mxu0 0.0
    %341 = vmatprep.subr.mxu0 0.0
    %342 = vmatpush1.msra.mxu0 0.0
    %343 = vmatprep.subr.mxu0 0.0
    %344 = vmatpush1.msra.mxu0 0.0
    %345 = vmatprep.subr.mxu0 0.0
    %v346 = vand.u32 %v182, 4294901760
    %v347 = vsub.f32 %v182, %v346
    %v348 = vand.u32 %v347, 4294901760
    %v349 = vsub.f32 %v347, %v348
    %v350 = vand.u32 %v349, 4294901760
    %351 = vmatpush1.msra.mxu0 %v350
    %352 = vmatprep.subr.mxu0 0.0
    %v353 = vand.u32 %v181, 4294901760
    %v354 = vsub.f32 %v181, %v353
    %v355 = vand.u32 %v354, 4294901760
    %v356 = vsub.f32 %v354, %v355
    %v357 = vand.u32 %v356, 4294901760
    %358 = vmatpush1.msra.mxu0 %v357
    %359 = vmatprep.subr.mxu0 0.0
    %v360 = vand.u32 %v180, 4294901760
    %v361 = vsub.f32 %v180, %v360
    %v362 = vand.u32 %v361, 4294901760
    %v363 = vsub.f32 %v361, %v362
    %v364 = vand.u32 %v363, 4294901760
    %365 = vmatpush1.msra.mxu0 %v364
    %366 = vmatprep.subr.mxu0 0.0
    %v367 = vand.u32 %v179, 4294901760
    %v368 = vsub.f32 %v179, %v367
    %v369 = vand.u32 %v368, 4294901760
    %v370 = vsub.f32 %v368, %v369
    %v371 = vand.u32 %v370, 4294901760
    %372 = vmatpush1.msra.mxu0 %v371
    %373 = vmatprep.subr.mxu0 0.0
    %v374 = vand.u32 %v203, 4294901760
    %v375 = vsub.f32 %v203, %v374
    %v376 = vand.u32 %v375, 4294901760
    %v377 = vsub.f32 %v375, %v376
    %v378 = vand.u32 %v377, 4294901760
    %379 = vmatpush1.msra.mxu0 %v378
    %380 = vmatprep.subr.mxu0 0.0
    %v381 = vand.u32 %v202, 4294901760
    %v382 = vsub.f32 %v202, %v381
    %v383 = vand.u32 %v382, 4294901760
    %v384 = vsub.f32 %v382, %v383
    %v385 = vand.u32 %v384, 4294901760
    %386 = vmatpush1.msra.mxu0 %v385
    %387 = vmatprep.subr.mxu0 0.0
    %v388 = vand.u32 %v201, 4294901760
    %v389 = vsub.f32 %v201, %v388
    %v390 = vand.u32 %v389, 4294901760
    %v391 = vsub.f32 %v389, %v390
    %v392 = vand.u32 %v391, 4294901760
    %393 = vmatpush1.msra.mxu0 %v392
    %394 = vmatprep.subr.mxu0 0.0
    %v395 = vand.u32 %v200, 4294901760
    %v396 = vsub.f32 %v200, %v395
    %v397 = vand.u32 %v396, 4294901760
    %v398 = vsub.f32 %v396, %v397
    %v399 = vand.u32 %v398, 4294901760
    %400 = vmatpush1.msra.mxu0 %v399
    %401 = vmatprep.subr.mxu0 0.0
    %v402 = vand.u32 %v135, 4294901760
    %v403 = vsub.f32 %v135, %v402
    %v404 = vand.u32 %v403, 4294901760
    %v405 = vsub.f32 %v403, %v404
    %v406 = vand.u32 %v405, 4294901760
    %407 = vmatpush1.msra.mxu0 %v406
    %408 = vmatprep.subr.mxu0 0.0
    %v409 = vand.u32 %v134, 4294901760
    %v410 = vsub.f32 %v134, %v409
    %v411 = vand.u32 %v410, 4294901760
    %v412 = vsub.f32 %v410, %v411
    %v413 = vand.u32 %v412, 4294901760
    %414 = vmatpush1.msra.mxu0 %v413
    %415 = vmatprep.subr.mxu0 0.0
    %v416 = vand.u32 %v133, 4294901760
    %v417 = vsub.f32 %v133, %v416
    %v418 = vand.u32 %v417, 4294901760
    %v419 = vsub.f32 %v417, %v418
    %v420 = vand.u32 %v419, 4294901760
    %421 = vmatpush1.msra.mxu0 %v420
    %422 = vmatprep.subr.mxu0 0.0
    %v423 = vand.u32 %v132, 4294901760
    %v424 = vsub.f32 %v132, %v423
    %v425 = vand.u32 %v424, 4294901760
    %v426 = vsub.f32 %v424, %v425
    %v427 = vand.u32 %v426, 4294901760
    %428 = vmatpush1.msra.mxu0 %v427
    %429 = vmatprep.subr.mxu0 0.0
    %430 = vmatpush2.msra.mxu0 0.0
    %431 = vmatprep.subr.mxu0 0.0
    %432 = vmatpush2.msra.mxu0 0.0
    %433 = vmatprep.subr.mxu0 0.0
    %434 = vmatpush2.msra.mxu0 0.0
    %435 = vmatprep.subr.mxu0 0.0
    %436 = vmatpush2.msra.mxu0 0.0
    %437 = vmatprep.subr.mxu0 0.0
    %438 = vmatpush2.msra.mxu0 0.0
    %439 = vmatprep.subr.mxu0 0.0
    %440 = vmatpush2.msra.mxu0 0.0
    %441 = vmatprep.subr.mxu0 0.0
    %442 = vmatpush2.msra.mxu0 0.0
    %443 = vmatprep.subr.mxu0 0.0
    %444 = vmatpush2.msra.mxu0 0.0
    %445 = vmatprep.subr.mxu0 0.0
    %446 = vmatpush2.msra.mxu0 0.0
    %447 = vmatprep.subr.mxu0 0.0
    %448 = vmatpush2.msra.mxu0 0.0
    %449 = vmatprep.subr.mxu0 0.0
    %450 = vmatpush2.msra.mxu0 0.0
    %451 = vmatprep.subr.mxu0 0.0
    %452 = vmatpush2.msra.mxu0 0.0
    %453 = vmatprep.subr.mxu0 0.0
    %454 = vmatpush2.msra.mxu0 0.0
    %455 = vmatprep.subr.mxu0 0.0
    %456 = vmatpush2.msra.mxu0 0.0
    %457 = vmatprep.subr.mxu0 0.0
    %458 = vmatpush2.msra.mxu0 0.0
    %459 = vmatprep.subr.mxu0 0.0
    %460 = vmatpush2.msra.mxu0 0.0
    %461 = vmatprep.mubr.f32.mxu0 0.0
    %v462 = vand.u32 %v209, 4294901760
    %463 = vmatmul.mubr.f32.gmra.mxu0 %v462
    %v464 = vpop.f32.mrf.mxu0
    %v465 = vadd.f32 %v304, %v464
    %v466 = vpop.f32.mrf.mxu0
    %467 = vmatprep.mubr.f32.mxu0 0.0
    %v468 = vand.u32 %v212, 4294901760
    %469 = vmatmul.mubr.f32.gmra.mxu0 %v468
    %v470 = vpop.f32.mrf.mxu0
    %v471 = vadd.f32 %v314, %v470
    %v472 = vpop.f32.mrf.mxu0
    %473 = vmatprep.mubr.f32.mxu0 0.0
    %v474 = vand.u32 %v215, 4294901760
    %475 = vmatmul.mubr.f32.gmra.mxu0 %v474
    %v476 = vpop.f32.mrf.mxu0
    %v477 = vadd.f32 %v324, %v476
    %v478 = vpop.f32.mrf.mxu0
    %479 = vmatprep.mubr.f32.mxu0 0.0
    %v480 = vand.u32 %v218, 4294901760
    %481 = vmatmul.mubr.f32.gmra.mxu0 %v480
    %v482 = vpop.f32.mrf.mxu0
    %v483 = vadd.f32 %v334, %v482
    %v484 = vpop.f32.mrf.mxu0
    %485 = vdwg.mxu0
    %486 = vmatprep.subr.mxu0 0.0
    %487 = vmatpush1.msra.mxu0 0.0
    %488 = vmatprep.subr.mxu0 0.0
    %489 = vmatpush1.msra.mxu0 0.0
    %490 = vmatprep.subr.mxu0 0.0
    %491 = vmatpush1.msra.mxu0 0.0
    %492 = vmatprep.subr.mxu0 0.0
    %493 = vmatpush1.msra.mxu0 0.0
    %494 = vmatprep.subr.mxu0 0.0
    %v495 = vand.u32 %v182, 4294901760
    %v496 = vsub.f32 %v182, %v495
    %497 = vmatpush1.msra.mxu0 %v496
    %498 = vmatprep.subr.mxu0 0.0
    %v499 = vand.u32 %v181, 4294901760
    %v500 = vsub.f32 %v181, %v499
    %501 = vmatpush1.msra.mxu0 %v500
    %502 = vmatprep.subr.mxu0 0.0
    %v503 = vand.u32 %v180, 4294901760
    %v504 = vsub.f32 %v180, %v503
    %505 = vmatpush1.msra.mxu0 %v504
    %506 = vmatprep.subr.mxu0 0.0
    %v507 = vand.u32 %v179, 4294901760
    %v508 = vsub.f32 %v179, %v507
    %509 = vmatpush1.msra.mxu0 %v508
    %510 = vmatprep.subr.mxu0 0.0
    %v511 = vand.u32 %v203, 4294901760
    %v512 = vsub.f32 %v203, %v511
    %513 = vmatpush1.msra.mxu0 %v512
    %514 = vmatprep.subr.mxu0 0.0
    %v515 = vand.u32 %v202, 4294901760
    %v516 = vsub.f32 %v202, %v515
    %517 = vmatpush1.msra.mxu0 %v516
    %518 = vmatprep.subr.mxu0 0.0
    %v519 = vand.u32 %v201, 4294901760
    %v520 = vsub.f32 %v201, %v519
    %521 = vmatpush1.msra.mxu0 %v520
    %522 = vmatprep.subr.mxu0 0.0
    %v523 = vand.u32 %v200, 4294901760
    %v524 = vsub.f32 %v200, %v523
    %525 = vmatpush1.msra.mxu0 %v524
    %526 = vmatprep.subr.mxu0 0.0
    %v527 = vand.u32 %v135, 4294901760
    %v528 = vsub.f32 %v135, %v527
    %529 = vmatpush1.msra.mxu0 %v528
    %530 = vmatprep.subr.mxu0 0.0
    %v531 = vand.u32 %v134, 4294901760
    %v532 = vsub.f32 %v134, %v531
    %533 = vmatpush1.msra.mxu0 %v532
    %534 = vmatprep.subr.mxu0 0.0
    %v535 = vand.u32 %v133, 4294901760
    %v536 = vsub.f32 %v133, %v535
    %537 = vmatpush1.msra.mxu0 %v536
    %538 = vmatprep.subr.mxu0 0.0
    %v539 = vand.u32 %v132, 4294901760
    %v540 = vsub.f32 %v132, %v539
    %541 = vmatpush1.msra.mxu0 %v540
    %542 = vmatprep.subr.mxu0 0.0
    %543 = vmatpush2.msra.mxu0 0.0
    %544 = vmatprep.subr.mxu0 0.0
    %545 = vmatpush2.msra.mxu0 0.0
    %546 = vmatprep.subr.mxu0 0.0
    %547 = vmatpush2.msra.mxu0 0.0
    %548 = vmatprep.subr.mxu0 0.0
    %549 = vmatpush2.msra.mxu0 0.0
    %550 = vmatprep.subr.mxu0 0.0
    %551 = vmatpush2.msra.mxu0 0.0
    %552 = vmatprep.subr.mxu0 0.0
    %553 = vmatpush2.msra.mxu0 0.0
    %554 = vmatprep.subr.mxu0 0.0
    %555 = vmatpush2.msra.mxu0 0.0
    %556 = vmatprep.subr.mxu0 0.0
    %557 = vmatpush2.msra.mxu0 0.0
    %558 = vmatprep.subr.mxu0 0.0
    %559 = vmatpush2.msra.mxu0 0.0
    %560 = vmatprep.subr.mxu0 0.0
    %561 = vmatpush2.msra.mxu0 0.0
    %562 = vmatprep.subr.mxu0 0.0
    %563 = vmatpush2.msra.mxu0 0.0
    %564 = vmatprep.subr.mxu0 0.0
    %565 = vmatpush2.msra.mxu0 0.0
    %566 = vmatprep.subr.mxu0 0.0
    %567 = vmatpush2.msra.mxu0 0.0
    %568 = vmatprep.subr.mxu0 0.0
    %569 = vmatpush2.msra.mxu0 0.0
    %570 = vmatprep.subr.mxu0 0.0
    %571 = vmatpush2.msra.mxu0 0.0
    %572 = vmatprep.subr.mxu0 0.0
    %573 = vmatpush2.msra.mxu0 0.0
    %574 = vmatprep.mubr.f32.mxu0 0.0
    %v575 = vand.u32 %v209, 4294901760
    %v576 = vsub.f32 %v209, %v575
    %577 = vmatmul.mubr.f32.gmra.mxu0 %v576
    %v578 = vpop.f32.mrf.mxu0
    %v579 = vadd.f32 %v465, %v578
    %v580 = vpop.f32.mrf.mxu0
    %581 = vmatprep.mubr.f32.mxu0 0.0
    %v582 = vand.u32 %v212, 4294901760
    %v583 = vsub.f32 %v212, %v582
    %584 = vmatmul.mubr.f32.gmra.mxu0 %v583
    %v585 = vpop.f32.mrf.mxu0
    %v586 = vadd.f32 %v471, %v585
    %v587 = vpop.f32.mrf.mxu0
    %588 = vmatprep.mubr.f32.mxu0 0.0
    %v589 = vand.u32 %v215, 4294901760
    %v590 = vsub.f32 %v215, %v589
    %591 = vmatmul.mubr.f32.gmra.mxu0 %v590
    %v592 = vpop.f32.mrf.mxu0
    %v593 = vadd.f32 %v477, %v592
    %v594 = vpop.f32.mrf.mxu0
    %595 = vmatprep.mubr.f32.mxu0 0.0
    %v596 = vand.u32 %v218, 4294901760
    %v597 = vsub.f32 %v218, %v596
    %598 = vmatmul.mubr.f32.gmra.mxu0 %v597
    %v599 = vpop.f32.mrf.mxu0
    %v600 = vadd.f32 %v483, %v599
    %v601 = vpop.f32.mrf.mxu0
    %602 = vdwg.mxu0
    %603 = vmatprep.subr.mxu0 0.0
    %604 = vmatpush1.msra.mxu0 0.0
    %605 = vmatprep.subr.mxu0 0.0
    %606 = vmatpush1.msra.mxu0 0.0
    %607 = vmatprep.subr.mxu0 0.0
    %608 = vmatpush1.msra.mxu0 0.0
    %609 = vmatprep.subr.mxu0 0.0
    %610 = vmatpush1.msra.mxu0 0.0
    %611 = vmatprep.subr.mxu0 0.0
    %v612 = vand.u32 %v182, 4294901760
    %613 = vmatpush1.msra.mxu0 %v612
    %614 = vmatprep.subr.mxu0 0.0
    %v615 = vand.u32 %v181, 4294901760
    %616 = vmatpush1.msra.mxu0 %v615
    %617 = vmatprep.subr.mxu0 0.0
    %v618 = vand.u32 %v180, 4294901760
    %619 = vmatpush1.msra.mxu0 %v618
    %620 = vmatprep.subr.mxu0 0.0
    %v621 = vand.u32 %v179, 4294901760
    %622 = vmatpush1.msra.mxu0 %v621
    %623 = vmatprep.subr.mxu0 0.0
    %v624 = vand.u32 %v203, 4294901760
    %625 = vmatpush1.msra.mxu0 %v624
    %626 = vmatprep.subr.mxu0 0.0
    %v627 = vand.u32 %v202, 4294901760
    %628 = vmatpush1.msra.mxu0 %v627
    %629 = vmatprep.subr.mxu0 0.0
    %v630 = vand.u32 %v201, 4294901760
    %631 = vmatpush1.msra.mxu0 %v630
    %632 = vmatprep.subr.mxu0 0.0
    %v633 = vand.u32 %v200, 4294901760
    %634 = vmatpush1.msra.mxu0 %v633
    %635 = vmatprep.subr.mxu0 0.0
    %v636 = vand.u32 %v135, 4294901760
    %637 = vmatpush1.msra.mxu0 %v636
    %638 = vmatprep.subr.mxu0 0.0
    %v639 = vand.u32 %v134, 4294901760
    %640 = vmatpush1.msra.mxu0 %v639
    %641 = vmatprep.subr.mxu0 0.0
    %v642 = vand.u32 %v133, 4294901760
    %643 = vmatpush1.msra.mxu0 %v642
    %644 = vmatprep.subr.mxu0 0.0
    %v645 = vand.u32 %v132, 4294901760
    %646 = vmatpush1.msra.mxu0 %v645
    %647 = vmatprep.subr.mxu0 0.0
    %648 = vmatpush2.msra.mxu0 0.0
    %649 = vmatprep.subr.mxu0 0.0
    %650 = vmatpush2.msra.mxu0 0.0
    %651 = vmatprep.subr.mxu0 0.0
    %652 = vmatpush2.msra.mxu0 0.0
    %653 = vmatprep.subr.mxu0 0.0
    %654 = vmatpush2.msra.mxu0 0.0
    %655 = vmatprep.subr.mxu0 0.0
    %656 = vmatpush2.msra.mxu0 0.0
    %657 = vmatprep.subr.mxu0 0.0
    %658 = vmatpush2.msra.mxu0 0.0
    %659 = vmatprep.subr.mxu0 0.0
    %660 = vmatpush2.msra.mxu0 0.0
    %661 = vmatprep.subr.mxu0 0.0
    %662 = vmatpush2.msra.mxu0 0.0
    %663 = vmatprep.subr.mxu0 0.0
    %664 = vmatpush2.msra.mxu0 0.0
    %665 = vmatprep.subr.mxu0 0.0
    %666 = vmatpush2.msra.mxu0 0.0
    %667 = vmatprep.subr.mxu0 0.0
    %668 = vmatpush2.msra.mxu0 0.0
    %669 = vmatprep.subr.mxu0 0.0
    %670 = vmatpush2.msra.mxu0 0.0
    %671 = vmatprep.subr.mxu0 0.0
    %672 = vmatpush2.msra.mxu0 0.0
    %673 = vmatprep.subr.mxu0 0.0
    %674 = vmatpush2.msra.mxu0 0.0
    %675 = vmatprep.subr.mxu0 0.0
    %676 = vmatpush2.msra.mxu0 0.0
    %677 = vmatprep.subr.mxu0 0.0
    %678 = vmatpush2.msra.mxu0 0.0
    %679 = vmatprep.mubr.f32.mxu0 0.0
    %v680 = vand.u32 %v209, 4294901760
    %v681 = vsub.f32 %v209, %v680
    %v682 = vand.u32 %v681, 4294901760
    %683 = vmatmul.mubr.f32.gmra.mxu0 %v682
    %v684 = vpop.f32.mrf.mxu0
    %v685 = vadd.f32 %v579, %v684
    %v686 = vpop.f32.mrf.mxu0
    %687 = vmatprep.mubr.f32.mxu0 0.0
    %v688 = vand.u32 %v212, 4294901760
    %v689 = vsub.f32 %v212, %v688
    %v690 = vand.u32 %v689, 4294901760
    %691 = vmatmul.mubr.f32.gmra.mxu0 %v690
    %v692 = vpop.f32.mrf.mxu0
    %v693 = vadd.f32 %v586, %v692
    %v694 = vpop.f32.mrf.mxu0
    %695 = vmatprep.mubr.f32.mxu0 0.0
    %v696 = vand.u32 %v215, 4294901760
    %v697 = vsub.f32 %v215, %v696
    %v698 = vand.u32 %v697, 4294901760
    %699 = vmatmul.mubr.f32.gmra.mxu0 %v698
    %v700 = vpop.f32.mrf.mxu0
    %v701 = vadd.f32 %v593, %v700
    %v702 = vpop.f32.mrf.mxu0
    %703 = vmatprep.mubr.f32.mxu0 0.0
    %v704 = vand.u32 %v218, 4294901760
    %v705 = vsub.f32 %v218, %v704
    %v706 = vand.u32 %v705, 4294901760
    %707 = vmatmul.mubr.f32.gmra.mxu0 %v706
    %v708 = vpop.f32.mrf.mxu0
    %v709 = vadd.f32 %v600, %v708
    %v710 = vpop.f32.mrf.mxu0
    %711 = vdwg.mxu0
    %712 = vmatprep.subr.mxu0 0.0
    %713 = vmatpush1.msra.mxu0 0.0
    %714 = vmatprep.subr.mxu0 0.0
    %715 = vmatpush1.msra.mxu0 0.0
    %716 = vmatprep.subr.mxu0 0.0
    %717 = vmatpush1.msra.mxu0 0.0
    %718 = vmatprep.subr.mxu0 0.0
    %719 = vmatpush1.msra.mxu0 0.0
    %720 = vmatprep.subr.mxu0 0.0
    %v721 = vand.u32 %v182, 4294901760
    %v722 = vsub.f32 %v182, %v721
    %v723 = vand.u32 %v722, 4294901760
    %724 = vmatpush1.msra.mxu0 %v723
    %725 = vmatprep.subr.mxu0 0.0
    %v726 = vand.u32 %v181, 4294901760
    %v727 = vsub.f32 %v181, %v726
    %v728 = vand.u32 %v727, 4294901760
    %729 = vmatpush1.msra.mxu0 %v728
    %730 = vmatprep.subr.mxu0 0.0
    %v731 = vand.u32 %v180, 4294901760
    %v732 = vsub.f32 %v180, %v731
    %v733 = vand.u32 %v732, 4294901760
    %734 = vmatpush1.msra.mxu0 %v733
    %735 = vmatprep.subr.mxu0 0.0
    %v736 = vand.u32 %v179, 4294901760
    %v737 = vsub.f32 %v179, %v736
    %v738 = vand.u32 %v737, 4294901760
    %739 = vmatpush1.msra.mxu0 %v738
    %740 = vmatprep.subr.mxu0 0.0
    %v741 = vand.u32 %v203, 4294901760
    %v742 = vsub.f32 %v203, %v741
    %v743 = vand.u32 %v742, 4294901760
    %744 = vmatpush1.msra.mxu0 %v743
    %745 = vmatprep.subr.mxu0 0.0
    %v746 = vand.u32 %v202, 4294901760
    %v747 = vsub.f32 %v202, %v746
    %v748 = vand.u32 %v747, 4294901760
    %749 = vmatpush1.msra.mxu0 %v748
    %750 = vmatprep.subr.mxu0 0.0
    %v751 = vand.u32 %v201, 4294901760
    %v752 = vsub.f32 %v201, %v751
    %v753 = vand.u32 %v752, 4294901760
    %754 = vmatpush1.msra.mxu0 %v753
    %755 = vmatprep.subr.mxu0 0.0
    %v756 = vand.u32 %v200, 4294901760
    %v757 = vsub.f32 %v200, %v756
    %v758 = vand.u32 %v757, 4294901760
    %759 = vmatpush1.msra.mxu0 %v758
    %760 = vmatprep.subr.mxu0 0.0
    %v761 = vand.u32 %v135, 4294901760
    %v762 = vsub.f32 %v135, %v761
    %v763 = vand.u32 %v762, 4294901760
    %764 = vmatpush1.msra.mxu0 %v763
    %765 = vmatprep.subr.mxu0 0.0
    %v766 = vand.u32 %v134, 4294901760
    %v767 = vsub.f32 %v134, %v766
    %v768 = vand.u32 %v767, 4294901760
    %769 = vmatpush1.msra.mxu0 %v768
    %770 = vmatprep.subr.mxu0 0.0
    %v771 = vand.u32 %v133, 4294901760
    %v772 = vsub.f32 %v133, %v771
    %v773 = vand.u32 %v772, 4294901760
    %774 = vmatpush1.msra.mxu0 %v773
    %775 = vmatprep.subr.mxu0 0.0
    %v776 = vand.u32 %v132, 4294901760
    %v777 = vsub.f32 %v132, %v776
    %v778 = vand.u32 %v777, 4294901760
    %779 = vmatpush1.msra.mxu0 %v778
    %780 = vmatprep.subr.mxu0 0.0
    %781 = vmatpush2.msra.mxu0 0.0
    %782 = vmatprep.subr.mxu0 0.0
    %783 = vmatpush2.msra.mxu0 0.0
    %784 = vmatprep.subr.mxu0 0.0
    %785 = vmatpush2.msra.mxu0 0.0
    %786 = vmatprep.subr.mxu0 0.0
    %787 = vmatpush2.msra.mxu0 0.0
    %788 = vmatprep.subr.mxu0 0.0
    %789 = vmatpush2.msra.mxu0 0.0
    %790 = vmatprep.subr.mxu0 0.0
    %791 = vmatpush2.msra.mxu0 0.0
    %792 = vmatprep.subr.mxu0 0.0
    %793 = vmatpush2.msra.mxu0 0.0
    %794 = vmatprep.subr.mxu0 0.0
    %795 = vmatpush2.msra.mxu0 0.0
    %796 = vmatprep.subr.mxu0 0.0
    %797 = vmatpush2.msra.mxu0 0.0
    %798 = vmatprep.subr.mxu0 0.0
    %799 = vmatpush2.msra.mxu0 0.0
    %800 = vmatprep.subr.mxu0 0.0
    %801 = vmatpush2.msra.mxu0 0.0
    %802 = vmatprep.subr.mxu0 0.0
    %803 = vmatpush2.msra.mxu0 0.0
    %804 = vmatprep.subr.mxu0 0.0
    %805 = vmatpush2.msra.mxu0 0.0
    %806 = vmatprep.subr.mxu0 0.0
    %807 = vmatpush2.msra.mxu0 0.0
    %808 = vmatprep.subr.mxu0 0.0
    %809 = vmatpush2.msra.mxu0 0.0
    %810 = vmatprep.subr.mxu0 0.0
    %811 = vmatpush2.msra.mxu0 0.0
    %812 = vmatprep.mubr.f32.mxu0 0.0
    %v813 = vand.u32 %v209, 4294901760
    %814 = vmatmul.mubr.f32.gmra.mxu0 %v813
    %v815 = vpop.f32.mrf.mxu0
    %v816 = vadd.f32 %v685, %v815
    %v817 = vpop.f32.mrf.mxu0
    %818 = vmatprep.mubr.f32.mxu0 0.0
    %v819 = vand.u32 %v212, 4294901760
    %820 = vmatmul.mubr.f32.gmra.mxu0 %v819
    %v821 = vpop.f32.mrf.mxu0
    %v822 = vadd.f32 %v693, %v821
    %v823 = vpop.f32.mrf.mxu0
    %824 = vmatprep.mubr.f32.mxu0 0.0
    %v825 = vand.u32 %v215, 4294901760
    %826 = vmatmul.mubr.f32.gmra.mxu0 %v825
    %v827 = vpop.f32.mrf.mxu0
    %v828 = vadd.f32 %v701, %v827
    %v829 = vpop.f32.mrf.mxu0
    %830 = vmatprep.mubr.f32.mxu0 0.0
    %v831 = vand.u32 %v218, 4294901760
    %832 = vmatmul.mubr.f32.gmra.mxu0 %v831
    %v833 = vpop.f32.mrf.mxu0
    %v834 = vadd.f32 %v709, %v833
    %v835 = vpop.f32.mrf.mxu0
    %836 = vdwg.mxu0
    %837 = vmatprep.subr.mxu0 0.0
    %838 = vmatpush1.msra.mxu0 0.0
    %839 = vmatprep.subr.mxu0 0.0
    %840 = vmatpush1.msra.mxu0 0.0
    %841 = vmatprep.subr.mxu0 0.0
    %842 = vmatpush1.msra.mxu0 0.0
    %843 = vmatprep.subr.mxu0 0.0
    %844 = vmatpush1.msra.mxu0 0.0
    %845 = vmatprep.subr.mxu0 0.0
    %v846 = vand.u32 %v182, 4294901760
    %847 = vmatpush1.msra.mxu0 %v846
    %848 = vmatprep.subr.mxu0 0.0
    %v849 = vand.u32 %v181, 4294901760
    %850 = vmatpush1.msra.mxu0 %v849
    %851 = vmatprep.subr.mxu0 0.0
    %v852 = vand.u32 %v180, 4294901760
    %853 = vmatpush1.msra.mxu0 %v852
    %854 = vmatprep.subr.mxu0 0.0
    %v855 = vand.u32 %v179, 4294901760
    %856 = vmatpush1.msra.mxu0 %v855
    %857 = vmatprep.subr.mxu0 0.0
    %v858 = vand.u32 %v203, 4294901760
    %859 = vmatpush1.msra.mxu0 %v858
    %860 = vmatprep.subr.mxu0 0.0
    %v861 = vand.u32 %v202, 4294901760
    %862 = vmatpush1.msra.mxu0 %v861
    %863 = vmatprep.subr.mxu0 0.0
    %v864 = vand.u32 %v201, 4294901760
    %865 = vmatpush1.msra.mxu0 %v864
    %866 = vmatprep.subr.mxu0 0.0
    %v867 = vand.u32 %v200, 4294901760
    %868 = vmatpush1.msra.mxu0 %v867
    %869 = vmatprep.subr.mxu0 0.0
    %v870 = vand.u32 %v135, 4294901760
    %871 = vmatpush1.msra.mxu0 %v870
    %872 = vmatprep.subr.mxu0 0.0
    %v873 = vand.u32 %v134, 4294901760
    %874 = vmatpush1.msra.mxu0 %v873
    %875 = vmatprep.subr.mxu0 0.0
    %v876 = vand.u32 %v133, 4294901760
    %877 = vmatpush1.msra.mxu0 %v876
    %878 = vmatprep.subr.mxu0 0.0
    %v879 = vand.u32 %v132, 4294901760
    %880 = vmatpush1.msra.mxu0 %v879
    %881 = vmatprep.subr.mxu0 0.0
    %882 = vmatpush2.msra.mxu0 0.0
    %883 = vmatprep.subr.mxu0 0.0
    %884 = vmatpush2.msra.mxu0 0.0
    %885 = vmatprep.subr.mxu0 0.0
    %886 = vmatpush2.msra.mxu0 0.0
    %887 = vmatprep.subr.mxu0 0.0
    %888 = vmatpush2.msra.mxu0 0.0
    %889 = vmatprep.subr.mxu0 0.0
    %890 = vmatpush2.msra.mxu0 0.0
    %891 = vmatprep.subr.mxu0 0.0
    %892 = vmatpush2.msra.mxu0 0.0
    %893 = vmatprep.subr.mxu0 0.0
    %894 = vmatpush2.msra.mxu0 0.0
    %895 = vmatprep.subr.mxu0 0.0
    %896 = vmatpush2.msra.mxu0 0.0
    %897 = vmatprep.subr.mxu0 0.0
    %898 = vmatpush2.msra.mxu0 0.0
    %899 = vmatprep.subr.mxu0 0.0
    %900 = vmatpush2.msra.mxu0 0.0
    %901 = vmatprep.subr.mxu0 0.0
    %902 = vmatpush2.msra.mxu0 0.0
    %903 = vmatprep.subr.mxu0 0.0
    %904 = vmatpush2.msra.mxu0 0.0
    %905 = vmatprep.subr.mxu0 0.0
    %906 = vmatpush2.msra.mxu0 0.0
    %907 = vmatprep.subr.mxu0 0.0
    %908 = vmatpush2.msra.mxu0 0.0
    %909 = vmatprep.subr.mxu0 0.0
    %910 = vmatpush2.msra.mxu0 0.0
    %911 = vmatprep.subr.mxu0 0.0
    %912 = vmatpush2.msra.mxu0 0.0
    %913 = vmatprep.mubr.f32.mxu0 0.0
    %v914 = vand.u32 %v209, 4294901760
    %915 = vmatmul.mubr.f32.gmra.mxu0 %v914
    %v916 = vpop.f32.mrf.mxu0
    %v917 = vadd.f32 %v816, %v916
    %v918 = vpop.f32.mrf.mxu0
    %919 = vmatprep.mubr.f32.mxu0 0.0
    %v920 = vand.u32 %v212, 4294901760
    %921 = vmatmul.mubr.f32.gmra.mxu0 %v920
    %v922 = vpop.f32.mrf.mxu0
    %v923 = vadd.f32 %v822, %v922
    %v924 = vpop.f32.mrf.mxu0
    %925 = vmatprep.mubr.f32.mxu0 0.0
    %v926 = vand.u32 %v215, 4294901760
    %927 = vmatmul.mubr.f32.gmra.mxu0 %v926
    %v928 = vpop.f32.mrf.mxu0
    %v929 = vadd.f32 %v828, %v928
    %v930 = vpop.f32.mrf.mxu0
    %931 = vmatprep.mubr.f32.mxu0 0.0
    %v932 = vand.u32 %v218, 4294901760
    %933 = vmatmul.mubr.f32.gmra.mxu0 %v932
    %v934 = vpop.f32.mrf.mxu0
    %v935 = vadd.f32 %v834, %v934
    %v936 = vpop.f32.mrf.mxu0
    %937 = vdwg.mxu0
    %938 = vadd.xlane.f32.xlu0 %v917
    %v939 = vpop.xlane.xlu0 %938
    %940 = vadd.xlane.f32.xlu0 %v923
    %v941 = vpop.xlane.xlu0 %940
    %942 = vadd.xlane.f32.xlu0 %v929
    %v943 = vpop.xlane.xlu0 %942
    %944 = vadd.xlane.f32.xlu0 %v935
    %v945 = vpop.xlane.xlu0 %944
    %v946 = vmul.f32 %v939, 0.0078125
    %v947 = vmul.f32 %v941, 0.0078125
    %v948 = vmul.f32 %v943, 0.0078125
    %v949 = vmul.f32 %v945, 0.0078125
    %v950 = vsub.f32 %v917, %v946
    %v951 = vsub.f32 %v923, %v947
    %v952 = vsub.f32 %v929, %v948
    %v953 = vsub.f32 %v935, %v949
    %v954 = vmul.f32 %v950, %v950
    %v955 = vmul.f32 %v951, %v951
    %v956 = vmul.f32 %v952, %v952
    %v957 = vmul.f32 %v953, %v953
    %958 = vadd.xlane.f32.xlu0 %v954
    %v959 = vpop.xlane.xlu0 %958
    %960 = vadd.xlane.f32.xlu0 %v955
    %v961 = vpop.xlane.xlu0 %960
    %962 = vadd.xlane.f32.xlu0 %v956
    %v963 = vpop.xlane.xlu0 %962
    %964 = vadd.xlane.f32.xlu0 %v957
    %v965 = vpop.xlane.xlu0 %964
    %v966 = vmul.f32 %v959, 0.0078125
    %v967 = vmul.f32 %v961, 0.0078125
    %v968 = vmul.f32 %v963, 0.0078125
    %v969 = vmul.f32 %v965, 0.0078125
    %v970 = vadd.f32 %v966, 1e-05
    %v971 = vadd.f32 %v967, 1e-05
    %v972 = vadd.f32 %v968, 1e-05
    %v973 = vadd.f32 %v969, 1e-05
    %v974 = vrsqrt.pop %v970
    %v975 = vrsqrt.pop %v971
    %v976 = vrsqrt.pop %v972
    %v977 = vrsqrt.pop %v973
    %v978 = vmul.f32 %v950, %v974
    %v979 = vmul.f32 %v951, %v975
    %v980 = vmul.f32 %v952, %v976
    %v981 = vmul.f32 %v953, %v977
    %983 = vset.pattern.permute.xlu0 0
    %984 = vperm.xlu0 %983, %v89
    %v985 = vpop.permute.xlu0 %984
    %988 = vset.pattern.permute.xlu0 0
    %989 = vperm.xlu0 %988, %v90
    %v990 = vpop.permute.xlu0 %989
    %993 = vset.pattern.permute.xlu0 0
    %994 = vperm.xlu0 %993, %v91
    %v995 = vpop.permute.xlu0 %994
    %998 = vset.pattern.permute.xlu0 0
    %999 = vperm.xlu0 %998, %v92
    %v1000 = vpop.permute.xlu0 %999
    %v1002 = vmul.f32 %v978, %v985
    %v1003 = vmul.f32 %v979, %v990
    %v1004 = vmul.f32 %v980, %v995
    %v1005 = vmul.f32 %v981, %v1000
    %1007 = vset.pattern.permute.xlu0 0
    %1008 = vperm.xlu0 %1007, %v93
    %v1009 = vpop.permute.xlu0 %1008
    %1012 = vset.pattern.permute.xlu0 0
    %1013 = vperm.xlu0 %1012, %v94
    %v1014 = vpop.permute.xlu0 %1013
    %1017 = vset.pattern.permute.xlu0 0
    %1018 = vperm.xlu0 %1017, %v95
    %v1019 = vpop.permute.xlu0 %1018
    %1022 = vset.pattern.permute.xlu0 0
    %1023 = vperm.xlu0 %1022, %v96
    %v1024 = vpop.permute.xlu0 %1023
    %v1026 = vadd.f32 %v1002, %v1009
    %v1027 = vadd.f32 %v1003, %v1014
    %v1028 = vadd.f32 %v1004, %v1019
    %v1029 = vadd.f32 %v1005, %v1024
    %v1030 = vmax.f32 %v1026, 0.0
    %v1031 = vmax.f32 %v1027, 0.0
    %v1032 = vmax.f32 %v1028, 0.0
    %v1033 = vmax.f32 %v1029, 0.0
    %v1034 = vld [vmem:[%s4] sm:$0xff]
    %v1035 = vld [vmem:[%s4 + $0x8] sm:$0xff]
    %v1036 = vld [vmem:[%s4 + $0x10] sm:$0xff]
    %v1037 = vld [vmem:[%s4 + $0x18] sm:$0xff]
    %v1038 = vld [vmem:[%s5] sm:$0xff]
    %v1039 = vld [vmem:[%s5 + $0x8] sm:$0xff]
    %v1040 = vld [vmem:[%s5 + $0x10] sm:$0xff]
    %v1041 = vld [vmem:[%s5 + $0x18] sm:$0xff]
    %v1042 = vld [vmem:[%s6] sm:$0xff]
    %v1043 = vld [vmem:[%s6 + $0x8] sm:$0xff]
    %v1044 = vld [vmem:[%s6 + $0x10] sm:$0xff]
    %v1045 = vld [vmem:[%s6 + $0x18] sm:$0xff]
    %1050 = vrot.lane.b32.xlu0 %v1030, 1
    %v1051 = vpop.permute.xlu0 %1050
    %1052 = vrot.lane.b32.xlu0 %v1031, 1
    %v1053 = vpop.permute.xlu0 %1052
    %1054 = vrot.lane.b32.xlu0 %v1032, 1
    %v1055 = vpop.permute.xlu0 %1054
    %1056 = vrot.lane.b32.xlu0 %v1033, 1
    %v1057 = vpop.permute.xlu0 %1056
    %v1062 = vsel %vm113, 0.0, %v1051
    %v1063 = vsel %vm113, 0.0, %v1053
    %v1064 = vsel %vm113, 0.0, %v1055
    %v1065 = vsel %vm113, 0.0, %v1057
    %v1066 = vsel %vm113, %v1051, 0.0
    %v1067 = vsel %vm113, %v1053, 0.0
    %v1068 = vsel %vm113, %v1055, 0.0
    %v1069 = vsel %vm113, %v1057, 0.0
    %v1070 = vsel %vm131, %v1062, 0.0
    %v1071 = vsel %vm131, %v1063, 0.0
    %v1072 = vsel %vm131, %v1064, 0.0
    %v1073 = vsel %vm131, %v1065, 0.0
    %1082 = vrot.lane.b32.xlu0 %v1062, 126
    %v1083 = vpop.permute.xlu0 %1082
    %1084 = vrot.lane.b32.xlu0 %v1066, 126
    %v1085 = vpop.permute.xlu0 %1084
    %1086 = vrot.lane.b32.xlu0 %v1063, 126
    %v1087 = vpop.permute.xlu0 %1086
    %1088 = vrot.lane.b32.xlu0 %v1067, 126
    %v1089 = vpop.permute.xlu0 %1088
    %1090 = vrot.lane.b32.xlu0 %v1064, 126
    %v1091 = vpop.permute.xlu0 %1090
    %1092 = vrot.lane.b32.xlu0 %v1068, 126
    %v1093 = vpop.permute.xlu0 %1092
    %1094 = vrot.lane.b32.xlu0 %v1065, 126
    %v1095 = vpop.permute.xlu0 %1094
    %1096 = vrot.lane.b32.xlu0 %v1069, 126
    %v1097 = vpop.permute.xlu0 %1096
    %v1098 = vsel %vm170, %v1083, %v1085
    %v1099 = vsel %vm170, %v1087, %v1089
    %v1100 = vsel %vm170, %v1091, %v1093
    %v1101 = vsel %vm170, %v1095, %v1097
    %v1106 = vsel %vm145, %v1098, 0.0
    %v1107 = vsel %vm145, %v1099, 0.0
    %v1108 = vsel %vm145, %v1100, 0.0
    %v1109 = vsel %vm145, %v1101, 0.0
    %1110 = vrot.lane.b32.xlu0 %v1062, 127
    %v1111 = vpop.permute.xlu0 %1110
    %1112 = vrot.lane.b32.xlu0 %v1066, 127
    %v1113 = vpop.permute.xlu0 %1112
    %1114 = vrot.lane.b32.xlu0 %v1063, 127
    %v1115 = vpop.permute.xlu0 %1114
    %1116 = vrot.lane.b32.xlu0 %v1067, 127
    %v1117 = vpop.permute.xlu0 %1116
    %1118 = vrot.lane.b32.xlu0 %v1064, 127
    %v1119 = vpop.permute.xlu0 %1118
    %1120 = vrot.lane.b32.xlu0 %v1068, 127
    %v1121 = vpop.permute.xlu0 %1120
    %1122 = vrot.lane.b32.xlu0 %v1065, 127
    %v1123 = vpop.permute.xlu0 %1122
    %1124 = vrot.lane.b32.xlu0 %v1069, 127
    %v1125 = vpop.permute.xlu0 %1124
    %v1126 = vsel %vm199, %v1111, %v1113
    %v1127 = vsel %vm199, %v1115, %v1117
    %v1128 = vsel %vm199, %v1119, %v1121
    %v1129 = vsel %vm199, %v1123, %v1125
    %v1135 = vsel %vm77, %v1034, 0
    %v1138 = vsel %vm77, %v1035, 0
    %v1141 = vsel %vm77, %v1036, 0
    %v1144 = vsel %vm77, %v1037, 0
    %1146 = vmatprep.subr.mxu0 0.0
    %1147 = vmatpush1.msra.mxu0 0.0
    %1148 = vmatprep.subr.mxu0 0.0
    %1149 = vmatpush1.msra.mxu0 0.0
    %1150 = vmatprep.subr.mxu0 0.0
    %1151 = vmatpush1.msra.mxu0 0.0
    %1152 = vmatprep.subr.mxu0 0.0
    %1153 = vmatpush1.msra.mxu0 0.0
    %1154 = vmatprep.subr.mxu0 0.0
    %v1155 = vand.u32 %v1109, 4294901760
    %1156 = vmatpush1.msra.mxu0 %v1155
    %1157 = vmatprep.subr.mxu0 0.0
    %v1158 = vand.u32 %v1108, 4294901760
    %1159 = vmatpush1.msra.mxu0 %v1158
    %1160 = vmatprep.subr.mxu0 0.0
    %v1161 = vand.u32 %v1107, 4294901760
    %1162 = vmatpush1.msra.mxu0 %v1161
    %1163 = vmatprep.subr.mxu0 0.0
    %v1164 = vand.u32 %v1106, 4294901760
    %1165 = vmatpush1.msra.mxu0 %v1164
    %1166 = vmatprep.subr.mxu0 0.0
    %v1167 = vand.u32 %v1129, 4294901760
    %1168 = vmatpush1.msra.mxu0 %v1167
    %1169 = vmatprep.subr.mxu0 0.0
    %v1170 = vand.u32 %v1128, 4294901760
    %1171 = vmatpush1.msra.mxu0 %v1170
    %1172 = vmatprep.subr.mxu0 0.0
    %v1173 = vand.u32 %v1127, 4294901760
    %1174 = vmatpush1.msra.mxu0 %v1173
    %1175 = vmatprep.subr.mxu0 0.0
    %v1176 = vand.u32 %v1126, 4294901760
    %1177 = vmatpush1.msra.mxu0 %v1176
    %1178 = vmatprep.subr.mxu0 0.0
    %v1179 = vand.u32 %v1073, 4294901760
    %1180 = vmatpush1.msra.mxu0 %v1179
    %1181 = vmatprep.subr.mxu0 0.0
    %v1182 = vand.u32 %v1072, 4294901760
    %1183 = vmatpush1.msra.mxu0 %v1182
    %1184 = vmatprep.subr.mxu0 0.0
    %v1185 = vand.u32 %v1071, 4294901760
    %1186 = vmatpush1.msra.mxu0 %v1185
    %1187 = vmatprep.subr.mxu0 0.0
    %v1188 = vand.u32 %v1070, 4294901760
    %1189 = vmatpush1.msra.mxu0 %v1188
    %1190 = vmatprep.subr.mxu0 0.0
    %1191 = vmatpush2.msra.mxu0 0.0
    %1192 = vmatprep.subr.mxu0 0.0
    %1193 = vmatpush2.msra.mxu0 0.0
    %1194 = vmatprep.subr.mxu0 0.0
    %1195 = vmatpush2.msra.mxu0 0.0
    %1196 = vmatprep.subr.mxu0 0.0
    %1197 = vmatpush2.msra.mxu0 0.0
    %1198 = vmatprep.subr.mxu0 0.0
    %1199 = vmatpush2.msra.mxu0 0.0
    %1200 = vmatprep.subr.mxu0 0.0
    %1201 = vmatpush2.msra.mxu0 0.0
    %1202 = vmatprep.subr.mxu0 0.0
    %1203 = vmatpush2.msra.mxu0 0.0
    %1204 = vmatprep.subr.mxu0 0.0
    %1205 = vmatpush2.msra.mxu0 0.0
    %1206 = vmatprep.subr.mxu0 0.0
    %1207 = vmatpush2.msra.mxu0 0.0
    %1208 = vmatprep.subr.mxu0 0.0
    %1209 = vmatpush2.msra.mxu0 0.0
    %1210 = vmatprep.subr.mxu0 0.0
    %1211 = vmatpush2.msra.mxu0 0.0
    %1212 = vmatprep.subr.mxu0 0.0
    %1213 = vmatpush2.msra.mxu0 0.0
    %1214 = vmatprep.subr.mxu0 0.0
    %1215 = vmatpush2.msra.mxu0 0.0
    %1216 = vmatprep.subr.mxu0 0.0
    %1217 = vmatpush2.msra.mxu0 0.0
    %1218 = vmatprep.subr.mxu0 0.0
    %1219 = vmatpush2.msra.mxu0 0.0
    %1220 = vmatprep.subr.mxu0 0.0
    %1221 = vmatpush2.msra.mxu0 0.0
    %1222 = vmatprep.mubr.f32.mxu0 0.0
    %v1223 = vand.u32 %v1135, 4294901760
    %v1224 = vsub.f32 %v1135, %v1223
    %v1225 = vand.u32 %v1224, 4294901760
    %v1226 = vsub.f32 %v1224, %v1225
    %v1227 = vand.u32 %v1226, 4294901760
    %1228 = vmatmul.mubr.f32.gmra.mxu0 %v1227
    %v1229 = vpop.f32.mrf.mxu0
    %v1230 = vadd.f32 0.0, %v1229
    %v1231 = vpop.f32.mrf.mxu0
    %1232 = vmatprep.mubr.f32.mxu0 0.0
    %v1233 = vand.u32 %v1138, 4294901760
    %v1234 = vsub.f32 %v1138, %v1233
    %v1235 = vand.u32 %v1234, 4294901760
    %v1236 = vsub.f32 %v1234, %v1235
    %v1237 = vand.u32 %v1236, 4294901760
    %1238 = vmatmul.mubr.f32.gmra.mxu0 %v1237
    %v1239 = vpop.f32.mrf.mxu0
    %v1240 = vadd.f32 0.0, %v1239
    %v1241 = vpop.f32.mrf.mxu0
    %1242 = vmatprep.mubr.f32.mxu0 0.0
    %v1243 = vand.u32 %v1141, 4294901760
    %v1244 = vsub.f32 %v1141, %v1243
    %v1245 = vand.u32 %v1244, 4294901760
    %v1246 = vsub.f32 %v1244, %v1245
    %v1247 = vand.u32 %v1246, 4294901760
    %1248 = vmatmul.mubr.f32.gmra.mxu0 %v1247
    %v1249 = vpop.f32.mrf.mxu0
    %v1250 = vadd.f32 0.0, %v1249
    %v1251 = vpop.f32.mrf.mxu0
    %1252 = vmatprep.mubr.f32.mxu0 0.0
    %v1253 = vand.u32 %v1144, 4294901760
    %v1254 = vsub.f32 %v1144, %v1253
    %v1255 = vand.u32 %v1254, 4294901760
    %v1256 = vsub.f32 %v1254, %v1255
    %v1257 = vand.u32 %v1256, 4294901760
    %1258 = vmatmul.mubr.f32.gmra.mxu0 %v1257
    %v1259 = vpop.f32.mrf.mxu0
    %v1260 = vadd.f32 0.0, %v1259
    %v1261 = vpop.f32.mrf.mxu0
    %1262 = vdwg.mxu0
    %1263 = vmatprep.subr.mxu0 0.0
    %1264 = vmatpush1.msra.mxu0 0.0
    %1265 = vmatprep.subr.mxu0 0.0
    %1266 = vmatpush1.msra.mxu0 0.0
    %1267 = vmatprep.subr.mxu0 0.0
    %1268 = vmatpush1.msra.mxu0 0.0
    %1269 = vmatprep.subr.mxu0 0.0
    %1270 = vmatpush1.msra.mxu0 0.0
    %1271 = vmatprep.subr.mxu0 0.0
    %v1272 = vand.u32 %v1109, 4294901760
    %v1273 = vsub.f32 %v1109, %v1272
    %v1274 = vand.u32 %v1273, 4294901760
    %v1275 = vsub.f32 %v1273, %v1274
    %v1276 = vand.u32 %v1275, 4294901760
    %1277 = vmatpush1.msra.mxu0 %v1276
    %1278 = vmatprep.subr.mxu0 0.0
    %v1279 = vand.u32 %v1108, 4294901760
    %v1280 = vsub.f32 %v1108, %v1279
    %v1281 = vand.u32 %v1280, 4294901760
    %v1282 = vsub.f32 %v1280, %v1281
    %v1283 = vand.u32 %v1282, 4294901760
    %1284 = vmatpush1.msra.mxu0 %v1283
    %1285 = vmatprep.subr.mxu0 0.0
    %v1286 = vand.u32 %v1107, 4294901760
    %v1287 = vsub.f32 %v1107, %v1286
    %v1288 = vand.u32 %v1287, 4294901760
    %v1289 = vsub.f32 %v1287, %v1288
    %v1290 = vand.u32 %v1289, 4294901760
    %1291 = vmatpush1.msra.mxu0 %v1290
    %1292 = vmatprep.subr.mxu0 0.0
    %v1293 = vand.u32 %v1106, 4294901760
    %v1294 = vsub.f32 %v1106, %v1293
    %v1295 = vand.u32 %v1294, 4294901760
    %v1296 = vsub.f32 %v1294, %v1295
    %v1297 = vand.u32 %v1296, 4294901760
    %1298 = vmatpush1.msra.mxu0 %v1297
    %1299 = vmatprep.subr.mxu0 0.0
    %v1300 = vand.u32 %v1129, 4294901760
    %v1301 = vsub.f32 %v1129, %v1300
    %v1302 = vand.u32 %v1301, 4294901760
    %v1303 = vsub.f32 %v1301, %v1302
    %v1304 = vand.u32 %v1303, 4294901760
    %1305 = vmatpush1.msra.mxu0 %v1304
    %1306 = vmatprep.subr.mxu0 0.0
    %v1307 = vand.u32 %v1128, 4294901760
    %v1308 = vsub.f32 %v1128, %v1307
    %v1309 = vand.u32 %v1308, 4294901760
    %v1310 = vsub.f32 %v1308, %v1309
    %v1311 = vand.u32 %v1310, 4294901760
    %1312 = vmatpush1.msra.mxu0 %v1311
    %1313 = vmatprep.subr.mxu0 0.0
    %v1314 = vand.u32 %v1127, 4294901760
    %v1315 = vsub.f32 %v1127, %v1314
    %v1316 = vand.u32 %v1315, 4294901760
    %v1317 = vsub.f32 %v1315, %v1316
    %v1318 = vand.u32 %v1317, 4294901760
    %1319 = vmatpush1.msra.mxu0 %v1318
    %1320 = vmatprep.subr.mxu0 0.0
    %v1321 = vand.u32 %v1126, 4294901760
    %v1322 = vsub.f32 %v1126, %v1321
    %v1323 = vand.u32 %v1322, 4294901760
    %v1324 = vsub.f32 %v1322, %v1323
    %v1325 = vand.u32 %v1324, 4294901760
    %1326 = vmatpush1.msra.mxu0 %v1325
    %1327 = vmatprep.subr.mxu0 0.0
    %v1328 = vand.u32 %v1073, 4294901760
    %v1329 = vsub.f32 %v1073, %v1328
    %v1330 = vand.u32 %v1329, 4294901760
    %v1331 = vsub.f32 %v1329, %v1330
    %v1332 = vand.u32 %v1331, 4294901760
    %1333 = vmatpush1.msra.mxu0 %v1332
    %1334 = vmatprep.subr.mxu0 0.0
    %v1335 = vand.u32 %v1072, 4294901760
    %v1336 = vsub.f32 %v1072, %v1335
    %v1337 = vand.u32 %v1336, 4294901760
    %v1338 = vsub.f32 %v1336, %v1337
    %v1339 = vand.u32 %v1338, 4294901760
    %1340 = vmatpush1.msra.mxu0 %v1339
    %1341 = vmatprep.subr.mxu0 0.0
    %v1342 = vand.u32 %v1071, 4294901760
    %v1343 = vsub.f32 %v1071, %v1342
    %v1344 = vand.u32 %v1343, 4294901760
    %v1345 = vsub.f32 %v1343, %v1344
    %v1346 = vand.u32 %v1345, 4294901760
    %1347 = vmatpush1.msra.mxu0 %v1346
    %1348 = vmatprep.subr.mxu0 0.0
    %v1349 = vand.u32 %v1070, 4294901760
    %v1350 = vsub.f32 %v1070, %v1349
    %v1351 = vand.u32 %v1350, 4294901760
    %v1352 = vsub.f32 %v1350, %v1351
    %v1353 = vand.u32 %v1352, 4294901760
    %1354 = vmatpush1.msra.mxu0 %v1353
    %1355 = vmatprep.subr.mxu0 0.0
    %1356 = vmatpush2.msra.mxu0 0.0
    %1357 = vmatprep.subr.mxu0 0.0
    %1358 = vmatpush2.msra.mxu0 0.0
    %1359 = vmatprep.subr.mxu0 0.0
    %1360 = vmatpush2.msra.mxu0 0.0
    %1361 = vmatprep.subr.mxu0 0.0
    %1362 = vmatpush2.msra.mxu0 0.0
    %1363 = vmatprep.subr.mxu0 0.0
    %1364 = vmatpush2.msra.mxu0 0.0
    %1365 = vmatprep.subr.mxu0 0.0
    %1366 = vmatpush2.msra.mxu0 0.0
    %1367 = vmatprep.subr.mxu0 0.0
    %1368 = vmatpush2.msra.mxu0 0.0
    %1369 = vmatprep.subr.mxu0 0.0
    %1370 = vmatpush2.msra.mxu0 0.0
    %1371 = vmatprep.subr.mxu0 0.0
    %1372 = vmatpush2.msra.mxu0 0.0
    %1373 = vmatprep.subr.mxu0 0.0
    %1374 = vmatpush2.msra.mxu0 0.0
    %1375 = vmatprep.subr.mxu0 0.0
    %1376 = vmatpush2.msra.mxu0 0.0
    %1377 = vmatprep.subr.mxu0 0.0
    %1378 = vmatpush2.msra.mxu0 0.0
    %1379 = vmatprep.subr.mxu0 0.0
    %1380 = vmatpush2.msra.mxu0 0.0
    %1381 = vmatprep.subr.mxu0 0.0
    %1382 = vmatpush2.msra.mxu0 0.0
    %1383 = vmatprep.subr.mxu0 0.0
    %1384 = vmatpush2.msra.mxu0 0.0
    %1385 = vmatprep.subr.mxu0 0.0
    %1386 = vmatpush2.msra.mxu0 0.0
    %1387 = vmatprep.mubr.f32.mxu0 0.0
    %v1388 = vand.u32 %v1135, 4294901760
    %1389 = vmatmul.mubr.f32.gmra.mxu0 %v1388
    %v1390 = vpop.f32.mrf.mxu0
    %v1391 = vadd.f32 %v1230, %v1390
    %v1392 = vpop.f32.mrf.mxu0
    %1393 = vmatprep.mubr.f32.mxu0 0.0
    %v1394 = vand.u32 %v1138, 4294901760
    %1395 = vmatmul.mubr.f32.gmra.mxu0 %v1394
    %v1396 = vpop.f32.mrf.mxu0
    %v1397 = vadd.f32 %v1240, %v1396
    %v1398 = vpop.f32.mrf.mxu0
    %1399 = vmatprep.mubr.f32.mxu0 0.0
    %v1400 = vand.u32 %v1141, 4294901760
    %1401 = vmatmul.mubr.f32.gmra.mxu0 %v1400
    %v1402 = vpop.f32.mrf.mxu0
    %v1403 = vadd.f32 %v1250, %v1402
    %v1404 = vpop.f32.mrf.mxu0
    %1405 = vmatprep.mubr.f32.mxu0 0.0
    %v1406 = vand.u32 %v1144, 4294901760
    %1407 = vmatmul.mubr.f32.gmra.mxu0 %v1406
    %v1408 = vpop.f32.mrf.mxu0
    %v1409 = vadd.f32 %v1260, %v1408
    %v1410 = vpop.f32.mrf.mxu0
    %1411 = vdwg.mxu0
    %1412 = vmatprep.subr.mxu0 0.0
    %1413 = vmatpush1.msra.mxu0 0.0
    %1414 = vmatprep.subr.mxu0 0.0
    %1415 = vmatpush1.msra.mxu0 0.0
    %1416 = vmatprep.subr.mxu0 0.0
    %1417 = vmatpush1.msra.mxu0 0.0
    %1418 = vmatprep.subr.mxu0 0.0
    %1419 = vmatpush1.msra.mxu0 0.0
    %1420 = vmatprep.subr.mxu0 0.0
    %v1421 = vand.u32 %v1109, 4294901760
    %v1422 = vsub.f32 %v1109, %v1421
    %1423 = vmatpush1.msra.mxu0 %v1422
    %1424 = vmatprep.subr.mxu0 0.0
    %v1425 = vand.u32 %v1108, 4294901760
    %v1426 = vsub.f32 %v1108, %v1425
    %1427 = vmatpush1.msra.mxu0 %v1426
    %1428 = vmatprep.subr.mxu0 0.0
    %v1429 = vand.u32 %v1107, 4294901760
    %v1430 = vsub.f32 %v1107, %v1429
    %1431 = vmatpush1.msra.mxu0 %v1430
    %1432 = vmatprep.subr.mxu0 0.0
    %v1433 = vand.u32 %v1106, 4294901760
    %v1434 = vsub.f32 %v1106, %v1433
    %1435 = vmatpush1.msra.mxu0 %v1434
    %1436 = vmatprep.subr.mxu0 0.0
    %v1437 = vand.u32 %v1129, 4294901760
    %v1438 = vsub.f32 %v1129, %v1437
    %1439 = vmatpush1.msra.mxu0 %v1438
    %1440 = vmatprep.subr.mxu0 0.0
    %v1441 = vand.u32 %v1128, 4294901760
    %v1442 = vsub.f32 %v1128, %v1441
    %1443 = vmatpush1.msra.mxu0 %v1442
    %1444 = vmatprep.subr.mxu0 0.0
    %v1445 = vand.u32 %v1127, 4294901760
    %v1446 = vsub.f32 %v1127, %v1445
    %1447 = vmatpush1.msra.mxu0 %v1446
    %1448 = vmatprep.subr.mxu0 0.0
    %v1449 = vand.u32 %v1126, 4294901760
    %v1450 = vsub.f32 %v1126, %v1449
    %1451 = vmatpush1.msra.mxu0 %v1450
    %1452 = vmatprep.subr.mxu0 0.0
    %v1453 = vand.u32 %v1073, 4294901760
    %v1454 = vsub.f32 %v1073, %v1453
    %1455 = vmatpush1.msra.mxu0 %v1454
    %1456 = vmatprep.subr.mxu0 0.0
    %v1457 = vand.u32 %v1072, 4294901760
    %v1458 = vsub.f32 %v1072, %v1457
    %1459 = vmatpush1.msra.mxu0 %v1458
    %1460 = vmatprep.subr.mxu0 0.0
    %v1461 = vand.u32 %v1071, 4294901760
    %v1462 = vsub.f32 %v1071, %v1461
    %1463 = vmatpush1.msra.mxu0 %v1462
    %1464 = vmatprep.subr.mxu0 0.0
    %v1465 = vand.u32 %v1070, 4294901760
    %v1466 = vsub.f32 %v1070, %v1465
    %1467 = vmatpush1.msra.mxu0 %v1466
    %1468 = vmatprep.subr.mxu0 0.0
    %1469 = vmatpush2.msra.mxu0 0.0
    %1470 = vmatprep.subr.mxu0 0.0
    %1471 = vmatpush2.msra.mxu0 0.0
    %1472 = vmatprep.subr.mxu0 0.0
    %1473 = vmatpush2.msra.mxu0 0.0
    %1474 = vmatprep.subr.mxu0 0.0
    %1475 = vmatpush2.msra.mxu0 0.0
    %1476 = vmatprep.subr.mxu0 0.0
    %1477 = vmatpush2.msra.mxu0 0.0
    %1478 = vmatprep.subr.mxu0 0.0
    %1479 = vmatpush2.msra.mxu0 0.0
    %1480 = vmatprep.subr.mxu0 0.0
    %1481 = vmatpush2.msra.mxu0 0.0
    %1482 = vmatprep.subr.mxu0 0.0
    %1483 = vmatpush2.msra.mxu0 0.0
    %1484 = vmatprep.subr.mxu0 0.0
    %1485 = vmatpush2.msra.mxu0 0.0
    %1486 = vmatprep.subr.mxu0 0.0
    %1487 = vmatpush2.msra.mxu0 0.0
    %1488 = vmatprep.subr.mxu0 0.0
    %1489 = vmatpush2.msra.mxu0 0.0
    %1490 = vmatprep.subr.mxu0 0.0
    %1491 = vmatpush2.msra.mxu0 0.0
    %1492 = vmatprep.subr.mxu0 0.0
    %1493 = vmatpush2.msra.mxu0 0.0
    %1494 = vmatprep.subr.mxu0 0.0
    %1495 = vmatpush2.msra.mxu0 0.0
    %1496 = vmatprep.subr.mxu0 0.0
    %1497 = vmatpush2.msra.mxu0 0.0
    %1498 = vmatprep.subr.mxu0 0.0
    %1499 = vmatpush2.msra.mxu0 0.0
    %1500 = vmatprep.mubr.f32.mxu0 0.0
    %v1501 = vand.u32 %v1135, 4294901760
    %v1502 = vsub.f32 %v1135, %v1501
    %1503 = vmatmul.mubr.f32.gmra.mxu0 %v1502
    %v1504 = vpop.f32.mrf.mxu0
    %v1505 = vadd.f32 %v1391, %v1504
    %v1506 = vpop.f32.mrf.mxu0
    %1507 = vmatprep.mubr.f32.mxu0 0.0
    %v1508 = vand.u32 %v1138, 4294901760
    %v1509 = vsub.f32 %v1138, %v1508
    %1510 = vmatmul.mubr.f32.gmra.mxu0 %v1509
    %v1511 = vpop.f32.mrf.mxu0
    %v1512 = vadd.f32 %v1397, %v1511
    %v1513 = vpop.f32.mrf.mxu0
    %1514 = vmatprep.mubr.f32.mxu0 0.0
    %v1515 = vand.u32 %v1141, 4294901760
    %v1516 = vsub.f32 %v1141, %v1515
    %1517 = vmatmul.mubr.f32.gmra.mxu0 %v1516
    %v1518 = vpop.f32.mrf.mxu0
    %v1519 = vadd.f32 %v1403, %v1518
    %v1520 = vpop.f32.mrf.mxu0
    %1521 = vmatprep.mubr.f32.mxu0 0.0
    %v1522 = vand.u32 %v1144, 4294901760
    %v1523 = vsub.f32 %v1144, %v1522
    %1524 = vmatmul.mubr.f32.gmra.mxu0 %v1523
    %v1525 = vpop.f32.mrf.mxu0
    %v1526 = vadd.f32 %v1409, %v1525
    %v1527 = vpop.f32.mrf.mxu0
    %1528 = vdwg.mxu0
    %1529 = vmatprep.subr.mxu0 0.0
    %1530 = vmatpush1.msra.mxu0 0.0
    %1531 = vmatprep.subr.mxu0 0.0
    %1532 = vmatpush1.msra.mxu0 0.0
    %1533 = vmatprep.subr.mxu0 0.0
    %1534 = vmatpush1.msra.mxu0 0.0
    %1535 = vmatprep.subr.mxu0 0.0
    %1536 = vmatpush1.msra.mxu0 0.0
    %1537 = vmatprep.subr.mxu0 0.0
    %v1538 = vand.u32 %v1109, 4294901760
    %1539 = vmatpush1.msra.mxu0 %v1538
    %1540 = vmatprep.subr.mxu0 0.0
    %v1541 = vand.u32 %v1108, 4294901760
    %1542 = vmatpush1.msra.mxu0 %v1541
    %1543 = vmatprep.subr.mxu0 0.0
    %v1544 = vand.u32 %v1107, 4294901760
    %1545 = vmatpush1.msra.mxu0 %v1544
    %1546 = vmatprep.subr.mxu0 0.0
    %v1547 = vand.u32 %v1106, 4294901760
    %1548 = vmatpush1.msra.mxu0 %v1547
    %1549 = vmatprep.subr.mxu0 0.0
    %v1550 = vand.u32 %v1129, 4294901760
    %1551 = vmatpush1.msra.mxu0 %v1550
    %1552 = vmatprep.subr.mxu0 0.0
    %v1553 = vand.u32 %v1128, 4294901760
    %1554 = vmatpush1.msra.mxu0 %v1553
    %1555 = vmatprep.subr.mxu0 0.0
    %v1556 = vand.u32 %v1127, 4294901760
    %1557 = vmatpush1.msra.mxu0 %v1556
    %1558 = vmatprep.subr.mxu0 0.0
    %v1559 = vand.u32 %v1126, 4294901760
    %1560 = vmatpush1.msra.mxu0 %v1559
    %1561 = vmatprep.subr.mxu0 0.0
    %v1562 = vand.u32 %v1073, 4294901760
    %1563 = vmatpush1.msra.mxu0 %v1562
    %1564 = vmatprep.subr.mxu0 0.0
    %v1565 = vand.u32 %v1072, 4294901760
    %1566 = vmatpush1.msra.mxu0 %v1565
    %1567 = vmatprep.subr.mxu0 0.0
    %v1568 = vand.u32 %v1071, 4294901760
    %1569 = vmatpush1.msra.mxu0 %v1568
    %1570 = vmatprep.subr.mxu0 0.0
    %v1571 = vand.u32 %v1070, 4294901760
    %1572 = vmatpush1.msra.mxu0 %v1571
    %1573 = vmatprep.subr.mxu0 0.0
    %1574 = vmatpush2.msra.mxu0 0.0
    %1575 = vmatprep.subr.mxu0 0.0
    %1576 = vmatpush2.msra.mxu0 0.0
    %1577 = vmatprep.subr.mxu0 0.0
    %1578 = vmatpush2.msra.mxu0 0.0
    %1579 = vmatprep.subr.mxu0 0.0
    %1580 = vmatpush2.msra.mxu0 0.0
    %1581 = vmatprep.subr.mxu0 0.0
    %1582 = vmatpush2.msra.mxu0 0.0
    %1583 = vmatprep.subr.mxu0 0.0
    %1584 = vmatpush2.msra.mxu0 0.0
    %1585 = vmatprep.subr.mxu0 0.0
    %1586 = vmatpush2.msra.mxu0 0.0
    %1587 = vmatprep.subr.mxu0 0.0
    %1588 = vmatpush2.msra.mxu0 0.0
    %1589 = vmatprep.subr.mxu0 0.0
    %1590 = vmatpush2.msra.mxu0 0.0
    %1591 = vmatprep.subr.mxu0 0.0
    %1592 = vmatpush2.msra.mxu0 0.0
    %1593 = vmatprep.subr.mxu0 0.0
    %1594 = vmatpush2.msra.mxu0 0.0
    %1595 = vmatprep.subr.mxu0 0.0
    %1596 = vmatpush2.msra.mxu0 0.0
    %1597 = vmatprep.subr.mxu0 0.0
    %1598 = vmatpush2.msra.mxu0 0.0
    %1599 = vmatprep.subr.mxu0 0.0
    %1600 = vmatpush2.msra.mxu0 0.0
    %1601 = vmatprep.subr.mxu0 0.0
    %1602 = vmatpush2.msra.mxu0 0.0
    %1603 = vmatprep.subr.mxu0 0.0
    %1604 = vmatpush2.msra.mxu0 0.0
    %1605 = vmatprep.mubr.f32.mxu0 0.0
    %v1606 = vand.u32 %v1135, 4294901760
    %v1607 = vsub.f32 %v1135, %v1606
    %v1608 = vand.u32 %v1607, 4294901760
    %1609 = vmatmul.mubr.f32.gmra.mxu0 %v1608
    %v1610 = vpop.f32.mrf.mxu0
    %v1611 = vadd.f32 %v1505, %v1610
    %v1612 = vpop.f32.mrf.mxu0
    %1613 = vmatprep.mubr.f32.mxu0 0.0
    %v1614 = vand.u32 %v1138, 4294901760
    %v1615 = vsub.f32 %v1138, %v1614
    %v1616 = vand.u32 %v1615, 4294901760
    %1617 = vmatmul.mubr.f32.gmra.mxu0 %v1616
    %v1618 = vpop.f32.mrf.mxu0
    %v1619 = vadd.f32 %v1512, %v1618
    %v1620 = vpop.f32.mrf.mxu0
    %1621 = vmatprep.mubr.f32.mxu0 0.0
    %v1622 = vand.u32 %v1141, 4294901760
    %v1623 = vsub.f32 %v1141, %v1622
    %v1624 = vand.u32 %v1623, 4294901760
    %1625 = vmatmul.mubr.f32.gmra.mxu0 %v1624
    %v1626 = vpop.f32.mrf.mxu0
    %v1627 = vadd.f32 %v1519, %v1626
    %v1628 = vpop.f32.mrf.mxu0
    %1629 = vmatprep.mubr.f32.mxu0 0.0
    %v1630 = vand.u32 %v1144, 4294901760
    %v1631 = vsub.f32 %v1144, %v1630
    %v1632 = vand.u32 %v1631, 4294901760
    %1633 = vmatmul.mubr.f32.gmra.mxu0 %v1632
    %v1634 = vpop.f32.mrf.mxu0
    %v1635 = vadd.f32 %v1526, %v1634
    %v1636 = vpop.f32.mrf.mxu0
    %1637 = vdwg.mxu0
    %1638 = vmatprep.subr.mxu0 0.0
    %1639 = vmatpush1.msra.mxu0 0.0
    %1640 = vmatprep.subr.mxu0 0.0
    %1641 = vmatpush1.msra.mxu0 0.0
    %1642 = vmatprep.subr.mxu0 0.0
    %1643 = vmatpush1.msra.mxu0 0.0
    %1644 = vmatprep.subr.mxu0 0.0
    %1645 = vmatpush1.msra.mxu0 0.0
    %1646 = vmatprep.subr.mxu0 0.0
    %v1647 = vand.u32 %v1109, 4294901760
    %v1648 = vsub.f32 %v1109, %v1647
    %v1649 = vand.u32 %v1648, 4294901760
    %1650 = vmatpush1.msra.mxu0 %v1649
    %1651 = vmatprep.subr.mxu0 0.0
    %v1652 = vand.u32 %v1108, 4294901760
    %v1653 = vsub.f32 %v1108, %v1652
    %v1654 = vand.u32 %v1653, 4294901760
    %1655 = vmatpush1.msra.mxu0 %v1654
    %1656 = vmatprep.subr.mxu0 0.0
    %v1657 = vand.u32 %v1107, 4294901760
    %v1658 = vsub.f32 %v1107, %v1657
    %v1659 = vand.u32 %v1658, 4294901760
    %1660 = vmatpush1.msra.mxu0 %v1659
    %1661 = vmatprep.subr.mxu0 0.0
    %v1662 = vand.u32 %v1106, 4294901760
    %v1663 = vsub.f32 %v1106, %v1662
    %v1664 = vand.u32 %v1663, 4294901760
    %1665 = vmatpush1.msra.mxu0 %v1664
    %1666 = vmatprep.subr.mxu0 0.0
    %v1667 = vand.u32 %v1129, 4294901760
    %v1668 = vsub.f32 %v1129, %v1667
    %v1669 = vand.u32 %v1668, 4294901760
    %1670 = vmatpush1.msra.mxu0 %v1669
    %1671 = vmatprep.subr.mxu0 0.0
    %v1672 = vand.u32 %v1128, 4294901760
    %v1673 = vsub.f32 %v1128, %v1672
    %v1674 = vand.u32 %v1673, 4294901760
    %1675 = vmatpush1.msra.mxu0 %v1674
    %1676 = vmatprep.subr.mxu0 0.0
    %v1677 = vand.u32 %v1127, 4294901760
    %v1678 = vsub.f32 %v1127, %v1677
    %v1679 = vand.u32 %v1678, 4294901760
    %1680 = vmatpush1.msra.mxu0 %v1679
    %1681 = vmatprep.subr.mxu0 0.0
    %v1682 = vand.u32 %v1126, 4294901760
    %v1683 = vsub.f32 %v1126, %v1682
    %v1684 = vand.u32 %v1683, 4294901760
    %1685 = vmatpush1.msra.mxu0 %v1684
    %1686 = vmatprep.subr.mxu0 0.0
    %v1687 = vand.u32 %v1073, 4294901760
    %v1688 = vsub.f32 %v1073, %v1687
    %v1689 = vand.u32 %v1688, 4294901760
    %1690 = vmatpush1.msra.mxu0 %v1689
    %1691 = vmatprep.subr.mxu0 0.0
    %v1692 = vand.u32 %v1072, 4294901760
    %v1693 = vsub.f32 %v1072, %v1692
    %v1694 = vand.u32 %v1693, 4294901760
    %1695 = vmatpush1.msra.mxu0 %v1694
    %1696 = vmatprep.subr.mxu0 0.0
    %v1697 = vand.u32 %v1071, 4294901760
    %v1698 = vsub.f32 %v1071, %v1697
    %v1699 = vand.u32 %v1698, 4294901760
    %1700 = vmatpush1.msra.mxu0 %v1699
    %1701 = vmatprep.subr.mxu0 0.0
    %v1702 = vand.u32 %v1070, 4294901760
    %v1703 = vsub.f32 %v1070, %v1702
    %v1704 = vand.u32 %v1703, 4294901760
    %1705 = vmatpush1.msra.mxu0 %v1704
    %1706 = vmatprep.subr.mxu0 0.0
    %1707 = vmatpush2.msra.mxu0 0.0
    %1708 = vmatprep.subr.mxu0 0.0
    %1709 = vmatpush2.msra.mxu0 0.0
    %1710 = vmatprep.subr.mxu0 0.0
    %1711 = vmatpush2.msra.mxu0 0.0
    %1712 = vmatprep.subr.mxu0 0.0
    %1713 = vmatpush2.msra.mxu0 0.0
    %1714 = vmatprep.subr.mxu0 0.0
    %1715 = vmatpush2.msra.mxu0 0.0
    %1716 = vmatprep.subr.mxu0 0.0
    %1717 = vmatpush2.msra.mxu0 0.0
    %1718 = vmatprep.subr.mxu0 0.0
    %1719 = vmatpush2.msra.mxu0 0.0
    %1720 = vmatprep.subr.mxu0 0.0
    %1721 = vmatpush2.msra.mxu0 0.0
    %1722 = vmatprep.subr.mxu0 0.0
    %1723 = vmatpush2.msra.mxu0 0.0
    %1724 = vmatprep.subr.mxu0 0.0
    %1725 = vmatpush2.msra.mxu0 0.0
    %1726 = vmatprep.subr.mxu0 0.0
    %1727 = vmatpush2.msra.mxu0 0.0
    %1728 = vmatprep.subr.mxu0 0.0
    %1729 = vmatpush2.msra.mxu0 0.0
    %1730 = vmatprep.subr.mxu0 0.0
    %1731 = vmatpush2.msra.mxu0 0.0
    %1732 = vmatprep.subr.mxu0 0.0
    %1733 = vmatpush2.msra.mxu0 0.0
    %1734 = vmatprep.subr.mxu0 0.0
    %1735 = vmatpush2.msra.mxu0 0.0
    %1736 = vmatprep.subr.mxu0 0.0
    %1737 = vmatpush2.msra.mxu0 0.0
    %1738 = vmatprep.mubr.f32.mxu0 0.0
    %v1739 = vand.u32 %v1135, 4294901760
    %1740 = vmatmul.mubr.f32.gmra.mxu0 %v1739
    %v1741 = vpop.f32.mrf.mxu0
    %v1742 = vadd.f32 %v1611, %v1741
    %v1743 = vpop.f32.mrf.mxu0
    %1744 = vmatprep.mubr.f32.mxu0 0.0
    %v1745 = vand.u32 %v1138, 4294901760
    %1746 = vmatmul.mubr.f32.gmra.mxu0 %v1745
    %v1747 = vpop.f32.mrf.mxu0
    %v1748 = vadd.f32 %v1619, %v1747
    %v1749 = vpop.f32.mrf.mxu0
    %1750 = vmatprep.mubr.f32.mxu0 0.0
    %v1751 = vand.u32 %v1141, 4294901760
    %1752 = vmatmul.mubr.f32.gmra.mxu0 %v1751
    %v1753 = vpop.f32.mrf.mxu0
    %v1754 = vadd.f32 %v1627, %v1753
    %v1755 = vpop.f32.mrf.mxu0
    %1756 = vmatprep.mubr.f32.mxu0 0.0
    %v1757 = vand.u32 %v1144, 4294901760
    %1758 = vmatmul.mubr.f32.gmra.mxu0 %v1757
    %v1759 = vpop.f32.mrf.mxu0
    %v1760 = vadd.f32 %v1635, %v1759
    %v1761 = vpop.f32.mrf.mxu0
    %1762 = vdwg.mxu0
    %1763 = vmatprep.subr.mxu0 0.0
    %1764 = vmatpush1.msra.mxu0 0.0
    %1765 = vmatprep.subr.mxu0 0.0
    %1766 = vmatpush1.msra.mxu0 0.0
    %1767 = vmatprep.subr.mxu0 0.0
    %1768 = vmatpush1.msra.mxu0 0.0
    %1769 = vmatprep.subr.mxu0 0.0
    %1770 = vmatpush1.msra.mxu0 0.0
    %1771 = vmatprep.subr.mxu0 0.0
    %v1772 = vand.u32 %v1109, 4294901760
    %1773 = vmatpush1.msra.mxu0 %v1772
    %1774 = vmatprep.subr.mxu0 0.0
    %v1775 = vand.u32 %v1108, 4294901760
    %1776 = vmatpush1.msra.mxu0 %v1775
    %1777 = vmatprep.subr.mxu0 0.0
    %v1778 = vand.u32 %v1107, 4294901760
    %1779 = vmatpush1.msra.mxu0 %v1778
    %1780 = vmatprep.subr.mxu0 0.0
    %v1781 = vand.u32 %v1106, 4294901760
    %1782 = vmatpush1.msra.mxu0 %v1781
    %1783 = vmatprep.subr.mxu0 0.0
    %v1784 = vand.u32 %v1129, 4294901760
    %1785 = vmatpush1.msra.mxu0 %v1784
    %1786 = vmatprep.subr.mxu0 0.0
    %v1787 = vand.u32 %v1128, 4294901760
    %1788 = vmatpush1.msra.mxu0 %v1787
    %1789 = vmatprep.subr.mxu0 0.0
    %v1790 = vand.u32 %v1127, 4294901760
    %1791 = vmatpush1.msra.mxu0 %v1790
    %1792 = vmatprep.subr.mxu0 0.0
    %v1793 = vand.u32 %v1126, 4294901760
    %1794 = vmatpush1.msra.mxu0 %v1793
    %1795 = vmatprep.subr.mxu0 0.0
    %v1796 = vand.u32 %v1073, 4294901760
    %1797 = vmatpush1.msra.mxu0 %v1796
    %1798 = vmatprep.subr.mxu0 0.0
    %v1799 = vand.u32 %v1072, 4294901760
    %1800 = vmatpush1.msra.mxu0 %v1799
    %1801 = vmatprep.subr.mxu0 0.0
    %v1802 = vand.u32 %v1071, 4294901760
    %1803 = vmatpush1.msra.mxu0 %v1802
    %1804 = vmatprep.subr.mxu0 0.0
    %v1805 = vand.u32 %v1070, 4294901760
    %1806 = vmatpush1.msra.mxu0 %v1805
    %1807 = vmatprep.subr.mxu0 0.0
    %1808 = vmatpush2.msra.mxu0 0.0
    %1809 = vmatprep.subr.mxu0 0.0
    %1810 = vmatpush2.msra.mxu0 0.0
    %1811 = vmatprep.subr.mxu0 0.0
    %1812 = vmatpush2.msra.mxu0 0.0
    %1813 = vmatprep.subr.mxu0 0.0
    %1814 = vmatpush2.msra.mxu0 0.0
    %1815 = vmatprep.subr.mxu0 0.0
    %1816 = vmatpush2.msra.mxu0 0.0
    %1817 = vmatprep.subr.mxu0 0.0
    %1818 = vmatpush2.msra.mxu0 0.0
    %1819 = vmatprep.subr.mxu0 0.0
    %1820 = vmatpush2.msra.mxu0 0.0
    %1821 = vmatprep.subr.mxu0 0.0
    %1822 = vmatpush2.msra.mxu0 0.0
    %1823 = vmatprep.subr.mxu0 0.0
    %1824 = vmatpush2.msra.mxu0 0.0
    %1825 = vmatprep.subr.mxu0 0.0
    %1826 = vmatpush2.msra.mxu0 0.0
    %1827 = vmatprep.subr.mxu0 0.0
    %1828 = vmatpush2.msra.mxu0 0.0
    %1829 = vmatprep.subr.mxu0 0.0
    %1830 = vmatpush2.msra.mxu0 0.0
    %1831 = vmatprep.subr.mxu0 0.0
    %1832 = vmatpush2.msra.mxu0 0.0
    %1833 = vmatprep.subr.mxu0 0.0
    %1834 = vmatpush2.msra.mxu0 0.0
    %1835 = vmatprep.subr.mxu0 0.0
    %1836 = vmatpush2.msra.mxu0 0.0
    %1837 = vmatprep.subr.mxu0 0.0
    %1838 = vmatpush2.msra.mxu0 0.0
    %1839 = vmatprep.mubr.f32.mxu0 0.0
    %v1840 = vand.u32 %v1135, 4294901760
    %1841 = vmatmul.mubr.f32.gmra.mxu0 %v1840
    %v1842 = vpop.f32.mrf.mxu0
    %v1843 = vadd.f32 %v1742, %v1842
    %v1844 = vpop.f32.mrf.mxu0
    %1845 = vmatprep.mubr.f32.mxu0 0.0
    %v1846 = vand.u32 %v1138, 4294901760
    %1847 = vmatmul.mubr.f32.gmra.mxu0 %v1846
    %v1848 = vpop.f32.mrf.mxu0
    %v1849 = vadd.f32 %v1748, %v1848
    %v1850 = vpop.f32.mrf.mxu0
    %1851 = vmatprep.mubr.f32.mxu0 0.0
    %v1852 = vand.u32 %v1141, 4294901760
    %1853 = vmatmul.mubr.f32.gmra.mxu0 %v1852
    %v1854 = vpop.f32.mrf.mxu0
    %v1855 = vadd.f32 %v1754, %v1854
    %v1856 = vpop.f32.mrf.mxu0
    %1857 = vmatprep.mubr.f32.mxu0 0.0
    %v1858 = vand.u32 %v1144, 4294901760
    %1859 = vmatmul.mubr.f32.gmra.mxu0 %v1858
    %v1860 = vpop.f32.mrf.mxu0
    %v1861 = vadd.f32 %v1760, %v1860
    %v1862 = vpop.f32.mrf.mxu0
    %1863 = vdwg.mxu0
    %1864 = vadd.xlane.f32.xlu0 %v1843
    %v1865 = vpop.xlane.xlu0 %1864
    %1866 = vadd.xlane.f32.xlu0 %v1849
    %v1867 = vpop.xlane.xlu0 %1866
    %1868 = vadd.xlane.f32.xlu0 %v1855
    %v1869 = vpop.xlane.xlu0 %1868
    %1870 = vadd.xlane.f32.xlu0 %v1861
    %v1871 = vpop.xlane.xlu0 %1870
    %v1872 = vmul.f32 %v1865, 0.0078125
    %v1873 = vmul.f32 %v1867, 0.0078125
    %v1874 = vmul.f32 %v1869, 0.0078125
    %v1875 = vmul.f32 %v1871, 0.0078125
    %v1876 = vsub.f32 %v1843, %v1872
    %v1877 = vsub.f32 %v1849, %v1873
    %v1878 = vsub.f32 %v1855, %v1874
    %v1879 = vsub.f32 %v1861, %v1875
    %v1880 = vmul.f32 %v1876, %v1876
    %v1881 = vmul.f32 %v1877, %v1877
    %v1882 = vmul.f32 %v1878, %v1878
    %v1883 = vmul.f32 %v1879, %v1879
    %1884 = vadd.xlane.f32.xlu0 %v1880
    %v1885 = vpop.xlane.xlu0 %1884
    %1886 = vadd.xlane.f32.xlu0 %v1881
    %v1887 = vpop.xlane.xlu0 %1886
    %1888 = vadd.xlane.f32.xlu0 %v1882
    %v1889 = vpop.xlane.xlu0 %1888
    %1890 = vadd.xlane.f32.xlu0 %v1883
    %v1891 = vpop.xlane.xlu0 %1890
    %v1892 = vmul.f32 %v1885, 0.0078125
    %v1893 = vmul.f32 %v1887, 0.0078125
    %v1894 = vmul.f32 %v1889, 0.0078125
    %v1895 = vmul.f32 %v1891, 0.0078125
    %v1896 = vadd.f32 %v1892, 1e-05
    %v1897 = vadd.f32 %v1893, 1e-05
    %v1898 = vadd.f32 %v1894, 1e-05
    %v1899 = vadd.f32 %v1895, 1e-05
    %v1900 = vrsqrt.pop %v1896
    %v1901 = vrsqrt.pop %v1897
    %v1902 = vrsqrt.pop %v1898
    %v1903 = vrsqrt.pop %v1899
    %v1904 = vmul.f32 %v1876, %v1900
    %v1905 = vmul.f32 %v1877, %v1901
    %v1906 = vmul.f32 %v1878, %v1902
    %v1907 = vmul.f32 %v1879, %v1903
    %1909 = vset.pattern.permute.xlu0 0
    %1910 = vperm.xlu0 %1909, %v1038
    %v1911 = vpop.permute.xlu0 %1910
    %1914 = vset.pattern.permute.xlu0 0
    %1915 = vperm.xlu0 %1914, %v1039
    %v1916 = vpop.permute.xlu0 %1915
    %1919 = vset.pattern.permute.xlu0 0
    %1920 = vperm.xlu0 %1919, %v1040
    %v1921 = vpop.permute.xlu0 %1920
    %1924 = vset.pattern.permute.xlu0 0
    %1925 = vperm.xlu0 %1924, %v1041
    %v1926 = vpop.permute.xlu0 %1925
    %v1928 = vmul.f32 %v1904, %v1911
    %v1929 = vmul.f32 %v1905, %v1916
    %v1930 = vmul.f32 %v1906, %v1921
    %v1931 = vmul.f32 %v1907, %v1926
    %1933 = vset.pattern.permute.xlu0 0
    %1934 = vperm.xlu0 %1933, %v1042
    %v1935 = vpop.permute.xlu0 %1934
    %1938 = vset.pattern.permute.xlu0 0
    %1939 = vperm.xlu0 %1938, %v1043
    %v1940 = vpop.permute.xlu0 %1939
    %1943 = vset.pattern.permute.xlu0 0
    %1944 = vperm.xlu0 %1943, %v1044
    %v1945 = vpop.permute.xlu0 %1944
    %1948 = vset.pattern.permute.xlu0 0
    %1949 = vperm.xlu0 %1948, %v1045
    %v1950 = vpop.permute.xlu0 %1949
    %v1952 = vadd.f32 %v1928, %v1935
    %v1953 = vadd.f32 %v1929, %v1940
    %v1954 = vadd.f32 %v1930, %v1945
    %v1955 = vadd.f32 %v1931, %v1950
    %v1956 = vmax.f32 %v1952, 0.0
    %v1957 = vmax.f32 %v1953, 0.0
    %v1958 = vmax.f32 %v1954, 0.0
    %v1959 = vmax.f32 %v1955, 0.0
    %v1960 = vlaneseq
    %v1961 = vshrl.u32 %v1960, 7
    %v1962 = vadd.s32 %v1961, 8
    %v1963 = vadd.s32 %v1961, 16
    %v1964 = vadd.s32 %v1961, 24
    %v1965 = vadd.s32 %v1961, 32
    %v1966 = vadd.s32 %v1961, 40
    %v1967 = vadd.s32 %v1961, 48
    %v1968 = vadd.s32 %v1961, 56
    %v1969 = vadd.s32 %v1961, 64
    %v1970 = vadd.s32 %v1961, 72
    %v1971 = vadd.s32 %v1961, 80
    %v1972 = vadd.s32 %v1961, 88
    %v1973 = vadd.s32 %v1961, 96
    %v1974 = vadd.s32 %v1961, 104
    %v1975 = vadd.s32 %v1961, 112
    %v1976 = vadd.s32 %v1961, 120
    %v1977 = vmul.u32 %v52, 16
    %vm1978 = vcmp.ge.s32.totalorder %v1961, %v1977
    %vm1979 = vcmp.ge.s32.totalorder %v1962, %v1977
    %vm1980 = vcmp.ge.s32.totalorder %v1963, %v1977
    %vm1981 = vcmp.ge.s32.totalorder %v1964, %v1977
    %vm1982 = vcmp.ge.s32.totalorder %v1965, %v1977
    %vm1983 = vcmp.ge.s32.totalorder %v1966, %v1977
    %vm1984 = vcmp.ge.s32.totalorder %v1967, %v1977
    %vm1985 = vcmp.ge.s32.totalorder %v1968, %v1977
    %vm1986 = vcmp.ge.s32.totalorder %v1969, %v1977
    %vm1987 = vcmp.ge.s32.totalorder %v1970, %v1977
    %vm1988 = vcmp.ge.s32.totalorder %v1971, %v1977
    %vm1989 = vcmp.ge.s32.totalorder %v1972, %v1977
    %vm1990 = vcmp.ge.s32.totalorder %v1973, %v1977
    %vm1991 = vcmp.ge.s32.totalorder %v1974, %v1977
    %vm1992 = vcmp.ge.s32.totalorder %v1975, %v1977
    %vm1993 = vcmp.ge.s32.totalorder %v1976, %v1977
    %v1994 = vadd.s32 %v52, 1
    %v1995 = vmul.u32 %v1994, 16
    %vm1996 = vcmp.lt.s32.totalorder %v1961, %v1995
    %vm1997 = vcmp.lt.s32.totalorder %v1962, %v1995
    %vm1998 = vcmp.lt.s32.totalorder %v1963, %v1995
    %vm1999 = vcmp.lt.s32.totalorder %v1964, %v1995
    %vm2000 = vcmp.lt.s32.totalorder %v1965, %v1995
    %vm2001 = vcmp.lt.s32.totalorder %v1966, %v1995
    %vm2002 = vcmp.lt.s32.totalorder %v1967, %v1995
    %vm2003 = vcmp.lt.s32.totalorder %v1968, %v1995
    %vm2004 = vcmp.lt.s32.totalorder %v1969, %v1995
    %vm2005 = vcmp.lt.s32.totalorder %v1970, %v1995
    %vm2006 = vcmp.lt.s32.totalorder %v1971, %v1995
    %vm2007 = vcmp.lt.s32.totalorder %v1972, %v1995
    %vm2008 = vcmp.lt.s32.totalorder %v1973, %v1995
    %vm2009 = vcmp.lt.s32.totalorder %v1974, %v1995
    %vm2010 = vcmp.lt.s32.totalorder %v1975, %v1995
    %vm2011 = vcmp.lt.s32.totalorder %v1976, %v1995
    %vm2012 = vmand %vm1978, %vm1996
    %vm2013 = vmand %vm1979, %vm1997
    %vm2014 = vmand %vm1980, %vm1998
    %vm2015 = vmand %vm1981, %vm1999
    %vm2016 = vmand %vm1982, %vm2000
    %vm2017 = vmand %vm1983, %vm2001
    %vm2018 = vmand %vm1984, %vm2002
    %vm2019 = vmand %vm1985, %vm2003
    %vm2020 = vmand %vm1986, %vm2004
    %vm2021 = vmand %vm1987, %vm2005
    %vm2022 = vmand %vm1988, %vm2006
    %vm2023 = vmand %vm1989, %vm2007
    %vm2024 = vmand %vm1990, %vm2008
    %vm2025 = vmand %vm1991, %vm2009
    %vm2026 = vmand %vm1992, %vm2010
    %vm2027 = vmand %vm1993, %vm2011
    %v2028 = vsel %vm2012, 1.0, 0.0
    %v2029 = vsel %vm2013, 1.0, 0.0
    %v2030 = vsel %vm2014, 1.0, 0.0
    %v2031 = vsel %vm2015, 1.0, 0.0
    %v2032 = vsel %vm2016, 1.0, 0.0
    %v2033 = vsel %vm2017, 1.0, 0.0
    %v2034 = vsel %vm2018, 1.0, 0.0
    %v2035 = vsel %vm2019, 1.0, 0.0
    %v2036 = vsel %vm2020, 1.0, 0.0
    %v2037 = vsel %vm2021, 1.0, 0.0
    %v2038 = vsel %vm2022, 1.0, 0.0
    %v2039 = vsel %vm2023, 1.0, 0.0
    %v2040 = vsel %vm2024, 1.0, 0.0
    %v2041 = vsel %vm2025, 1.0, 0.0
    %v2042 = vsel %vm2026, 1.0, 0.0
    %v2043 = vsel %vm2027, 1.0, 0.0
    %v2044 = vmul.u32 %v1961, 16
    %vm2045 = vcmp.ge.s32.totalorder %v52, %v2044
    %v2046 = vadd.s32 %v1961, 1
    %v2047 = vmul.u32 %v2046, 16
    %vm2048 = vcmp.lt.s32.totalorder %v52, %v2047
    %vm2049 = vmand %vm2045, %vm2048
    %v2050 = vsel %vm2049, 1.0, 0.0
    %2051 = vmatprep.subr.mxu0 0.0
    %2052 = vmatpush1.msra.mxu0 %v2043
    %2053 = vmatprep.subr.mxu0 0.0
    %2054 = vmatpush1.msra.mxu0 %v2042
    %2055 = vmatprep.subr.mxu0 0.0
    %2056 = vmatpush1.msra.mxu0 %v2041
    %2057 = vmatprep.subr.mxu0 0.0
    %2058 = vmatpush1.msra.mxu0 %v2040
    %2059 = vmatprep.subr.mxu0 0.0
    %2060 = vmatpush1.msra.mxu0 %v2039
    %2061 = vmatprep.subr.mxu0 0.0
    %2062 = vmatpush1.msra.mxu0 %v2038
    %2063 = vmatprep.subr.mxu0 0.0
    %2064 = vmatpush1.msra.mxu0 %v2037
    %2065 = vmatprep.subr.mxu0 0.0
    %2066 = vmatpush1.msra.mxu0 %v2036
    %2067 = vmatprep.subr.mxu0 0.0
    %2068 = vmatpush1.msra.mxu0 %v2035
    %2069 = vmatprep.subr.mxu0 0.0
    %2070 = vmatpush1.msra.mxu0 %v2034
    %2071 = vmatprep.subr.mxu0 0.0
    %2072 = vmatpush1.msra.mxu0 %v2033
    %2073 = vmatprep.subr.mxu0 0.0
    %2074 = vmatpush1.msra.mxu0 %v2032
    %2075 = vmatprep.subr.mxu0 0.0
    %2076 = vmatpush1.msra.mxu0 %v2031
    %2077 = vmatprep.subr.mxu0 0.0
    %2078 = vmatpush1.msra.mxu0 %v2030
    %2079 = vmatprep.subr.mxu0 0.0
    %2080 = vmatpush1.msra.mxu0 %v2029
    %2081 = vmatprep.subr.mxu0 0.0
    %2082 = vmatpush1.msra.mxu0 %v2028
    %2083 = vmatprep.subr.mxu0 0.0
    %2084 = vmatpush2.msra.mxu0 0.0
    %2085 = vmatprep.subr.mxu0 0.0
    %2086 = vmatpush2.msra.mxu0 0.0
    %2087 = vmatprep.subr.mxu0 0.0
    %2088 = vmatpush2.msra.mxu0 0.0
    %2089 = vmatprep.subr.mxu0 0.0
    %2090 = vmatpush2.msra.mxu0 0.0
    %2091 = vmatprep.subr.mxu0 0.0
    %2092 = vmatpush2.msra.mxu0 0.0
    %2093 = vmatprep.subr.mxu0 0.0
    %2094 = vmatpush2.msra.mxu0 0.0
    %2095 = vmatprep.subr.mxu0 0.0
    %2096 = vmatpush2.msra.mxu0 0.0
    %2097 = vmatprep.subr.mxu0 0.0
    %2098 = vmatpush2.msra.mxu0 0.0
    %2099 = vmatprep.subr.mxu0 0.0
    %2100 = vmatpush2.msra.mxu0 0.0
    %2101 = vmatprep.subr.mxu0 0.0
    %2102 = vmatpush2.msra.mxu0 0.0
    %2103 = vmatprep.subr.mxu0 0.0
    %2104 = vmatpush2.msra.mxu0 0.0
    %2105 = vmatprep.subr.mxu0 0.0
    %2106 = vmatpush2.msra.mxu0 0.0
    %2107 = vmatprep.subr.mxu0 0.0
    %2108 = vmatpush2.msra.mxu0 0.0
    %2109 = vmatprep.subr.mxu0 0.0
    %2110 = vmatpush2.msra.mxu0 0.0
    %2111 = vmatprep.subr.mxu0 0.0
    %2112 = vmatpush2.msra.mxu0 0.0
    %2113 = vmatprep.subr.mxu0 0.0
    %2114 = vmatpush2.msra.mxu0 0.0
    %2115 = vmatprep.mubr.f32.mxu0 0.0
    %v2116 = vand.u32 %v1956, 4294901760
    %v2117 = vsub.f32 %v1956, %v2116
    %v2118 = vand.u32 %v2117, 4294901760
    %v2119 = vsub.f32 %v2117, %v2118
    %v2120 = vand.u32 %v2119, 4294901760
    %2121 = vmatmul.mubr.f32.gmra.mxu0 %v2120
    %v2122 = vpop.f32.mrf.mxu0
    %v2123 = vadd.f32 0.0, %v2122
    %v2124 = vpop.f32.mrf.mxu0
    %2125 = vmatprep.mubr.f32.mxu0 0.0
    %v2126 = vand.u32 %v1957, 4294901760
    %v2127 = vsub.f32 %v1957, %v2126
    %v2128 = vand.u32 %v2127, 4294901760
    %v2129 = vsub.f32 %v2127, %v2128
    %v2130 = vand.u32 %v2129, 4294901760
    %2131 = vmatmul.mubr.f32.gmra.mxu0 %v2130
    %v2132 = vpop.f32.mrf.mxu0
    %v2133 = vadd.f32 0.0, %v2132
    %v2134 = vpop.f32.mrf.mxu0
    %2135 = vmatprep.mubr.f32.mxu0 0.0
    %v2136 = vand.u32 %v1958, 4294901760
    %v2137 = vsub.f32 %v1958, %v2136
    %v2138 = vand.u32 %v2137, 4294901760
    %v2139 = vsub.f32 %v2137, %v2138
    %v2140 = vand.u32 %v2139, 4294901760
    %2141 = vmatmul.mubr.f32.gmra.mxu0 %v2140
    %v2142 = vpop.f32.mrf.mxu0
    %v2143 = vadd.f32 0.0, %v2142
    %v2144 = vpop.f32.mrf.mxu0
    %2145 = vmatprep.mubr.f32.mxu0 0.0
    %v2146 = vand.u32 %v1959, 4294901760
    %v2147 = vsub.f32 %v1959, %v2146
    %v2148 = vand.u32 %v2147, 4294901760
    %v2149 = vsub.f32 %v2147, %v2148
    %v2150 = vand.u32 %v2149, 4294901760
    %2151 = vmatmul.mubr.f32.gmra.mxu0 %v2150
    %v2152 = vpop.f32.mrf.mxu0
    %v2153 = vadd.f32 0.0, %v2152
    %v2154 = vpop.f32.mrf.mxu0
    %2155 = vdwg.mxu0
    %2156 = vmatprep.subr.mxu0 0.0
    %v2157 = vsub.f32 %v2043, %v2043
    %v2158 = vand.u32 %v2157, 4294901760
    %v2159 = vsub.f32 %v2157, %v2158
    %v2160 = vand.u32 %v2159, 4294901760
    %2161 = vmatpush1.msra.mxu0 %v2160
    %2162 = vmatprep.subr.mxu0 0.0
    %v2163 = vsub.f32 %v2042, %v2042
    %v2164 = vand.u32 %v2163, 4294901760
    %v2165 = vsub.f32 %v2163, %v2164
    %v2166 = vand.u32 %v2165, 4294901760
    %2167 = vmatpush1.msra.mxu0 %v2166
    %2168 = vmatprep.subr.mxu0 0.0
    %v2169 = vsub.f32 %v2041, %v2041
    %v2170 = vand.u32 %v2169, 4294901760
    %v2171 = vsub.f32 %v2169, %v2170
    %v2172 = vand.u32 %v2171, 4294901760
    %2173 = vmatpush1.msra.mxu0 %v2172
    %2174 = vmatprep.subr.mxu0 0.0
    %v2175 = vsub.f32 %v2040, %v2040
    %v2176 = vand.u32 %v2175, 4294901760
    %v2177 = vsub.f32 %v2175, %v2176
    %v2178 = vand.u32 %v2177, 4294901760
    %2179 = vmatpush1.msra.mxu0 %v2178
    %2180 = vmatprep.subr.mxu0 0.0
    %v2181 = vsub.f32 %v2039, %v2039
    %v2182 = vand.u32 %v2181, 4294901760
    %v2183 = vsub.f32 %v2181, %v2182
    %v2184 = vand.u32 %v2183, 4294901760
    %2185 = vmatpush1.msra.mxu0 %v2184
    %2186 = vmatprep.subr.mxu0 0.0
    %v2187 = vsub.f32 %v2038, %v2038
    %v2188 = vand.u32 %v2187, 4294901760
    %v2189 = vsub.f32 %v2187, %v2188
    %v2190 = vand.u32 %v2189, 4294901760
    %2191 = vmatpush1.msra.mxu0 %v2190
    %2192 = vmatprep.subr.mxu0 0.0
    %v2193 = vsub.f32 %v2037, %v2037
    %v2194 = vand.u32 %v2193, 4294901760
    %v2195 = vsub.f32 %v2193, %v2194
    %v2196 = vand.u32 %v2195, 4294901760
    %2197 = vmatpush1.msra.mxu0 %v2196
    %2198 = vmatprep.subr.mxu0 0.0
    %v2199 = vsub.f32 %v2036, %v2036
    %v2200 = vand.u32 %v2199, 4294901760
    %v2201 = vsub.f32 %v2199, %v2200
    %v2202 = vand.u32 %v2201, 4294901760
    %2203 = vmatpush1.msra.mxu0 %v2202
    %2204 = vmatprep.subr.mxu0 0.0
    %v2205 = vsub.f32 %v2035, %v2035
    %v2206 = vand.u32 %v2205, 4294901760
    %v2207 = vsub.f32 %v2205, %v2206
    %v2208 = vand.u32 %v2207, 4294901760
    %2209 = vmatpush1.msra.mxu0 %v2208
    %2210 = vmatprep.subr.mxu0 0.0
    %v2211 = vsub.f32 %v2034, %v2034
    %v2212 = vand.u32 %v2211, 4294901760
    %v2213 = vsub.f32 %v2211, %v2212
    %v2214 = vand.u32 %v2213, 4294901760
    %2215 = vmatpush1.msra.mxu0 %v2214
    %2216 = vmatprep.subr.mxu0 0.0
    %v2217 = vsub.f32 %v2033, %v2033
    %v2218 = vand.u32 %v2217, 4294901760
    %v2219 = vsub.f32 %v2217, %v2218
    %v2220 = vand.u32 %v2219, 4294901760
    %2221 = vmatpush1.msra.mxu0 %v2220
    %2222 = vmatprep.subr.mxu0 0.0
    %v2223 = vsub.f32 %v2032, %v2032
    %v2224 = vand.u32 %v2223, 4294901760
    %v2225 = vsub.f32 %v2223, %v2224
    %v2226 = vand.u32 %v2225, 4294901760
    %2227 = vmatpush1.msra.mxu0 %v2226
    %2228 = vmatprep.subr.mxu0 0.0
    %v2229 = vsub.f32 %v2031, %v2031
    %v2230 = vand.u32 %v2229, 4294901760
    %v2231 = vsub.f32 %v2229, %v2230
    %v2232 = vand.u32 %v2231, 4294901760
    %2233 = vmatpush1.msra.mxu0 %v2232
    %2234 = vmatprep.subr.mxu0 0.0
    %v2235 = vsub.f32 %v2030, %v2030
    %v2236 = vand.u32 %v2235, 4294901760
    %v2237 = vsub.f32 %v2235, %v2236
    %v2238 = vand.u32 %v2237, 4294901760
    %2239 = vmatpush1.msra.mxu0 %v2238
    %2240 = vmatprep.subr.mxu0 0.0
    %v2241 = vsub.f32 %v2029, %v2029
    %v2242 = vand.u32 %v2241, 4294901760
    %v2243 = vsub.f32 %v2241, %v2242
    %v2244 = vand.u32 %v2243, 4294901760
    %2245 = vmatpush1.msra.mxu0 %v2244
    %2246 = vmatprep.subr.mxu0 0.0
    %v2247 = vsub.f32 %v2028, %v2028
    %v2248 = vand.u32 %v2247, 4294901760
    %v2249 = vsub.f32 %v2247, %v2248
    %v2250 = vand.u32 %v2249, 4294901760
    %2251 = vmatpush1.msra.mxu0 %v2250
    %2252 = vmatprep.subr.mxu0 0.0
    %2253 = vmatpush2.msra.mxu0 0.0
    %2254 = vmatprep.subr.mxu0 0.0
    %2255 = vmatpush2.msra.mxu0 0.0
    %2256 = vmatprep.subr.mxu0 0.0
    %2257 = vmatpush2.msra.mxu0 0.0
    %2258 = vmatprep.subr.mxu0 0.0
    %2259 = vmatpush2.msra.mxu0 0.0
    %2260 = vmatprep.subr.mxu0 0.0
    %2261 = vmatpush2.msra.mxu0 0.0
    %2262 = vmatprep.subr.mxu0 0.0
    %2263 = vmatpush2.msra.mxu0 0.0
    %2264 = vmatprep.subr.mxu0 0.0
    %2265 = vmatpush2.msra.mxu0 0.0
    %2266 = vmatprep.subr.mxu0 0.0
    %2267 = vmatpush2.msra.mxu0 0.0
    %2268 = vmatprep.subr.mxu0 0.0
    %2269 = vmatpush2.msra.mxu0 0.0
    %2270 = vmatprep.subr.mxu0 0.0
    %2271 = vmatpush2.msra.mxu0 0.0
    %2272 = vmatprep.subr.mxu0 0.0
    %2273 = vmatpush2.msra.mxu0 0.0
    %2274 = vmatprep.subr.mxu0 0.0
    %2275 = vmatpush2.msra.mxu0 0.0
    %2276 = vmatprep.subr.mxu0 0.0
    %2277 = vmatpush2.msra.mxu0 0.0
    %2278 = vmatprep.subr.mxu0 0.0
    %2279 = vmatpush2.msra.mxu0 0.0
    %2280 = vmatprep.subr.mxu0 0.0
    %2281 = vmatpush2.msra.mxu0 0.0
    %2282 = vmatprep.subr.mxu0 0.0
    %2283 = vmatpush2.msra.mxu0 0.0
    %2284 = vmatprep.mubr.f32.mxu0 0.0
    %v2285 = vand.u32 %v1956, 4294901760
    %2286 = vmatmul.mubr.f32.gmra.mxu0 %v2285
    %v2287 = vpop.f32.mrf.mxu0
    %v2288 = vadd.f32 %v2123, %v2287
    %v2289 = vpop.f32.mrf.mxu0
    %2290 = vmatprep.mubr.f32.mxu0 0.0
    %v2291 = vand.u32 %v1957, 4294901760
    %2292 = vmatmul.mubr.f32.gmra.mxu0 %v2291
    %v2293 = vpop.f32.mrf.mxu0
    %v2294 = vadd.f32 %v2133, %v2293
    %v2295 = vpop.f32.mrf.mxu0
    %2296 = vmatprep.mubr.f32.mxu0 0.0
    %v2297 = vand.u32 %v1958, 4294901760
    %2298 = vmatmul.mubr.f32.gmra.mxu0 %v2297
    %v2299 = vpop.f32.mrf.mxu0
    %v2300 = vadd.f32 %v2143, %v2299
    %v2301 = vpop.f32.mrf.mxu0
    %2302 = vmatprep.mubr.f32.mxu0 0.0
    %v2303 = vand.u32 %v1959, 4294901760
    %2304 = vmatmul.mubr.f32.gmra.mxu0 %v2303
    %v2305 = vpop.f32.mrf.mxu0
    %v2306 = vadd.f32 %v2153, %v2305
    %v2307 = vpop.f32.mrf.mxu0
    %2308 = vdwg.mxu0
    %2309 = vmatprep.subr.mxu0 0.0
    %v2310 = vsub.f32 %v2043, %v2043
    %2311 = vmatpush1.msra.mxu0 %v2310
    %2312 = vmatprep.subr.mxu0 0.0
    %v2313 = vsub.f32 %v2042, %v2042
    %2314 = vmatpush1.msra.mxu0 %v2313
    %2315 = vmatprep.subr.mxu0 0.0
    %v2316 = vsub.f32 %v2041, %v2041
    %2317 = vmatpush1.msra.mxu0 %v2316
    %2318 = vmatprep.subr.mxu0 0.0
    %v2319 = vsub.f32 %v2040, %v2040
    %2320 = vmatpush1.msra.mxu0 %v2319
    %2321 = vmatprep.subr.mxu0 0.0
    %v2322 = vsub.f32 %v2039, %v2039
    %2323 = vmatpush1.msra.mxu0 %v2322
    %2324 = vmatprep.subr.mxu0 0.0
    %v2325 = vsub.f32 %v2038, %v2038
    %2326 = vmatpush1.msra.mxu0 %v2325
    %2327 = vmatprep.subr.mxu0 0.0
    %v2328 = vsub.f32 %v2037, %v2037
    %2329 = vmatpush1.msra.mxu0 %v2328
    %2330 = vmatprep.subr.mxu0 0.0
    %v2331 = vsub.f32 %v2036, %v2036
    %2332 = vmatpush1.msra.mxu0 %v2331
    %2333 = vmatprep.subr.mxu0 0.0
    %v2334 = vsub.f32 %v2035, %v2035
    %2335 = vmatpush1.msra.mxu0 %v2334
    %2336 = vmatprep.subr.mxu0 0.0
    %v2337 = vsub.f32 %v2034, %v2034
    %2338 = vmatpush1.msra.mxu0 %v2337
    %2339 = vmatprep.subr.mxu0 0.0
    %v2340 = vsub.f32 %v2033, %v2033
    %2341 = vmatpush1.msra.mxu0 %v2340
    %2342 = vmatprep.subr.mxu0 0.0
    %v2343 = vsub.f32 %v2032, %v2032
    %2344 = vmatpush1.msra.mxu0 %v2343
    %2345 = vmatprep.subr.mxu0 0.0
    %v2346 = vsub.f32 %v2031, %v2031
    %2347 = vmatpush1.msra.mxu0 %v2346
    %2348 = vmatprep.subr.mxu0 0.0
    %v2349 = vsub.f32 %v2030, %v2030
    %2350 = vmatpush1.msra.mxu0 %v2349
    %2351 = vmatprep.subr.mxu0 0.0
    %v2352 = vsub.f32 %v2029, %v2029
    %2353 = vmatpush1.msra.mxu0 %v2352
    %2354 = vmatprep.subr.mxu0 0.0
    %v2355 = vsub.f32 %v2028, %v2028
    %2356 = vmatpush1.msra.mxu0 %v2355
    %2357 = vmatprep.subr.mxu0 0.0
    %2358 = vmatpush2.msra.mxu0 0.0
    %2359 = vmatprep.subr.mxu0 0.0
    %2360 = vmatpush2.msra.mxu0 0.0
    %2361 = vmatprep.subr.mxu0 0.0
    %2362 = vmatpush2.msra.mxu0 0.0
    %2363 = vmatprep.subr.mxu0 0.0
    %2364 = vmatpush2.msra.mxu0 0.0
    %2365 = vmatprep.subr.mxu0 0.0
    %2366 = vmatpush2.msra.mxu0 0.0
    %2367 = vmatprep.subr.mxu0 0.0
    %2368 = vmatpush2.msra.mxu0 0.0
    %2369 = vmatprep.subr.mxu0 0.0
    %2370 = vmatpush2.msra.mxu0 0.0
    %2371 = vmatprep.subr.mxu0 0.0
    %2372 = vmatpush2.msra.mxu0 0.0
    %2373 = vmatprep.subr.mxu0 0.0
    %2374 = vmatpush2.msra.mxu0 0.0
    %2375 = vmatprep.subr.mxu0 0.0
    %2376 = vmatpush2.msra.mxu0 0.0
    %2377 = vmatprep.subr.mxu0 0.0
    %2378 = vmatpush2.msra.mxu0 0.0
    %2379 = vmatprep.subr.mxu0 0.0
    %2380 = vmatpush2.msra.mxu0 0.0
    %2381 = vmatprep.subr.mxu0 0.0
    %2382 = vmatpush2.msra.mxu0 0.0
    %2383 = vmatprep.subr.mxu0 0.0
    %2384 = vmatpush2.msra.mxu0 0.0
    %2385 = vmatprep.subr.mxu0 0.0
    %2386 = vmatpush2.msra.mxu0 0.0
    %2387 = vmatprep.subr.mxu0 0.0
    %2388 = vmatpush2.msra.mxu0 0.0
    %2389 = vmatprep.mubr.f32.mxu0 0.0
    %v2390 = vand.u32 %v1956, 4294901760
    %v2391 = vsub.f32 %v1956, %v2390
    %2392 = vmatmul.mubr.f32.gmra.mxu0 %v2391
    %v2393 = vpop.f32.mrf.mxu0
    %v2394 = vadd.f32 %v2288, %v2393
    %v2395 = vpop.f32.mrf.mxu0
    %2396 = vmatprep.mubr.f32.mxu0 0.0
    %v2397 = vand.u32 %v1957, 4294901760
    %v2398 = vsub.f32 %v1957, %v2397
    %2399 = vmatmul.mubr.f32.gmra.mxu0 %v2398
    %v2400 = vpop.f32.mrf.mxu0
    %v2401 = vadd.f32 %v2294, %v2400
    %v2402 = vpop.f32.mrf.mxu0
    %2403 = vmatprep.mubr.f32.mxu0 0.0
    %v2404 = vand.u32 %v1958, 4294901760
    %v2405 = vsub.f32 %v1958, %v2404
    %2406 = vmatmul.mubr.f32.gmra.mxu0 %v2405
    %v2407 = vpop.f32.mrf.mxu0
    %v2408 = vadd.f32 %v2300, %v2407
    %v2409 = vpop.f32.mrf.mxu0
    %2410 = vmatprep.mubr.f32.mxu0 0.0
    %v2411 = vand.u32 %v1959, 4294901760
    %v2412 = vsub.f32 %v1959, %v2411
    %2413 = vmatmul.mubr.f32.gmra.mxu0 %v2412
    %v2414 = vpop.f32.mrf.mxu0
    %v2415 = vadd.f32 %v2306, %v2414
    %v2416 = vpop.f32.mrf.mxu0
    %2417 = vdwg.mxu0
    %2418 = vmatprep.subr.mxu0 0.0
    %2419 = vmatpush1.msra.mxu0 %v2043
    %2420 = vmatprep.subr.mxu0 0.0
    %2421 = vmatpush1.msra.mxu0 %v2042
    %2422 = vmatprep.subr.mxu0 0.0
    %2423 = vmatpush1.msra.mxu0 %v2041
    %2424 = vmatprep.subr.mxu0 0.0
    %2425 = vmatpush1.msra.mxu0 %v2040
    %2426 = vmatprep.subr.mxu0 0.0
    %2427 = vmatpush1.msra.mxu0 %v2039
    %2428 = vmatprep.subr.mxu0 0.0
    %2429 = vmatpush1.msra.mxu0 %v2038
    %2430 = vmatprep.subr.mxu0 0.0
    %2431 = vmatpush1.msra.mxu0 %v2037
    %2432 = vmatprep.subr.mxu0 0.0
    %2433 = vmatpush1.msra.mxu0 %v2036
    %2434 = vmatprep.subr.mxu0 0.0
    %2435 = vmatpush1.msra.mxu0 %v2035
    %2436 = vmatprep.subr.mxu0 0.0
    %2437 = vmatpush1.msra.mxu0 %v2034
    %2438 = vmatprep.subr.mxu0 0.0
    %2439 = vmatpush1.msra.mxu0 %v2033
    %2440 = vmatprep.subr.mxu0 0.0
    %2441 = vmatpush1.msra.mxu0 %v2032
    %2442 = vmatprep.subr.mxu0 0.0
    %2443 = vmatpush1.msra.mxu0 %v2031
    %2444 = vmatprep.subr.mxu0 0.0
    %2445 = vmatpush1.msra.mxu0 %v2030
    %2446 = vmatprep.subr.mxu0 0.0
    %2447 = vmatpush1.msra.mxu0 %v2029
    %2448 = vmatprep.subr.mxu0 0.0
    %2449 = vmatpush1.msra.mxu0 %v2028
    %2450 = vmatprep.subr.mxu0 0.0
    %2451 = vmatpush2.msra.mxu0 0.0
    %2452 = vmatprep.subr.mxu0 0.0
    %2453 = vmatpush2.msra.mxu0 0.0
    %2454 = vmatprep.subr.mxu0 0.0
    %2455 = vmatpush2.msra.mxu0 0.0
    %2456 = vmatprep.subr.mxu0 0.0
    %2457 = vmatpush2.msra.mxu0 0.0
    %2458 = vmatprep.subr.mxu0 0.0
    %2459 = vmatpush2.msra.mxu0 0.0
    %2460 = vmatprep.subr.mxu0 0.0
    %2461 = vmatpush2.msra.mxu0 0.0
    %2462 = vmatprep.subr.mxu0 0.0
    %2463 = vmatpush2.msra.mxu0 0.0
    %2464 = vmatprep.subr.mxu0 0.0
    %2465 = vmatpush2.msra.mxu0 0.0
    %2466 = vmatprep.subr.mxu0 0.0
    %2467 = vmatpush2.msra.mxu0 0.0
    %2468 = vmatprep.subr.mxu0 0.0
    %2469 = vmatpush2.msra.mxu0 0.0
    %2470 = vmatprep.subr.mxu0 0.0
    %2471 = vmatpush2.msra.mxu0 0.0
    %2472 = vmatprep.subr.mxu0 0.0
    %2473 = vmatpush2.msra.mxu0 0.0
    %2474 = vmatprep.subr.mxu0 0.0
    %2475 = vmatpush2.msra.mxu0 0.0
    %2476 = vmatprep.subr.mxu0 0.0
    %2477 = vmatpush2.msra.mxu0 0.0
    %2478 = vmatprep.subr.mxu0 0.0
    %2479 = vmatpush2.msra.mxu0 0.0
    %2480 = vmatprep.subr.mxu0 0.0
    %2481 = vmatpush2.msra.mxu0 0.0
    %2482 = vmatprep.mubr.f32.mxu0 0.0
    %v2483 = vand.u32 %v1956, 4294901760
    %v2484 = vsub.f32 %v1956, %v2483
    %v2485 = vand.u32 %v2484, 4294901760
    %2486 = vmatmul.mubr.f32.gmra.mxu0 %v2485
    %v2487 = vpop.f32.mrf.mxu0
    %v2488 = vadd.f32 %v2394, %v2487
    %v2489 = vpop.f32.mrf.mxu0
    %2490 = vmatprep.mubr.f32.mxu0 0.0
    %v2491 = vand.u32 %v1957, 4294901760
    %v2492 = vsub.f32 %v1957, %v2491
    %v2493 = vand.u32 %v2492, 4294901760
    %2494 = vmatmul.mubr.f32.gmra.mxu0 %v2493
    %v2495 = vpop.f32.mrf.mxu0
    %v2496 = vadd.f32 %v2401, %v2495
    %v2497 = vpop.f32.mrf.mxu0
    %2498 = vmatprep.mubr.f32.mxu0 0.0
    %v2499 = vand.u32 %v1958, 4294901760
    %v2500 = vsub.f32 %v1958, %v2499
    %v2501 = vand.u32 %v2500, 4294901760
    %2502 = vmatmul.mubr.f32.gmra.mxu0 %v2501
    %v2503 = vpop.f32.mrf.mxu0
    %v2504 = vadd.f32 %v2408, %v2503
    %v2505 = vpop.f32.mrf.mxu0
    %2506 = vmatprep.mubr.f32.mxu0 0.0
    %v2507 = vand.u32 %v1959, 4294901760
    %v2508 = vsub.f32 %v1959, %v2507
    %v2509 = vand.u32 %v2508, 4294901760
    %2510 = vmatmul.mubr.f32.gmra.mxu0 %v2509
    %v2511 = vpop.f32.mrf.mxu0
    %v2512 = vadd.f32 %v2415, %v2511
    %v2513 = vpop.f32.mrf.mxu0
    %2514 = vdwg.mxu0
    %2515 = vmatprep.subr.mxu0 0.0
    %v2516 = vsub.f32 %v2043, %v2043
    %v2517 = vand.u32 %v2516, 4294901760
    %2518 = vmatpush1.msra.mxu0 %v2517
    %2519 = vmatprep.subr.mxu0 0.0
    %v2520 = vsub.f32 %v2042, %v2042
    %v2521 = vand.u32 %v2520, 4294901760
    %2522 = vmatpush1.msra.mxu0 %v2521
    %2523 = vmatprep.subr.mxu0 0.0
    %v2524 = vsub.f32 %v2041, %v2041
    %v2525 = vand.u32 %v2524, 4294901760
    %2526 = vmatpush1.msra.mxu0 %v2525
    %2527 = vmatprep.subr.mxu0 0.0
    %v2528 = vsub.f32 %v2040, %v2040
    %v2529 = vand.u32 %v2528, 4294901760
    %2530 = vmatpush1.msra.mxu0 %v2529
    %2531 = vmatprep.subr.mxu0 0.0
    %v2532 = vsub.f32 %v2039, %v2039
    %v2533 = vand.u32 %v2532, 4294901760
    %2534 = vmatpush1.msra.mxu0 %v2533
    %2535 = vmatprep.subr.mxu0 0.0
    %v2536 = vsub.f32 %v2038, %v2038
    %v2537 = vand.u32 %v2536, 4294901760
    %2538 = vmatpush1.msra.mxu0 %v2537
    %2539 = vmatprep.subr.mxu0 0.0
    %v2540 = vsub.f32 %v2037, %v2037
    %v2541 = vand.u32 %v2540, 4294901760
    %2542 = vmatpush1.msra.mxu0 %v2541
    %2543 = vmatprep.subr.mxu0 0.0
    %v2544 = vsub.f32 %v2036, %v2036
    %v2545 = vand.u32 %v2544, 4294901760
    %2546 = vmatpush1.msra.mxu0 %v2545
    %2547 = vmatprep.subr.mxu0 0.0
    %v2548 = vsub.f32 %v2035, %v2035
    %v2549 = vand.u32 %v2548, 4294901760
    %2550 = vmatpush1.msra.mxu0 %v2549
    %2551 = vmatprep.subr.mxu0 0.0
    %v2552 = vsub.f32 %v2034, %v2034
    %v2553 = vand.u32 %v2552, 4294901760
    %2554 = vmatpush1.msra.mxu0 %v2553
    %2555 = vmatprep.subr.mxu0 0.0
    %v2556 = vsub.f32 %v2033, %v2033
    %v2557 = vand.u32 %v2556, 4294901760
    %2558 = vmatpush1.msra.mxu0 %v2557
    %2559 = vmatprep.subr.mxu0 0.0
    %v2560 = vsub.f32 %v2032, %v2032
    %v2561 = vand.u32 %v2560, 4294901760
    %2562 = vmatpush1.msra.mxu0 %v2561
    %2563 = vmatprep.subr.mxu0 0.0
    %v2564 = vsub.f32 %v2031, %v2031
    %v2565 = vand.u32 %v2564, 4294901760
    %2566 = vmatpush1.msra.mxu0 %v2565
    %2567 = vmatprep.subr.mxu0 0.0
    %v2568 = vsub.f32 %v2030, %v2030
    %v2569 = vand.u32 %v2568, 4294901760
    %2570 = vmatpush1.msra.mxu0 %v2569
    %2571 = vmatprep.subr.mxu0 0.0
    %v2572 = vsub.f32 %v2029, %v2029
    %v2573 = vand.u32 %v2572, 4294901760
    %2574 = vmatpush1.msra.mxu0 %v2573
    %2575 = vmatprep.subr.mxu0 0.0
    %v2576 = vsub.f32 %v2028, %v2028
    %v2577 = vand.u32 %v2576, 4294901760
    %2578 = vmatpush1.msra.mxu0 %v2577
    %2579 = vmatprep.subr.mxu0 0.0
    %2580 = vmatpush2.msra.mxu0 0.0
    %2581 = vmatprep.subr.mxu0 0.0
    %2582 = vmatpush2.msra.mxu0 0.0
    %2583 = vmatprep.subr.mxu0 0.0
    %2584 = vmatpush2.msra.mxu0 0.0
    %2585 = vmatprep.subr.mxu0 0.0
    %2586 = vmatpush2.msra.mxu0 0.0
    %2587 = vmatprep.subr.mxu0 0.0
    %2588 = vmatpush2.msra.mxu0 0.0
    %2589 = vmatprep.subr.mxu0 0.0
    %2590 = vmatpush2.msra.mxu0 0.0
    %2591 = vmatprep.subr.mxu0 0.0
    %2592 = vmatpush2.msra.mxu0 0.0
    %2593 = vmatprep.subr.mxu0 0.0
    %2594 = vmatpush2.msra.mxu0 0.0
    %2595 = vmatprep.subr.mxu0 0.0
    %2596 = vmatpush2.msra.mxu0 0.0
    %2597 = vmatprep.subr.mxu0 0.0
    %2598 = vmatpush2.msra.mxu0 0.0
    %2599 = vmatprep.subr.mxu0 0.0
    %2600 = vmatpush2.msra.mxu0 0.0
    %2601 = vmatprep.subr.mxu0 0.0
    %2602 = vmatpush2.msra.mxu0 0.0
    %2603 = vmatprep.subr.mxu0 0.0
    %2604 = vmatpush2.msra.mxu0 0.0
    %2605 = vmatprep.subr.mxu0 0.0
    %2606 = vmatpush2.msra.mxu0 0.0
    %2607 = vmatprep.subr.mxu0 0.0
    %2608 = vmatpush2.msra.mxu0 0.0
    %2609 = vmatprep.subr.mxu0 0.0
    %2610 = vmatpush2.msra.mxu0 0.0
    %2611 = vmatprep.mubr.f32.mxu0 0.0
    %v2612 = vand.u32 %v1956, 4294901760
    %2613 = vmatmul.mubr.f32.gmra.mxu0 %v2612
    %v2614 = vpop.f32.mrf.mxu0
    %v2615 = vadd.f32 %v2488, %v2614
    %v2616 = vpop.f32.mrf.mxu0
    %2617 = vmatprep.mubr.f32.mxu0 0.0
    %v2618 = vand.u32 %v1957, 4294901760
    %2619 = vmatmul.mubr.f32.gmra.mxu0 %v2618
    %v2620 = vpop.f32.mrf.mxu0
    %v2621 = vadd.f32 %v2496, %v2620
    %v2622 = vpop.f32.mrf.mxu0
    %2623 = vmatprep.mubr.f32.mxu0 0.0
    %v2624 = vand.u32 %v1958, 4294901760
    %2625 = vmatmul.mubr.f32.gmra.mxu0 %v2624
    %v2626 = vpop.f32.mrf.mxu0
    %v2627 = vadd.f32 %v2504, %v2626
    %v2628 = vpop.f32.mrf.mxu0
    %2629 = vmatprep.mubr.f32.mxu0 0.0
    %v2630 = vand.u32 %v1959, 4294901760
    %2631 = vmatmul.mubr.f32.gmra.mxu0 %v2630
    %v2632 = vpop.f32.mrf.mxu0
    %v2633 = vadd.f32 %v2512, %v2632
    %v2634 = vpop.f32.mrf.mxu0
    %2635 = vdwg.mxu0
    %2636 = vmatprep.subr.mxu0 0.0
    %2637 = vmatpush1.msra.mxu0 %v2043
    %2638 = vmatprep.subr.mxu0 0.0
    %2639 = vmatpush1.msra.mxu0 %v2042
    %2640 = vmatprep.subr.mxu0 0.0
    %2641 = vmatpush1.msra.mxu0 %v2041
    %2642 = vmatprep.subr.mxu0 0.0
    %2643 = vmatpush1.msra.mxu0 %v2040
    %2644 = vmatprep.subr.mxu0 0.0
    %2645 = vmatpush1.msra.mxu0 %v2039
    %2646 = vmatprep.subr.mxu0 0.0
    %2647 = vmatpush1.msra.mxu0 %v2038
    %2648 = vmatprep.subr.mxu0 0.0
    %2649 = vmatpush1.msra.mxu0 %v2037
    %2650 = vmatprep.subr.mxu0 0.0
    %2651 = vmatpush1.msra.mxu0 %v2036
    %2652 = vmatprep.subr.mxu0 0.0
    %2653 = vmatpush1.msra.mxu0 %v2035
    %2654 = vmatprep.subr.mxu0 0.0
    %2655 = vmatpush1.msra.mxu0 %v2034
    %2656 = vmatprep.subr.mxu0 0.0
    %2657 = vmatpush1.msra.mxu0 %v2033
    %2658 = vmatprep.subr.mxu0 0.0
    %2659 = vmatpush1.msra.mxu0 %v2032
    %2660 = vmatprep.subr.mxu0 0.0
    %2661 = vmatpush1.msra.mxu0 %v2031
    %2662 = vmatprep.subr.mxu0 0.0
    %2663 = vmatpush1.msra.mxu0 %v2030
    %2664 = vmatprep.subr.mxu0 0.0
    %2665 = vmatpush1.msra.mxu0 %v2029
    %2666 = vmatprep.subr.mxu0 0.0
    %2667 = vmatpush1.msra.mxu0 %v2028
    %2668 = vmatprep.subr.mxu0 0.0
    %2669 = vmatpush2.msra.mxu0 0.0
    %2670 = vmatprep.subr.mxu0 0.0
    %2671 = vmatpush2.msra.mxu0 0.0
    %2672 = vmatprep.subr.mxu0 0.0
    %2673 = vmatpush2.msra.mxu0 0.0
    %2674 = vmatprep.subr.mxu0 0.0
    %2675 = vmatpush2.msra.mxu0 0.0
    %2676 = vmatprep.subr.mxu0 0.0
    %2677 = vmatpush2.msra.mxu0 0.0
    %2678 = vmatprep.subr.mxu0 0.0
    %2679 = vmatpush2.msra.mxu0 0.0
    %2680 = vmatprep.subr.mxu0 0.0
    %2681 = vmatpush2.msra.mxu0 0.0
    %2682 = vmatprep.subr.mxu0 0.0
    %2683 = vmatpush2.msra.mxu0 0.0
    %2684 = vmatprep.subr.mxu0 0.0
    %2685 = vmatpush2.msra.mxu0 0.0
    %2686 = vmatprep.subr.mxu0 0.0
    %2687 = vmatpush2.msra.mxu0 0.0
    %2688 = vmatprep.subr.mxu0 0.0
    %2689 = vmatpush2.msra.mxu0 0.0
    %2690 = vmatprep.subr.mxu0 0.0
    %2691 = vmatpush2.msra.mxu0 0.0
    %2692 = vmatprep.subr.mxu0 0.0
    %2693 = vmatpush2.msra.mxu0 0.0
    %2694 = vmatprep.subr.mxu0 0.0
    %2695 = vmatpush2.msra.mxu0 0.0
    %2696 = vmatprep.subr.mxu0 0.0
    %2697 = vmatpush2.msra.mxu0 0.0
    %2698 = vmatprep.subr.mxu0 0.0
    %2699 = vmatpush2.msra.mxu0 0.0
    %2700 = vmatprep.mubr.f32.mxu0 0.0
    %v2701 = vand.u32 %v1956, 4294901760
    %2702 = vmatmul.mubr.f32.gmra.mxu0 %v2701
    %v2703 = vpop.f32.mrf.mxu0
    %v2704 = vadd.f32 %v2615, %v2703
    %v2705 = vpop.f32.mrf.mxu0
    %2706 = vmatprep.mubr.f32.mxu0 0.0
    %v2707 = vand.u32 %v1957, 4294901760
    %2708 = vmatmul.mubr.f32.gmra.mxu0 %v2707
    %v2709 = vpop.f32.mrf.mxu0
    %v2710 = vadd.f32 %v2621, %v2709
    %v2711 = vpop.f32.mrf.mxu0
    %2712 = vmatprep.mubr.f32.mxu0 0.0
    %v2713 = vand.u32 %v1958, 4294901760
    %2714 = vmatmul.mubr.f32.gmra.mxu0 %v2713
    %v2715 = vpop.f32.mrf.mxu0
    %v2716 = vadd.f32 %v2627, %v2715
    %v2717 = vpop.f32.mrf.mxu0
    %2718 = vmatprep.mubr.f32.mxu0 0.0
    %v2719 = vand.u32 %v1959, 4294901760
    %2720 = vmatmul.mubr.f32.gmra.mxu0 %v2719
    %v2721 = vpop.f32.mrf.mxu0
    %v2722 = vadd.f32 %v2633, %v2721
    %v2723 = vpop.f32.mrf.mxu0
    %2724 = vdwg.mxu0
    %v2725 = vmul.f32 %v2704, 0.0625
    %v2726 = vmul.f32 %v2710, 0.0625
    %v2727 = vmul.f32 %v2716, 0.0625
    %v2728 = vmul.f32 %v2722, 0.0625
    %vm2729 = vcmask 64512
    %v2731 = vsel %vm2729, %v2725, 0
    %v2734 = vsel %vm2729, %v2726, 0
    %v2737 = vsel %vm2729, %v2727, 0
    %v2740 = vsel %vm2729, %v2728, 0
    %2742 = vmatprep.subr.mxu0 0.0
    %2743 = vmatpush1.msra.mxu0 0.0
    %2744 = vmatprep.subr.mxu0 0.0
    %2745 = vmatpush1.msra.mxu0 0.0
    %2746 = vmatprep.subr.mxu0 0.0
    %2747 = vmatpush1.msra.mxu0 0.0
    %2748 = vmatprep.subr.mxu0 0.0
    %2749 = vmatpush1.msra.mxu0 0.0
    %2750 = vmatprep.subr.mxu0 0.0
    %2751 = vmatpush1.msra.mxu0 0.0
    %2752 = vmatprep.subr.mxu0 0.0
    %2753 = vmatpush1.msra.mxu0 0.0
    %2754 = vmatprep.subr.mxu0 0.0
    %2755 = vmatpush1.msra.mxu0 0.0
    %2756 = vmatprep.subr.mxu0 0.0
    %2757 = vmatpush1.msra.mxu0 0.0
    %2758 = vmatprep.subr.mxu0 0.0
    %2759 = vmatpush1.msra.mxu0 0.0
    %2760 = vmatprep.subr.mxu0 0.0
    %2761 = vmatpush1.msra.mxu0 0.0
    %2762 = vmatprep.subr.mxu0 0.0
    %2763 = vmatpush1.msra.mxu0 0.0
    %2764 = vmatprep.subr.mxu0 0.0
    %2765 = vmatpush1.msra.mxu0 0.0
    %2766 = vmatprep.subr.mxu0 0.0
    %2767 = vmatpush1.msra.mxu0 0.0
    %2768 = vmatprep.subr.mxu0 0.0
    %2769 = vmatpush1.msra.mxu0 0.0
    %2770 = vmatprep.subr.mxu0 0.0
    %2771 = vmatpush1.msra.mxu0 0.0
    %2772 = vmatprep.subr.mxu0 0.0
    %2773 = vmatpush1.msra.mxu0 %v2050
    %2774 = vmatprep.subr.mxu0 0.0
    %2775 = vmatpush2.msra.mxu0 0.0
    %2776 = vmatprep.subr.mxu0 0.0
    %2777 = vmatpush2.msra.mxu0 0.0
    %2778 = vmatprep.subr.mxu0 0.0
    %2779 = vmatpush2.msra.mxu0 0.0
    %2780 = vmatprep.subr.mxu0 0.0
    %2781 = vmatpush2.msra.mxu0 0.0
    %2782 = vmatprep.subr.mxu0 0.0
    %2783 = vmatpush2.msra.mxu0 0.0
    %2784 = vmatprep.subr.mxu0 0.0
    %2785 = vmatpush2.msra.mxu0 0.0
    %2786 = vmatprep.subr.mxu0 0.0
    %2787 = vmatpush2.msra.mxu0 0.0
    %2788 = vmatprep.subr.mxu0 0.0
    %2789 = vmatpush2.msra.mxu0 0.0
    %2790 = vmatprep.subr.mxu0 0.0
    %2791 = vmatpush2.msra.mxu0 0.0
    %2792 = vmatprep.subr.mxu0 0.0
    %2793 = vmatpush2.msra.mxu0 0.0
    %2794 = vmatprep.subr.mxu0 0.0
    %2795 = vmatpush2.msra.mxu0 0.0
    %2796 = vmatprep.subr.mxu0 0.0
    %2797 = vmatpush2.msra.mxu0 0.0
    %2798 = vmatprep.subr.mxu0 0.0
    %2799 = vmatpush2.msra.mxu0 0.0
    %2800 = vmatprep.subr.mxu0 0.0
    %2801 = vmatpush2.msra.mxu0 0.0
    %2802 = vmatprep.subr.mxu0 0.0
    %2803 = vmatpush2.msra.mxu0 0.0
    %2804 = vmatprep.subr.mxu0 0.0
    %2805 = vmatpush2.msra.mxu0 0.0
    %2806 = vmatprep.mubr.f32.mxu0 0.0
    %v2807 = vand.u32 %v2731, 4294901760
    %v2808 = vsub.f32 %v2731, %v2807
    %v2809 = vand.u32 %v2808, 4294901760
    %v2810 = vsub.f32 %v2808, %v2809
    %v2811 = vand.u32 %v2810, 4294901760
    %2812 = vmatmul.mubr.f32.gmra.mxu0 %v2811
    %v2813 = vpop.f32.mrf.mxu0
    %v2814 = vadd.f32 0.0, %v2813
    %v2815 = vpop.f32.mrf.mxu0
    %2816 = vmatprep.mubr.f32.mxu0 0.0
    %v2817 = vand.u32 %v2734, 4294901760
    %v2818 = vsub.f32 %v2734, %v2817
    %v2819 = vand.u32 %v2818, 4294901760
    %v2820 = vsub.f32 %v2818, %v2819
    %v2821 = vand.u32 %v2820, 4294901760
    %2822 = vmatmul.mubr.f32.gmra.mxu0 %v2821
    %v2823 = vpop.f32.mrf.mxu0
    %v2824 = vadd.f32 0.0, %v2823
    %v2825 = vpop.f32.mrf.mxu0
    %2826 = vmatprep.mubr.f32.mxu0 0.0
    %v2827 = vand.u32 %v2737, 4294901760
    %v2828 = vsub.f32 %v2737, %v2827
    %v2829 = vand.u32 %v2828, 4294901760
    %v2830 = vsub.f32 %v2828, %v2829
    %v2831 = vand.u32 %v2830, 4294901760
    %2832 = vmatmul.mubr.f32.gmra.mxu0 %v2831
    %v2833 = vpop.f32.mrf.mxu0
    %v2834 = vadd.f32 0.0, %v2833
    %v2835 = vpop.f32.mrf.mxu0
    %2836 = vmatprep.mubr.f32.mxu0 0.0
    %v2837 = vand.u32 %v2740, 4294901760
    %v2838 = vsub.f32 %v2740, %v2837
    %v2839 = vand.u32 %v2838, 4294901760
    %v2840 = vsub.f32 %v2838, %v2839
    %v2841 = vand.u32 %v2840, 4294901760
    %2842 = vmatmul.mubr.f32.gmra.mxu0 %v2841
    %v2843 = vpop.f32.mrf.mxu0
    %v2844 = vadd.f32 0.0, %v2843
    %v2845 = vpop.f32.mrf.mxu0
    %2846 = vdwg.mxu0
    %2847 = vmatprep.subr.mxu0 0.0
    %2848 = vmatpush1.msra.mxu0 0.0
    %2849 = vmatprep.subr.mxu0 0.0
    %2850 = vmatpush1.msra.mxu0 0.0
    %2851 = vmatprep.subr.mxu0 0.0
    %2852 = vmatpush1.msra.mxu0 0.0
    %2853 = vmatprep.subr.mxu0 0.0
    %2854 = vmatpush1.msra.mxu0 0.0
    %2855 = vmatprep.subr.mxu0 0.0
    %2856 = vmatpush1.msra.mxu0 0.0
    %2857 = vmatprep.subr.mxu0 0.0
    %2858 = vmatpush1.msra.mxu0 0.0
    %2859 = vmatprep.subr.mxu0 0.0
    %2860 = vmatpush1.msra.mxu0 0.0
    %2861 = vmatprep.subr.mxu0 0.0
    %2862 = vmatpush1.msra.mxu0 0.0
    %2863 = vmatprep.subr.mxu0 0.0
    %2864 = vmatpush1.msra.mxu0 0.0
    %2865 = vmatprep.subr.mxu0 0.0
    %2866 = vmatpush1.msra.mxu0 0.0
    %2867 = vmatprep.subr.mxu0 0.0
    %2868 = vmatpush1.msra.mxu0 0.0
    %2869 = vmatprep.subr.mxu0 0.0
    %2870 = vmatpush1.msra.mxu0 0.0
    %2871 = vmatprep.subr.mxu0 0.0
    %2872 = vmatpush1.msra.mxu0 0.0
    %2873 = vmatprep.subr.mxu0 0.0
    %2874 = vmatpush1.msra.mxu0 0.0
    %2875 = vmatprep.subr.mxu0 0.0
    %2876 = vmatpush1.msra.mxu0 0.0
    %2877 = vmatprep.subr.mxu0 0.0
    %v2878 = vsub.f32 %v2050, %v2050
    %v2879 = vand.u32 %v2878, 4294901760
    %v2880 = vsub.f32 %v2878, %v2879
    %v2881 = vand.u32 %v2880, 4294901760
    %2882 = vmatpush1.msra.mxu0 %v2881
    %2883 = vmatprep.subr.mxu0 0.0
    %2884 = vmatpush2.msra.mxu0 0.0
    %2885 = vmatprep.subr.mxu0 0.0
    %2886 = vmatpush2.msra.mxu0 0.0
    %2887 = vmatprep.subr.mxu0 0.0
    %2888 = vmatpush2.msra.mxu0 0.0
    %2889 = vmatprep.subr.mxu0 0.0
    %2890 = vmatpush2.msra.mxu0 0.0
    %2891 = vmatprep.subr.mxu0 0.0
    %2892 = vmatpush2.msra.mxu0 0.0
    %2893 = vmatprep.subr.mxu0 0.0
    %2894 = vmatpush2.msra.mxu0 0.0
    %2895 = vmatprep.subr.mxu0 0.0
    %2896 = vmatpush2.msra.mxu0 0.0
    %2897 = vmatprep.subr.mxu0 0.0
    %2898 = vmatpush2.msra.mxu0 0.0
    %2899 = vmatprep.subr.mxu0 0.0
    %2900 = vmatpush2.msra.mxu0 0.0
    %2901 = vmatprep.subr.mxu0 0.0
    %2902 = vmatpush2.msra.mxu0 0.0
    %2903 = vmatprep.subr.mxu0 0.0
    %2904 = vmatpush2.msra.mxu0 0.0
    %2905 = vmatprep.subr.mxu0 0.0
    %2906 = vmatpush2.msra.mxu0 0.0
    %2907 = vmatprep.subr.mxu0 0.0
    %2908 = vmatpush2.msra.mxu0 0.0
    %2909 = vmatprep.subr.mxu0 0.0
    %2910 = vmatpush2.msra.mxu0 0.0
    %2911 = vmatprep.subr.mxu0 0.0
    %2912 = vmatpush2.msra.mxu0 0.0
    %2913 = vmatprep.subr.mxu0 0.0
    %2914 = vmatpush2.msra.mxu0 0.0
    %2915 = vmatprep.mubr.f32.mxu0 0.0
    %v2916 = vand.u32 %v2731, 4294901760
    %2917 = vmatmul.mubr.f32.gmra.mxu0 %v2916
    %v2918 = vpop.f32.mrf.mxu0
    %v2919 = vadd.f32 %v2814, %v2918
    %v2920 = vpop.f32.mrf.mxu0
    %2921 = vmatprep.mubr.f32.mxu0 0.0
    %v2922 = vand.u32 %v2734, 4294901760
    %2923 = vmatmul.mubr.f32.gmra.mxu0 %v2922
    %v2924 = vpop.f32.mrf.mxu0
    %v2925 = vadd.f32 %v2824, %v2924
    %v2926 = vpop.f32.mrf.mxu0
    %2927 = vmatprep.mubr.f32.mxu0 0.0
    %v2928 = vand.u32 %v2737, 4294901760
    %2929 = vmatmul.mubr.f32.gmra.mxu0 %v2928
    %v2930 = vpop.f32.mrf.mxu0
    %v2931 = vadd.f32 %v2834, %v2930
    %v2932 = vpop.f32.mrf.mxu0
    %2933 = vmatprep.mubr.f32.mxu0 0.0
    %v2934 = vand.u32 %v2740, 4294901760
    %2935 = vmatmul.mubr.f32.gmra.mxu0 %v2934
    %v2936 = vpop.f32.mrf.mxu0
    %v2937 = vadd.f32 %v2844, %v2936
    %v2938 = vpop.f32.mrf.mxu0
    %2939 = vdwg.mxu0
    %2940 = vmatprep.subr.mxu0 0.0
    %2941 = vmatpush1.msra.mxu0 0.0
    %2942 = vmatprep.subr.mxu0 0.0
    %2943 = vmatpush1.msra.mxu0 0.0
    %2944 = vmatprep.subr.mxu0 0.0
    %2945 = vmatpush1.msra.mxu0 0.0
    %2946 = vmatprep.subr.mxu0 0.0
    %2947 = vmatpush1.msra.mxu0 0.0
    %2948 = vmatprep.subr.mxu0 0.0
    %2949 = vmatpush1.msra.mxu0 0.0
    %2950 = vmatprep.subr.mxu0 0.0
    %2951 = vmatpush1.msra.mxu0 0.0
    %2952 = vmatprep.subr.mxu0 0.0
    %2953 = vmatpush1.msra.mxu0 0.0
    %2954 = vmatprep.subr.mxu0 0.0
    %2955 = vmatpush1.msra.mxu0 0.0
    %2956 = vmatprep.subr.mxu0 0.0
    %2957 = vmatpush1.msra.mxu0 0.0
    %2958 = vmatprep.subr.mxu0 0.0
    %2959 = vmatpush1.msra.mxu0 0.0
    %2960 = vmatprep.subr.mxu0 0.0
    %2961 = vmatpush1.msra.mxu0 0.0
    %2962 = vmatprep.subr.mxu0 0.0
    %2963 = vmatpush1.msra.mxu0 0.0
    %2964 = vmatprep.subr.mxu0 0.0
    %2965 = vmatpush1.msra.mxu0 0.0
    %2966 = vmatprep.subr.mxu0 0.0
    %2967 = vmatpush1.msra.mxu0 0.0
    %2968 = vmatprep.subr.mxu0 0.0
    %2969 = vmatpush1.msra.mxu0 0.0
    %2970 = vmatprep.subr.mxu0 0.0
    %v2971 = vsub.f32 %v2050, %v2050
    %2972 = vmatpush1.msra.mxu0 %v2971
    %2973 = vmatprep.subr.mxu0 0.0
    %2974 = vmatpush2.msra.mxu0 0.0
    %2975 = vmatprep.subr.mxu0 0.0
    %2976 = vmatpush2.msra.mxu0 0.0
    %2977 = vmatprep.subr.mxu0 0.0
    %2978 = vmatpush2.msra.mxu0 0.0
    %2979 = vmatprep.subr.mxu0 0.0
    %2980 = vmatpush2.msra.mxu0 0.0
    %2981 = vmatprep.subr.mxu0 0.0
    %2982 = vmatpush2.msra.mxu0 0.0
    %2983 = vmatprep.subr.mxu0 0.0
    %2984 = vmatpush2.msra.mxu0 0.0
    %2985 = vmatprep.subr.mxu0 0.0
    %2986 = vmatpush2.msra.mxu0 0.0
    %2987 = vmatprep.subr.mxu0 0.0
    %2988 = vmatpush2.msra.mxu0 0.0
    %2989 = vmatprep.subr.mxu0 0.0
    %2990 = vmatpush2.msra.mxu0 0.0
    %2991 = vmatprep.subr.mxu0 0.0
    %2992 = vmatpush2.msra.mxu0 0.0
    %2993 = vmatprep.subr.mxu0 0.0
    %2994 = vmatpush2.msra.mxu0 0.0
    %2995 = vmatprep.subr.mxu0 0.0
    %2996 = vmatpush2.msra.mxu0 0.0
    %2997 = vmatprep.subr.mxu0 0.0
    %2998 = vmatpush2.msra.mxu0 0.0
    %2999 = vmatprep.subr.mxu0 0.0
    %3000 = vmatpush2.msra.mxu0 0.0
    %3001 = vmatprep.subr.mxu0 0.0
    %3002 = vmatpush2.msra.mxu0 0.0
    %3003 = vmatprep.subr.mxu0 0.0
    %3004 = vmatpush2.msra.mxu0 0.0
    %3005 = vmatprep.mubr.f32.mxu0 0.0
    %v3006 = vand.u32 %v2731, 4294901760
    %v3007 = vsub.f32 %v2731, %v3006
    %3008 = vmatmul.mubr.f32.gmra.mxu0 %v3007
    %v3009 = vpop.f32.mrf.mxu0
    %v3010 = vadd.f32 %v2919, %v3009
    %v3011 = vpop.f32.mrf.mxu0
    %3012 = vmatprep.mubr.f32.mxu0 0.0
    %v3013 = vand.u32 %v2734, 4294901760
    %v3014 = vsub.f32 %v2734, %v3013
    %3015 = vmatmul.mubr.f32.gmra.mxu0 %v3014
    %v3016 = vpop.f32.mrf.mxu0
    %v3017 = vadd.f32 %v2925, %v3016
    %v3018 = vpop.f32.mrf.mxu0
    %3019 = vmatprep.mubr.f32.mxu0 0.0
    %v3020 = vand.u32 %v2737, 4294901760
    %v3021 = vsub.f32 %v2737, %v3020
    %3022 = vmatmul.mubr.f32.gmra.mxu0 %v3021
    %v3023 = vpop.f32.mrf.mxu0
    %v3024 = vadd.f32 %v2931, %v3023
    %v3025 = vpop.f32.mrf.mxu0
    %3026 = vmatprep.mubr.f32.mxu0 0.0
    %v3027 = vand.u32 %v2740, 4294901760
    %v3028 = vsub.f32 %v2740, %v3027
    %3029 = vmatmul.mubr.f32.gmra.mxu0 %v3028
    %v3030 = vpop.f32.mrf.mxu0
    %v3031 = vadd.f32 %v2937, %v3030
    %v3032 = vpop.f32.mrf.mxu0
    %3033 = vdwg.mxu0
    %3034 = vmatprep.subr.mxu0 0.0
    %3035 = vmatpush1.msra.mxu0 0.0
    %3036 = vmatprep.subr.mxu0 0.0
    %3037 = vmatpush1.msra.mxu0 0.0
    %3038 = vmatprep.subr.mxu0 0.0
    %3039 = vmatpush1.msra.mxu0 0.0
    %3040 = vmatprep.subr.mxu0 0.0
    %3041 = vmatpush1.msra.mxu0 0.0
    %3042 = vmatprep.subr.mxu0 0.0
    %3043 = vmatpush1.msra.mxu0 0.0
    %3044 = vmatprep.subr.mxu0 0.0
    %3045 = vmatpush1.msra.mxu0 0.0
    %3046 = vmatprep.subr.mxu0 0.0
    %3047 = vmatpush1.msra.mxu0 0.0
    %3048 = vmatprep.subr.mxu0 0.0
    %3049 = vmatpush1.msra.mxu0 0.0
    %3050 = vmatprep.subr.mxu0 0.0
    %3051 = vmatpush1.msra.mxu0 0.0
    %3052 = vmatprep.subr.mxu0 0.0
    %3053 = vmatpush1.msra.mxu0 0.0
    %3054 = vmatprep.subr.mxu0 0.0
    %3055 = vmatpush1.msra.mxu0 0.0
    %3056 = vmatprep.subr.mxu0 0.0
    %3057 = vmatpush1.msra.mxu0 0.0
    %3058 = vmatprep.subr.mxu0 0.0
    %3059 = vmatpush1.msra.mxu0 0.0
    %3060 = vmatprep.subr.mxu0 0.0
    %3061 = vmatpush1.msra.mxu0 0.0
    %3062 = vmatprep.subr.mxu0 0.0
    %3063 = vmatpush1.msra.mxu0 0.0
    %3064 = vmatprep.subr.mxu0 0.0
    %3065 = vmatpush1.msra.mxu0 %v2050
    %3066 = vmatprep.subr.mxu0 0.0
    %3067 = vmatpush2.msra.mxu0 0.0
    %3068 = vmatprep.subr.mxu0 0.0
    %3069 = vmatpush2.msra.mxu0 0.0
    %3070 = vmatprep.subr.mxu0 0.0
    %3071 = vmatpush2.msra.mxu0 0.0
    %3072 = vmatprep.subr.mxu0 0.0
    %3073 = vmatpush2.msra.mxu0 0.0
    %3074 = vmatprep.subr.mxu0 0.0
    %3075 = vmatpush2.msra.mxu0 0.0
    %3076 = vmatprep.subr.mxu0 0.0
    %3077 = vmatpush2.msra.mxu0 0.0
    %3078 = vmatprep.subr.mxu0 0.0
    %3079 = vmatpush2.msra.mxu0 0.0
    %3080 = vmatprep.subr.mxu0 0.0
    %3081 = vmatpush2.msra.mxu0 0.0
    %3082 = vmatprep.subr.mxu0 0.0
    %3083 = vmatpush2.msra.mxu0 0.0
    %3084 = vmatprep.subr.mxu0 0.0
    %3085 = vmatpush2.msra.mxu0 0.0
    %3086 = vmatprep.subr.mxu0 0.0
    %3087 = vmatpush2.msra.mxu0 0.0
    %3088 = vmatprep.subr.mxu0 0.0
    %3089 = vmatpush2.msra.mxu0 0.0
    %3090 = vmatprep.subr.mxu0 0.0
    %3091 = vmatpush2.msra.mxu0 0.0
    %3092 = vmatprep.subr.mxu0 0.0
    %3093 = vmatpush2.msra.mxu0 0.0
    %3094 = vmatprep.subr.mxu0 0.0
    %3095 = vmatpush2.msra.mxu0 0.0
    %3096 = vmatprep.subr.mxu0 0.0
    %3097 = vmatpush2.msra.mxu0 0.0
    %3098 = vmatprep.mubr.f32.mxu0 0.0
    %v3099 = vand.u32 %v2731, 4294901760
    %v3100 = vsub.f32 %v2731, %v3099
    %v3101 = vand.u32 %v3100, 4294901760
    %3102 = vmatmul.mubr.f32.gmra.mxu0 %v3101
    %v3103 = vpop.f32.mrf.mxu0
    %v3104 = vadd.f32 %v3010, %v3103
    %v3105 = vpop.f32.mrf.mxu0
    %3106 = vmatprep.mubr.f32.mxu0 0.0
    %v3107 = vand.u32 %v2734, 4294901760
    %v3108 = vsub.f32 %v2734, %v3107
    %v3109 = vand.u32 %v3108, 4294901760
    %3110 = vmatmul.mubr.f32.gmra.mxu0 %v3109
    %v3111 = vpop.f32.mrf.mxu0
    %v3112 = vadd.f32 %v3017, %v3111
    %v3113 = vpop.f32.mrf.mxu0
    %3114 = vmatprep.mubr.f32.mxu0 0.0
    %v3115 = vand.u32 %v2737, 4294901760
    %v3116 = vsub.f32 %v2737, %v3115
    %v3117 = vand.u32 %v3116, 4294901760
    %3118 = vmatmul.mubr.f32.gmra.mxu0 %v3117
    %v3119 = vpop.f32.mrf.mxu0
    %v3120 = vadd.f32 %v3024, %v3119
    %v3121 = vpop.f32.mrf.mxu0
    %3122 = vmatprep.mubr.f32.mxu0 0.0
    %v3123 = vand.u32 %v2740, 4294901760
    %v3124 = vsub.f32 %v2740, %v3123
    %v3125 = vand.u32 %v3124, 4294901760
    %3126 = vmatmul.mubr.f32.gmra.mxu0 %v3125
    %v3127 = vpop.f32.mrf.mxu0
    %v3128 = vadd.f32 %v3031, %v3127
    %v3129 = vpop.f32.mrf.mxu0
    %3130 = vdwg.mxu0
    %3131 = vmatprep.subr.mxu0 0.0
    %3132 = vmatpush1.msra.mxu0 0.0
    %3133 = vmatprep.subr.mxu0 0.0
    %3134 = vmatpush1.msra.mxu0 0.0
    %3135 = vmatprep.subr.mxu0 0.0
    %3136 = vmatpush1.msra.mxu0 0.0
    %3137 = vmatprep.subr.mxu0 0.0
    %3138 = vmatpush1.msra.mxu0 0.0
    %3139 = vmatprep.subr.mxu0 0.0
    %3140 = vmatpush1.msra.mxu0 0.0
    %3141 = vmatprep.subr.mxu0 0.0
    %3142 = vmatpush1.msra.mxu0 0.0
    %3143 = vmatprep.subr.mxu0 0.0
    %3144 = vmatpush1.msra.mxu0 0.0
    %3145 = vmatprep.subr.mxu0 0.0
    %3146 = vmatpush1.msra.mxu0 0.0
    %3147 = vmatprep.subr.mxu0 0.0
    %3148 = vmatpush1.msra.mxu0 0.0
    %3149 = vmatprep.subr.mxu0 0.0
    %3150 = vmatpush1.msra.mxu0 0.0
    %3151 = vmatprep.subr.mxu0 0.0
    %3152 = vmatpush1.msra.mxu0 0.0
    %3153 = vmatprep.subr.mxu0 0.0
    %3154 = vmatpush1.msra.mxu0 0.0
    %3155 = vmatprep.subr.mxu0 0.0
    %3156 = vmatpush1.msra.mxu0 0.0
    %3157 = vmatprep.subr.mxu0 0.0
    %3158 = vmatpush1.msra.mxu0 0.0
    %3159 = vmatprep.subr.mxu0 0.0
    %3160 = vmatpush1.msra.mxu0 0.0
    %3161 = vmatprep.subr.mxu0 0.0
    %v3162 = vsub.f32 %v2050, %v2050
    %v3163 = vand.u32 %v3162, 4294901760
    %3164 = vmatpush1.msra.mxu0 %v3163
    %3165 = vmatprep.subr.mxu0 0.0
    %3166 = vmatpush2.msra.mxu0 0.0
    %3167 = vmatprep.subr.mxu0 0.0
    %3168 = vmatpush2.msra.mxu0 0.0
    %3169 = vmatprep.subr.mxu0 0.0
    %3170 = vmatpush2.msra.mxu0 0.0
    %3171 = vmatprep.subr.mxu0 0.0
    %3172 = vmatpush2.msra.mxu0 0.0
    %3173 = vmatprep.subr.mxu0 0.0
    %3174 = vmatpush2.msra.mxu0 0.0
    %3175 = vmatprep.subr.mxu0 0.0
    %3176 = vmatpush2.msra.mxu0 0.0
    %3177 = vmatprep.subr.mxu0 0.0
    %3178 = vmatpush2.msra.mxu0 0.0
    %3179 = vmatprep.subr.mxu0 0.0
    %3180 = vmatpush2.msra.mxu0 0.0
    %3181 = vmatprep.subr.mxu0 0.0
    %3182 = vmatpush2.msra.mxu0 0.0
    %3183 = vmatprep.subr.mxu0 0.0
    %3184 = vmatpush2.msra.mxu0 0.0
    %3185 = vmatprep.subr.mxu0 0.0
    %3186 = vmatpush2.msra.mxu0 0.0
    %3187 = vmatprep.subr.mxu0 0.0
    %3188 = vmatpush2.msra.mxu0 0.0
    %3189 = vmatprep.subr.mxu0 0.0
    %3190 = vmatpush2.msra.mxu0 0.0
    %3191 = vmatprep.subr.mxu0 0.0
    %3192 = vmatpush2.msra.mxu0 0.0
    %3193 = vmatprep.subr.mxu0 0.0
    %3194 = vmatpush2.msra.mxu0 0.0
    %3195 = vmatprep.subr.mxu0 0.0
    %3196 = vmatpush2.msra.mxu0 0.0
    %3197 = vmatprep.mubr.f32.mxu0 0.0
    %v3198 = vand.u32 %v2731, 4294901760
    %3199 = vmatmul.mubr.f32.gmra.mxu0 %v3198
    %v3200 = vpop.f32.mrf.mxu0
    %v3201 = vadd.f32 %v3104, %v3200
    %v3202 = vpop.f32.mrf.mxu0
    %3203 = vmatprep.mubr.f32.mxu0 0.0
    %v3204 = vand.u32 %v2734, 4294901760
    %3205 = vmatmul.mubr.f32.gmra.mxu0 %v3204
    %v3206 = vpop.f32.mrf.mxu0
    %v3207 = vadd.f32 %v3112, %v3206
    %v3208 = vpop.f32.mrf.mxu0
    %3209 = vmatprep.mubr.f32.mxu0 0.0
    %v3210 = vand.u32 %v2737, 4294901760
    %3211 = vmatmul.mubr.f32.gmra.mxu0 %v3210
    %v3212 = vpop.f32.mrf.mxu0
    %v3213 = vadd.f32 %v3120, %v3212
    %v3214 = vpop.f32.mrf.mxu0
    %3215 = vmatprep.mubr.f32.mxu0 0.0
    %v3216 = vand.u32 %v2740, 4294901760
    %3217 = vmatmul.mubr.f32.gmra.mxu0 %v3216
    %v3218 = vpop.f32.mrf.mxu0
    %v3219 = vadd.f32 %v3128, %v3218
    %v3220 = vpop.f32.mrf.mxu0
    %3221 = vdwg.mxu0
    %3222 = vmatprep.subr.mxu0 0.0
    %3223 = vmatpush1.msra.mxu0 0.0
    %3224 = vmatprep.subr.mxu0 0.0
    %3225 = vmatpush1.msra.mxu0 0.0
    %3226 = vmatprep.subr.mxu0 0.0
    %3227 = vmatpush1.msra.mxu0 0.0
    %3228 = vmatprep.subr.mxu0 0.0
    %3229 = vmatpush1.msra.mxu0 0.0
    %3230 = vmatprep.subr.mxu0 0.0
    %3231 = vmatpush1.msra.mxu0 0.0
    %3232 = vmatprep.subr.mxu0 0.0
    %3233 = vmatpush1.msra.mxu0 0.0
    %3234 = vmatprep.subr.mxu0 0.0
    %3235 = vmatpush1.msra.mxu0 0.0
    %3236 = vmatprep.subr.mxu0 0.0
    %3237 = vmatpush1.msra.mxu0 0.0
    %3238 = vmatprep.subr.mxu0 0.0
    %3239 = vmatpush1.msra.mxu0 0.0
    %3240 = vmatprep.subr.mxu0 0.0
    %3241 = vmatpush1.msra.mxu0 0.0
    %3242 = vmatprep.subr.mxu0 0.0
    %3243 = vmatpush1.msra.mxu0 0.0
    %3244 = vmatprep.subr.mxu0 0.0
    %3245 = vmatpush1.msra.mxu0 0.0
    %3246 = vmatprep.subr.mxu0 0.0
    %3247 = vmatpush1.msra.mxu0 0.0
    %3248 = vmatprep.subr.mxu0 0.0
    %3249 = vmatpush1.msra.mxu0 0.0
    %3250 = vmatprep.subr.mxu0 0.0
    %3251 = vmatpush1.msra.mxu0 0.0
    %3252 = vmatprep.subr.mxu0 0.0
    %3253 = vmatpush1.msra.mxu0 %v2050
    %3254 = vmatprep.subr.mxu0 0.0
    %3255 = vmatpush2.msra.mxu0 0.0
    %3256 = vmatprep.subr.mxu0 0.0
    %3257 = vmatpush2.msra.mxu0 0.0
    %3258 = vmatprep.subr.mxu0 0.0
    %3259 = vmatpush2.msra.mxu0 0.0
    %3260 = vmatprep.subr.mxu0 0.0
    %3261 = vmatpush2.msra.mxu0 0.0
    %3262 = vmatprep.subr.mxu0 0.0
    %3263 = vmatpush2.msra.mxu0 0.0
    %3264 = vmatprep.subr.mxu0 0.0
    %3265 = vmatpush2.msra.mxu0 0.0
    %3266 = vmatprep.subr.mxu0 0.0
    %3267 = vmatpush2.msra.mxu0 0.0
    %3268 = vmatprep.subr.mxu0 0.0
    %3269 = vmatpush2.msra.mxu0 0.0
    %3270 = vmatprep.subr.mxu0 0.0
    %3271 = vmatpush2.msra.mxu0 0.0
    %3272 = vmatprep.subr.mxu0 0.0
    %3273 = vmatpush2.msra.mxu0 0.0
    %3274 = vmatprep.subr.mxu0 0.0
    %3275 = vmatpush2.msra.mxu0 0.0
    %3276 = vmatprep.subr.mxu0 0.0
    %3277 = vmatpush2.msra.mxu0 0.0
    %3278 = vmatprep.subr.mxu0 0.0
    %3279 = vmatpush2.msra.mxu0 0.0
    %3280 = vmatprep.subr.mxu0 0.0
    %3281 = vmatpush2.msra.mxu0 0.0
    %3282 = vmatprep.subr.mxu0 0.0
    %3283 = vmatpush2.msra.mxu0 0.0
    %3284 = vmatprep.subr.mxu0 0.0
    %3285 = vmatpush2.msra.mxu0 0.0
    %3286 = vmatprep.mubr.f32.mxu0 0.0
    %v3287 = vand.u32 %v2731, 4294901760
    %3288 = vmatmul.mubr.f32.gmra.mxu0 %v3287
    %v3289 = vpop.f32.mrf.mxu0
    %v3290 = vadd.f32 %v3201, %v3289
    %v3291 = vpop.f32.mrf.mxu0
    %3292 = vmatprep.mubr.f32.mxu0 0.0
    %v3293 = vand.u32 %v2734, 4294901760
    %3294 = vmatmul.mubr.f32.gmra.mxu0 %v3293
    %v3295 = vpop.f32.mrf.mxu0
    %v3296 = vadd.f32 %v3207, %v3295
    %v3297 = vpop.f32.mrf.mxu0
    %3298 = vmatprep.mubr.f32.mxu0 0.0
    %v3299 = vand.u32 %v2737, 4294901760
    %3300 = vmatmul.mubr.f32.gmra.mxu0 %v3299
    %v3301 = vpop.f32.mrf.mxu0
    %v3302 = vadd.f32 %v3213, %v3301
    %v3303 = vpop.f32.mrf.mxu0
    %3304 = vmatprep.mubr.f32.mxu0 0.0
    %v3305 = vand.u32 %v2740, 4294901760
    %3306 = vmatmul.mubr.f32.gmra.mxu0 %v3305
    %v3307 = vpop.f32.mrf.mxu0
    %v3308 = vadd.f32 %v3219, %v3307
    %v3309 = vpop.f32.mrf.mxu0
    %3310 = vdwg.mxu0
    %v3311 = vsub.f32 %v1956, %v3290
    %v3312 = vsub.f32 %v1957, %v3296
    %v3313 = vsub.f32 %v1958, %v3302
    %v3314 = vsub.f32 %v1959, %v3308
    %v3315 = vmul.f32 %v3311, %v3311
    %v3316 = vmul.f32 %v3312, %v3312
    %v3317 = vmul.f32 %v3313, %v3313
    %v3318 = vmul.f32 %v3314, %v3314
    %3319 = vmatprep.subr.mxu0 0.0
    %3320 = vmatpush1.msra.mxu0 %v2043
    %3321 = vmatprep.subr.mxu0 0.0
    %3322 = vmatpush1.msra.mxu0 %v2042
    %3323 = vmatprep.subr.mxu0 0.0
    %3324 = vmatpush1.msra.mxu0 %v2041
    %3325 = vmatprep.subr.mxu0 0.0
    %3326 = vmatpush1.msra.mxu0 %v2040
    %3327 = vmatprep.subr.mxu0 0.0
    %3328 = vmatpush1.msra.mxu0 %v2039
    %3329 = vmatprep.subr.mxu0 0.0
    %3330 = vmatpush1.msra.mxu0 %v2038
    %3331 = vmatprep.subr.mxu0 0.0
    %3332 = vmatpush1.msra.mxu0 %v2037
    %3333 = vmatprep.subr.mxu0 0.0
    %3334 = vmatpush1.msra.mxu0 %v2036
    %3335 = vmatprep.subr.mxu0 0.0
    %3336 = vmatpush1.msra.mxu0 %v2035
    %3337 = vmatprep.subr.mxu0 0.0
    %3338 = vmatpush1.msra.mxu0 %v2034
    %3339 = vmatprep.subr.mxu0 0.0
    %3340 = vmatpush1.msra.mxu0 %v2033
    %3341 = vmatprep.subr.mxu0 0.0
    %3342 = vmatpush1.msra.mxu0 %v2032
    %3343 = vmatprep.subr.mxu0 0.0
    %3344 = vmatpush1.msra.mxu0 %v2031
    %3345 = vmatprep.subr.mxu0 0.0
    %3346 = vmatpush1.msra.mxu0 %v2030
    %3347 = vmatprep.subr.mxu0 0.0
    %3348 = vmatpush1.msra.mxu0 %v2029
    %3349 = vmatprep.subr.mxu0 0.0
    %3350 = vmatpush1.msra.mxu0 %v2028
    %3351 = vmatprep.subr.mxu0 0.0
    %3352 = vmatpush2.msra.mxu0 0.0
    %3353 = vmatprep.subr.mxu0 0.0
    %3354 = vmatpush2.msra.mxu0 0.0
    %3355 = vmatprep.subr.mxu0 0.0
    %3356 = vmatpush2.msra.mxu0 0.0
    %3357 = vmatprep.subr.mxu0 0.0
    %3358 = vmatpush2.msra.mxu0 0.0
    %3359 = vmatprep.subr.mxu0 0.0
    %3360 = vmatpush2.msra.mxu0 0.0
    %3361 = vmatprep.subr.mxu0 0.0
    %3362 = vmatpush2.msra.mxu0 0.0
    %3363 = vmatprep.subr.mxu0 0.0
    %3364 = vmatpush2.msra.mxu0 0.0
    %3365 = vmatprep.subr.mxu0 0.0
    %3366 = vmatpush2.msra.mxu0 0.0
    %3367 = vmatprep.subr.mxu0 0.0
    %3368 = vmatpush2.msra.mxu0 0.0
    %3369 = vmatprep.subr.mxu0 0.0
    %3370 = vmatpush2.msra.mxu0 0.0
    %3371 = vmatprep.subr.mxu0 0.0
    %3372 = vmatpush2.msra.mxu0 0.0
    %3373 = vmatprep.subr.mxu0 0.0
    %3374 = vmatpush2.msra.mxu0 0.0
    %3375 = vmatprep.subr.mxu0 0.0
    %3376 = vmatpush2.msra.mxu0 0.0
    %3377 = vmatprep.subr.mxu0 0.0
    %3378 = vmatpush2.msra.mxu0 0.0
    %3379 = vmatprep.subr.mxu0 0.0
    %3380 = vmatpush2.msra.mxu0 0.0
    %3381 = vmatprep.subr.mxu0 0.0
    %3382 = vmatpush2.msra.mxu0 0.0
    %3383 = vmatprep.mubr.f32.mxu0 0.0
    %v3384 = vand.u32 %v3315, 4294901760
    %v3385 = vsub.f32 %v3315, %v3384
    %v3386 = vand.u32 %v3385, 4294901760
    %v3387 = vsub.f32 %v3385, %v3386
    %v3388 = vand.u32 %v3387, 4294901760
    %3389 = vmatmul.mubr.f32.gmra.mxu0 %v3388
    %v3390 = vpop.f32.mrf.mxu0
    %v3391 = vadd.f32 0.0, %v3390
    %v3392 = vpop.f32.mrf.mxu0
    %3393 = vmatprep.mubr.f32.mxu0 0.0
    %v3394 = vand.u32 %v3316, 4294901760
    %v3395 = vsub.f32 %v3316, %v3394
    %v3396 = vand.u32 %v3395, 4294901760
    %v3397 = vsub.f32 %v3395, %v3396
    %v3398 = vand.u32 %v3397, 4294901760
    %3399 = vmatmul.mubr.f32.gmra.mxu0 %v3398
    %v3400 = vpop.f32.mrf.mxu0
    %v3401 = vadd.f32 0.0, %v3400
    %v3402 = vpop.f32.mrf.mxu0
    %3403 = vmatprep.mubr.f32.mxu0 0.0
    %v3404 = vand.u32 %v3317, 4294901760
    %v3405 = vsub.f32 %v3317, %v3404
    %v3406 = vand.u32 %v3405, 4294901760
    %v3407 = vsub.f32 %v3405, %v3406
    %v3408 = vand.u32 %v3407, 4294901760
    %3409 = vmatmul.mubr.f32.gmra.mxu0 %v3408
    %v3410 = vpop.f32.mrf.mxu0
    %v3411 = vadd.f32 0.0, %v3410
    %v3412 = vpop.f32.mrf.mxu0
    %3413 = vmatprep.mubr.f32.mxu0 0.0
    %v3414 = vand.u32 %v3318, 4294901760
    %v3415 = vsub.f32 %v3318, %v3414
    %v3416 = vand.u32 %v3415, 4294901760
    %v3417 = vsub.f32 %v3415, %v3416
    %v3418 = vand.u32 %v3417, 4294901760
    %3419 = vmatmul.mubr.f32.gmra.mxu0 %v3418
    %v3420 = vpop.f32.mrf.mxu0
    %v3421 = vadd.f32 0.0, %v3420
    %v3422 = vpop.f32.mrf.mxu0
    %3423 = vdwg.mxu0
    %3424 = vmatprep.subr.mxu0 0.0
    %v3425 = vsub.f32 %v2043, %v2043
    %v3426 = vand.u32 %v3425, 4294901760
    %v3427 = vsub.f32 %v3425, %v3426
    %v3428 = vand.u32 %v3427, 4294901760
    %3429 = vmatpush1.msra.mxu0 %v3428
    %3430 = vmatprep.subr.mxu0 0.0
    %v3431 = vsub.f32 %v2042, %v2042
    %v3432 = vand.u32 %v3431, 4294901760
    %v3433 = vsub.f32 %v3431, %v3432
    %v3434 = vand.u32 %v3433, 4294901760
    %3435 = vmatpush1.msra.mxu0 %v3434
    %3436 = vmatprep.subr.mxu0 0.0
    %v3437 = vsub.f32 %v2041, %v2041
    %v3438 = vand.u32 %v3437, 4294901760
    %v3439 = vsub.f32 %v3437, %v3438
    %v3440 = vand.u32 %v3439, 4294901760
    %3441 = vmatpush1.msra.mxu0 %v3440
    %3442 = vmatprep.subr.mxu0 0.0
    %v3443 = vsub.f32 %v2040, %v2040
    %v3444 = vand.u32 %v3443, 4294901760
    %v3445 = vsub.f32 %v3443, %v3444
    %v3446 = vand.u32 %v3445, 4294901760
    %3447 = vmatpush1.msra.mxu0 %v3446
    %3448 = vmatprep.subr.mxu0 0.0
    %v3449 = vsub.f32 %v2039, %v2039
    %v3450 = vand.u32 %v3449, 4294901760
    %v3451 = vsub.f32 %v3449, %v3450
    %v3452 = vand.u32 %v3451, 4294901760
    %3453 = vmatpush1.msra.mxu0 %v3452
    %3454 = vmatprep.subr.mxu0 0.0
    %v3455 = vsub.f32 %v2038, %v2038
    %v3456 = vand.u32 %v3455, 4294901760
    %v3457 = vsub.f32 %v3455, %v3456
    %v3458 = vand.u32 %v3457, 4294901760
    %3459 = vmatpush1.msra.mxu0 %v3458
    %3460 = vmatprep.subr.mxu0 0.0
    %v3461 = vsub.f32 %v2037, %v2037
    %v3462 = vand.u32 %v3461, 4294901760
    %v3463 = vsub.f32 %v3461, %v3462
    %v3464 = vand.u32 %v3463, 4294901760
    %3465 = vmatpush1.msra.mxu0 %v3464
    %3466 = vmatprep.subr.mxu0 0.0
    %v3467 = vsub.f32 %v2036, %v2036
    %v3468 = vand.u32 %v3467, 4294901760
    %v3469 = vsub.f32 %v3467, %v3468
    %v3470 = vand.u32 %v3469, 4294901760
    %3471 = vmatpush1.msra.mxu0 %v3470
    %3472 = vmatprep.subr.mxu0 0.0
    %v3473 = vsub.f32 %v2035, %v2035
    %v3474 = vand.u32 %v3473, 4294901760
    %v3475 = vsub.f32 %v3473, %v3474
    %v3476 = vand.u32 %v3475, 4294901760
    %3477 = vmatpush1.msra.mxu0 %v3476
    %3478 = vmatprep.subr.mxu0 0.0
    %v3479 = vsub.f32 %v2034, %v2034
    %v3480 = vand.u32 %v3479, 4294901760
    %v3481 = vsub.f32 %v3479, %v3480
    %v3482 = vand.u32 %v3481, 4294901760
    %3483 = vmatpush1.msra.mxu0 %v3482
    %3484 = vmatprep.subr.mxu0 0.0
    %v3485 = vsub.f32 %v2033, %v2033
    %v3486 = vand.u32 %v3485, 4294901760
    %v3487 = vsub.f32 %v3485, %v3486
    %v3488 = vand.u32 %v3487, 4294901760
    %3489 = vmatpush1.msra.mxu0 %v3488
    %3490 = vmatprep.subr.mxu0 0.0
    %v3491 = vsub.f32 %v2032, %v2032
    %v3492 = vand.u32 %v3491, 4294901760
    %v3493 = vsub.f32 %v3491, %v3492
    %v3494 = vand.u32 %v3493, 4294901760
    %3495 = vmatpush1.msra.mxu0 %v3494
    %3496 = vmatprep.subr.mxu0 0.0
    %v3497 = vsub.f32 %v2031, %v2031
    %v3498 = vand.u32 %v3497, 4294901760
    %v3499 = vsub.f32 %v3497, %v3498
    %v3500 = vand.u32 %v3499, 4294901760
    %3501 = vmatpush1.msra.mxu0 %v3500
    %3502 = vmatprep.subr.mxu0 0.0
    %v3503 = vsub.f32 %v2030, %v2030
    %v3504 = vand.u32 %v3503, 4294901760
    %v3505 = vsub.f32 %v3503, %v3504
    %v3506 = vand.u32 %v3505, 4294901760
    %3507 = vmatpush1.msra.mxu0 %v3506
    %3508 = vmatprep.subr.mxu0 0.0
    %v3509 = vsub.f32 %v2029, %v2029
    %v3510 = vand.u32 %v3509, 4294901760
    %v3511 = vsub.f32 %v3509, %v3510
    %v3512 = vand.u32 %v3511, 4294901760
    %3513 = vmatpush1.msra.mxu0 %v3512
    %3514 = vmatprep.subr.mxu0 0.0
    %v3515 = vsub.f32 %v2028, %v2028
    %v3516 = vand.u32 %v3515, 4294901760
    %v3517 = vsub.f32 %v3515, %v3516
    %v3518 = vand.u32 %v3517, 4294901760
    %3519 = vmatpush1.msra.mxu0 %v3518
    %3520 = vmatprep.subr.mxu0 0.0
    %3521 = vmatpush2.msra.mxu0 0.0
    %3522 = vmatprep.subr.mxu0 0.0
    %3523 = vmatpush2.msra.mxu0 0.0
    %3524 = vmatprep.subr.mxu0 0.0
    %3525 = vmatpush2.msra.mxu0 0.0
    %3526 = vmatprep.subr.mxu0 0.0
    %3527 = vmatpush2.msra.mxu0 0.0
    %3528 = vmatprep.subr.mxu0 0.0
    %3529 = vmatpush2.msra.mxu0 0.0
    %3530 = vmatprep.subr.mxu0 0.0
    %3531 = vmatpush2.msra.mxu0 0.0
    %3532 = vmatprep.subr.mxu0 0.0
    %3533 = vmatpush2.msra.mxu0 0.0
    %3534 = vmatprep.subr.mxu0 0.0
    %3535 = vmatpush2.msra.mxu0 0.0
    %3536 = vmatprep.subr.mxu0 0.0
    %3537 = vmatpush2.msra.mxu0 0.0
    %3538 = vmatprep.subr.mxu0 0.0
    %3539 = vmatpush2.msra.mxu0 0.0
    %3540 = vmatprep.subr.mxu0 0.0
    %3541 = vmatpush2.msra.mxu0 0.0
    %3542 = vmatprep.subr.mxu0 0.0
    %3543 = vmatpush2.msra.mxu0 0.0
    %3544 = vmatprep.subr.mxu0 0.0
    %3545 = vmatpush2.msra.mxu0 0.0
    %3546 = vmatprep.subr.mxu0 0.0
    %3547 = vmatpush2.msra.mxu0 0.0
    %3548 = vmatprep.subr.mxu0 0.0
    %3549 = vmatpush2.msra.mxu0 0.0
    %3550 = vmatprep.subr.mxu0 0.0
    %3551 = vmatpush2.msra.mxu0 0.0
    %3552 = vmatprep.mubr.f32.mxu0 0.0
    %v3553 = vand.u32 %v3315, 4294901760
    %3554 = vmatmul.mubr.f32.gmra.mxu0 %v3553
    %v3555 = vpop.f32.mrf.mxu0
    %v3556 = vadd.f32 %v3391, %v3555
    %v3557 = vpop.f32.mrf.mxu0
    %3558 = vmatprep.mubr.f32.mxu0 0.0
    %v3559 = vand.u32 %v3316, 4294901760
    %3560 = vmatmul.mubr.f32.gmra.mxu0 %v3559
    %v3561 = vpop.f32.mrf.mxu0
    %v3562 = vadd.f32 %v3401, %v3561
    %v3563 = vpop.f32.mrf.mxu0
    %3564 = vmatprep.mubr.f32.mxu0 0.0
    %v3565 = vand.u32 %v3317, 4294901760
    %3566 = vmatmul.mubr.f32.gmra.mxu0 %v3565
    %v3567 = vpop.f32.mrf.mxu0
    %v3568 = vadd.f32 %v3411, %v3567
    %v3569 = vpop.f32.mrf.mxu0
    %3570 = vmatprep.mubr.f32.mxu0 0.0
    %v3571 = vand.u32 %v3318, 4294901760
    %3572 = vmatmul.mubr.f32.gmra.mxu0 %v3571
    %v3573 = vpop.f32.mrf.mxu0
    %v3574 = vadd.f32 %v3421, %v3573
    %v3575 = vpop.f32.mrf.mxu0
    %3576 = vdwg.mxu0
    %3577 = vmatprep.subr.mxu0 0.0
    %v3578 = vsub.f32 %v2043, %v2043
    %3579 = vmatpush1.msra.mxu0 %v3578
    %3580 = vmatprep.subr.mxu0 0.0
    %v3581 = vsub.f32 %v2042, %v2042
    %3582 = vmatpush1.msra.mxu0 %v3581
    %3583 = vmatprep.subr.mxu0 0.0
    %v3584 = vsub.f32 %v2041, %v2041
    %3585 = vmatpush1.msra.mxu0 %v3584
    %3586 = vmatprep.subr.mxu0 0.0
    %v3587 = vsub.f32 %v2040, %v2040
    %3588 = vmatpush1.msra.mxu0 %v3587
    %3589 = vmatprep.subr.mxu0 0.0
    %v3590 = vsub.f32 %v2039, %v2039
    %3591 = vmatpush1.msra.mxu0 %v3590
    %3592 = vmatprep.subr.mxu0 0.0
    %v3593 = vsub.f32 %v2038, %v2038
    %3594 = vmatpush1.msra.mxu0 %v3593
    %3595 = vmatprep.subr.mxu0 0.0
    %v3596 = vsub.f32 %v2037, %v2037
    %3597 = vmatpush1.msra.mxu0 %v3596
    %3598 = vmatprep.subr.mxu0 0.0
    %v3599 = vsub.f32 %v2036, %v2036
    %3600 = vmatpush1.msra.mxu0 %v3599
    %3601 = vmatprep.subr.mxu0 0.0
    %v3602 = vsub.f32 %v2035, %v2035
    %3603 = vmatpush1.msra.mxu0 %v3602
    %3604 = vmatprep.subr.mxu0 0.0
    %v3605 = vsub.f32 %v2034, %v2034
    %3606 = vmatpush1.msra.mxu0 %v3605
    %3607 = vmatprep.subr.mxu0 0.0
    %v3608 = vsub.f32 %v2033, %v2033
    %3609 = vmatpush1.msra.mxu0 %v3608
    %3610 = vmatprep.subr.mxu0 0.0
    %v3611 = vsub.f32 %v2032, %v2032
    %3612 = vmatpush1.msra.mxu0 %v3611
    %3613 = vmatprep.subr.mxu0 0.0
    %v3614 = vsub.f32 %v2031, %v2031
    %3615 = vmatpush1.msra.mxu0 %v3614
    %3616 = vmatprep.subr.mxu0 0.0
    %v3617 = vsub.f32 %v2030, %v2030
    %3618 = vmatpush1.msra.mxu0 %v3617
    %3619 = vmatprep.subr.mxu0 0.0
    %v3620 = vsub.f32 %v2029, %v2029
    %3621 = vmatpush1.msra.mxu0 %v3620
    %3622 = vmatprep.subr.mxu0 0.0
    %v3623 = vsub.f32 %v2028, %v2028
    %3624 = vmatpush1.msra.mxu0 %v3623
    %3625 = vmatprep.subr.mxu0 0.0
    %3626 = vmatpush2.msra.mxu0 0.0
    %3627 = vmatprep.subr.mxu0 0.0
    %3628 = vmatpush2.msra.mxu0 0.0
    %3629 = vmatprep.subr.mxu0 0.0
    %3630 = vmatpush2.msra.mxu0 0.0
    %3631 = vmatprep.subr.mxu0 0.0
    %3632 = vmatpush2.msra.mxu0 0.0
    %3633 = vmatprep.subr.mxu0 0.0
    %3634 = vmatpush2.msra.mxu0 0.0
    %3635 = vmatprep.subr.mxu0 0.0
    %3636 = vmatpush2.msra.mxu0 0.0
    %3637 = vmatprep.subr.mxu0 0.0
    %3638 = vmatpush2.msra.mxu0 0.0
    %3639 = vmatprep.subr.mxu0 0.0
    %3640 = vmatpush2.msra.mxu0 0.0
    %3641 = vmatprep.subr.mxu0 0.0
    %3642 = vmatpush2.msra.mxu0 0.0
    %3643 = vmatprep.subr.mxu0 0.0
    %3644 = vmatpush2.msra.mxu0 0.0
    %3645 = vmatprep.subr.mxu0 0.0
    %3646 = vmatpush2.msra.mxu0 0.0
    %3647 = vmatprep.subr.mxu0 0.0
    %3648 = vmatpush2.msra.mxu0 0.0
    %3649 = vmatprep.subr.mxu0 0.0
    %3650 = vmatpush2.msra.mxu0 0.0
    %3651 = vmatprep.subr.mxu0 0.0
    %3652 = vmatpush2.msra.mxu0 0.0
    %3653 = vmatprep.subr.mxu0 0.0
    %3654 = vmatpush2.msra.mxu0 0.0
    %3655 = vmatprep.subr.mxu0 0.0
    %3656 = vmatpush2.msra.mxu0 0.0
    %3657 = vmatprep.mubr.f32.mxu0 0.0
    %v3658 = vand.u32 %v3315, 4294901760
    %v3659 = vsub.f32 %v3315, %v3658
    %3660 = vmatmul.mubr.f32.gmra.mxu0 %v3659
    %v3661 = vpop.f32.mrf.mxu0
    %v3662 = vadd.f32 %v3556, %v3661
    %v3663 = vpop.f32.mrf.mxu0
    %3664 = vmatprep.mubr.f32.mxu0 0.0
    %v3665 = vand.u32 %v3316, 4294901760
    %v3666 = vsub.f32 %v3316, %v3665
    %3667 = vmatmul.mubr.f32.gmra.mxu0 %v3666
    %v3668 = vpop.f32.mrf.mxu0
    %v3669 = vadd.f32 %v3562, %v3668
    %v3670 = vpop.f32.mrf.mxu0
    %3671 = vmatprep.mubr.f32.mxu0 0.0
    %v3672 = vand.u32 %v3317, 4294901760
    %v3673 = vsub.f32 %v3317, %v3672
    %3674 = vmatmul.mubr.f32.gmra.mxu0 %v3673
    %v3675 = vpop.f32.mrf.mxu0
    %v3676 = vadd.f32 %v3568, %v3675
    %v3677 = vpop.f32.mrf.mxu0
    %3678 = vmatprep.mubr.f32.mxu0 0.0
    %v3679 = vand.u32 %v3318, 4294901760
    %v3680 = vsub.f32 %v3318, %v3679
    %3681 = vmatmul.mubr.f32.gmra.mxu0 %v3680
    %v3682 = vpop.f32.mrf.mxu0
    %v3683 = vadd.f32 %v3574, %v3682
    %v3684 = vpop.f32.mrf.mxu0
    %3685 = vdwg.mxu0
    %3686 = vmatprep.subr.mxu0 0.0
    %3687 = vmatpush1.msra.mxu0 %v2043
    %3688 = vmatprep.subr.mxu0 0.0
    %3689 = vmatpush1.msra.mxu0 %v2042
    %3690 = vmatprep.subr.mxu0 0.0
    %3691 = vmatpush1.msra.mxu0 %v2041
    %3692 = vmatprep.subr.mxu0 0.0
    %3693 = vmatpush1.msra.mxu0 %v2040
    %3694 = vmatprep.subr.mxu0 0.0
    %3695 = vmatpush1.msra.mxu0 %v2039
    %3696 = vmatprep.subr.mxu0 0.0
    %3697 = vmatpush1.msra.mxu0 %v2038
    %3698 = vmatprep.subr.mxu0 0.0
    %3699 = vmatpush1.msra.mxu0 %v2037
    %3700 = vmatprep.subr.mxu0 0.0
    %3701 = vmatpush1.msra.mxu0 %v2036
    %3702 = vmatprep.subr.mxu0 0.0
    %3703 = vmatpush1.msra.mxu0 %v2035
    %3704 = vmatprep.subr.mxu0 0.0
    %3705 = vmatpush1.msra.mxu0 %v2034
    %3706 = vmatprep.subr.mxu0 0.0
    %3707 = vmatpush1.msra.mxu0 %v2033
    %3708 = vmatprep.subr.mxu0 0.0
    %3709 = vmatpush1.msra.mxu0 %v2032
    %3710 = vmatprep.subr.mxu0 0.0
    %3711 = vmatpush1.msra.mxu0 %v2031
    %3712 = vmatprep.subr.mxu0 0.0
    %3713 = vmatpush1.msra.mxu0 %v2030
    %3714 = vmatprep.subr.mxu0 0.0
    %3715 = vmatpush1.msra.mxu0 %v2029
    %3716 = vmatprep.subr.mxu0 0.0
    %3717 = vmatpush1.msra.mxu0 %v2028
    %3718 = vmatprep.subr.mxu0 0.0
    %3719 = vmatpush2.msra.mxu0 0.0
    %3720 = vmatprep.subr.mxu0 0.0
    %3721 = vmatpush2.msra.mxu0 0.0
    %3722 = vmatprep.subr.mxu0 0.0
    %3723 = vmatpush2.msra.mxu0 0.0
    %3724 = vmatprep.subr.mxu0 0.0
    %3725 = vmatpush2.msra.mxu0 0.0
    %3726 = vmatprep.subr.mxu0 0.0
    %3727 = vmatpush2.msra.mxu0 0.0
    %3728 = vmatprep.subr.mxu0 0.0
    %3729 = vmatpush2.msra.mxu0 0.0
    %3730 = vmatprep.subr.mxu0 0.0
    %3731 = vmatpush2.msra.mxu0 0.0
    %3732 = vmatprep.subr.mxu0 0.0
    %3733 = vmatpush2.msra.mxu0 0.0
    %3734 = vmatprep.subr.mxu0 0.0
    %3735 = vmatpush2.msra.mxu0 0.0
    %3736 = vmatprep.subr.mxu0 0.0
    %3737 = vmatpush2.msra.mxu0 0.0
    %3738 = vmatprep.subr.mxu0 0.0
    %3739 = vmatpush2.msra.mxu0 0.0
    %3740 = vmatprep.subr.mxu0 0.0
    %3741 = vmatpush2.msra.mxu0 0.0
    %3742 = vmatprep.subr.mxu0 0.0
    %3743 = vmatpush2.msra.mxu0 0.0
    %3744 = vmatprep.subr.mxu0 0.0
    %3745 = vmatpush2.msra.mxu0 0.0
    %3746 = vmatprep.subr.mxu0 0.0
    %3747 = vmatpush2.msra.mxu0 0.0
    %3748 = vmatprep.subr.mxu0 0.0
    %3749 = vmatpush2.msra.mxu0 0.0
    %3750 = vmatprep.mubr.f32.mxu0 0.0
    %v3751 = vand.u32 %v3315, 4294901760
    %v3752 = vsub.f32 %v3315, %v3751
    %v3753 = vand.u32 %v3752, 4294901760
    %3754 = vmatmul.mubr.f32.gmra.mxu0 %v3753
    %v3755 = vpop.f32.mrf.mxu0
    %v3756 = vadd.f32 %v3662, %v3755
    %v3757 = vpop.f32.mrf.mxu0
    %3758 = vmatprep.mubr.f32.mxu0 0.0
    %v3759 = vand.u32 %v3316, 4294901760
    %v3760 = vsub.f32 %v3316, %v3759
    %v3761 = vand.u32 %v3760, 4294901760
    %3762 = vmatmul.mubr.f32.gmra.mxu0 %v3761
    %v3763 = vpop.f32.mrf.mxu0
    %v3764 = vadd.f32 %v3669, %v3763
    %v3765 = vpop.f32.mrf.mxu0
    %3766 = vmatprep.mubr.f32.mxu0 0.0
    %v3767 = vand.u32 %v3317, 4294901760
    %v3768 = vsub.f32 %v3317, %v3767
    %v3769 = vand.u32 %v3768, 4294901760
    %3770 = vmatmul.mubr.f32.gmra.mxu0 %v3769
    %v3771 = vpop.f32.mrf.mxu0
    %v3772 = vadd.f32 %v3676, %v3771
    %v3773 = vpop.f32.mrf.mxu0
    %3774 = vmatprep.mubr.f32.mxu0 0.0
    %v3775 = vand.u32 %v3318, 4294901760
    %v3776 = vsub.f32 %v3318, %v3775
    %v3777 = vand.u32 %v3776, 4294901760
    %3778 = vmatmul.mubr.f32.gmra.mxu0 %v3777
    %v3779 = vpop.f32.mrf.mxu0
    %v3780 = vadd.f32 %v3683, %v3779
    %v3781 = vpop.f32.mrf.mxu0
    %3782 = vdwg.mxu0
    %3783 = vmatprep.subr.mxu0 0.0
    %v3784 = vsub.f32 %v2043, %v2043
    %v3785 = vand.u32 %v3784, 4294901760
    %3786 = vmatpush1.msra.mxu0 %v3785
    %3787 = vmatprep.subr.mxu0 0.0
    %v3788 = vsub.f32 %v2042, %v2042
    %v3789 = vand.u32 %v3788, 4294901760
    %3790 = vmatpush1.msra.mxu0 %v3789
    %3791 = vmatprep.subr.mxu0 0.0
    %v3792 = vsub.f32 %v2041, %v2041
    %v3793 = vand.u32 %v3792, 4294901760
    %3794 = vmatpush1.msra.mxu0 %v3793
    %3795 = vmatprep.subr.mxu0 0.0
    %v3796 = vsub.f32 %v2040, %v2040
    %v3797 = vand.u32 %v3796, 4294901760
    %3798 = vmatpush1.msra.mxu0 %v3797
    %3799 = vmatprep.subr.mxu0 0.0
    %v3800 = vsub.f32 %v2039, %v2039
    %v3801 = vand.u32 %v3800, 4294901760
    %3802 = vmatpush1.msra.mxu0 %v3801
    %3803 = vmatprep.subr.mxu0 0.0
    %v3804 = vsub.f32 %v2038, %v2038
    %v3805 = vand.u32 %v3804, 4294901760
    %3806 = vmatpush1.msra.mxu0 %v3805
    %3807 = vmatprep.subr.mxu0 0.0
    %v3808 = vsub.f32 %v2037, %v2037
    %v3809 = vand.u32 %v3808, 4294901760
    %3810 = vmatpush1.msra.mxu0 %v3809
    %3811 = vmatprep.subr.mxu0 0.0
    %v3812 = vsub.f32 %v2036, %v2036
    %v3813 = vand.u32 %v3812, 4294901760
    %3814 = vmatpush1.msra.mxu0 %v3813
    %3815 = vmatprep.subr.mxu0 0.0
    %v3816 = vsub.f32 %v2035, %v2035
    %v3817 = vand.u32 %v3816, 4294901760
    %3818 = vmatpush1.msra.mxu0 %v3817
    %3819 = vmatprep.subr.mxu0 0.0
    %v3820 = vsub.f32 %v2034, %v2034
    %v3821 = vand.u32 %v3820, 4294901760
    %3822 = vmatpush1.msra.mxu0 %v3821
    %3823 = vmatprep.subr.mxu0 0.0
    %v3824 = vsub.f32 %v2033, %v2033
    %v3825 = vand.u32 %v3824, 4294901760
    %3826 = vmatpush1.msra.mxu0 %v3825
    %3827 = vmatprep.subr.mxu0 0.0
    %v3828 = vsub.f32 %v2032, %v2032
    %v3829 = vand.u32 %v3828, 4294901760
    %3830 = vmatpush1.msra.mxu0 %v3829
    %3831 = vmatprep.subr.mxu0 0.0
    %v3832 = vsub.f32 %v2031, %v2031
    %v3833 = vand.u32 %v3832, 4294901760
    %3834 = vmatpush1.msra.mxu0 %v3833
    %3835 = vmatprep.subr.mxu0 0.0
    %v3836 = vsub.f32 %v2030, %v2030
    %v3837 = vand.u32 %v3836, 4294901760
    %3838 = vmatpush1.msra.mxu0 %v3837
    %3839 = vmatprep.subr.mxu0 0.0
    %v3840 = vsub.f32 %v2029, %v2029
    %v3841 = vand.u32 %v3840, 4294901760
    %3842 = vmatpush1.msra.mxu0 %v3841
    %3843 = vmatprep.subr.mxu0 0.0
    %v3844 = vsub.f32 %v2028, %v2028
    %v3845 = vand.u32 %v3844, 4294901760
    %3846 = vmatpush1.msra.mxu0 %v3845
    %3847 = vmatprep.subr.mxu0 0.0
    %3848 = vmatpush2.msra.mxu0 0.0
    %3849 = vmatprep.subr.mxu0 0.0
    %3850 = vmatpush2.msra.mxu0 0.0
    %3851 = vmatprep.subr.mxu0 0.0
    %3852 = vmatpush2.msra.mxu0 0.0
    %3853 = vmatprep.subr.mxu0 0.0
    %3854 = vmatpush2.msra.mxu0 0.0
    %3855 = vmatprep.subr.mxu0 0.0
    %3856 = vmatpush2.msra.mxu0 0.0
    %3857 = vmatprep.subr.mxu0 0.0
    %3858 = vmatpush2.msra.mxu0 0.0
    %3859 = vmatprep.subr.mxu0 0.0
    %3860 = vmatpush2.msra.mxu0 0.0
    %3861 = vmatprep.subr.mxu0 0.0
    %3862 = vmatpush2.msra.mxu0 0.0
    %3863 = vmatprep.subr.mxu0 0.0
    %3864 = vmatpush2.msra.mxu0 0.0
    %3865 = vmatprep.subr.mxu0 0.0
    %3866 = vmatpush2.msra.mxu0 0.0
    %3867 = vmatprep.subr.mxu0 0.0
    %3868 = vmatpush2.msra.mxu0 0.0
    %3869 = vmatprep.subr.mxu0 0.0
    %3870 = vmatpush2.msra.mxu0 0.0
    %3871 = vmatprep.subr.mxu0 0.0
    %3872 = vmatpush2.msra.mxu0 0.0
    %3873 = vmatprep.subr.mxu0 0.0
    %3874 = vmatpush2.msra.mxu0 0.0
    %3875 = vmatprep.subr.mxu0 0.0
    %3876 = vmatpush2.msra.mxu0 0.0
    %3877 = vmatprep.subr.mxu0 0.0
    %3878 = vmatpush2.msra.mxu0 0.0
    %3879 = vmatprep.mubr.f32.mxu0 0.0
    %v3880 = vand.u32 %v3315, 4294901760
    %3881 = vmatmul.mubr.f32.gmra.mxu0 %v3880
    %v3882 = vpop.f32.mrf.mxu0
    %v3883 = vadd.f32 %v3756, %v3882
    %v3884 = vpop.f32.mrf.mxu0
    %3885 = vmatprep.mubr.f32.mxu0 0.0
    %v3886 = vand.u32 %v3316, 4294901760
    %3887 = vmatmul.mubr.f32.gmra.mxu0 %v3886
    %v3888 = vpop.f32.mrf.mxu0
    %v3889 = vadd.f32 %v3764, %v3888
    %v3890 = vpop.f32.mrf.mxu0
    %3891 = vmatprep.mubr.f32.mxu0 0.0
    %v3892 = vand.u32 %v3317, 4294901760
    %3893 = vmatmul.mubr.f32.gmra.mxu0 %v3892
    %v3894 = vpop.f32.mrf.mxu0
    %v3895 = vadd.f32 %v3772, %v3894
    %v3896 = vpop.f32.mrf.mxu0
    %3897 = vmatprep.mubr.f32.mxu0 0.0
    %v3898 = vand.u32 %v3318, 4294901760
    %3899 = vmatmul.mubr.f32.gmra.mxu0 %v3898
    %v3900 = vpop.f32.mrf.mxu0
    %v3901 = vadd.f32 %v3780, %v3900
    %v3902 = vpop.f32.mrf.mxu0
    %3903 = vdwg.mxu0
    %3904 = vmatprep.subr.mxu0 0.0
    %3905 = vmatpush1.msra.mxu0 %v2043
    %3906 = vmatprep.subr.mxu0 0.0
    %3907 = vmatpush1.msra.mxu0 %v2042
    %3908 = vmatprep.subr.mxu0 0.0
    %3909 = vmatpush1.msra.mxu0 %v2041
    %3910 = vmatprep.subr.mxu0 0.0
    %3911 = vmatpush1.msra.mxu0 %v2040
    %3912 = vmatprep.subr.mxu0 0.0
    %3913 = vmatpush1.msra.mxu0 %v2039
    %3914 = vmatprep.subr.mxu0 0.0
    %3915 = vmatpush1.msra.mxu0 %v2038
    %3916 = vmatprep.subr.mxu0 0.0
    %3917 = vmatpush1.msra.mxu0 %v2037
    %3918 = vmatprep.subr.mxu0 0.0
    %3919 = vmatpush1.msra.mxu0 %v2036
    %3920 = vmatprep.subr.mxu0 0.0
    %3921 = vmatpush1.msra.mxu0 %v2035
    %3922 = vmatprep.subr.mxu0 0.0
    %3923 = vmatpush1.msra.mxu0 %v2034
    %3924 = vmatprep.subr.mxu0 0.0
    %3925 = vmatpush1.msra.mxu0 %v2033
    %3926 = vmatprep.subr.mxu0 0.0
    %3927 = vmatpush1.msra.mxu0 %v2032
    %3928 = vmatprep.subr.mxu0 0.0
    %3929 = vmatpush1.msra.mxu0 %v2031
    %3930 = vmatprep.subr.mxu0 0.0
    %3931 = vmatpush1.msra.mxu0 %v2030
    %3932 = vmatprep.subr.mxu0 0.0
    %3933 = vmatpush1.msra.mxu0 %v2029
    %3934 = vmatprep.subr.mxu0 0.0
    %3935 = vmatpush1.msra.mxu0 %v2028
    %3936 = vmatprep.subr.mxu0 0.0
    %3937 = vmatpush2.msra.mxu0 0.0
    %3938 = vmatprep.subr.mxu0 0.0
    %3939 = vmatpush2.msra.mxu0 0.0
    %3940 = vmatprep.subr.mxu0 0.0
    %3941 = vmatpush2.msra.mxu0 0.0
    %3942 = vmatprep.subr.mxu0 0.0
    %3943 = vmatpush2.msra.mxu0 0.0
    %3944 = vmatprep.subr.mxu0 0.0
    %3945 = vmatpush2.msra.mxu0 0.0
    %3946 = vmatprep.subr.mxu0 0.0
    %3947 = vmatpush2.msra.mxu0 0.0
    %3948 = vmatprep.subr.mxu0 0.0
    %3949 = vmatpush2.msra.mxu0 0.0
    %3950 = vmatprep.subr.mxu0 0.0
    %3951 = vmatpush2.msra.mxu0 0.0
    %3952 = vmatprep.subr.mxu0 0.0
    %3953 = vmatpush2.msra.mxu0 0.0
    %3954 = vmatprep.subr.mxu0 0.0
    %3955 = vmatpush2.msra.mxu0 0.0
    %3956 = vmatprep.subr.mxu0 0.0
    %3957 = vmatpush2.msra.mxu0 0.0
    %3958 = vmatprep.subr.mxu0 0.0
    %3959 = vmatpush2.msra.mxu0 0.0
    %3960 = vmatprep.subr.mxu0 0.0
    %3961 = vmatpush2.msra.mxu0 0.0
    %3962 = vmatprep.subr.mxu0 0.0
    %3963 = vmatpush2.msra.mxu0 0.0
    %3964 = vmatprep.subr.mxu0 0.0
    %3965 = vmatpush2.msra.mxu0 0.0
    %3966 = vmatprep.subr.mxu0 0.0
    %3967 = vmatpush2.msra.mxu0 0.0
    %3968 = vmatprep.mubr.f32.mxu0 0.0
    %v3969 = vand.u32 %v3315, 4294901760
    %3970 = vmatmul.mubr.f32.gmra.mxu0 %v3969
    %v3971 = vpop.f32.mrf.mxu0
    %v3972 = vadd.f32 %v3883, %v3971
    %v3973 = vpop.f32.mrf.mxu0
    %3974 = vmatprep.mubr.f32.mxu0 0.0
    %v3975 = vand.u32 %v3316, 4294901760
    %3976 = vmatmul.mubr.f32.gmra.mxu0 %v3975
    %v3977 = vpop.f32.mrf.mxu0
    %v3978 = vadd.f32 %v3889, %v3977
    %v3979 = vpop.f32.mrf.mxu0
    %3980 = vmatprep.mubr.f32.mxu0 0.0
    %v3981 = vand.u32 %v3317, 4294901760
    %3982 = vmatmul.mubr.f32.gmra.mxu0 %v3981
    %v3983 = vpop.f32.mrf.mxu0
    %v3984 = vadd.f32 %v3895, %v3983
    %v3985 = vpop.f32.mrf.mxu0
    %3986 = vmatprep.mubr.f32.mxu0 0.0
    %v3987 = vand.u32 %v3318, 4294901760
    %3988 = vmatmul.mubr.f32.gmra.mxu0 %v3987
    %v3989 = vpop.f32.mrf.mxu0
    %v3990 = vadd.f32 %v3901, %v3989
    %v3991 = vpop.f32.mrf.mxu0
    %3992 = vdwg.mxu0
    %v3993 = vmul.f32 %v3972, 0.0625
    %v3994 = vmul.f32 %v3978, 0.0625
    %v3995 = vmul.f32 %v3984, 0.0625
    %v3996 = vmul.f32 %v3990, 0.0625
    %v3998 = vsel %vm2729, %v3993, 0
    %v4001 = vsel %vm2729, %v3994, 0
    %v4004 = vsel %vm2729, %v3995, 0
    %v4007 = vsel %vm2729, %v3996, 0
    %4009 = vmatprep.subr.mxu0 0.0
    %4010 = vmatpush1.msra.mxu0 0.0
    %4011 = vmatprep.subr.mxu0 0.0
    %4012 = vmatpush1.msra.mxu0 0.0
    %4013 = vmatprep.subr.mxu0 0.0
    %4014 = vmatpush1.msra.mxu0 0.0
    %4015 = vmatprep.subr.mxu0 0.0
    %4016 = vmatpush1.msra.mxu0 0.0
    %4017 = vmatprep.subr.mxu0 0.0
    %4018 = vmatpush1.msra.mxu0 0.0
    %4019 = vmatprep.subr.mxu0 0.0
    %4020 = vmatpush1.msra.mxu0 0.0
    %4021 = vmatprep.subr.mxu0 0.0
    %4022 = vmatpush1.msra.mxu0 0.0
    %4023 = vmatprep.subr.mxu0 0.0
    %4024 = vmatpush1.msra.mxu0 0.0
    %4025 = vmatprep.subr.mxu0 0.0
    %4026 = vmatpush1.msra.mxu0 0.0
    %4027 = vmatprep.subr.mxu0 0.0
    %4028 = vmatpush1.msra.mxu0 0.0
    %4029 = vmatprep.subr.mxu0 0.0
    %4030 = vmatpush1.msra.mxu0 0.0
    %4031 = vmatprep.subr.mxu0 0.0
    %4032 = vmatpush1.msra.mxu0 0.0
    %4033 = vmatprep.subr.mxu0 0.0
    %4034 = vmatpush1.msra.mxu0 0.0
    %4035 = vmatprep.subr.mxu0 0.0
    %4036 = vmatpush1.msra.mxu0 0.0
    %4037 = vmatprep.subr.mxu0 0.0
    %4038 = vmatpush1.msra.mxu0 0.0
    %4039 = vmatprep.subr.mxu0 0.0
    %4040 = vmatpush1.msra.mxu0 %v2050
    %4041 = vmatprep.subr.mxu0 0.0
    %4042 = vmatpush2.msra.mxu0 0.0
    %4043 = vmatprep.subr.mxu0 0.0
    %4044 = vmatpush2.msra.mxu0 0.0
    %4045 = vmatprep.subr.mxu0 0.0
    %4046 = vmatpush2.msra.mxu0 0.0
    %4047 = vmatprep.subr.mxu0 0.0
    %4048 = vmatpush2.msra.mxu0 0.0
    %4049 = vmatprep.subr.mxu0 0.0
    %4050 = vmatpush2.msra.mxu0 0.0
    %4051 = vmatprep.subr.mxu0 0.0
    %4052 = vmatpush2.msra.mxu0 0.0
    %4053 = vmatprep.subr.mxu0 0.0
    %4054 = vmatpush2.msra.mxu0 0.0
    %4055 = vmatprep.subr.mxu0 0.0
    %4056 = vmatpush2.msra.mxu0 0.0
    %4057 = vmatprep.subr.mxu0 0.0
    %4058 = vmatpush2.msra.mxu0 0.0
    %4059 = vmatprep.subr.mxu0 0.0
    %4060 = vmatpush2.msra.mxu0 0.0
    %4061 = vmatprep.subr.mxu0 0.0
    %4062 = vmatpush2.msra.mxu0 0.0
    %4063 = vmatprep.subr.mxu0 0.0
    %4064 = vmatpush2.msra.mxu0 0.0
    %4065 = vmatprep.subr.mxu0 0.0
    %4066 = vmatpush2.msra.mxu0 0.0
    %4067 = vmatprep.subr.mxu0 0.0
    %4068 = vmatpush2.msra.mxu0 0.0
    %4069 = vmatprep.subr.mxu0 0.0
    %4070 = vmatpush2.msra.mxu0 0.0
    %4071 = vmatprep.subr.mxu0 0.0
    %4072 = vmatpush2.msra.mxu0 0.0
    %4073 = vmatprep.mubr.f32.mxu0 0.0
    %v4074 = vand.u32 %v3998, 4294901760
    %v4075 = vsub.f32 %v3998, %v4074
    %v4076 = vand.u32 %v4075, 4294901760
    %v4077 = vsub.f32 %v4075, %v4076
    %v4078 = vand.u32 %v4077, 4294901760
    %4079 = vmatmul.mubr.f32.gmra.mxu0 %v4078
    %v4080 = vpop.f32.mrf.mxu0
    %v4081 = vadd.f32 1e-05, %v4080
    %v4082 = vpop.f32.mrf.mxu0
    %4083 = vmatprep.mubr.f32.mxu0 0.0
    %v4084 = vand.u32 %v4001, 4294901760
    %v4085 = vsub.f32 %v4001, %v4084
    %v4086 = vand.u32 %v4085, 4294901760
    %v4087 = vsub.f32 %v4085, %v4086
    %v4088 = vand.u32 %v4087, 4294901760
    %4089 = vmatmul.mubr.f32.gmra.mxu0 %v4088
    %v4090 = vpop.f32.mrf.mxu0
    %v4091 = vadd.f32 1e-05, %v4090
    %v4092 = vpop.f32.mrf.mxu0
    %4093 = vmatprep.mubr.f32.mxu0 0.0
    %v4094 = vand.u32 %v4004, 4294901760
    %v4095 = vsub.f32 %v4004, %v4094
    %v4096 = vand.u32 %v4095, 4294901760
    %v4097 = vsub.f32 %v4095, %v4096
    %v4098 = vand.u32 %v4097, 4294901760
    %4099 = vmatmul.mubr.f32.gmra.mxu0 %v4098
    %v4100 = vpop.f32.mrf.mxu0
    %v4101 = vadd.f32 1e-05, %v4100
    %v4102 = vpop.f32.mrf.mxu0
    %4103 = vmatprep.mubr.f32.mxu0 0.0
    %v4104 = vand.u32 %v4007, 4294901760
    %v4105 = vsub.f32 %v4007, %v4104
    %v4106 = vand.u32 %v4105, 4294901760
    %v4107 = vsub.f32 %v4105, %v4106
    %v4108 = vand.u32 %v4107, 4294901760
    %4109 = vmatmul.mubr.f32.gmra.mxu0 %v4108
    %v4110 = vpop.f32.mrf.mxu0
    %v4111 = vadd.f32 1e-05, %v4110
    %v4112 = vpop.f32.mrf.mxu0
    %4113 = vdwg.mxu0
    %4114 = vmatprep.subr.mxu0 0.0
    %4115 = vmatpush1.msra.mxu0 0.0
    %4116 = vmatprep.subr.mxu0 0.0
    %4117 = vmatpush1.msra.mxu0 0.0
    %4118 = vmatprep.subr.mxu0 0.0
    %4119 = vmatpush1.msra.mxu0 0.0
    %4120 = vmatprep.subr.mxu0 0.0
    %4121 = vmatpush1.msra.mxu0 0.0
    %4122 = vmatprep.subr.mxu0 0.0
    %4123 = vmatpush1.msra.mxu0 0.0
    %4124 = vmatprep.subr.mxu0 0.0
    %4125 = vmatpush1.msra.mxu0 0.0
    %4126 = vmatprep.subr.mxu0 0.0
    %4127 = vmatpush1.msra.mxu0 0.0
    %4128 = vmatprep.subr.mxu0 0.0
    %4129 = vmatpush1.msra.mxu0 0.0
    %4130 = vmatprep.subr.mxu0 0.0
    %4131 = vmatpush1.msra.mxu0 0.0
    %4132 = vmatprep.subr.mxu0 0.0
    %4133 = vmatpush1.msra.mxu0 0.0
    %4134 = vmatprep.subr.mxu0 0.0
    %4135 = vmatpush1.msra.mxu0 0.0
    %4136 = vmatprep.subr.mxu0 0.0
    %4137 = vmatpush1.msra.mxu0 0.0
    %4138 = vmatprep.subr.mxu0 0.0
    %4139 = vmatpush1.msra.mxu0 0.0
    %4140 = vmatprep.subr.mxu0 0.0
    %4141 = vmatpush1.msra.mxu0 0.0
    %4142 = vmatprep.subr.mxu0 0.0
    %4143 = vmatpush1.msra.mxu0 0.0
    %4144 = vmatprep.subr.mxu0 0.0
    %v4145 = vsub.f32 %v2050, %v2050
    %v4146 = vand.u32 %v4145, 4294901760
    %v4147 = vsub.f32 %v4145, %v4146
    %v4148 = vand.u32 %v4147, 4294901760
    %4149 = vmatpush1.msra.mxu0 %v4148
    %4150 = vmatprep.subr.mxu0 0.0
    %4151 = vmatpush2.msra.mxu0 0.0
    %4152 = vmatprep.subr.mxu0 0.0
    %4153 = vmatpush2.msra.mxu0 0.0
    %4154 = vmatprep.subr.mxu0 0.0
    %4155 = vmatpush2.msra.mxu0 0.0
    %4156 = vmatprep.subr.mxu0 0.0
    %4157 = vmatpush2.msra.mxu0 0.0
    %4158 = vmatprep.subr.mxu0 0.0
    %4159 = vmatpush2.msra.mxu0 0.0
    %4160 = vmatprep.subr.mxu0 0.0
    %4161 = vmatpush2.msra.mxu0 0.0
    %4162 = vmatprep.subr.mxu0 0.0
    %4163 = vmatpush2.msra.mxu0 0.0
    %4164 = vmatprep.subr.mxu0 0.0
    %4165 = vmatpush2.msra.mxu0 0.0
    %4166 = vmatprep.subr.mxu0 0.0
    %4167 = vmatpush2.msra.mxu0 0.0
    %4168 = vmatprep.subr.mxu0 0.0
    %4169 = vmatpush2.msra.mxu0 0.0
    %4170 = vmatprep.subr.mxu0 0.0
    %4171 = vmatpush2.msra.mxu0 0.0
    %4172 = vmatprep.subr.mxu0 0.0
    %4173 = vmatpush2.msra.mxu0 0.0
    %4174 = vmatprep.subr.mxu0 0.0
    %4175 = vmatpush2.msra.mxu0 0.0
    %4176 = vmatprep.subr.mxu0 0.0
    %4177 = vmatpush2.msra.mxu0 0.0
    %4178 = vmatprep.subr.mxu0 0.0
    %4179 = vmatpush2.msra.mxu0 0.0
    %4180 = vmatprep.subr.mxu0 0.0
    %4181 = vmatpush2.msra.mxu0 0.0
    %4182 = vmatprep.mubr.f32.mxu0 0.0
    %v4183 = vand.u32 %v3998, 4294901760
    %4184 = vmatmul.mubr.f32.gmra.mxu0 %v4183
    %v4185 = vpop.f32.mrf.mxu0
    %v4186 = vadd.f32 %v4081, %v4185
    %v4187 = vpop.f32.mrf.mxu0
    %4188 = vmatprep.mubr.f32.mxu0 0.0
    %v4189 = vand.u32 %v4001, 4294901760
    %4190 = vmatmul.mubr.f32.gmra.mxu0 %v4189
    %v4191 = vpop.f32.mrf.mxu0
    %v4192 = vadd.f32 %v4091, %v4191
    %v4193 = vpop.f32.mrf.mxu0
    %4194 = vmatprep.mubr.f32.mxu0 0.0
    %v4195 = vand.u32 %v4004, 4294901760
    %4196 = vmatmul.mubr.f32.gmra.mxu0 %v4195
    %v4197 = vpop.f32.mrf.mxu0
    %v4198 = vadd.f32 %v4101, %v4197
    %v4199 = vpop.f32.mrf.mxu0
    %4200 = vmatprep.mubr.f32.mxu0 0.0
    %v4201 = vand.u32 %v4007, 4294901760
    %4202 = vmatmul.mubr.f32.gmra.mxu0 %v4201
    %v4203 = vpop.f32.mrf.mxu0
    %v4204 = vadd.f32 %v4111, %v4203
    %v4205 = vpop.f32.mrf.mxu0
    %4206 = vdwg.mxu0
    %4207 = vmatprep.subr.mxu0 0.0
    %4208 = vmatpush1.msra.mxu0 0.0
    %4209 = vmatprep.subr.mxu0 0.0
    %4210 = vmatpush1.msra.mxu0 0.0
    %4211 = vmatprep.subr.mxu0 0.0
    %4212 = vmatpush1.msra.mxu0 0.0
    %4213 = vmatprep.subr.mxu0 0.0
    %4214 = vmatpush1.msra.mxu0 0.0
    %4215 = vmatprep.subr.mxu0 0.0
    %4216 = vmatpush1.msra.mxu0 0.0
    %4217 = vmatprep.subr.mxu0 0.0
    %4218 = vmatpush1.msra.mxu0 0.0
    %4219 = vmatprep.subr.mxu0 0.0
    %4220 = vmatpush1.msra.mxu0 0.0
    %4221 = vmatprep.subr.mxu0 0.0
    %4222 = vmatpush1.msra.mxu0 0.0
    %4223 = vmatprep.subr.mxu0 0.0
    %4224 = vmatpush1.msra.mxu0 0.0
    %4225 = vmatprep.subr.mxu0 0.0
    %4226 = vmatpush1.msra.mxu0 0.0
    %4227 = vmatprep.subr.mxu0 0.0
    %4228 = vmatpush1.msra.mxu0 0.0
    %4229 = vmatprep.subr.mxu0 0.0
    %4230 = vmatpush1.msra.mxu0 0.0
    %4231 = vmatprep.subr.mxu0 0.0
    %4232 = vmatpush1.msra.mxu0 0.0
    %4233 = vmatprep.subr.mxu0 0.0
    %4234 = vmatpush1.msra.mxu0 0.0
    %4235 = vmatprep.subr.mxu0 0.0
    %4236 = vmatpush1.msra.mxu0 0.0
    %4237 = vmatprep.subr.mxu0 0.0
    %v4238 = vsub.f32 %v2050, %v2050
    %4239 = vmatpush1.msra.mxu0 %v4238
    %4240 = vmatprep.subr.mxu0 0.0
    %4241 = vmatpush2.msra.mxu0 0.0
    %4242 = vmatprep.subr.mxu0 0.0
    %4243 = vmatpush2.msra.mxu0 0.0
    %4244 = vmatprep.subr.mxu0 0.0
    %4245 = vmatpush2.msra.mxu0 0.0
    %4246 = vmatprep.subr.mxu0 0.0
    %4247 = vmatpush2.msra.mxu0 0.0
    %4248 = vmatprep.subr.mxu0 0.0
    %4249 = vmatpush2.msra.mxu0 0.0
    %4250 = vmatprep.subr.mxu0 0.0
    %4251 = vmatpush2.msra.mxu0 0.0
    %4252 = vmatprep.subr.mxu0 0.0
    %4253 = vmatpush2.msra.mxu0 0.0
    %4254 = vmatprep.subr.mxu0 0.0
    %4255 = vmatpush2.msra.mxu0 0.0
    %4256 = vmatprep.subr.mxu0 0.0
    %4257 = vmatpush2.msra.mxu0 0.0
    %4258 = vmatprep.subr.mxu0 0.0
    %4259 = vmatpush2.msra.mxu0 0.0
    %4260 = vmatprep.subr.mxu0 0.0
    %4261 = vmatpush2.msra.mxu0 0.0
    %4262 = vmatprep.subr.mxu0 0.0
    %4263 = vmatpush2.msra.mxu0 0.0
    %4264 = vmatprep.subr.mxu0 0.0
    %4265 = vmatpush2.msra.mxu0 0.0
    %4266 = vmatprep.subr.mxu0 0.0
    %4267 = vmatpush2.msra.mxu0 0.0
    %4268 = vmatprep.subr.mxu0 0.0
    %4269 = vmatpush2.msra.mxu0 0.0
    %4270 = vmatprep.subr.mxu0 0.0
    %4271 = vmatpush2.msra.mxu0 0.0
    %4272 = vmatprep.mubr.f32.mxu0 0.0
    %v4273 = vand.u32 %v3998, 4294901760
    %v4274 = vsub.f32 %v3998, %v4273
    %4275 = vmatmul.mubr.f32.gmra.mxu0 %v4274
    %v4276 = vpop.f32.mrf.mxu0
    %v4277 = vadd.f32 %v4186, %v4276
    %v4278 = vpop.f32.mrf.mxu0
    %4279 = vmatprep.mubr.f32.mxu0 0.0
    %v4280 = vand.u32 %v4001, 4294901760
    %v4281 = vsub.f32 %v4001, %v4280
    %4282 = vmatmul.mubr.f32.gmra.mxu0 %v4281
    %v4283 = vpop.f32.mrf.mxu0
    %v4284 = vadd.f32 %v4192, %v4283
    %v4285 = vpop.f32.mrf.mxu0
    %4286 = vmatprep.mubr.f32.mxu0 0.0
    %v4287 = vand.u32 %v4004, 4294901760
    %v4288 = vsub.f32 %v4004, %v4287
    %4289 = vmatmul.mubr.f32.gmra.mxu0 %v4288
    %v4290 = vpop.f32.mrf.mxu0
    %v4291 = vadd.f32 %v4198, %v4290
    %v4292 = vpop.f32.mrf.mxu0
    %4293 = vmatprep.mubr.f32.mxu0 0.0
    %v4294 = vand.u32 %v4007, 4294901760
    %v4295 = vsub.f32 %v4007, %v4294
    %4296 = vmatmul.mubr.f32.gmra.mxu0 %v4295
    %v4297 = vpop.f32.mrf.mxu0
    %v4298 = vadd.f32 %v4204, %v4297
    %v4299 = vpop.f32.mrf.mxu0
    %4300 = vdwg.mxu0
    %4301 = vmatprep.subr.mxu0 0.0
    %4302 = vmatpush1.msra.mxu0 0.0
    %4303 = vmatprep.subr.mxu0 0.0
    %4304 = vmatpush1.msra.mxu0 0.0
    %4305 = vmatprep.subr.mxu0 0.0
    %4306 = vmatpush1.msra.mxu0 0.0
    %4307 = vmatprep.subr.mxu0 0.0
    %4308 = vmatpush1.msra.mxu0 0.0
    %4309 = vmatprep.subr.mxu0 0.0
    %4310 = vmatpush1.msra.mxu0 0.0
    %4311 = vmatprep.subr.mxu0 0.0
    %4312 = vmatpush1.msra.mxu0 0.0
    %4313 = vmatprep.subr.mxu0 0.0
    %4314 = vmatpush1.msra.mxu0 0.0
    %4315 = vmatprep.subr.mxu0 0.0
    %4316 = vmatpush1.msra.mxu0 0.0
    %4317 = vmatprep.subr.mxu0 0.0
    %4318 = vmatpush1.msra.mxu0 0.0
    %4319 = vmatprep.subr.mxu0 0.0
    %4320 = vmatpush1.msra.mxu0 0.0
    %4321 = vmatprep.subr.mxu0 0.0
    %4322 = vmatpush1.msra.mxu0 0.0
    %4323 = vmatprep.subr.mxu0 0.0
    %4324 = vmatpush1.msra.mxu0 0.0
    %4325 = vmatprep.subr.mxu0 0.0
    %4326 = vmatpush1.msra.mxu0 0.0
    %4327 = vmatprep.subr.mxu0 0.0
    %4328 = vmatpush1.msra.mxu0 0.0
    %4329 = vmatprep.subr.mxu0 0.0
    %4330 = vmatpush1.msra.mxu0 0.0
    %4331 = vmatprep.subr.mxu0 0.0
    %4332 = vmatpush1.msra.mxu0 %v2050
    %4333 = vmatprep.subr.mxu0 0.0
    %4334 = vmatpush2.msra.mxu0 0.0
    %4335 = vmatprep.subr.mxu0 0.0
    %4336 = vmatpush2.msra.mxu0 0.0
    %4337 = vmatprep.subr.mxu0 0.0
    %4338 = vmatpush2.msra.mxu0 0.0
    %4339 = vmatprep.subr.mxu0 0.0
    %4340 = vmatpush2.msra.mxu0 0.0
    %4341 = vmatprep.subr.mxu0 0.0
    %4342 = vmatpush2.msra.mxu0 0.0
    %4343 = vmatprep.subr.mxu0 0.0
    %4344 = vmatpush2.msra.mxu0 0.0
    %4345 = vmatprep.subr.mxu0 0.0
    %4346 = vmatpush2.msra.mxu0 0.0
    %4347 = vmatprep.subr.mxu0 0.0
    %4348 = vmatpush2.msra.mxu0 0.0
    %4349 = vmatprep.subr.mxu0 0.0
    %4350 = vmatpush2.msra.mxu0 0.0
    %4351 = vmatprep.subr.mxu0 0.0
    %4352 = vmatpush2.msra.mxu0 0.0
    %4353 = vmatprep.subr.mxu0 0.0
    %4354 = vmatpush2.msra.mxu0 0.0
    %4355 = vmatprep.subr.mxu0 0.0
    %4356 = vmatpush2.msra.mxu0 0.0
    %4357 = vmatprep.subr.mxu0 0.0
    %4358 = vmatpush2.msra.mxu0 0.0
    %4359 = vmatprep.subr.mxu0 0.0
    %4360 = vmatpush2.msra.mxu0 0.0
    %4361 = vmatprep.subr.mxu0 0.0
    %4362 = vmatpush2.msra.mxu0 0.0
    %4363 = vmatprep.subr.mxu0 0.0
    %4364 = vmatpush2.msra.mxu0 0.0
    %4365 = vmatprep.mubr.f32.mxu0 0.0
    %v4366 = vand.u32 %v3998, 4294901760
    %v4367 = vsub.f32 %v3998, %v4366
    %v4368 = vand.u32 %v4367, 4294901760
    %4369 = vmatmul.mubr.f32.gmra.mxu0 %v4368
    %v4370 = vpop.f32.mrf.mxu0
    %v4371 = vadd.f32 %v4277, %v4370
    %v4372 = vpop.f32.mrf.mxu0
    %4373 = vmatprep.mubr.f32.mxu0 0.0
    %v4374 = vand.u32 %v4001, 4294901760
    %v4375 = vsub.f32 %v4001, %v4374
    %v4376 = vand.u32 %v4375, 4294901760
    %4377 = vmatmul.mubr.f32.gmra.mxu0 %v4376
    %v4378 = vpop.f32.mrf.mxu0
    %v4379 = vadd.f32 %v4284, %v4378
    %v4380 = vpop.f32.mrf.mxu0
    %4381 = vmatprep.mubr.f32.mxu0 0.0
    %v4382 = vand.u32 %v4004, 4294901760
    %v4383 = vsub.f32 %v4004, %v4382
    %v4384 = vand.u32 %v4383, 4294901760
    %4385 = vmatmul.mubr.f32.gmra.mxu0 %v4384
    %v4386 = vpop.f32.mrf.mxu0
    %v4387 = vadd.f32 %v4291, %v4386
    %v4388 = vpop.f32.mrf.mxu0
    %4389 = vmatprep.mubr.f32.mxu0 0.0
    %v4390 = vand.u32 %v4007, 4294901760
    %v4391 = vsub.f32 %v4007, %v4390
    %v4392 = vand.u32 %v4391, 4294901760
    %4393 = vmatmul.mubr.f32.gmra.mxu0 %v4392
    %v4394 = vpop.f32.mrf.mxu0
    %v4395 = vadd.f32 %v4298, %v4394
    %v4396 = vpop.f32.mrf.mxu0
    %4397 = vdwg.mxu0
    %4398 = vmatprep.subr.mxu0 0.0
    %4399 = vmatpush1.msra.mxu0 0.0
    %4400 = vmatprep.subr.mxu0 0.0
    %4401 = vmatpush1.msra.mxu0 0.0
    %4402 = vmatprep.subr.mxu0 0.0
    %4403 = vmatpush1.msra.mxu0 0.0
    %4404 = vmatprep.subr.mxu0 0.0
    %4405 = vmatpush1.msra.mxu0 0.0
    %4406 = vmatprep.subr.mxu0 0.0
    %4407 = vmatpush1.msra.mxu0 0.0
    %4408 = vmatprep.subr.mxu0 0.0
    %4409 = vmatpush1.msra.mxu0 0.0
    %4410 = vmatprep.subr.mxu0 0.0
    %4411 = vmatpush1.msra.mxu0 0.0
    %4412 = vmatprep.subr.mxu0 0.0
    %4413 = vmatpush1.msra.mxu0 0.0
    %4414 = vmatprep.subr.mxu0 0.0
    %4415 = vmatpush1.msra.mxu0 0.0
    %4416 = vmatprep.subr.mxu0 0.0
    %4417 = vmatpush1.msra.mxu0 0.0
    %4418 = vmatprep.subr.mxu0 0.0
    %4419 = vmatpush1.msra.mxu0 0.0
    %4420 = vmatprep.subr.mxu0 0.0
    %4421 = vmatpush1.msra.mxu0 0.0
    %4422 = vmatprep.subr.mxu0 0.0
    %4423 = vmatpush1.msra.mxu0 0.0
    %4424 = vmatprep.subr.mxu0 0.0
    %4425 = vmatpush1.msra.mxu0 0.0
    %4426 = vmatprep.subr.mxu0 0.0
    %4427 = vmatpush1.msra.mxu0 0.0
    %4428 = vmatprep.subr.mxu0 0.0
    %v4429 = vsub.f32 %v2050, %v2050
    %v4430 = vand.u32 %v4429, 4294901760
    %4431 = vmatpush1.msra.mxu0 %v4430
    %4432 = vmatprep.subr.mxu0 0.0
    %4433 = vmatpush2.msra.mxu0 0.0
    %4434 = vmatprep.subr.mxu0 0.0
    %4435 = vmatpush2.msra.mxu0 0.0
    %4436 = vmatprep.subr.mxu0 0.0
    %4437 = vmatpush2.msra.mxu0 0.0
    %4438 = vmatprep.subr.mxu0 0.0
    %4439 = vmatpush2.msra.mxu0 0.0
    %4440 = vmatprep.subr.mxu0 0.0
    %4441 = vmatpush2.msra.mxu0 0.0
    %4442 = vmatprep.subr.mxu0 0.0
    %4443 = vmatpush2.msra.mxu0 0.0
    %4444 = vmatprep.subr.mxu0 0.0
    %4445 = vmatpush2.msra.mxu0 0.0
    %4446 = vmatprep.subr.mxu0 0.0
    %4447 = vmatpush2.msra.mxu0 0.0
    %4448 = vmatprep.subr.mxu0 0.0
    %4449 = vmatpush2.msra.mxu0 0.0
    %4450 = vmatprep.subr.mxu0 0.0
    %4451 = vmatpush2.msra.mxu0 0.0
    %4452 = vmatprep.subr.mxu0 0.0
    %4453 = vmatpush2.msra.mxu0 0.0
    %4454 = vmatprep.subr.mxu0 0.0
    %4455 = vmatpush2.msra.mxu0 0.0
    %4456 = vmatprep.subr.mxu0 0.0
    %4457 = vmatpush2.msra.mxu0 0.0
    %4458 = vmatprep.subr.mxu0 0.0
    %4459 = vmatpush2.msra.mxu0 0.0
    %4460 = vmatprep.subr.mxu0 0.0
    %4461 = vmatpush2.msra.mxu0 0.0
    %4462 = vmatprep.subr.mxu0 0.0
    %4463 = vmatpush2.msra.mxu0 0.0
    %4464 = vmatprep.mubr.f32.mxu0 0.0
    %v4465 = vand.u32 %v3998, 4294901760
    %4466 = vmatmul.mubr.f32.gmra.mxu0 %v4465
    %v4467 = vpop.f32.mrf.mxu0
    %v4468 = vadd.f32 %v4371, %v4467
    %v4469 = vpop.f32.mrf.mxu0
    %4470 = vmatprep.mubr.f32.mxu0 0.0
    %v4471 = vand.u32 %v4001, 4294901760
    %4472 = vmatmul.mubr.f32.gmra.mxu0 %v4471
    %v4473 = vpop.f32.mrf.mxu0
    %v4474 = vadd.f32 %v4379, %v4473
    %v4475 = vpop.f32.mrf.mxu0
    %4476 = vmatprep.mubr.f32.mxu0 0.0
    %v4477 = vand.u32 %v4004, 4294901760
    %4478 = vmatmul.mubr.f32.gmra.mxu0 %v4477
    %v4479 = vpop.f32.mrf.mxu0
    %v4480 = vadd.f32 %v4387, %v4479
    %v4481 = vpop.f32.mrf.mxu0
    %4482 = vmatprep.mubr.f32.mxu0 0.0
    %v4483 = vand.u32 %v4007, 4294901760
    %4484 = vmatmul.mubr.f32.gmra.mxu0 %v4483
    %v4485 = vpop.f32.mrf.mxu0
    %v4486 = vadd.f32 %v4395, %v4485
    %v4487 = vpop.f32.mrf.mxu0
    %4488 = vdwg.mxu0
    %4489 = vmatprep.subr.mxu0 0.0
    %4490 = vmatpush1.msra.mxu0 0.0
    %4491 = vmatprep.subr.mxu0 0.0
    %4492 = vmatpush1.msra.mxu0 0.0
    %4493 = vmatprep.subr.mxu0 0.0
    %4494 = vmatpush1.msra.mxu0 0.0
    %4495 = vmatprep.subr.mxu0 0.0
    %4496 = vmatpush1.msra.mxu0 0.0
    %4497 = vmatprep.subr.mxu0 0.0
    %4498 = vmatpush1.msra.mxu0 0.0
    %4499 = vmatprep.subr.mxu0 0.0
    %4500 = vmatpush1.msra.mxu0 0.0
    %4501 = vmatprep.subr.mxu0 0.0
    %4502 = vmatpush1.msra.mxu0 0.0
    %4503 = vmatprep.subr.mxu0 0.0
    %4504 = vmatpush1.msra.mxu0 0.0
    %4505 = vmatprep.subr.mxu0 0.0
    %4506 = vmatpush1.msra.mxu0 0.0
    %4507 = vmatprep.subr.mxu0 0.0
    %4508 = vmatpush1.msra.mxu0 0.0
    %4509 = vmatprep.subr.mxu0 0.0
    %4510 = vmatpush1.msra.mxu0 0.0
    %4511 = vmatprep.subr.mxu0 0.0
    %4512 = vmatpush1.msra.mxu0 0.0
    %4513 = vmatprep.subr.mxu0 0.0
    %4514 = vmatpush1.msra.mxu0 0.0
    %4515 = vmatprep.subr.mxu0 0.0
    %4516 = vmatpush1.msra.mxu0 0.0
    %4517 = vmatprep.subr.mxu0 0.0
    %4518 = vmatpush1.msra.mxu0 0.0
    %4519 = vmatprep.subr.mxu0 0.0
    %4520 = vmatpush1.msra.mxu0 %v2050
    %4521 = vmatprep.subr.mxu0 0.0
    %4522 = vmatpush2.msra.mxu0 0.0
    %4523 = vmatprep.subr.mxu0 0.0
    %4524 = vmatpush2.msra.mxu0 0.0
    %4525 = vmatprep.subr.mxu0 0.0
    %4526 = vmatpush2.msra.mxu0 0.0
    %4527 = vmatprep.subr.mxu0 0.0
    %4528 = vmatpush2.msra.mxu0 0.0
    %4529 = vmatprep.subr.mxu0 0.0
    %4530 = vmatpush2.msra.mxu0 0.0
    %4531 = vmatprep.subr.mxu0 0.0
    %4532 = vmatpush2.msra.mxu0 0.0
    %4533 = vmatprep.subr.mxu0 0.0
    %4534 = vmatpush2.msra.mxu0 0.0
    %4535 = vmatprep.subr.mxu0 0.0
    %4536 = vmatpush2.msra.mxu0 0.0
    %4537 = vmatprep.subr.mxu0 0.0
    %4538 = vmatpush2.msra.mxu0 0.0
    %4539 = vmatprep.subr.mxu0 0.0
    %4540 = vmatpush2.msra.mxu0 0.0
    %4541 = vmatprep.subr.mxu0 0.0
    %4542 = vmatpush2.msra.mxu0 0.0
    %4543 = vmatprep.subr.mxu0 0.0
    %4544 = vmatpush2.msra.mxu0 0.0
    %4545 = vmatprep.subr.mxu0 0.0
    %4546 = vmatpush2.msra.mxu0 0.0
    %4547 = vmatprep.subr.mxu0 0.0
    %4548 = vmatpush2.msra.mxu0 0.0
    %4549 = vmatprep.subr.mxu0 0.0
    %4550 = vmatpush2.msra.mxu0 0.0
    %4551 = vmatprep.subr.mxu0 0.0
    %4552 = vmatpush2.msra.mxu0 0.0
    %4553 = vmatprep.mubr.f32.mxu0 0.0
    %v4554 = vand.u32 %v3998, 4294901760
    %4555 = vmatmul.mubr.f32.gmra.mxu0 %v4554
    %v4556 = vpop.f32.mrf.mxu0
    %v4557 = vadd.f32 %v4468, %v4556
    %v4558 = vpop.f32.mrf.mxu0
    %4559 = vmatprep.mubr.f32.mxu0 0.0
    %v4560 = vand.u32 %v4001, 4294901760
    %4561 = vmatmul.mubr.f32.gmra.mxu0 %v4560
    %v4562 = vpop.f32.mrf.mxu0
    %v4563 = vadd.f32 %v4474, %v4562
    %v4564 = vpop.f32.mrf.mxu0
    %4565 = vmatprep.mubr.f32.mxu0 0.0
    %v4566 = vand.u32 %v4004, 4294901760
    %4567 = vmatmul.mubr.f32.gmra.mxu0 %v4566
    %v4568 = vpop.f32.mrf.mxu0
    %v4569 = vadd.f32 %v4480, %v4568
    %v4570 = vpop.f32.mrf.mxu0
    %4571 = vmatprep.mubr.f32.mxu0 0.0
    %v4572 = vand.u32 %v4007, 4294901760
    %4573 = vmatmul.mubr.f32.gmra.mxu0 %v4572
    %v4574 = vpop.f32.mrf.mxu0
    %v4575 = vadd.f32 %v4486, %v4574
    %v4576 = vpop.f32.mrf.mxu0
    %4577 = vdwg.mxu0
    %v4578 = vrsqrt.pop %v4557
    %v4579 = vrsqrt.pop %v4563
    %v4580 = vrsqrt.pop %v4569
    %v4581 = vrsqrt.pop %v4575
    %v4582 = vmul.f32 %v3311, %v4578
    %v4583 = vmul.f32 %v3312, %v4579
    %v4584 = vmul.f32 %v3313, %v4580
    %v4585 = vmul.f32 %v3314, %v4581
    %v4586 = vld [vmem:[%s7] sm:$0x1]
    %v4588 = vlaneseq
    %v4589 = vshrl.u32 %v4588, 7
    %v4590 = vsub.s32 0, %v4589
    %v4591 = vrot.slane %v4586, %v4590
    %v4593 = vmul.f32 %v4582, %v4591
    %v4594 = vmul.f32 %v4583, %v4591
    %v4595 = vmul.f32 %v4584, %v4591
    %v4596 = vmul.f32 %v4585, %v4591
    %v4597 = vld [vmem:[%s8] sm:$0x1]
    %v4599 = vlaneseq
    %v4600 = vshrl.u32 %v4599, 7
    %v4601 = vsub.s32 0, %v4600
    %v4602 = vrot.slane %v4597, %v4601
    %v4604 = vadd.f32 %v4593, %v4602
    %v4605 = vadd.f32 %v4594, %v4602
    %v4606 = vadd.f32 %v4595, %v4602
    %v4607 = vadd.f32 %v4596, %v4602
    %v4608 = vld [vmem:[%s9] sm:$0xff]
    %v4609 = vld [vmem:[%s9 + $0x8] sm:$0xff]
    %v4610 = vld [vmem:[%s9 + $0x10] sm:$0xff]
    %v4611 = vld [vmem:[%s9 + $0x18] sm:$0xff]
    %4616 = vrot.lane.b32.xlu0 %v4604, 3
    %v4617 = vpop.permute.xlu0 %4616
    %4618 = vrot.lane.b32.xlu0 %v4605, 3
    %v4619 = vpop.permute.xlu0 %4618
    %4620 = vrot.lane.b32.xlu0 %v4606, 3
    %v4621 = vpop.permute.xlu0 %4620
    %4622 = vrot.lane.b32.xlu0 %v4607, 3
    %v4623 = vpop.permute.xlu0 %4622
    %vm4628 = vcmask 23552
    %v4629 = vsel %vm4628, 0.0, %v4617
    %v4630 = vsel %vm4628, 0.0, %v4619
    %v4631 = vsel %vm4628, 0.0, %v4621
    %v4632 = vsel %vm4628, 0.0, %v4623
    %v4633 = vsel %vm4628, %v4617, 0.0
    %v4634 = vsel %vm4628, %v4619, 0.0
    %v4635 = vsel %vm4628, %v4621, 0.0
    %v4636 = vsel %vm4628, %v4623, 0.0
    %v4637 = vadd.s32 %v80, 4294967293
    %vm4638 = vcmp.ge.s32.totalorder %v4637, 0
    %vm4639 = vcmp.le.s32.totalorder %v4637, 15
    %vm4640 = vmand %vm4638, %vm4639
    %v4641 = vsel %vm4640, 1, 0
    %v4642 = vlaneseq
    %v4643 = vshrl.u32 %v4642, 7
    %v4644 = vsub.s32 0, %v4643
    %v4645 = vrot.slane %v4641, %v4644
    %vm4646 = vcmp.eq.s32.totalorder %v4645, 1
    %v4647 = vsel %vm4646, %v4629, 0.0
    %v4648 = vsel %vm4646, %v4630, 0.0
    %v4649 = vsel %vm4646, %v4631, 0.0
    %v4650 = vsel %vm4646, %v4632, 0.0
    %v4651 = vadd.s32 %v80, 4294967294
    %vm4652 = vcmp.ge.s32.totalorder %v4651, 0
    %vm4653 = vcmp.le.s32.totalorder %v4651, 15
    %vm4654 = vmand %vm4652, %vm4653
    %v4655 = vsel %vm4654, 1, 0
    %v4656 = vlaneseq
    %v4657 = vshrl.u32 %v4656, 7
    %v4658 = vsub.s32 0, %v4657
    %v4659 = vrot.slane %v4655, %v4658
    %vm4660 = vcmp.eq.s32.totalorder %v4659, 1
    %4669 = vrot.lane.b32.xlu0 %v4629, 127
    %v4670 = vpop.permute.xlu0 %4669
    %4671 = vrot.lane.b32.xlu0 %v4633, 127
    %v4672 = vpop.permute.xlu0 %4671
    %4673 = vrot.lane.b32.xlu0 %v4630, 127
    %v4674 = vpop.permute.xlu0 %4673
    %4675 = vrot.lane.b32.xlu0 %v4634, 127
    %v4676 = vpop.permute.xlu0 %4675
    %4677 = vrot.lane.b32.xlu0 %v4631, 127
    %v4678 = vpop.permute.xlu0 %4677
    %4679 = vrot.lane.b32.xlu0 %v4635, 127
    %v4680 = vpop.permute.xlu0 %4679
    %4681 = vrot.lane.b32.xlu0 %v4632, 127
    %v4682 = vpop.permute.xlu0 %4681
    %4683 = vrot.lane.b32.xlu0 %v4636, 127
    %v4684 = vpop.permute.xlu0 %4683
    %v4685 = vsel %vm199, %v4670, %v4672
    %v4686 = vsel %vm199, %v4674, %v4676
    %v4687 = vsel %vm199, %v4678, %v4680
    %v4688 = vsel %vm199, %v4682, %v4684
    %v4693 = vsel %vm4660, %v4685, 0.0
    %v4694 = vsel %vm4660, %v4686, 0.0
    %v4695 = vsel %vm4660, %v4687, 0.0
    %v4696 = vsel %vm4660, %v4688, 0.0
    %4697 = vrot.lane.b32.xlu0 %v4629, 126
    %v4698 = vpop.permute.xlu0 %4697
    %4699 = vrot.lane.b32.xlu0 %v4633, 126
    %v4700 = vpop.permute.xlu0 %4699
    %4701 = vrot.lane.b32.xlu0 %v4630, 126
    %v4702 = vpop.permute.xlu0 %4701
    %4703 = vrot.lane.b32.xlu0 %v4634, 126
    %v4704 = vpop.permute.xlu0 %4703
    %4705 = vrot.lane.b32.xlu0 %v4631, 126
    %v4706 = vpop.permute.xlu0 %4705
    %4707 = vrot.lane.b32.xlu0 %v4635, 126
    %v4708 = vpop.permute.xlu0 %4707
    %4709 = vrot.lane.b32.xlu0 %v4632, 126
    %v4710 = vpop.permute.xlu0 %4709
    %4711 = vrot.lane.b32.xlu0 %v4636, 126
    %v4712 = vpop.permute.xlu0 %4711
    %v4713 = vsel %vm170, %v4698, %v4700
    %v4714 = vsel %vm170, %v4702, %v4704
    %v4715 = vsel %vm170, %v4706, %v4708
    %v4716 = vsel %vm170, %v4710, %v4712
    %v4721 = vsel %vm131, %v4713, 0.0
    %v4722 = vsel %vm131, %v4714, 0.0
    %v4723 = vsel %vm131, %v4715, 0.0
    %v4724 = vsel %vm131, %v4716, 0.0
    %4725 = vrot.lane.b32.xlu0 %v4629, 124
    %v4726 = vpop.permute.xlu0 %4725
    %4727 = vrot.lane.b32.xlu0 %v4633, 124
    %v4728 = vpop.permute.xlu0 %4727
    %4729 = vrot.lane.b32.xlu0 %v4630, 124
    %v4730 = vpop.permute.xlu0 %4729
    %4731 = vrot.lane.b32.xlu0 %v4634, 124
    %v4732 = vpop.permute.xlu0 %4731
    %4733 = vrot.lane.b32.xlu0 %v4631, 124
    %v4734 = vpop.permute.xlu0 %4733
    %4735 = vrot.lane.b32.xlu0 %v4635, 124
    %v4736 = vpop.permute.xlu0 %4735
    %4737 = vrot.lane.b32.xlu0 %v4632, 124
    %v4738 = vpop.permute.xlu0 %4737
    %4739 = vrot.lane.b32.xlu0 %v4636, 124
    %v4740 = vpop.permute.xlu0 %4739
    %vm4741 = vcmask 1014784
    %v4742 = vsel %vm4741, %v4726, %v4728
    %v4743 = vsel %vm4741, %v4730, %v4732
    %v4744 = vsel %vm4741, %v4734, %v4736
    %v4745 = vsel %vm4741, %v4738, %v4740
    %v4750 = vsel %vm145, %v4742, 0.0
    %v4751 = vsel %vm145, %v4743, 0.0
    %v4752 = vsel %vm145, %v4744, 0.0
    %v4753 = vsel %vm145, %v4745, 0.0
    %v4754 = vadd.s32 %v80, 2
    %vm4755 = vcmp.ge.s32.totalorder %v4754, 0
    %vm4756 = vcmp.le.s32.totalorder %v4754, 15
    %vm4757 = vmand %vm4755, %vm4756
    %v4758 = vsel %vm4757, 1, 0
    %v4759 = vlaneseq
    %v4760 = vshrl.u32 %v4759, 7
    %v4761 = vsub.s32 0, %v4760
    %v4762 = vrot.slane %v4758, %v4761
    %vm4763 = vcmp.eq.s32.totalorder %v4762, 1
    %4764 = vrot.lane.b32.xlu0 %v4629, 123
    %v4765 = vpop.permute.xlu0 %4764
    %4766 = vrot.lane.b32.xlu0 %v4633, 123
    %v4767 = vpop.permute.xlu0 %4766
    %4768 = vrot.lane.b32.xlu0 %v4630, 123
    %v4769 = vpop.permute.xlu0 %4768
    %4770 = vrot.lane.b32.xlu0 %v4634, 123
    %v4771 = vpop.permute.xlu0 %4770
    %4772 = vrot.lane.b32.xlu0 %v4631, 123
    %v4773 = vpop.permute.xlu0 %4772
    %4774 = vrot.lane.b32.xlu0 %v4635, 123
    %v4775 = vpop.permute.xlu0 %4774
    %4776 = vrot.lane.b32.xlu0 %v4632, 123
    %v4777 = vpop.permute.xlu0 %4776
    %4778 = vrot.lane.b32.xlu0 %v4636, 123
    %v4779 = vpop.permute.xlu0 %4778
    %vm4780 = vcmask 1006592
    %v4781 = vsel %vm4780, %v4765, %v4767
    %v4782 = vsel %vm4780, %v4769, %v4771
    %v4783 = vsel %vm4780, %v4773, %v4775
    %v4784 = vsel %vm4780, %v4777, %v4779
    %v4789 = vsel %vm4763, %v4781, 0.0
    %v4790 = vsel %vm4763, %v4782, 0.0
    %v4791 = vsel %vm4763, %v4783, 0.0
    %v4792 = vsel %vm4763, %v4784, 0.0
    %v4793 = vadd.s32 %v80, 3
    %vm4794 = vcmp.ge.s32.totalorder %v4793, 0
    %vm4795 = vcmp.le.s32.totalorder %v4793, 15
    %vm4796 = vmand %vm4794, %vm4795
    %v4797 = vsel %vm4796, 1, 0
    %v4798 = vlaneseq
    %v4799 = vshrl.u32 %v4798, 7
    %v4800 = vsub.s32 0, %v4799
    %v4801 = vrot.slane %v4797, %v4800
    %vm4802 = vcmp.eq.s32.totalorder %v4801, 1
    %4803 = vrot.lane.b32.xlu0 %v4629, 122
    %v4804 = vpop.permute.xlu0 %4803
    %4805 = vrot.lane.b32.xlu0 %v4633, 122
    %v4806 = vpop.permute.xlu0 %4805
    %4807 = vrot.lane.b32.xlu0 %v4630, 122
    %v4808 = vpop.permute.xlu0 %4807
    %4809 = vrot.lane.b32.xlu0 %v4634, 122
    %v4810 = vpop.permute.xlu0 %4809
    %4811 = vrot.lane.b32.xlu0 %v4631, 122
    %v4812 = vpop.permute.xlu0 %4811
    %4813 = vrot.lane.b32.xlu0 %v4635, 122
    %v4814 = vpop.permute.xlu0 %4813
    %4815 = vrot.lane.b32.xlu0 %v4632, 122
    %v4816 = vpop.permute.xlu0 %4815
    %4817 = vrot.lane.b32.xlu0 %v4636, 122
    %v4818 = vpop.permute.xlu0 %4817
    %vm4819 = vcmask 998400
    %v4820 = vsel %vm4819, %v4804, %v4806
    %v4821 = vsel %vm4819, %v4808, %v4810
    %v4822 = vsel %vm4819, %v4812, %v4814
    %v4823 = vsel %vm4819, %v4816, %v4818
    %v4828 = vsel %vm4802, %v4820, 0.0
    %v4829 = vsel %vm4802, %v4821, 0.0
    %v4830 = vsel %vm4802, %v4822, 0.0
    %v4831 = vsel %vm4802, %v4823, 0.0
    %4833 = vset.pattern.permute.xlu0 0
    %4834 = vperm.xlu0 %4833, %v4608
    %v4835 = vpop.permute.xlu0 %4834
    %4838 = vset.pattern.permute.xlu0 0
    %4839 = vperm.xlu0 %4838, %v4609
    %v4840 = vpop.permute.xlu0 %4839
    %4843 = vset.pattern.permute.xlu0 0
    %4844 = vperm.xlu0 %4843, %v4610
    %v4845 = vpop.permute.xlu0 %4844
    %4848 = vset.pattern.permute.xlu0 0
    %4849 = vperm.xlu0 %4848, %v4611
    %v4850 = vpop.permute.xlu0 %4849
    %v4852 = vmul.f32 %v4647, %v4835
    %v4853 = vmul.f32 %v4648, %v4840
    %v4854 = vmul.f32 %v4649, %v4845
    %v4855 = vmul.f32 %v4650, %v4850
    %4856 = vset.pattern.permute.xlu0 1
    %4857 = vperm.xlu0 %4856, %v4608
    %v4858 = vpop.permute.xlu0 %4857
    %4860 = vset.pattern.permute.xlu0 1
    %4861 = vperm.xlu0 %4860, %v4609
    %v4862 = vpop.permute.xlu0 %4861
    %4864 = vset.pattern.permute.xlu0 1
    %4865 = vperm.xlu0 %4864, %v4610
    %v4866 = vpop.permute.xlu0 %4865
    %4868 = vset.pattern.permute.xlu0 1
    %4869 = vperm.xlu0 %4868, %v4611
    %v4870 = vpop.permute.xlu0 %4869
    %v4872 = vmul.f32 %v4693, %v4858
    %v4873 = vmul.f32 %v4694, %v4862
    %v4874 = vmul.f32 %v4695, %v4866
    %v4875 = vmul.f32 %v4696, %v4870
    %v4876 = vadd.f32 %v4852, %v4872
    %v4877 = vadd.f32 %v4853, %v4873
    %v4878 = vadd.f32 %v4854, %v4874
    %v4879 = vadd.f32 %v4855, %v4875
    %4880 = vset.pattern.permute.xlu0 2
    %4881 = vperm.xlu0 %4880, %v4608
    %v4882 = vpop.permute.xlu0 %4881
    %4884 = vset.pattern.permute.xlu0 2
    %4885 = vperm.xlu0 %4884, %v4609
    %v4886 = vpop.permute.xlu0 %4885
    %4888 = vset.pattern.permute.xlu0 2
    %4889 = vperm.xlu0 %4888, %v4610
    %v4890 = vpop.permute.xlu0 %4889
    %4892 = vset.pattern.permute.xlu0 2
    %4893 = vperm.xlu0 %4892, %v4611
    %v4894 = vpop.permute.xlu0 %4893
    %v4896 = vmul.f32 %v4721, %v4882
    %v4897 = vmul.f32 %v4722, %v4886
    %v4898 = vmul.f32 %v4723, %v4890
    %v4899 = vmul.f32 %v4724, %v4894
    %v4900 = vadd.f32 %v4876, %v4896
    %v4901 = vadd.f32 %v4877, %v4897
    %v4902 = vadd.f32 %v4878, %v4898
    %v4903 = vadd.f32 %v4879, %v4899
    %4904 = vset.pattern.permute.xlu0 3
    %4905 = vperm.xlu0 %4904, %v4608
    %v4906 = vpop.permute.xlu0 %4905
    %4908 = vset.pattern.permute.xlu0 3
    %4909 = vperm.xlu0 %4908, %v4609
    %v4910 = vpop.permute.xlu0 %4909
    %4912 = vset.pattern.permute.xlu0 3
    %4913 = vperm.xlu0 %4912, %v4610
    %v4914 = vpop.permute.xlu0 %4913
    %4916 = vset.pattern.permute.xlu0 3
    %4917 = vperm.xlu0 %4916, %v4611
    %v4918 = vpop.permute.xlu0 %4917
    %v4920 = vmul.f32 %v4629, %v4906
    %v4921 = vmul.f32 %v4633, %v4906
    %v4922 = vmul.f32 %v4630, %v4910
    %v4923 = vmul.f32 %v4634, %v4910
    %v4924 = vmul.f32 %v4631, %v4914
    %v4925 = vmul.f32 %v4635, %v4914
    %v4926 = vmul.f32 %v4632, %v4918
    %v4927 = vmul.f32 %v4636, %v4918
    %4936 = vrot.lane.b32.xlu0 %v4920, 125
    %v4937 = vpop.permute.xlu0 %4936
    %4938 = vrot.lane.b32.xlu0 %v4921, 125
    %v4939 = vpop.permute.xlu0 %4938
    %4940 = vrot.lane.b32.xlu0 %v4922, 125
    %v4941 = vpop.permute.xlu0 %4940
    %4942 = vrot.lane.b32.xlu0 %v4923, 125
    %v4943 = vpop.permute.xlu0 %4942
    %4944 = vrot.lane.b32.xlu0 %v4924, 125
    %v4945 = vpop.permute.xlu0 %4944
    %4946 = vrot.lane.b32.xlu0 %v4925, 125
    %v4947 = vpop.permute.xlu0 %4946
    %4948 = vrot.lane.b32.xlu0 %v4926, 125
    %v4949 = vpop.permute.xlu0 %4948
    %4950 = vrot.lane.b32.xlu0 %v4927, 125
    %v4951 = vpop.permute.xlu0 %4950
    %vm4952 = vcmask 1022976
    %v4953 = vsel %vm4952, %v4937, %v4939
    %v4954 = vsel %vm4952, %v4941, %v4943
    %v4955 = vsel %vm4952, %v4945, %v4947
    %v4956 = vsel %vm4952, %v4949, %v4951
    %v4961 = vadd.f32 %v4900, %v4953
    %v4962 = vadd.f32 %v4901, %v4954
    %v4963 = vadd.f32 %v4902, %v4955
    %v4964 = vadd.f32 %v4903, %v4956
    %4965 = vset.pattern.permute.xlu0 4
    %4966 = vperm.xlu0 %4965, %v4608
    %v4967 = vpop.permute.xlu0 %4966
    %4969 = vset.pattern.permute.xlu0 4
    %4970 = vperm.xlu0 %4969, %v4609
    %v4971 = vpop.permute.xlu0 %4970
    %4973 = vset.pattern.permute.xlu0 4
    %4974 = vperm.xlu0 %4973, %v4610
    %v4975 = vpop.permute.xlu0 %4974
    %4977 = vset.pattern.permute.xlu0 4
    %4978 = vperm.xlu0 %4977, %v4611
    %v4979 = vpop.permute.xlu0 %4978
    %v4981 = vmul.f32 %v4750, %v4967
    %v4982 = vmul.f32 %v4751, %v4971
    %v4983 = vmul.f32 %v4752, %v4975
    %v4984 = vmul.f32 %v4753, %v4979
    %v4985 = vadd.f32 %v4961, %v4981
    %v4986 = vadd.f32 %v4962, %v4982
    %v4987 = vadd.f32 %v4963, %v4983
    %v4988 = vadd.f32 %v4964, %v4984
    %4989 = vset.pattern.permute.xlu0 5
    %4990 = vperm.xlu0 %4989, %v4608
    %v4991 = vpop.permute.xlu0 %4990
    %4993 = vset.pattern.permute.xlu0 5
    %4994 = vperm.xlu0 %4993, %v4609
    %v4995 = vpop.permute.xlu0 %4994
    %4997 = vset.pattern.permute.xlu0 5
    %4998 = vperm.xlu0 %4997, %v4610
    %v4999 = vpop.permute.xlu0 %4998
    %5001 = vset.pattern.permute.xlu0 5
    %5002 = vperm.xlu0 %5001, %v4611
    %v5003 = vpop.permute.xlu0 %5002
    %v5005 = vmul.f32 %v4789, %v4991
    %v5006 = vmul.f32 %v4790, %v4995
    %v5007 = vmul.f32 %v4791, %v4999
    %v5008 = vmul.f32 %v4792, %v5003
    %v5009 = vadd.f32 %v4985, %v5005
    %v5010 = vadd.f32 %v4986, %v5006
    %v5011 = vadd.f32 %v4987, %v5007
    %v5012 = vadd.f32 %v4988, %v5008
    %5013 = vset.pattern.permute.xlu0 6
    %5014 = vperm.xlu0 %5013, %v4608
    %v5015 = vpop.permute.xlu0 %5014
    %5017 = vset.pattern.permute.xlu0 6
    %5018 = vperm.xlu0 %5017, %v4609
    %v5019 = vpop.permute.xlu0 %5018
    %5021 = vset.pattern.permute.xlu0 6
    %5022 = vperm.xlu0 %5021, %v4610
    %v5023 = vpop.permute.xlu0 %5022
    %5025 = vset.pattern.permute.xlu0 6
    %5026 = vperm.xlu0 %5025, %v4611
    %v5027 = vpop.permute.xlu0 %5026
    %v5029 = vmul.f32 %v4828, %v5015
    %v5030 = vmul.f32 %v4829, %v5019
    %v5031 = vmul.f32 %v4830, %v5023
    %v5032 = vmul.f32 %v4831, %v5027
    %v5033 = vadd.f32 %v5009, %v5029
    %v5034 = vadd.f32 %v5010, %v5030
    %v5035 = vadd.f32 %v5011, %v5031
    %v5036 = vadd.f32 %v5012, %v5032
    %v5037 = vld [vmem:[%s10] sm:$0xff]
    %v5038 = vld [vmem:[%s10 + $0x8] sm:$0xff]
    %v5039 = vld [vmem:[%s10 + $0x10] sm:$0xff]
    %v5040 = vld [vmem:[%s10 + $0x18] sm:$0xff]
    %5042 = vset.pattern.permute.xlu0 0
    %5043 = vperm.xlu0 %5042, %v5037
    %v5044 = vpop.permute.xlu0 %5043
    %5047 = vset.pattern.permute.xlu0 0
    %5048 = vperm.xlu0 %5047, %v5038
    %v5049 = vpop.permute.xlu0 %5048
    %5052 = vset.pattern.permute.xlu0 0
    %5053 = vperm.xlu0 %5052, %v5039
    %v5054 = vpop.permute.xlu0 %5053
    %5057 = vset.pattern.permute.xlu0 0
    %5058 = vperm.xlu0 %5057, %v5040
    %v5059 = vpop.permute.xlu0 %5058
    %v5061 = vadd.f32 %v5033, %v5044
    %v5062 = vadd.f32 %v5034, %v5049
    %v5063 = vadd.f32 %v5035, %v5054
    %v5064 = vadd.f32 %v5036, %v5059
    %v5065 = vsub.f32 0.0, %v5061
    %v5066 = vsub.f32 0.0, %v5062
    %v5067 = vsub.f32 0.0, %v5063
    %v5068 = vsub.f32 0.0, %v5064
    %v5069 = vmul.f32 %v5065, 1.442695
    %v5070 = vpow.pop %v5069
    %v5071 = vmul.f32 %v5066, 1.442695
    %v5072 = vpow.pop %v5071
    %v5073 = vmul.f32 %v5067, 1.442695
    %v5074 = vpow.pop %v5073
    %v5075 = vmul.f32 %v5068, 1.442695
    %v5076 = vpow.pop %v5075
    %v5077 = vadd.f32 %v5070, 1.0
    %v5078 = vadd.f32 %v5072, 1.0
    %v5079 = vadd.f32 %v5074, 1.0
    %v5080 = vadd.f32 %v5076, 1.0
    %v5081 = vrcp.pop %v5077
    %v5082 = vmul.f32 1.0, %v5081
    %v5083 = vrcp.pop %v5078
    %v5084 = vmul.f32 1.0, %v5083
    %v5085 = vrcp.pop %v5079
    %v5086 = vmul.f32 1.0, %v5085
    %v5087 = vrcp.pop %v5080
    %v5088 = vmul.f32 1.0, %v5087
    %v5089 = vmul.f32 %v4604, %v5082
    %v5090 = vmul.f32 %v4605, %v5084
    %v5091 = vmul.f32 %v4606, %v5086
    %v5092 = vmul.f32 %v4607, %v5088
    %5093 = vmatprep.subr.mxu0 0.0
    %5094 = vmatpush1.msra.mxu0 %v2043
    %5095 = vmatprep.subr.mxu0 0.0
    %5096 = vmatpush1.msra.mxu0 %v2042
    %5097 = vmatprep.subr.mxu0 0.0
    %5098 = vmatpush1.msra.mxu0 %v2041
    %5099 = vmatprep.subr.mxu0 0.0
    %5100 = vmatpush1.msra.mxu0 %v2040
    %5101 = vmatprep.subr.mxu0 0.0
    %5102 = vmatpush1.msra.mxu0 %v2039
    %5103 = vmatprep.subr.mxu0 0.0
    %5104 = vmatpush1.msra.mxu0 %v2038
    %5105 = vmatprep.subr.mxu0 0.0
    %5106 = vmatpush1.msra.mxu0 %v2037
    %5107 = vmatprep.subr.mxu0 0.0
    %5108 = vmatpush1.msra.mxu0 %v2036
    %5109 = vmatprep.subr.mxu0 0.0
    %5110 = vmatpush1.msra.mxu0 %v2035
    %5111 = vmatprep.subr.mxu0 0.0
    %5112 = vmatpush1.msra.mxu0 %v2034
    %5113 = vmatprep.subr.mxu0 0.0
    %5114 = vmatpush1.msra.mxu0 %v2033
    %5115 = vmatprep.subr.mxu0 0.0
    %5116 = vmatpush1.msra.mxu0 %v2032
    %5117 = vmatprep.subr.mxu0 0.0
    %5118 = vmatpush1.msra.mxu0 %v2031
    %5119 = vmatprep.subr.mxu0 0.0
    %5120 = vmatpush1.msra.mxu0 %v2030
    %5121 = vmatprep.subr.mxu0 0.0
    %5122 = vmatpush1.msra.mxu0 %v2029
    %5123 = vmatprep.subr.mxu0 0.0
    %5124 = vmatpush1.msra.mxu0 %v2028
    %5125 = vmatprep.subr.mxu0 0.0
    %5126 = vmatpush2.msra.mxu0 0.0
    %5127 = vmatprep.subr.mxu0 0.0
    %5128 = vmatpush2.msra.mxu0 0.0
    %5129 = vmatprep.subr.mxu0 0.0
    %5130 = vmatpush2.msra.mxu0 0.0
    %5131 = vmatprep.subr.mxu0 0.0
    %5132 = vmatpush2.msra.mxu0 0.0
    %5133 = vmatprep.subr.mxu0 0.0
    %5134 = vmatpush2.msra.mxu0 0.0
    %5135 = vmatprep.subr.mxu0 0.0
    %5136 = vmatpush2.msra.mxu0 0.0
    %5137 = vmatprep.subr.mxu0 0.0
    %5138 = vmatpush2.msra.mxu0 0.0
    %5139 = vmatprep.subr.mxu0 0.0
    %5140 = vmatpush2.msra.mxu0 0.0
    %5141 = vmatprep.subr.mxu0 0.0
    %5142 = vmatpush2.msra.mxu0 0.0
    %5143 = vmatprep.subr.mxu0 0.0
    %5144 = vmatpush2.msra.mxu0 0.0
    %5145 = vmatprep.subr.mxu0 0.0
    %5146 = vmatpush2.msra.mxu0 0.0
    %5147 = vmatprep.subr.mxu0 0.0
    %5148 = vmatpush2.msra.mxu0 0.0
    %5149 = vmatprep.subr.mxu0 0.0
    %5150 = vmatpush2.msra.mxu0 0.0
    %5151 = vmatprep.subr.mxu0 0.0
    %5152 = vmatpush2.msra.mxu0 0.0
    %5153 = vmatprep.subr.mxu0 0.0
    %5154 = vmatpush2.msra.mxu0 0.0
    %5155 = vmatprep.subr.mxu0 0.0
    %5156 = vmatpush2.msra.mxu0 0.0
    %5157 = vmatprep.mubr.f32.mxu0 0.0
    %v5158 = vand.u32 %v5089, 4294901760
    %v5159 = vsub.f32 %v5089, %v5158
    %v5160 = vand.u32 %v5159, 4294901760
    %v5161 = vsub.f32 %v5159, %v5160
    %v5162 = vand.u32 %v5161, 4294901760
    %5163 = vmatmul.mubr.f32.gmra.mxu0 %v5162
    %v5164 = vpop.f32.mrf.mxu0
    %v5165 = vadd.f32 0.0, %v5164
    %v5166 = vpop.f32.mrf.mxu0
    %5167 = vmatprep.mubr.f32.mxu0 0.0
    %v5168 = vand.u32 %v5090, 4294901760
    %v5169 = vsub.f32 %v5090, %v5168
    %v5170 = vand.u32 %v5169, 4294901760
    %v5171 = vsub.f32 %v5169, %v5170
    %v5172 = vand.u32 %v5171, 4294901760
    %5173 = vmatmul.mubr.f32.gmra.mxu0 %v5172
    %v5174 = vpop.f32.mrf.mxu0
    %v5175 = vadd.f32 0.0, %v5174
    %v5176 = vpop.f32.mrf.mxu0
    %5177 = vmatprep.mubr.f32.mxu0 0.0
    %v5178 = vand.u32 %v5091, 4294901760
    %v5179 = vsub.f32 %v5091, %v5178
    %v5180 = vand.u32 %v5179, 4294901760
    %v5181 = vsub.f32 %v5179, %v5180
    %v5182 = vand.u32 %v5181, 4294901760
    %5183 = vmatmul.mubr.f32.gmra.mxu0 %v5182
    %v5184 = vpop.f32.mrf.mxu0
    %v5185 = vadd.f32 0.0, %v5184
    %v5186 = vpop.f32.mrf.mxu0
    %5187 = vmatprep.mubr.f32.mxu0 0.0
    %v5188 = vand.u32 %v5092, 4294901760
    %v5189 = vsub.f32 %v5092, %v5188
    %v5190 = vand.u32 %v5189, 4294901760
    %v5191 = vsub.f32 %v5189, %v5190
    %v5192 = vand.u32 %v5191, 4294901760
    %5193 = vmatmul.mubr.f32.gmra.mxu0 %v5192
    %v5194 = vpop.f32.mrf.mxu0
    %v5195 = vadd.f32 0.0, %v5194
    %v5196 = vpop.f32.mrf.mxu0
    %5197 = vdwg.mxu0
    %5198 = vmatprep.subr.mxu0 0.0
    %v5199 = vsub.f32 %v2043, %v2043
    %v5200 = vand.u32 %v5199, 4294901760
    %v5201 = vsub.f32 %v5199, %v5200
    %v5202 = vand.u32 %v5201, 4294901760
    %5203 = vmatpush1.msra.mxu0 %v5202
    %5204 = vmatprep.subr.mxu0 0.0
    %v5205 = vsub.f32 %v2042, %v2042
    %v5206 = vand.u32 %v5205, 4294901760
    %v5207 = vsub.f32 %v5205, %v5206
    %v5208 = vand.u32 %v5207, 4294901760
    %5209 = vmatpush1.msra.mxu0 %v5208
    %5210 = vmatprep.subr.mxu0 0.0
    %v5211 = vsub.f32 %v2041, %v2041
    %v5212 = vand.u32 %v5211, 4294901760
    %v5213 = vsub.f32 %v5211, %v5212
    %v5214 = vand.u32 %v5213, 4294901760
    %5215 = vmatpush1.msra.mxu0 %v5214
    %5216 = vmatprep.subr.mxu0 0.0
    %v5217 = vsub.f32 %v2040, %v2040
    %v5218 = vand.u32 %v5217, 4294901760
    %v5219 = vsub.f32 %v5217, %v5218
    %v5220 = vand.u32 %v5219, 4294901760
    %5221 = vmatpush1.msra.mxu0 %v5220
    %5222 = vmatprep.subr.mxu0 0.0
    %v5223 = vsub.f32 %v2039, %v2039
    %v5224 = vand.u32 %v5223, 4294901760
    %v5225 = vsub.f32 %v5223, %v5224
    %v5226 = vand.u32 %v5225, 4294901760
    %5227 = vmatpush1.msra.mxu0 %v5226
    %5228 = vmatprep.subr.mxu0 0.0
    %v5229 = vsub.f32 %v2038, %v2038
    %v5230 = vand.u32 %v5229, 4294901760
    %v5231 = vsub.f32 %v5229, %v5230
    %v5232 = vand.u32 %v5231, 4294901760
    %5233 = vmatpush1.msra.mxu0 %v5232
    %5234 = vmatprep.subr.mxu0 0.0
    %v5235 = vsub.f32 %v2037, %v2037
    %v5236 = vand.u32 %v5235, 4294901760
    %v5237 = vsub.f32 %v5235, %v5236
    %v5238 = vand.u32 %v5237, 4294901760
    %5239 = vmatpush1.msra.mxu0 %v5238
    %5240 = vmatprep.subr.mxu0 0.0
    %v5241 = vsub.f32 %v2036, %v2036
    %v5242 = vand.u32 %v5241, 4294901760
    %v5243 = vsub.f32 %v5241, %v5242
    %v5244 = vand.u32 %v5243, 4294901760
    %5245 = vmatpush1.msra.mxu0 %v5244
    %5246 = vmatprep.subr.mxu0 0.0
    %v5247 = vsub.f32 %v2035, %v2035
    %v5248 = vand.u32 %v5247, 4294901760
    %v5249 = vsub.f32 %v5247, %v5248
    %v5250 = vand.u32 %v5249, 4294901760
    %5251 = vmatpush1.msra.mxu0 %v5250
    %5252 = vmatprep.subr.mxu0 0.0
    %v5253 = vsub.f32 %v2034, %v2034
    %v5254 = vand.u32 %v5253, 4294901760
    %v5255 = vsub.f32 %v5253, %v5254
    %v5256 = vand.u32 %v5255, 4294901760
    %5257 = vmatpush1.msra.mxu0 %v5256
    %5258 = vmatprep.subr.mxu0 0.0
    %v5259 = vsub.f32 %v2033, %v2033
    %v5260 = vand.u32 %v5259, 4294901760
    %v5261 = vsub.f32 %v5259, %v5260
    %v5262 = vand.u32 %v5261, 4294901760
    %5263 = vmatpush1.msra.mxu0 %v5262
    %5264 = vmatprep.subr.mxu0 0.0
    %v5265 = vsub.f32 %v2032, %v2032
    %v5266 = vand.u32 %v5265, 4294901760
    %v5267 = vsub.f32 %v5265, %v5266
    %v5268 = vand.u32 %v5267, 4294901760
    %5269 = vmatpush1.msra.mxu0 %v5268
    %5270 = vmatprep.subr.mxu0 0.0
    %v5271 = vsub.f32 %v2031, %v2031
    %v5272 = vand.u32 %v5271, 4294901760
    %v5273 = vsub.f32 %v5271, %v5272
    %v5274 = vand.u32 %v5273, 4294901760
    %5275 = vmatpush1.msra.mxu0 %v5274
    %5276 = vmatprep.subr.mxu0 0.0
    %v5277 = vsub.f32 %v2030, %v2030
    %v5278 = vand.u32 %v5277, 4294901760
    %v5279 = vsub.f32 %v5277, %v5278
    %v5280 = vand.u32 %v5279, 4294901760
    %5281 = vmatpush1.msra.mxu0 %v5280
    %5282 = vmatprep.subr.mxu0 0.0
    %v5283 = vsub.f32 %v2029, %v2029
    %v5284 = vand.u32 %v5283, 4294901760
    %v5285 = vsub.f32 %v5283, %v5284
    %v5286 = vand.u32 %v5285, 4294901760
    %5287 = vmatpush1.msra.mxu0 %v5286
    %5288 = vmatprep.subr.mxu0 0.0
    %v5289 = vsub.f32 %v2028, %v2028
    %v5290 = vand.u32 %v5289, 4294901760
    %v5291 = vsub.f32 %v5289, %v5290
    %v5292 = vand.u32 %v5291, 4294901760
    %5293 = vmatpush1.msra.mxu0 %v5292
    %5294 = vmatprep.subr.mxu0 0.0
    %5295 = vmatpush2.msra.mxu0 0.0
    %5296 = vmatprep.subr.mxu0 0.0
    %5297 = vmatpush2.msra.mxu0 0.0
    %5298 = vmatprep.subr.mxu0 0.0
    %5299 = vmatpush2.msra.mxu0 0.0
    %5300 = vmatprep.subr.mxu0 0.0
    %5301 = vmatpush2.msra.mxu0 0.0
    %5302 = vmatprep.subr.mxu0 0.0
    %5303 = vmatpush2.msra.mxu0 0.0
    %5304 = vmatprep.subr.mxu0 0.0
    %5305 = vmatpush2.msra.mxu0 0.0
    %5306 = vmatprep.subr.mxu0 0.0
    %5307 = vmatpush2.msra.mxu0 0.0
    %5308 = vmatprep.subr.mxu0 0.0
    %5309 = vmatpush2.msra.mxu0 0.0
    %5310 = vmatprep.subr.mxu0 0.0
    %5311 = vmatpush2.msra.mxu0 0.0
    %5312 = vmatprep.subr.mxu0 0.0
    %5313 = vmatpush2.msra.mxu0 0.0
    %5314 = vmatprep.subr.mxu0 0.0
    %5315 = vmatpush2.msra.mxu0 0.0
    %5316 = vmatprep.subr.mxu0 0.0
    %5317 = vmatpush2.msra.mxu0 0.0
    %5318 = vmatprep.subr.mxu0 0.0
    %5319 = vmatpush2.msra.mxu0 0.0
    %5320 = vmatprep.subr.mxu0 0.0
    %5321 = vmatpush2.msra.mxu0 0.0
    %5322 = vmatprep.subr.mxu0 0.0
    %5323 = vmatpush2.msra.mxu0 0.0
    %5324 = vmatprep.subr.mxu0 0.0
    %5325 = vmatpush2.msra.mxu0 0.0
    %5326 = vmatprep.mubr.f32.mxu0 0.0
    %v5327 = vand.u32 %v5089, 4294901760
    %5328 = vmatmul.mubr.f32.gmra.mxu0 %v5327
    %v5329 = vpop.f32.mrf.mxu0
    %v5330 = vadd.f32 %v5165, %v5329
    %v5331 = vpop.f32.mrf.mxu0
    %5332 = vmatprep.mubr.f32.mxu0 0.0
    %v5333 = vand.u32 %v5090, 4294901760
    %5334 = vmatmul.mubr.f32.gmra.mxu0 %v5333
    %v5335 = vpop.f32.mrf.mxu0
    %v5336 = vadd.f32 %v5175, %v5335
    %v5337 = vpop.f32.mrf.mxu0
    %5338 = vmatprep.mubr.f32.mxu0 0.0
    %v5339 = vand.u32 %v5091, 4294901760
    %5340 = vmatmul.mubr.f32.gmra.mxu0 %v5339
    %v5341 = vpop.f32.mrf.mxu0
    %v5342 = vadd.f32 %v5185, %v5341
    %v5343 = vpop.f32.mrf.mxu0
    %5344 = vmatprep.mubr.f32.mxu0 0.0
    %v5345 = vand.u32 %v5092, 4294901760
    %5346 = vmatmul.mubr.f32.gmra.mxu0 %v5345
    %v5347 = vpop.f32.mrf.mxu0
    %v5348 = vadd.f32 %v5195, %v5347
    %v5349 = vpop.f32.mrf.mxu0
    %5350 = vdwg.mxu0
    %5351 = vmatprep.subr.mxu0 0.0
    %v5352 = vsub.f32 %v2043, %v2043
    %5353 = vmatpush1.msra.mxu0 %v5352
    %5354 = vmatprep.subr.mxu0 0.0
    %v5355 = vsub.f32 %v2042, %v2042
    %5356 = vmatpush1.msra.mxu0 %v5355
    %5357 = vmatprep.subr.mxu0 0.0
    %v5358 = vsub.f32 %v2041, %v2041
    %5359 = vmatpush1.msra.mxu0 %v5358
    %5360 = vmatprep.subr.mxu0 0.0
    %v5361 = vsub.f32 %v2040, %v2040
    %5362 = vmatpush1.msra.mxu0 %v5361
    %5363 = vmatprep.subr.mxu0 0.0
    %v5364 = vsub.f32 %v2039, %v2039
    %5365 = vmatpush1.msra.mxu0 %v5364
    %5366 = vmatprep.subr.mxu0 0.0
    %v5367 = vsub.f32 %v2038, %v2038
    %5368 = vmatpush1.msra.mxu0 %v5367
    %5369 = vmatprep.subr.mxu0 0.0
    %v5370 = vsub.f32 %v2037, %v2037
    %5371 = vmatpush1.msra.mxu0 %v5370
    %5372 = vmatprep.subr.mxu0 0.0
    %v5373 = vsub.f32 %v2036, %v2036
    %5374 = vmatpush1.msra.mxu0 %v5373
    %5375 = vmatprep.subr.mxu0 0.0
    %v5376 = vsub.f32 %v2035, %v2035
    %5377 = vmatpush1.msra.mxu0 %v5376
    %5378 = vmatprep.subr.mxu0 0.0
    %v5379 = vsub.f32 %v2034, %v2034
    %5380 = vmatpush1.msra.mxu0 %v5379
    %5381 = vmatprep.subr.mxu0 0.0
    %v5382 = vsub.f32 %v2033, %v2033
    %5383 = vmatpush1.msra.mxu0 %v5382
    %5384 = vmatprep.subr.mxu0 0.0
    %v5385 = vsub.f32 %v2032, %v2032
    %5386 = vmatpush1.msra.mxu0 %v5385
    %5387 = vmatprep.subr.mxu0 0.0
    %v5388 = vsub.f32 %v2031, %v2031
    %5389 = vmatpush1.msra.mxu0 %v5388
    %5390 = vmatprep.subr.mxu0 0.0
    %v5391 = vsub.f32 %v2030, %v2030
    %5392 = vmatpush1.msra.mxu0 %v5391
    %5393 = vmatprep.subr.mxu0 0.0
    %v5394 = vsub.f32 %v2029, %v2029
    %5395 = vmatpush1.msra.mxu0 %v5394
    %5396 = vmatprep.subr.mxu0 0.0
    %v5397 = vsub.f32 %v2028, %v2028
    %5398 = vmatpush1.msra.mxu0 %v5397
    %5399 = vmatprep.subr.mxu0 0.0
    %5400 = vmatpush2.msra.mxu0 0.0
    %5401 = vmatprep.subr.mxu0 0.0
    %5402 = vmatpush2.msra.mxu0 0.0
    %5403 = vmatprep.subr.mxu0 0.0
    %5404 = vmatpush2.msra.mxu0 0.0
    %5405 = vmatprep.subr.mxu0 0.0
    %5406 = vmatpush2.msra.mxu0 0.0
    %5407 = vmatprep.subr.mxu0 0.0
    %5408 = vmatpush2.msra.mxu0 0.0
    %5409 = vmatprep.subr.mxu0 0.0
    %5410 = vmatpush2.msra.mxu0 0.0
    %5411 = vmatprep.subr.mxu0 0.0
    %5412 = vmatpush2.msra.mxu0 0.0
    %5413 = vmatprep.subr.mxu0 0.0
    %5414 = vmatpush2.msra.mxu0 0.0
    %5415 = vmatprep.subr.mxu0 0.0
    %5416 = vmatpush2.msra.mxu0 0.0
    %5417 = vmatprep.subr.mxu0 0.0
    %5418 = vmatpush2.msra.mxu0 0.0
    %5419 = vmatprep.subr.mxu0 0.0
    %5420 = vmatpush2.msra.mxu0 0.0
    %5421 = vmatprep.subr.mxu0 0.0
    %5422 = vmatpush2.msra.mxu0 0.0
    %5423 = vmatprep.subr.mxu0 0.0
    %5424 = vmatpush2.msra.mxu0 0.0
    %5425 = vmatprep.subr.mxu0 0.0
    %5426 = vmatpush2.msra.mxu0 0.0
    %5427 = vmatprep.subr.mxu0 0.0
    %5428 = vmatpush2.msra.mxu0 0.0
    %5429 = vmatprep.subr.mxu0 0.0
    %5430 = vmatpush2.msra.mxu0 0.0
    %5431 = vmatprep.mubr.f32.mxu0 0.0
    %v5432 = vand.u32 %v5089, 4294901760
    %v5433 = vsub.f32 %v5089, %v5432
    %5434 = vmatmul.mubr.f32.gmra.mxu0 %v5433
    %v5435 = vpop.f32.mrf.mxu0
    %v5436 = vadd.f32 %v5330, %v5435
    %v5437 = vpop.f32.mrf.mxu0
    %5438 = vmatprep.mubr.f32.mxu0 0.0
    %v5439 = vand.u32 %v5090, 4294901760
    %v5440 = vsub.f32 %v5090, %v5439
    %5441 = vmatmul.mubr.f32.gmra.mxu0 %v5440
    %v5442 = vpop.f32.mrf.mxu0
    %v5443 = vadd.f32 %v5336, %v5442
    %v5444 = vpop.f32.mrf.mxu0
    %5445 = vmatprep.mubr.f32.mxu0 0.0
    %v5446 = vand.u32 %v5091, 4294901760
    %v5447 = vsub.f32 %v5091, %v5446
    %5448 = vmatmul.mubr.f32.gmra.mxu0 %v5447
    %v5449 = vpop.f32.mrf.mxu0
    %v5450 = vadd.f32 %v5342, %v5449
    %v5451 = vpop.f32.mrf.mxu0
    %5452 = vmatprep.mubr.f32.mxu0 0.0
    %v5453 = vand.u32 %v5092, 4294901760
    %v5454 = vsub.f32 %v5092, %v5453
    %5455 = vmatmul.mubr.f32.gmra.mxu0 %v5454
    %v5456 = vpop.f32.mrf.mxu0
    %v5457 = vadd.f32 %v5348, %v5456
    %v5458 = vpop.f32.mrf.mxu0
    %5459 = vdwg.mxu0
    %5460 = vmatprep.subr.mxu0 0.0
    %5461 = vmatpush1.msra.mxu0 %v2043
    %5462 = vmatprep.subr.mxu0 0.0
    %5463 = vmatpush1.msra.mxu0 %v2042
    %5464 = vmatprep.subr.mxu0 0.0
    %5465 = vmatpush1.msra.mxu0 %v2041
    %5466 = vmatprep.subr.mxu0 0.0
    %5467 = vmatpush1.msra.mxu0 %v2040
    %5468 = vmatprep.subr.mxu0 0.0
    %5469 = vmatpush1.msra.mxu0 %v2039
    %5470 = vmatprep.subr.mxu0 0.0
    %5471 = vmatpush1.msra.mxu0 %v2038
    %5472 = vmatprep.subr.mxu0 0.0
    %5473 = vmatpush1.msra.mxu0 %v2037
    %5474 = vmatprep.subr.mxu0 0.0
    %5475 = vmatpush1.msra.mxu0 %v2036
    %5476 = vmatprep.subr.mxu0 0.0
    %5477 = vmatpush1.msra.mxu0 %v2035
    %5478 = vmatprep.subr.mxu0 0.0
    %5479 = vmatpush1.msra.mxu0 %v2034
    %5480 = vmatprep.subr.mxu0 0.0
    %5481 = vmatpush1.msra.mxu0 %v2033
    %5482 = vmatprep.subr.mxu0 0.0
    %5483 = vmatpush1.msra.mxu0 %v2032
    %5484 = vmatprep.subr.mxu0 0.0
    %5485 = vmatpush1.msra.mxu0 %v2031
    %5486 = vmatprep.subr.mxu0 0.0
    %5487 = vmatpush1.msra.mxu0 %v2030
    %5488 = vmatprep.subr.mxu0 0.0
    %5489 = vmatpush1.msra.mxu0 %v2029
    %5490 = vmatprep.subr.mxu0 0.0
    %5491 = vmatpush1.msra.mxu0 %v2028
    %5492 = vmatprep.subr.mxu0 0.0
    %5493 = vmatpush2.msra.mxu0 0.0
    %5494 = vmatprep.subr.mxu0 0.0
    %5495 = vmatpush2.msra.mxu0 0.0
    %5496 = vmatprep.subr.mxu0 0.0
    %5497 = vmatpush2.msra.mxu0 0.0
    %5498 = vmatprep.subr.mxu0 0.0
    %5499 = vmatpush2.msra.mxu0 0.0
    %5500 = vmatprep.subr.mxu0 0.0
    %5501 = vmatpush2.msra.mxu0 0.0
    %5502 = vmatprep.subr.mxu0 0.0
    %5503 = vmatpush2.msra.mxu0 0.0
    %5504 = vmatprep.subr.mxu0 0.0
    %5505 = vmatpush2.msra.mxu0 0.0
    %5506 = vmatprep.subr.mxu0 0.0
    %5507 = vmatpush2.msra.mxu0 0.0
    %5508 = vmatprep.subr.mxu0 0.0
    %5509 = vmatpush2.msra.mxu0 0.0
    %5510 = vmatprep.subr.mxu0 0.0
    %5511 = vmatpush2.msra.mxu0 0.0
    %5512 = vmatprep.subr.mxu0 0.0
    %5513 = vmatpush2.msra.mxu0 0.0
    %5514 = vmatprep.subr.mxu0 0.0
    %5515 = vmatpush2.msra.mxu0 0.0
    %5516 = vmatprep.subr.mxu0 0.0
    %5517 = vmatpush2.msra.mxu0 0.0
    %5518 = vmatprep.subr.mxu0 0.0
    %5519 = vmatpush2.msra.mxu0 0.0
    %5520 = vmatprep.subr.mxu0 0.0
    %5521 = vmatpush2.msra.mxu0 0.0
    %5522 = vmatprep.subr.mxu0 0.0
    %5523 = vmatpush2.msra.mxu0 0.0
    %5524 = vmatprep.mubr.f32.mxu0 0.0
    %v5525 = vand.u32 %v5089, 4294901760
    %v5526 = vsub.f32 %v5089, %v5525
    %v5527 = vand.u32 %v5526, 4294901760
    %5528 = vmatmul.mubr.f32.gmra.mxu0 %v5527
    %v5529 = vpop.f32.mrf.mxu0
    %v5530 = vadd.f32 %v5436, %v5529
    %v5531 = vpop.f32.mrf.mxu0
    %5532 = vmatprep.mubr.f32.mxu0 0.0
    %v5533 = vand.u32 %v5090, 4294901760
    %v5534 = vsub.f32 %v5090, %v5533
    %v5535 = vand.u32 %v5534, 4294901760
    %5536 = vmatmul.mubr.f32.gmra.mxu0 %v5535
    %v5537 = vpop.f32.mrf.mxu0
    %v5538 = vadd.f32 %v5443, %v5537
    %v5539 = vpop.f32.mrf.mxu0
    %5540 = vmatprep.mubr.f32.mxu0 0.0
    %v5541 = vand.u32 %v5091, 4294901760
    %v5542 = vsub.f32 %v5091, %v5541
    %v5543 = vand.u32 %v5542, 4294901760
    %5544 = vmatmul.mubr.f32.gmra.mxu0 %v5543
    %v5545 = vpop.f32.mrf.mxu0
    %v5546 = vadd.f32 %v5450, %v5545
    %v5547 = vpop.f32.mrf.mxu0
    %5548 = vmatprep.mubr.f32.mxu0 0.0
    %v5549 = vand.u32 %v5092, 4294901760
    %v5550 = vsub.f32 %v5092, %v5549
    %v5551 = vand.u32 %v5550, 4294901760
    %5552 = vmatmul.mubr.f32.gmra.mxu0 %v5551
    %v5553 = vpop.f32.mrf.mxu0
    %v5554 = vadd.f32 %v5457, %v5553
    %v5555 = vpop.f32.mrf.mxu0
    %5556 = vdwg.mxu0
    %5557 = vmatprep.subr.mxu0 0.0
    %v5558 = vsub.f32 %v2043, %v2043
    %v5559 = vand.u32 %v5558, 4294901760
    %5560 = vmatpush1.msra.mxu0 %v5559
    %5561 = vmatprep.subr.mxu0 0.0
    %v5562 = vsub.f32 %v2042, %v2042
    %v5563 = vand.u32 %v5562, 4294901760
    %5564 = vmatpush1.msra.mxu0 %v5563
    %5565 = vmatprep.subr.mxu0 0.0
    %v5566 = vsub.f32 %v2041, %v2041
    %v5567 = vand.u32 %v5566, 4294901760
    %5568 = vmatpush1.msra.mxu0 %v5567
    %5569 = vmatprep.subr.mxu0 0.0
    %v5570 = vsub.f32 %v2040, %v2040
    %v5571 = vand.u32 %v5570, 4294901760
    %5572 = vmatpush1.msra.mxu0 %v5571
    %5573 = vmatprep.subr.mxu0 0.0
    %v5574 = vsub.f32 %v2039, %v2039
    %v5575 = vand.u32 %v5574, 4294901760
    %5576 = vmatpush1.msra.mxu0 %v5575
    %5577 = vmatprep.subr.mxu0 0.0
    %v5578 = vsub.f32 %v2038, %v2038
    %v5579 = vand.u32 %v5578, 4294901760
    %5580 = vmatpush1.msra.mxu0 %v5579
    %5581 = vmatprep.subr.mxu0 0.0
    %v5582 = vsub.f32 %v2037, %v2037
    %v5583 = vand.u32 %v5582, 4294901760
    %5584 = vmatpush1.msra.mxu0 %v5583
    %5585 = vmatprep.subr.mxu0 0.0
    %v5586 = vsub.f32 %v2036, %v2036
    %v5587 = vand.u32 %v5586, 4294901760
    %5588 = vmatpush1.msra.mxu0 %v5587
    %5589 = vmatprep.subr.mxu0 0.0
    %v5590 = vsub.f32 %v2035, %v2035
    %v5591 = vand.u32 %v5590, 4294901760
    %5592 = vmatpush1.msra.mxu0 %v5591
    %5593 = vmatprep.subr.mxu0 0.0
    %v5594 = vsub.f32 %v2034, %v2034
    %v5595 = vand.u32 %v5594, 4294901760
    %5596 = vmatpush1.msra.mxu0 %v5595
    %5597 = vmatprep.subr.mxu0 0.0
    %v5598 = vsub.f32 %v2033, %v2033
    %v5599 = vand.u32 %v5598, 4294901760
    %5600 = vmatpush1.msra.mxu0 %v5599
    %5601 = vmatprep.subr.mxu0 0.0
    %v5602 = vsub.f32 %v2032, %v2032
    %v5603 = vand.u32 %v5602, 4294901760
    %5604 = vmatpush1.msra.mxu0 %v5603
    %5605 = vmatprep.subr.mxu0 0.0
    %v5606 = vsub.f32 %v2031, %v2031
    %v5607 = vand.u32 %v5606, 4294901760
    %5608 = vmatpush1.msra.mxu0 %v5607
    %5609 = vmatprep.subr.mxu0 0.0
    %v5610 = vsub.f32 %v2030, %v2030
    %v5611 = vand.u32 %v5610, 4294901760
    %5612 = vmatpush1.msra.mxu0 %v5611
    %5613 = vmatprep.subr.mxu0 0.0
    %v5614 = vsub.f32 %v2029, %v2029
    %v5615 = vand.u32 %v5614, 4294901760
    %5616 = vmatpush1.msra.mxu0 %v5615
    %5617 = vmatprep.subr.mxu0 0.0
    %v5618 = vsub.f32 %v2028, %v2028
    %v5619 = vand.u32 %v5618, 4294901760
    %5620 = vmatpush1.msra.mxu0 %v5619
    %5621 = vmatprep.subr.mxu0 0.0
    %5622 = vmatpush2.msra.mxu0 0.0
    %5623 = vmatprep.subr.mxu0 0.0
    %5624 = vmatpush2.msra.mxu0 0.0
    %5625 = vmatprep.subr.mxu0 0.0
    %5626 = vmatpush2.msra.mxu0 0.0
    %5627 = vmatprep.subr.mxu0 0.0
    %5628 = vmatpush2.msra.mxu0 0.0
    %5629 = vmatprep.subr.mxu0 0.0
    %5630 = vmatpush2.msra.mxu0 0.0
    %5631 = vmatprep.subr.mxu0 0.0
    %5632 = vmatpush2.msra.mxu0 0.0
    %5633 = vmatprep.subr.mxu0 0.0
    %5634 = vmatpush2.msra.mxu0 0.0
    %5635 = vmatprep.subr.mxu0 0.0
    %5636 = vmatpush2.msra.mxu0 0.0
    %5637 = vmatprep.subr.mxu0 0.0
    %5638 = vmatpush2.msra.mxu0 0.0
    %5639 = vmatprep.subr.mxu0 0.0
    %5640 = vmatpush2.msra.mxu0 0.0
    %5641 = vmatprep.subr.mxu0 0.0
    %5642 = vmatpush2.msra.mxu0 0.0
    %5643 = vmatprep.subr.mxu0 0.0
    %5644 = vmatpush2.msra.mxu0 0.0
    %5645 = vmatprep.subr.mxu0 0.0
    %5646 = vmatpush2.msra.mxu0 0.0
    %5647 = vmatprep.subr.mxu0 0.0
    %5648 = vmatpush2.msra.mxu0 0.0
    %5649 = vmatprep.subr.mxu0 0.0
    %5650 = vmatpush2.msra.mxu0 0.0
    %5651 = vmatprep.subr.mxu0 0.0
    %5652 = vmatpush2.msra.mxu0 0.0
    %5653 = vmatprep.mubr.f32.mxu0 0.0
    %v5654 = vand.u32 %v5089, 4294901760
    %5655 = vmatmul.mubr.f32.gmra.mxu0 %v5654
    %v5656 = vpop.f32.mrf.mxu0
    %v5657 = vadd.f32 %v5530, %v5656
    %v5658 = vpop.f32.mrf.mxu0
    %5659 = vmatprep.mubr.f32.mxu0 0.0
    %v5660 = vand.u32 %v5090, 4294901760
    %5661 = vmatmul.mubr.f32.gmra.mxu0 %v5660
    %v5662 = vpop.f32.mrf.mxu0
    %v5663 = vadd.f32 %v5538, %v5662
    %v5664 = vpop.f32.mrf.mxu0
    %5665 = vmatprep.mubr.f32.mxu0 0.0
    %v5666 = vand.u32 %v5091, 4294901760
    %5667 = vmatmul.mubr.f32.gmra.mxu0 %v5666
    %v5668 = vpop.f32.mrf.mxu0
    %v5669 = vadd.f32 %v5546, %v5668
    %v5670 = vpop.f32.mrf.mxu0
    %5671 = vmatprep.mubr.f32.mxu0 0.0
    %v5672 = vand.u32 %v5092, 4294901760
    %5673 = vmatmul.mubr.f32.gmra.mxu0 %v5672
    %v5674 = vpop.f32.mrf.mxu0
    %v5675 = vadd.f32 %v5554, %v5674
    %v5676 = vpop.f32.mrf.mxu0
    %5677 = vdwg.mxu0
    %5678 = vmatprep.subr.mxu0 0.0
    %5679 = vmatpush1.msra.mxu0 %v2043
    %5680 = vmatprep.subr.mxu0 0.0
    %5681 = vmatpush1.msra.mxu0 %v2042
    %5682 = vmatprep.subr.mxu0 0.0
    %5683 = vmatpush1.msra.mxu0 %v2041
    %5684 = vmatprep.subr.mxu0 0.0
    %5685 = vmatpush1.msra.mxu0 %v2040
    %5686 = vmatprep.subr.mxu0 0.0
    %5687 = vmatpush1.msra.mxu0 %v2039
    %5688 = vmatprep.subr.mxu0 0.0
    %5689 = vmatpush1.msra.mxu0 %v2038
    %5690 = vmatprep.subr.mxu0 0.0
    %5691 = vmatpush1.msra.mxu0 %v2037
    %5692 = vmatprep.subr.mxu0 0.0
    %5693 = vmatpush1.msra.mxu0 %v2036
    %5694 = vmatprep.subr.mxu0 0.0
    %5695 = vmatpush1.msra.mxu0 %v2035
    %5696 = vmatprep.subr.mxu0 0.0
    %5697 = vmatpush1.msra.mxu0 %v2034
    %5698 = vmatprep.subr.mxu0 0.0
    %5699 = vmatpush1.msra.mxu0 %v2033
    %5700 = vmatprep.subr.mxu0 0.0
    %5701 = vmatpush1.msra.mxu0 %v2032
    %5702 = vmatprep.subr.mxu0 0.0
    %5703 = vmatpush1.msra.mxu0 %v2031
    %5704 = vmatprep.subr.mxu0 0.0
    %5705 = vmatpush1.msra.mxu0 %v2030
    %5706 = vmatprep.subr.mxu0 0.0
    %5707 = vmatpush1.msra.mxu0 %v2029
    %5708 = vmatprep.subr.mxu0 0.0
    %5709 = vmatpush1.msra.mxu0 %v2028
    %5710 = vmatprep.subr.mxu0 0.0
    %5711 = vmatpush2.msra.mxu0 0.0
    %5712 = vmatprep.subr.mxu0 0.0
    %5713 = vmatpush2.msra.mxu0 0.0
    %5714 = vmatprep.subr.mxu0 0.0
    %5715 = vmatpush2.msra.mxu0 0.0
    %5716 = vmatprep.subr.mxu0 0.0
    %5717 = vmatpush2.msra.mxu0 0.0
    %5718 = vmatprep.subr.mxu0 0.0
    %5719 = vmatpush2.msra.mxu0 0.0
    %5720 = vmatprep.subr.mxu0 0.0
    %5721 = vmatpush2.msra.mxu0 0.0
    %5722 = vmatprep.subr.mxu0 0.0
    %5723 = vmatpush2.msra.mxu0 0.0
    %5724 = vmatprep.subr.mxu0 0.0
    %5725 = vmatpush2.msra.mxu0 0.0
    %5726 = vmatprep.subr.mxu0 0.0
    %5727 = vmatpush2.msra.mxu0 0.0
    %5728 = vmatprep.subr.mxu0 0.0
    %5729 = vmatpush2.msra.mxu0 0.0
    %5730 = vmatprep.subr.mxu0 0.0
    %5731 = vmatpush2.msra.mxu0 0.0
    %5732 = vmatprep.subr.mxu0 0.0
    %5733 = vmatpush2.msra.mxu0 0.0
    %5734 = vmatprep.subr.mxu0 0.0
    %5735 = vmatpush2.msra.mxu0 0.0
    %5736 = vmatprep.subr.mxu0 0.0
    %5737 = vmatpush2.msra.mxu0 0.0
    %5738 = vmatprep.subr.mxu0 0.0
    %5739 = vmatpush2.msra.mxu0 0.0
    %5740 = vmatprep.subr.mxu0 0.0
    %5741 = vmatpush2.msra.mxu0 0.0
    %5742 = vmatprep.mubr.f32.mxu0 0.0
    %v5743 = vand.u32 %v5089, 4294901760
    %5744 = vmatmul.mubr.f32.gmra.mxu0 %v5743
    %v5745 = vpop.f32.mrf.mxu0
    %v5746 = vadd.f32 %v5657, %v5745
    %v5747 = vpop.f32.mrf.mxu0
    %5748 = vmatprep.mubr.f32.mxu0 0.0
    %v5749 = vand.u32 %v5090, 4294901760
    %5750 = vmatmul.mubr.f32.gmra.mxu0 %v5749
    %v5751 = vpop.f32.mrf.mxu0
    %v5752 = vadd.f32 %v5663, %v5751
    %v5753 = vpop.f32.mrf.mxu0
    %5754 = vmatprep.mubr.f32.mxu0 0.0
    %v5755 = vand.u32 %v5091, 4294901760
    %5756 = vmatmul.mubr.f32.gmra.mxu0 %v5755
    %v5757 = vpop.f32.mrf.mxu0
    %v5758 = vadd.f32 %v5669, %v5757
    %v5759 = vpop.f32.mrf.mxu0
    %5760 = vmatprep.mubr.f32.mxu0 0.0
    %v5761 = vand.u32 %v5092, 4294901760
    %5762 = vmatmul.mubr.f32.gmra.mxu0 %v5761
    %v5763 = vpop.f32.mrf.mxu0
    %v5764 = vadd.f32 %v5675, %v5763
    %v5765 = vpop.f32.mrf.mxu0
    %5766 = vdwg.mxu0
    %v5767 = vmul.f32 %v5746, 0.0625
    %v5768 = vmul.f32 %v5752, 0.0625
    %v5769 = vmul.f32 %v5758, 0.0625
    %v5770 = vmul.f32 %v5764, 0.0625
    %v5771 = vld [vmem:[%s11] sm:$0x3]
    %v5772 = vld [vmem:[%s12] sm:$0x3]
    %5774 = vset.pattern.permute.xlu0 0
    %5775 = vperm.xlu0 %5774, %v5772
    %v5776 = vpop.permute.xlu0 %5775
    %v5779 = vsel %vm69, %v5771, 0
    %5781 = vmatprep.subr.mxu0 0.0
    %5782 = vmatpush1.msra.mxu0 0.0
    %5783 = vmatprep.subr.mxu0 0.0
    %5784 = vmatpush1.msra.mxu0 0.0
    %5785 = vmatprep.subr.mxu0 0.0
    %5786 = vmatpush1.msra.mxu0 0.0
    %5787 = vmatprep.subr.mxu0 0.0
    %5788 = vmatpush1.msra.mxu0 0.0
    %5789 = vmatprep.subr.mxu0 0.0
    %5790 = vmatpush1.msra.mxu0 0.0
    %5791 = vmatprep.subr.mxu0 0.0
    %5792 = vmatpush1.msra.mxu0 0.0
    %5793 = vmatprep.subr.mxu0 0.0
    %5794 = vmatpush1.msra.mxu0 0.0
    %5795 = vmatprep.subr.mxu0 0.0
    %5796 = vmatpush1.msra.mxu0 0.0
    %5797 = vmatprep.subr.mxu0 0.0
    %5798 = vmatpush1.msra.mxu0 0.0
    %5799 = vmatprep.subr.mxu0 0.0
    %5800 = vmatpush1.msra.mxu0 0.0
    %5801 = vmatprep.subr.mxu0 0.0
    %5802 = vmatpush1.msra.mxu0 0.0
    %5803 = vmatprep.subr.mxu0 0.0
    %5804 = vmatpush1.msra.mxu0 0.0
    %5805 = vmatprep.subr.mxu0 0.0
    %v5806 = vand.u32 %v5770, 4294901760
    %5807 = vmatpush1.msra.mxu0 %v5806
    %5808 = vmatprep.subr.mxu0 0.0
    %v5809 = vand.u32 %v5769, 4294901760
    %5810 = vmatpush1.msra.mxu0 %v5809
    %5811 = vmatprep.subr.mxu0 0.0
    %v5812 = vand.u32 %v5768, 4294901760
    %5813 = vmatpush1.msra.mxu0 %v5812
    %5814 = vmatprep.subr.mxu0 0.0
    %v5815 = vand.u32 %v5767, 4294901760
    %5816 = vmatpush1.msra.mxu0 %v5815
    %5817 = vmatprep.subr.mxu0 0.0
    %5818 = vmatpush2.msra.mxu0 0.0
    %5819 = vmatprep.subr.mxu0 0.0
    %5820 = vmatpush2.msra.mxu0 0.0
    %5821 = vmatprep.subr.mxu0 0.0
    %5822 = vmatpush2.msra.mxu0 0.0
    %5823 = vmatprep.subr.mxu0 0.0
    %5824 = vmatpush2.msra.mxu0 0.0
    %5825 = vmatprep.subr.mxu0 0.0
    %5826 = vmatpush2.msra.mxu0 0.0
    %5827 = vmatprep.subr.mxu0 0.0
    %5828 = vmatpush2.msra.mxu0 0.0
    %5829 = vmatprep.subr.mxu0 0.0
    %5830 = vmatpush2.msra.mxu0 0.0
    %5831 = vmatprep.subr.mxu0 0.0
    %5832 = vmatpush2.msra.mxu0 0.0
    %5833 = vmatprep.subr.mxu0 0.0
    %5834 = vmatpush2.msra.mxu0 0.0
    %5835 = vmatprep.subr.mxu0 0.0
    %5836 = vmatpush2.msra.mxu0 0.0
    %5837 = vmatprep.subr.mxu0 0.0
    %5838 = vmatpush2.msra.mxu0 0.0
    %5839 = vmatprep.subr.mxu0 0.0
    %5840 = vmatpush2.msra.mxu0 0.0
    %5841 = vmatprep.subr.mxu0 0.0
    %5842 = vmatpush2.msra.mxu0 0.0
    %5843 = vmatprep.subr.mxu0 0.0
    %5844 = vmatpush2.msra.mxu0 0.0
    %5845 = vmatprep.subr.mxu0 0.0
    %5846 = vmatpush2.msra.mxu0 0.0
    %5847 = vmatprep.subr.mxu0 0.0
    %5848 = vmatpush2.msra.mxu0 0.0
    %5849 = vmatprep.mubr.f32.mxu0 0.0
    %v5850 = vand.u32 %v5779, 4294901760
    %v5851 = vsub.f32 %v5779, %v5850
    %v5852 = vand.u32 %v5851, 4294901760
    %v5853 = vsub.f32 %v5851, %v5852
    %v5854 = vand.u32 %v5853, 4294901760
    %5855 = vmatmul.mubr.f32.gmra.mxu0 %v5854
    %v5856 = vpop.f32.mrf.mxu0
    %v5857 = vadd.f32 %v5776, %v5856
    %v5858 = vpop.f32.mrf.mxu0
    %5859 = vdwg.mxu0
    %5860 = vmatprep.subr.mxu0 0.0
    %5861 = vmatpush1.msra.mxu0 0.0
    %5862 = vmatprep.subr.mxu0 0.0
    %5863 = vmatpush1.msra.mxu0 0.0
    %5864 = vmatprep.subr.mxu0 0.0
    %5865 = vmatpush1.msra.mxu0 0.0
    %5866 = vmatprep.subr.mxu0 0.0
    %5867 = vmatpush1.msra.mxu0 0.0
    %5868 = vmatprep.subr.mxu0 0.0
    %5869 = vmatpush1.msra.mxu0 0.0
    %5870 = vmatprep.subr.mxu0 0.0
    %5871 = vmatpush1.msra.mxu0 0.0
    %5872 = vmatprep.subr.mxu0 0.0
    %5873 = vmatpush1.msra.mxu0 0.0
    %5874 = vmatprep.subr.mxu0 0.0
    %5875 = vmatpush1.msra.mxu0 0.0
    %5876 = vmatprep.subr.mxu0 0.0
    %5877 = vmatpush1.msra.mxu0 0.0
    %5878 = vmatprep.subr.mxu0 0.0
    %5879 = vmatpush1.msra.mxu0 0.0
    %5880 = vmatprep.subr.mxu0 0.0
    %5881 = vmatpush1.msra.mxu0 0.0
    %5882 = vmatprep.subr.mxu0 0.0
    %5883 = vmatpush1.msra.mxu0 0.0
    %5884 = vmatprep.subr.mxu0 0.0
    %v5885 = vand.u32 %v5770, 4294901760
    %v5886 = vsub.f32 %v5770, %v5885
    %v5887 = vand.u32 %v5886, 4294901760
    %v5888 = vsub.f32 %v5886, %v5887
    %v5889 = vand.u32 %v5888, 4294901760
    %5890 = vmatpush1.msra.mxu0 %v5889
    %5891 = vmatprep.subr.mxu0 0.0
    %v5892 = vand.u32 %v5769, 4294901760
    %v5893 = vsub.f32 %v5769, %v5892
    %v5894 = vand.u32 %v5893, 4294901760
    %v5895 = vsub.f32 %v5893, %v5894
    %v5896 = vand.u32 %v5895, 4294901760
    %5897 = vmatpush1.msra.mxu0 %v5896
    %5898 = vmatprep.subr.mxu0 0.0
    %v5899 = vand.u32 %v5768, 4294901760
    %v5900 = vsub.f32 %v5768, %v5899
    %v5901 = vand.u32 %v5900, 4294901760
    %v5902 = vsub.f32 %v5900, %v5901
    %v5903 = vand.u32 %v5902, 4294901760
    %5904 = vmatpush1.msra.mxu0 %v5903
    %5905 = vmatprep.subr.mxu0 0.0
    %v5906 = vand.u32 %v5767, 4294901760
    %v5907 = vsub.f32 %v5767, %v5906
    %v5908 = vand.u32 %v5907, 4294901760
    %v5909 = vsub.f32 %v5907, %v5908
    %v5910 = vand.u32 %v5909, 4294901760
    %5911 = vmatpush1.msra.mxu0 %v5910
    %5912 = vmatprep.subr.mxu0 0.0
    %5913 = vmatpush2.msra.mxu0 0.0
    %5914 = vmatprep.subr.mxu0 0.0
    %5915 = vmatpush2.msra.mxu0 0.0
    %5916 = vmatprep.subr.mxu0 0.0
    %5917 = vmatpush2.msra.mxu0 0.0
    %5918 = vmatprep.subr.mxu0 0.0
    %5919 = vmatpush2.msra.mxu0 0.0
    %5920 = vmatprep.subr.mxu0 0.0
    %5921 = vmatpush2.msra.mxu0 0.0
    %5922 = vmatprep.subr.mxu0 0.0
    %5923 = vmatpush2.msra.mxu0 0.0
    %5924 = vmatprep.subr.mxu0 0.0
    %5925 = vmatpush2.msra.mxu0 0.0
    %5926 = vmatprep.subr.mxu0 0.0
    %5927 = vmatpush2.msra.mxu0 0.0
    %5928 = vmatprep.subr.mxu0 0.0
    %5929 = vmatpush2.msra.mxu0 0.0
    %5930 = vmatprep.subr.mxu0 0.0
    %5931 = vmatpush2.msra.mxu0 0.0
    %5932 = vmatprep.subr.mxu0 0.0
    %5933 = vmatpush2.msra.mxu0 0.0
    %5934 = vmatprep.subr.mxu0 0.0
    %5935 = vmatpush2.msra.mxu0 0.0
    %5936 = vmatprep.subr.mxu0 0.0
    %5937 = vmatpush2.msra.mxu0 0.0
    %5938 = vmatprep.subr.mxu0 0.0
    %5939 = vmatpush2.msra.mxu0 0.0
    %5940 = vmatprep.subr.mxu0 0.0
    %5941 = vmatpush2.msra.mxu0 0.0
    %5942 = vmatprep.subr.mxu0 0.0
    %5943 = vmatpush2.msra.mxu0 0.0
    %5944 = vmatprep.mubr.f32.mxu0 0.0
    %v5945 = vand.u32 %v5779, 4294901760
    %5946 = vmatmul.mubr.f32.gmra.mxu0 %v5945
    %v5947 = vpop.f32.mrf.mxu0
    %v5948 = vadd.f32 %v5857, %v5947
    %v5949 = vpop.f32.mrf.mxu0
    %5950 = vdwg.mxu0
    %5951 = vmatprep.subr.mxu0 0.0
    %5952 = vmatpush1.msra.mxu0 0.0
    %5953 = vmatprep.subr.mxu0 0.0
    %5954 = vmatpush1.msra.mxu0 0.0
    %5955 = vmatprep.subr.mxu0 0.0
    %5956 = vmatpush1.msra.mxu0 0.0
    %5957 = vmatprep.subr.mxu0 0.0
    %5958 = vmatpush1.msra.mxu0 0.0
    %5959 = vmatprep.subr.mxu0 0.0
    %5960 = vmatpush1.msra.mxu0 0.0
    %5961 = vmatprep.subr.mxu0 0.0
    %5962 = vmatpush1.msra.mxu0 0.0
    %5963 = vmatprep.subr.mxu0 0.0
    %5964 = vmatpush1.msra.mxu0 0.0
    %5965 = vmatprep.subr.mxu0 0.0
    %5966 = vmatpush1.msra.mxu0 0.0
    %5967 = vmatprep.subr.mxu0 0.0
    %5968 = vmatpush1.msra.mxu0 0.0
    %5969 = vmatprep.subr.mxu0 0.0
    %5970 = vmatpush1.msra.mxu0 0.0
    %5971 = vmatprep.subr.mxu0 0.0
    %5972 = vmatpush1.msra.mxu0 0.0
    %5973 = vmatprep.subr.mxu0 0.0
    %5974 = vmatpush1.msra.mxu0 0.0
    %5975 = vmatprep.subr.mxu0 0.0
    %v5976 = vand.u32 %v5770, 4294901760
    %v5977 = vsub.f32 %v5770, %v5976
    %5978 = vmatpush1.msra.mxu0 %v5977
    %5979 = vmatprep.subr.mxu0 0.0
    %v5980 = vand.u32 %v5769, 4294901760
    %v5981 = vsub.f32 %v5769, %v5980
    %5982 = vmatpush1.msra.mxu0 %v5981
    %5983 = vmatprep.subr.mxu0 0.0
    %v5984 = vand.u32 %v5768, 4294901760
    %v5985 = vsub.f32 %v5768, %v5984
    %5986 = vmatpush1.msra.mxu0 %v5985
    %5987 = vmatprep.subr.mxu0 0.0
    %v5988 = vand.u32 %v5767, 4294901760
    %v5989 = vsub.f32 %v5767, %v5988
    %5990 = vmatpush1.msra.mxu0 %v5989
    %5991 = vmatprep.subr.mxu0 0.0
    %5992 = vmatpush2.msra.mxu0 0.0
    %5993 = vmatprep.subr.mxu0 0.0
    %5994 = vmatpush2.msra.mxu0 0.0
    %5995 = vmatprep.subr.mxu0 0.0
    %5996 = vmatpush2.msra.mxu0 0.0
    %5997 = vmatprep.subr.mxu0 0.0
    %5998 = vmatpush2.msra.mxu0 0.0
    %5999 = vmatprep.subr.mxu0 0.0
    %6000 = vmatpush2.msra.mxu0 0.0
    %6001 = vmatprep.subr.mxu0 0.0
    %6002 = vmatpush2.msra.mxu0 0.0
    %6003 = vmatprep.subr.mxu0 0.0
    %6004 = vmatpush2.msra.mxu0 0.0
    %6005 = vmatprep.subr.mxu0 0.0
    %6006 = vmatpush2.msra.mxu0 0.0
    %6007 = vmatprep.subr.mxu0 0.0
    %6008 = vmatpush2.msra.mxu0 0.0
    %6009 = vmatprep.subr.mxu0 0.0
    %6010 = vmatpush2.msra.mxu0 0.0
    %6011 = vmatprep.subr.mxu0 0.0
    %6012 = vmatpush2.msra.mxu0 0.0
    %6013 = vmatprep.subr.mxu0 0.0
    %6014 = vmatpush2.msra.mxu0 0.0
    %6015 = vmatprep.subr.mxu0 0.0
    %6016 = vmatpush2.msra.mxu0 0.0
    %6017 = vmatprep.subr.mxu0 0.0
    %6018 = vmatpush2.msra.mxu0 0.0
    %6019 = vmatprep.subr.mxu0 0.0
    %6020 = vmatpush2.msra.mxu0 0.0
    %6021 = vmatprep.subr.mxu0 0.0
    %6022 = vmatpush2.msra.mxu0 0.0
    %6023 = vmatprep.mubr.f32.mxu0 0.0
    %v6024 = vand.u32 %v5779, 4294901760
    %v6025 = vsub.f32 %v5779, %v6024
    %6026 = vmatmul.mubr.f32.gmra.mxu0 %v6025
    %v6027 = vpop.f32.mrf.mxu0
    %v6028 = vadd.f32 %v5948, %v6027
    %v6029 = vpop.f32.mrf.mxu0
    %6030 = vdwg.mxu0
    %6031 = vmatprep.subr.mxu0 0.0
    %6032 = vmatpush1.msra.mxu0 0.0
    %6033 = vmatprep.subr.mxu0 0.0
    %6034 = vmatpush1.msra.mxu0 0.0
    %6035 = vmatprep.subr.mxu0 0.0
    %6036 = vmatpush1.msra.mxu0 0.0
    %6037 = vmatprep.subr.mxu0 0.0
    %6038 = vmatpush1.msra.mxu0 0.0
    %6039 = vmatprep.subr.mxu0 0.0
    %6040 = vmatpush1.msra.mxu0 0.0
    %6041 = vmatprep.subr.mxu0 0.0
    %6042 = vmatpush1.msra.mxu0 0.0
    %6043 = vmatprep.subr.mxu0 0.0
    %6044 = vmatpush1.msra.mxu0 0.0
    %6045 = vmatprep.subr.mxu0 0.0
    %6046 = vmatpush1.msra.mxu0 0.0
    %6047 = vmatprep.subr.mxu0 0.0
    %6048 = vmatpush1.msra.mxu0 0.0
    %6049 = vmatprep.subr.mxu0 0.0
    %6050 = vmatpush1.msra.mxu0 0.0
    %6051 = vmatprep.subr.mxu0 0.0
    %6052 = vmatpush1.msra.mxu0 0.0
    %6053 = vmatprep.subr.mxu0 0.0
    %6054 = vmatpush1.msra.mxu0 0.0
    %6055 = vmatprep.subr.mxu0 0.0
    %v6056 = vand.u32 %v5770, 4294901760
    %6057 = vmatpush1.msra.mxu0 %v6056
    %6058 = vmatprep.subr.mxu0 0.0
    %v6059 = vand.u32 %v5769, 4294901760
    %6060 = vmatpush1.msra.mxu0 %v6059
    %6061 = vmatprep.subr.mxu0 0.0
    %v6062 = vand.u32 %v5768, 4294901760
    %6063 = vmatpush1.msra.mxu0 %v6062
    %6064 = vmatprep.subr.mxu0 0.0
    %v6065 = vand.u32 %v5767, 4294901760
    %6066 = vmatpush1.msra.mxu0 %v6065
    %6067 = vmatprep.subr.mxu0 0.0
    %6068 = vmatpush2.msra.mxu0 0.0
    %6069 = vmatprep.subr.mxu0 0.0
    %6070 = vmatpush2.msra.mxu0 0.0
    %6071 = vmatprep.subr.mxu0 0.0
    %6072 = vmatpush2.msra.mxu0 0.0
    %6073 = vmatprep.subr.mxu0 0.0
    %6074 = vmatpush2.msra.mxu0 0.0
    %6075 = vmatprep.subr.mxu0 0.0
    %6076 = vmatpush2.msra.mxu0 0.0
    %6077 = vmatprep.subr.mxu0 0.0
    %6078 = vmatpush2.msra.mxu0 0.0
    %6079 = vmatprep.subr.mxu0 0.0
    %6080 = vmatpush2.msra.mxu0 0.0
    %6081 = vmatprep.subr.mxu0 0.0
    %6082 = vmatpush2.msra.mxu0 0.0
    %6083 = vmatprep.subr.mxu0 0.0
    %6084 = vmatpush2.msra.mxu0 0.0
    %6085 = vmatprep.subr.mxu0 0.0
    %6086 = vmatpush2.msra.mxu0 0.0
    %6087 = vmatprep.subr.mxu0 0.0
    %6088 = vmatpush2.msra.mxu0 0.0
    %6089 = vmatprep.subr.mxu0 0.0
    %6090 = vmatpush2.msra.mxu0 0.0
    %6091 = vmatprep.subr.mxu0 0.0
    %6092 = vmatpush2.msra.mxu0 0.0
    %6093 = vmatprep.subr.mxu0 0.0
    %6094 = vmatpush2.msra.mxu0 0.0
    %6095 = vmatprep.subr.mxu0 0.0
    %6096 = vmatpush2.msra.mxu0 0.0
    %6097 = vmatprep.subr.mxu0 0.0
    %6098 = vmatpush2.msra.mxu0 0.0
    %6099 = vmatprep.mubr.f32.mxu0 0.0
    %v6100 = vand.u32 %v5779, 4294901760
    %v6101 = vsub.f32 %v5779, %v6100
    %v6102 = vand.u32 %v6101, 4294901760
    %6103 = vmatmul.mubr.f32.gmra.mxu0 %v6102
    %v6104 = vpop.f32.mrf.mxu0
    %v6105 = vadd.f32 %v6028, %v6104
    %v6106 = vpop.f32.mrf.mxu0
    %6107 = vdwg.mxu0
    %6108 = vmatprep.subr.mxu0 0.0
    %6109 = vmatpush1.msra.mxu0 0.0
    %6110 = vmatprep.subr.mxu0 0.0
    %6111 = vmatpush1.msra.mxu0 0.0
    %6112 = vmatprep.subr.mxu0 0.0
    %6113 = vmatpush1.msra.mxu0 0.0
    %6114 = vmatprep.subr.mxu0 0.0
    %6115 = vmatpush1.msra.mxu0 0.0
    %6116 = vmatprep.subr.mxu0 0.0
    %6117 = vmatpush1.msra.mxu0 0.0
    %6118 = vmatprep.subr.mxu0 0.0
    %6119 = vmatpush1.msra.mxu0 0.0
    %6120 = vmatprep.subr.mxu0 0.0
    %6121 = vmatpush1.msra.mxu0 0.0
    %6122 = vmatprep.subr.mxu0 0.0
    %6123 = vmatpush1.msra.mxu0 0.0
    %6124 = vmatprep.subr.mxu0 0.0
    %6125 = vmatpush1.msra.mxu0 0.0
    %6126 = vmatprep.subr.mxu0 0.0
    %6127 = vmatpush1.msra.mxu0 0.0
    %6128 = vmatprep.subr.mxu0 0.0
    %6129 = vmatpush1.msra.mxu0 0.0
    %6130 = vmatprep.subr.mxu0 0.0
    %6131 = vmatpush1.msra.mxu0 0.0
    %6132 = vmatprep.subr.mxu0 0.0
    %v6133 = vand.u32 %v5770, 4294901760
    %v6134 = vsub.f32 %v5770, %v6133
    %v6135 = vand.u32 %v6134, 4294901760
    %6136 = vmatpush1.msra.mxu0 %v6135
    %6137 = vmatprep.subr.mxu0 0.0
    %v6138 = vand.u32 %v5769, 4294901760
    %v6139 = vsub.f32 %v5769, %v6138
    %v6140 = vand.u32 %v6139, 4294901760
    %6141 = vmatpush1.msra.mxu0 %v6140
    %6142 = vmatprep.subr.mxu0 0.0
    %v6143 = vand.u32 %v5768, 4294901760
    %v6144 = vsub.f32 %v5768, %v6143
    %v6145 = vand.u32 %v6144, 4294901760
    %6146 = vmatpush1.msra.mxu0 %v6145
    %6147 = vmatprep.subr.mxu0 0.0
    %v6148 = vand.u32 %v5767, 4294901760
    %v6149 = vsub.f32 %v5767, %v6148
    %v6150 = vand.u32 %v6149, 4294901760
    %6151 = vmatpush1.msra.mxu0 %v6150
    %6152 = vmatprep.subr.mxu0 0.0
    %6153 = vmatpush2.msra.mxu0 0.0
    %6154 = vmatprep.subr.mxu0 0.0
    %6155 = vmatpush2.msra.mxu0 0.0
    %6156 = vmatprep.subr.mxu0 0.0
    %6157 = vmatpush2.msra.mxu0 0.0
    %6158 = vmatprep.subr.mxu0 0.0
    %6159 = vmatpush2.msra.mxu0 0.0
    %6160 = vmatprep.subr.mxu0 0.0
    %6161 = vmatpush2.msra.mxu0 0.0
    %6162 = vmatprep.subr.mxu0 0.0
    %6163 = vmatpush2.msra.mxu0 0.0
    %6164 = vmatprep.subr.mxu0 0.0
    %6165 = vmatpush2.msra.mxu0 0.0
    %6166 = vmatprep.subr.mxu0 0.0
    %6167 = vmatpush2.msra.mxu0 0.0
    %6168 = vmatprep.subr.mxu0 0.0
    %6169 = vmatpush2.msra.mxu0 0.0
    %6170 = vmatprep.subr.mxu0 0.0
    %6171 = vmatpush2.msra.mxu0 0.0
    %6172 = vmatprep.subr.mxu0 0.0
    %6173 = vmatpush2.msra.mxu0 0.0
    %6174 = vmatprep.subr.mxu0 0.0
    %6175 = vmatpush2.msra.mxu0 0.0
    %6176 = vmatprep.subr.mxu0 0.0
    %6177 = vmatpush2.msra.mxu0 0.0
    %6178 = vmatprep.subr.mxu0 0.0
    %6179 = vmatpush2.msra.mxu0 0.0
    %6180 = vmatprep.subr.mxu0 0.0
    %6181 = vmatpush2.msra.mxu0 0.0
    %6182 = vmatprep.subr.mxu0 0.0
    %6183 = vmatpush2.msra.mxu0 0.0
    %6184 = vmatprep.mubr.f32.mxu0 0.0
    %v6185 = vand.u32 %v5779, 4294901760
    %6186 = vmatmul.mubr.f32.gmra.mxu0 %v6185
    %v6187 = vpop.f32.mrf.mxu0
    %v6188 = vadd.f32 %v6105, %v6187
    %v6189 = vpop.f32.mrf.mxu0
    %6190 = vdwg.mxu0
    %6191 = vmatprep.subr.mxu0 0.0
    %6192 = vmatpush1.msra.mxu0 0.0
    %6193 = vmatprep.subr.mxu0 0.0
    %6194 = vmatpush1.msra.mxu0 0.0
    %6195 = vmatprep.subr.mxu0 0.0
    %6196 = vmatpush1.msra.mxu0 0.0
    %6197 = vmatprep.subr.mxu0 0.0
    %6198 = vmatpush1.msra.mxu0 0.0
    %6199 = vmatprep.subr.mxu0 0.0
    %6200 = vmatpush1.msra.mxu0 0.0
    %6201 = vmatprep.subr.mxu0 0.0
    %6202 = vmatpush1.msra.mxu0 0.0
    %6203 = vmatprep.subr.mxu0 0.0
    %6204 = vmatpush1.msra.mxu0 0.0
    %6205 = vmatprep.subr.mxu0 0.0
    %6206 = vmatpush1.msra.mxu0 0.0
    %6207 = vmatprep.subr.mxu0 0.0
    %6208 = vmatpush1.msra.mxu0 0.0
    %6209 = vmatprep.subr.mxu0 0.0
    %6210 = vmatpush1.msra.mxu0 0.0
    %6211 = vmatprep.subr.mxu0 0.0
    %6212 = vmatpush1.msra.mxu0 0.0
    %6213 = vmatprep.subr.mxu0 0.0
    %6214 = vmatpush1.msra.mxu0 0.0
    %6215 = vmatprep.subr.mxu0 0.0
    %v6216 = vand.u32 %v5770, 4294901760
    %6217 = vmatpush1.msra.mxu0 %v6216
    %6218 = vmatprep.subr.mxu0 0.0
    %v6219 = vand.u32 %v5769, 4294901760
    %6220 = vmatpush1.msra.mxu0 %v6219
    %6221 = vmatprep.subr.mxu0 0.0
    %v6222 = vand.u32 %v5768, 4294901760
    %6223 = vmatpush1.msra.mxu0 %v6222
    %6224 = vmatprep.subr.mxu0 0.0
    %v6225 = vand.u32 %v5767, 4294901760
    %6226 = vmatpush1.msra.mxu0 %v6225
    %6227 = vmatprep.subr.mxu0 0.0
    %6228 = vmatpush2.msra.mxu0 0.0
    %6229 = vmatprep.subr.mxu0 0.0
    %6230 = vmatpush2.msra.mxu0 0.0
    %6231 = vmatprep.subr.mxu0 0.0
    %6232 = vmatpush2.msra.mxu0 0.0
    %6233 = vmatprep.subr.mxu0 0.0
    %6234 = vmatpush2.msra.mxu0 0.0
    %6235 = vmatprep.subr.mxu0 0.0
    %6236 = vmatpush2.msra.mxu0 0.0
    %6237 = vmatprep.subr.mxu0 0.0
    %6238 = vmatpush2.msra.mxu0 0.0
    %6239 = vmatprep.subr.mxu0 0.0
    %6240 = vmatpush2.msra.mxu0 0.0
    %6241 = vmatprep.subr.mxu0 0.0
    %6242 = vmatpush2.msra.mxu0 0.0
    %6243 = vmatprep.subr.mxu0 0.0
    %6244 = vmatpush2.msra.mxu0 0.0
    %6245 = vmatprep.subr.mxu0 0.0
    %6246 = vmatpush2.msra.mxu0 0.0
    %6247 = vmatprep.subr.mxu0 0.0
    %6248 = vmatpush2.msra.mxu0 0.0
    %6249 = vmatprep.subr.mxu0 0.0
    %6250 = vmatpush2.msra.mxu0 0.0
    %6251 = vmatprep.subr.mxu0 0.0
    %6252 = vmatpush2.msra.mxu0 0.0
    %6253 = vmatprep.subr.mxu0 0.0
    %6254 = vmatpush2.msra.mxu0 0.0
    %6255 = vmatprep.subr.mxu0 0.0
    %6256 = vmatpush2.msra.mxu0 0.0
    %6257 = vmatprep.subr.mxu0 0.0
    %6258 = vmatpush2.msra.mxu0 0.0
    %6259 = vmatprep.mubr.f32.mxu0 0.0
    %v6260 = vand.u32 %v5779, 4294901760
    %6261 = vmatmul.mubr.f32.gmra.mxu0 %v6260
    %v6262 = vpop.f32.mrf.mxu0
    %v6263 = vadd.f32 %v6188, %v6262
    %v6264 = vpop.f32.mrf.mxu0
    %6265 = vdwg.mxu0
    %v6266 = vmax.f32 %v6263, 0.0
    %v6267 = vld [vmem:[%s13] sm:$0xff]
    %v6268 = vld [vmem:[%s13 + $0x8] sm:$0xff]
    %v6269 = vld [vmem:[%s13 + $0x10] sm:$0xff]
    %v6270 = vld [vmem:[%s13 + $0x18] sm:$0xff]
    %v6271 = vld [vmem:[%s14] sm:$0xff]
    %v6272 = vld [vmem:[%s14 + $0x8] sm:$0xff]
    %v6273 = vld [vmem:[%s14 + $0x10] sm:$0xff]
    %v6274 = vld [vmem:[%s14 + $0x18] sm:$0xff]
    %6276 = vset.pattern.permute.xlu0 0
    %6277 = vperm.xlu0 %6276, %v6271
    %v6278 = vpop.permute.xlu0 %6277
    %6281 = vset.pattern.permute.xlu0 0
    %6282 = vperm.xlu0 %6281, %v6272
    %v6283 = vpop.permute.xlu0 %6282
    %6286 = vset.pattern.permute.xlu0 0
    %6287 = vperm.xlu0 %6286, %v6273
    %v6288 = vpop.permute.xlu0 %6287
    %6291 = vset.pattern.permute.xlu0 0
    %6292 = vperm.xlu0 %6291, %v6274
    %v6293 = vpop.permute.xlu0 %6292
    %vm6295 = vcmask 15360
    %v6297 = vsel %vm6295, %v6267, 0
    %v6300 = vsel %vm6295, %v6268, 0
    %v6303 = vsel %vm6295, %v6269, 0
    %v6306 = vsel %vm6295, %v6270, 0
    %vm6308 = vcmask 1041408
    %v6310 = vsel %vm6308, %v6266, 0
    %6312 = vmatprep.subr.mxu0 0.0
    %6313 = vmatpush1.msra.mxu0 0.0
    %6314 = vmatprep.subr.mxu0 0.0
    %6315 = vmatpush1.msra.mxu0 0.0
    %6316 = vmatprep.subr.mxu0 0.0
    %6317 = vmatpush1.msra.mxu0 0.0
    %6318 = vmatprep.subr.mxu0 0.0
    %6319 = vmatpush1.msra.mxu0 0.0
    %6320 = vmatprep.subr.mxu0 0.0
    %6321 = vmatpush1.msra.mxu0 0.0
    %6322 = vmatprep.subr.mxu0 0.0
    %6323 = vmatpush1.msra.mxu0 0.0
    %6324 = vmatprep.subr.mxu0 0.0
    %6325 = vmatpush1.msra.mxu0 0.0
    %6326 = vmatprep.subr.mxu0 0.0
    %6327 = vmatpush1.msra.mxu0 0.0
    %6328 = vmatprep.subr.mxu0 0.0
    %6329 = vmatpush1.msra.mxu0 0.0
    %6330 = vmatprep.subr.mxu0 0.0
    %6331 = vmatpush1.msra.mxu0 0.0
    %6332 = vmatprep.subr.mxu0 0.0
    %6333 = vmatpush1.msra.mxu0 0.0
    %6334 = vmatprep.subr.mxu0 0.0
    %6335 = vmatpush1.msra.mxu0 0.0
    %6336 = vmatprep.subr.mxu0 0.0
    %6337 = vmatpush1.msra.mxu0 0.0
    %6338 = vmatprep.subr.mxu0 0.0
    %6339 = vmatpush1.msra.mxu0 0.0
    %6340 = vmatprep.subr.mxu0 0.0
    %6341 = vmatpush1.msra.mxu0 0.0
    %6342 = vmatprep.subr.mxu0 0.0
    %v6343 = vand.u32 %v6310, 4294901760
    %6344 = vmatpush1.msra.mxu0 %v6343
    %6345 = vmatprep.subr.mxu0 0.0
    %6346 = vmatpush2.msra.mxu0 0.0
    %6347 = vmatprep.subr.mxu0 0.0
    %6348 = vmatpush2.msra.mxu0 0.0
    %6349 = vmatprep.subr.mxu0 0.0
    %6350 = vmatpush2.msra.mxu0 0.0
    %6351 = vmatprep.subr.mxu0 0.0
    %6352 = vmatpush2.msra.mxu0 0.0
    %6353 = vmatprep.subr.mxu0 0.0
    %6354 = vmatpush2.msra.mxu0 0.0
    %6355 = vmatprep.subr.mxu0 0.0
    %6356 = vmatpush2.msra.mxu0 0.0
    %6357 = vmatprep.subr.mxu0 0.0
    %6358 = vmatpush2.msra.mxu0 0.0
    %6359 = vmatprep.subr.mxu0 0.0
    %6360 = vmatpush2.msra.mxu0 0.0
    %6361 = vmatprep.subr.mxu0 0.0
    %6362 = vmatpush2.msra.mxu0 0.0
    %6363 = vmatprep.subr.mxu0 0.0
    %6364 = vmatpush2.msra.mxu0 0.0
    %6365 = vmatprep.subr.mxu0 0.0
    %6366 = vmatpush2.msra.mxu0 0.0
    %6367 = vmatprep.subr.mxu0 0.0
    %6368 = vmatpush2.msra.mxu0 0.0
    %6369 = vmatprep.subr.mxu0 0.0
    %6370 = vmatpush2.msra.mxu0 0.0
    %6371 = vmatprep.subr.mxu0 0.0
    %6372 = vmatpush2.msra.mxu0 0.0
    %6373 = vmatprep.subr.mxu0 0.0
    %6374 = vmatpush2.msra.mxu0 0.0
    %6375 = vmatprep.subr.mxu0 0.0
    %6376 = vmatpush2.msra.mxu0 0.0
    %6377 = vmatprep.mubr.f32.mxu0 0.0
    %v6378 = vand.u32 %v6297, 4294901760
    %v6379 = vsub.f32 %v6297, %v6378
    %v6380 = vand.u32 %v6379, 4294901760
    %v6381 = vsub.f32 %v6379, %v6380
    %v6382 = vand.u32 %v6381, 4294901760
    %6383 = vmatmul.mubr.f32.gmra.mxu0 %v6382
    %v6384 = vpop.f32.mrf.mxu0
    %v6385 = vadd.f32 %v6278, %v6384
    %v6386 = vpop.f32.mrf.mxu0
    %6387 = vmatprep.mubr.f32.mxu0 0.0
    %v6388 = vand.u32 %v6300, 4294901760
    %v6389 = vsub.f32 %v6300, %v6388
    %v6390 = vand.u32 %v6389, 4294901760
    %v6391 = vsub.f32 %v6389, %v6390
    %v6392 = vand.u32 %v6391, 4294901760
    %6393 = vmatmul.mubr.f32.gmra.mxu0 %v6392
    %v6394 = vpop.f32.mrf.mxu0
    %v6395 = vadd.f32 %v6283, %v6394
    %v6396 = vpop.f32.mrf.mxu0
    %6397 = vmatprep.mubr.f32.mxu0 0.0
    %v6398 = vand.u32 %v6303, 4294901760
    %v6399 = vsub.f32 %v6303, %v6398
    %v6400 = vand.u32 %v6399, 4294901760
    %v6401 = vsub.f32 %v6399, %v6400
    %v6402 = vand.u32 %v6401, 4294901760
    %6403 = vmatmul.mubr.f32.gmra.mxu0 %v6402
    %v6404 = vpop.f32.mrf.mxu0
    %v6405 = vadd.f32 %v6288, %v6404
    %v6406 = vpop.f32.mrf.mxu0
    %6407 = vmatprep.mubr.f32.mxu0 0.0
    %v6408 = vand.u32 %v6306, 4294901760
    %v6409 = vsub.f32 %v6306, %v6408
    %v6410 = vand.u32 %v6409, 4294901760
    %v6411 = vsub.f32 %v6409, %v6410
    %v6412 = vand.u32 %v6411, 4294901760
    %6413 = vmatmul.mubr.f32.gmra.mxu0 %v6412
    %v6414 = vpop.f32.mrf.mxu0
    %v6415 = vadd.f32 %v6293, %v6414
    %v6416 = vpop.f32.mrf.mxu0
    %6417 = vdwg.mxu0
    %6418 = vmatprep.subr.mxu0 0.0
    %6419 = vmatpush1.msra.mxu0 0.0
    %6420 = vmatprep.subr.mxu0 0.0
    %6421 = vmatpush1.msra.mxu0 0.0
    %6422 = vmatprep.subr.mxu0 0.0
    %6423 = vmatpush1.msra.mxu0 0.0
    %6424 = vmatprep.subr.mxu0 0.0
    %6425 = vmatpush1.msra.mxu0 0.0
    %6426 = vmatprep.subr.mxu0 0.0
    %6427 = vmatpush1.msra.mxu0 0.0
    %6428 = vmatprep.subr.mxu0 0.0
    %6429 = vmatpush1.msra.mxu0 0.0
    %6430 = vmatprep.subr.mxu0 0.0
    %6431 = vmatpush1.msra.mxu0 0.0
    %6432 = vmatprep.subr.mxu0 0.0
    %6433 = vmatpush1.msra.mxu0 0.0
    %6434 = vmatprep.subr.mxu0 0.0
    %6435 = vmatpush1.msra.mxu0 0.0
    %6436 = vmatprep.subr.mxu0 0.0
    %6437 = vmatpush1.msra.mxu0 0.0
    %6438 = vmatprep.subr.mxu0 0.0
    %6439 = vmatpush1.msra.mxu0 0.0
    %6440 = vmatprep.subr.mxu0 0.0
    %6441 = vmatpush1.msra.mxu0 0.0
    %6442 = vmatprep.subr.mxu0 0.0
    %6443 = vmatpush1.msra.mxu0 0.0
    %6444 = vmatprep.subr.mxu0 0.0
    %6445 = vmatpush1.msra.mxu0 0.0
    %6446 = vmatprep.subr.mxu0 0.0
    %6447 = vmatpush1.msra.mxu0 0.0
    %6448 = vmatprep.subr.mxu0 0.0
    %v6449 = vand.u32 %v6310, 4294901760
    %v6450 = vsub.f32 %v6310, %v6449
    %v6451 = vand.u32 %v6450, 4294901760
    %v6452 = vsub.f32 %v6450, %v6451
    %v6453 = vand.u32 %v6452, 4294901760
    %6454 = vmatpush1.msra.mxu0 %v6453
    %6455 = vmatprep.subr.mxu0 0.0
    %6456 = vmatpush2.msra.mxu0 0.0
    %6457 = vmatprep.subr.mxu0 0.0
    %6458 = vmatpush2.msra.mxu0 0.0
    %6459 = vmatprep.subr.mxu0 0.0
    %6460 = vmatpush2.msra.mxu0 0.0
    %6461 = vmatprep.subr.mxu0 0.0
    %6462 = vmatpush2.msra.mxu0 0.0
    %6463 = vmatprep.subr.mxu0 0.0
    %6464 = vmatpush2.msra.mxu0 0.0
    %6465 = vmatprep.subr.mxu0 0.0
    %6466 = vmatpush2.msra.mxu0 0.0
    %6467 = vmatprep.subr.mxu0 0.0
    %6468 = vmatpush2.msra.mxu0 0.0
    %6469 = vmatprep.subr.mxu0 0.0
    %6470 = vmatpush2.msra.mxu0 0.0
    %6471 = vmatprep.subr.mxu0 0.0
    %6472 = vmatpush2.msra.mxu0 0.0
    %6473 = vmatprep.subr.mxu0 0.0
    %6474 = vmatpush2.msra.mxu0 0.0
    %6475 = vmatprep.subr.mxu0 0.0
    %6476 = vmatpush2.msra.mxu0 0.0
    %6477 = vmatprep.subr.mxu0 0.0
    %6478 = vmatpush2.msra.mxu0 0.0
    %6479 = vmatprep.subr.mxu0 0.0
    %6480 = vmatpush2.msra.mxu0 0.0
    %6481 = vmatprep.subr.mxu0 0.0
    %6482 = vmatpush2.msra.mxu0 0.0
    %6483 = vmatprep.subr.mxu0 0.0
    %6484 = vmatpush2.msra.mxu0 0.0
    %6485 = vmatprep.subr.mxu0 0.0
    %6486 = vmatpush2.msra.mxu0 0.0
    %6487 = vmatprep.mubr.f32.mxu0 0.0
    %v6488 = vand.u32 %v6297, 4294901760
    %6489 = vmatmul.mubr.f32.gmra.mxu0 %v6488
    %v6490 = vpop.f32.mrf.mxu0
    %v6491 = vadd.f32 %v6385, %v6490
    %v6492 = vpop.f32.mrf.mxu0
    %6493 = vmatprep.mubr.f32.mxu0 0.0
    %v6494 = vand.u32 %v6300, 4294901760
    %6495 = vmatmul.mubr.f32.gmra.mxu0 %v6494
    %v6496 = vpop.f32.mrf.mxu0
    %v6497 = vadd.f32 %v6395, %v6496
    %v6498 = vpop.f32.mrf.mxu0
    %6499 = vmatprep.mubr.f32.mxu0 0.0
    %v6500 = vand.u32 %v6303, 4294901760
    %6501 = vmatmul.mubr.f32.gmra.mxu0 %v6500
    %v6502 = vpop.f32.mrf.mxu0
    %v6503 = vadd.f32 %v6405, %v6502
    %v6504 = vpop.f32.mrf.mxu0
    %6505 = vmatprep.mubr.f32.mxu0 0.0
    %v6506 = vand.u32 %v6306, 4294901760
    %6507 = vmatmul.mubr.f32.gmra.mxu0 %v6506
    %v6508 = vpop.f32.mrf.mxu0
    %v6509 = vadd.f32 %v6415, %v6508
    %v6510 = vpop.f32.mrf.mxu0
    %6511 = vdwg.mxu0
    %6512 = vmatprep.subr.mxu0 0.0
    %6513 = vmatpush1.msra.mxu0 0.0
    %6514 = vmatprep.subr.mxu0 0.0
    %6515 = vmatpush1.msra.mxu0 0.0
    %6516 = vmatprep.subr.mxu0 0.0
    %6517 = vmatpush1.msra.mxu0 0.0
    %6518 = vmatprep.subr.mxu0 0.0
    %6519 = vmatpush1.msra.mxu0 0.0
    %6520 = vmatprep.subr.mxu0 0.0
    %6521 = vmatpush1.msra.mxu0 0.0
    %6522 = vmatprep.subr.mxu0 0.0
    %6523 = vmatpush1.msra.mxu0 0.0
    %6524 = vmatprep.subr.mxu0 0.0
    %6525 = vmatpush1.msra.mxu0 0.0
    %6526 = vmatprep.subr.mxu0 0.0
    %6527 = vmatpush1.msra.mxu0 0.0
    %6528 = vmatprep.subr.mxu0 0.0
    %6529 = vmatpush1.msra.mxu0 0.0
    %6530 = vmatprep.subr.mxu0 0.0
    %6531 = vmatpush1.msra.mxu0 0.0
    %6532 = vmatprep.subr.mxu0 0.0
    %6533 = vmatpush1.msra.mxu0 0.0
    %6534 = vmatprep.subr.mxu0 0.0
    %6535 = vmatpush1.msra.mxu0 0.0
    %6536 = vmatprep.subr.mxu0 0.0
    %6537 = vmatpush1.msra.mxu0 0.0
    %6538 = vmatprep.subr.mxu0 0.0
    %6539 = vmatpush1.msra.mxu0 0.0
    %6540 = vmatprep.subr.mxu0 0.0
    %6541 = vmatpush1.msra.mxu0 0.0
    %6542 = vmatprep.subr.mxu0 0.0
    %v6543 = vand.u32 %v6310, 4294901760
    %v6544 = vsub.f32 %v6310, %v6543
    %6545 = vmatpush1.msra.mxu0 %v6544
    %6546 = vmatprep.subr.mxu0 0.0
    %6547 = vmatpush2.msra.mxu0 0.0
    %6548 = vmatprep.subr.mxu0 0.0
    %6549 = vmatpush2.msra.mxu0 0.0
    %6550 = vmatprep.subr.mxu0 0.0
    %6551 = vmatpush2.msra.mxu0 0.0
    %6552 = vmatprep.subr.mxu0 0.0
    %6553 = vmatpush2.msra.mxu0 0.0
    %6554 = vmatprep.subr.mxu0 0.0
    %6555 = vmatpush2.msra.mxu0 0.0
    %6556 = vmatprep.subr.mxu0 0.0
    %6557 = vmatpush2.msra.mxu0 0.0
    %6558 = vmatprep.subr.mxu0 0.0
    %6559 = vmatpush2.msra.mxu0 0.0
    %6560 = vmatprep.subr.mxu0 0.0
    %6561 = vmatpush2.msra.mxu0 0.0
    %6562 = vmatprep.subr.mxu0 0.0
    %6563 = vmatpush2.msra.mxu0 0.0
    %6564 = vmatprep.subr.mxu0 0.0
    %6565 = vmatpush2.msra.mxu0 0.0
    %6566 = vmatprep.subr.mxu0 0.0
    %6567 = vmatpush2.msra.mxu0 0.0
    %6568 = vmatprep.subr.mxu0 0.0
    %6569 = vmatpush2.msra.mxu0 0.0
    %6570 = vmatprep.subr.mxu0 0.0
    %6571 = vmatpush2.msra.mxu0 0.0
    %6572 = vmatprep.subr.mxu0 0.0
    %6573 = vmatpush2.msra.mxu0 0.0
    %6574 = vmatprep.subr.mxu0 0.0
    %6575 = vmatpush2.msra.mxu0 0.0
    %6576 = vmatprep.subr.mxu0 0.0
    %6577 = vmatpush2.msra.mxu0 0.0
    %6578 = vmatprep.mubr.f32.mxu0 0.0
    %v6579 = vand.u32 %v6297, 4294901760
    %v6580 = vsub.f32 %v6297, %v6579
    %6581 = vmatmul.mubr.f32.gmra.mxu0 %v6580
    %v6582 = vpop.f32.mrf.mxu0
    %v6583 = vadd.f32 %v6491, %v6582
    %v6584 = vpop.f32.mrf.mxu0
    %6585 = vmatprep.mubr.f32.mxu0 0.0
    %v6586 = vand.u32 %v6300, 4294901760
    %v6587 = vsub.f32 %v6300, %v6586
    %6588 = vmatmul.mubr.f32.gmra.mxu0 %v6587
    %v6589 = vpop.f32.mrf.mxu0
    %v6590 = vadd.f32 %v6497, %v6589
    %v6591 = vpop.f32.mrf.mxu0
    %6592 = vmatprep.mubr.f32.mxu0 0.0
    %v6593 = vand.u32 %v6303, 4294901760
    %v6594 = vsub.f32 %v6303, %v6593
    %6595 = vmatmul.mubr.f32.gmra.mxu0 %v6594
    %v6596 = vpop.f32.mrf.mxu0
    %v6597 = vadd.f32 %v6503, %v6596
    %v6598 = vpop.f32.mrf.mxu0
    %6599 = vmatprep.mubr.f32.mxu0 0.0
    %v6600 = vand.u32 %v6306, 4294901760
    %v6601 = vsub.f32 %v6306, %v6600
    %6602 = vmatmul.mubr.f32.gmra.mxu0 %v6601
    %v6603 = vpop.f32.mrf.mxu0
    %v6604 = vadd.f32 %v6509, %v6603
    %v6605 = vpop.f32.mrf.mxu0
    %6606 = vdwg.mxu0
    %6607 = vmatprep.subr.mxu0 0.0
    %6608 = vmatpush1.msra.mxu0 0.0
    %6609 = vmatprep.subr.mxu0 0.0
    %6610 = vmatpush1.msra.mxu0 0.0
    %6611 = vmatprep.subr.mxu0 0.0
    %6612 = vmatpush1.msra.mxu0 0.0
    %6613 = vmatprep.subr.mxu0 0.0
    %6614 = vmatpush1.msra.mxu0 0.0
    %6615 = vmatprep.subr.mxu0 0.0
    %6616 = vmatpush1.msra.mxu0 0.0
    %6617 = vmatprep.subr.mxu0 0.0
    %6618 = vmatpush1.msra.mxu0 0.0
    %6619 = vmatprep.subr.mxu0 0.0
    %6620 = vmatpush1.msra.mxu0 0.0
    %6621 = vmatprep.subr.mxu0 0.0
    %6622 = vmatpush1.msra.mxu0 0.0
    %6623 = vmatprep.subr.mxu0 0.0
    %6624 = vmatpush1.msra.mxu0 0.0
    %6625 = vmatprep.subr.mxu0 0.0
    %6626 = vmatpush1.msra.mxu0 0.0
    %6627 = vmatprep.subr.mxu0 0.0
    %6628 = vmatpush1.msra.mxu0 0.0
    %6629 = vmatprep.subr.mxu0 0.0
    %6630 = vmatpush1.msra.mxu0 0.0
    %6631 = vmatprep.subr.mxu0 0.0
    %6632 = vmatpush1.msra.mxu0 0.0
    %6633 = vmatprep.subr.mxu0 0.0
    %6634 = vmatpush1.msra.mxu0 0.0
    %6635 = vmatprep.subr.mxu0 0.0
    %6636 = vmatpush1.msra.mxu0 0.0
    %6637 = vmatprep.subr.mxu0 0.0
    %v6638 = vand.u32 %v6310, 4294901760
    %6639 = vmatpush1.msra.mxu0 %v6638
    %6640 = vmatprep.subr.mxu0 0.0
    %6641 = vmatpush2.msra.mxu0 0.0
    %6642 = vmatprep.subr.mxu0 0.0
    %6643 = vmatpush2.msra.mxu0 0.0
    %6644 = vmatprep.subr.mxu0 0.0
    %6645 = vmatpush2.msra.mxu0 0.0
    %6646 = vmatprep.subr.mxu0 0.0
    %6647 = vmatpush2.msra.mxu0 0.0
    %6648 = vmatprep.subr.mxu0 0.0
    %6649 = vmatpush2.msra.mxu0 0.0
    %6650 = vmatprep.subr.mxu0 0.0
    %6651 = vmatpush2.msra.mxu0 0.0
    %6652 = vmatprep.subr.mxu0 0.0
    %6653 = vmatpush2.msra.mxu0 0.0
    %6654 = vmatprep.subr.mxu0 0.0
    %6655 = vmatpush2.msra.mxu0 0.0
    %6656 = vmatprep.subr.mxu0 0.0
    %6657 = vmatpush2.msra.mxu0 0.0
    %6658 = vmatprep.subr.mxu0 0.0
    %6659 = vmatpush2.msra.mxu0 0.0
    %6660 = vmatprep.subr.mxu0 0.0
    %6661 = vmatpush2.msra.mxu0 0.0
    %6662 = vmatprep.subr.mxu0 0.0
    %6663 = vmatpush2.msra.mxu0 0.0
    %6664 = vmatprep.subr.mxu0 0.0
    %6665 = vmatpush2.msra.mxu0 0.0
    %6666 = vmatprep.subr.mxu0 0.0
    %6667 = vmatpush2.msra.mxu0 0.0
    %6668 = vmatprep.subr.mxu0 0.0
    %6669 = vmatpush2.msra.mxu0 0.0
    %6670 = vmatprep.subr.mxu0 0.0
    %6671 = vmatpush2.msra.mxu0 0.0
    %6672 = vmatprep.mubr.f32.mxu0 0.0
    %v6673 = vand.u32 %v6297, 4294901760
    %v6674 = vsub.f32 %v6297, %v6673
    %v6675 = vand.u32 %v6674, 4294901760
    %6676 = vmatmul.mubr.f32.gmra.mxu0 %v6675
    %v6677 = vpop.f32.mrf.mxu0
    %v6678 = vadd.f32 %v6583, %v6677
    %v6679 = vpop.f32.mrf.mxu0
    %6680 = vmatprep.mubr.f32.mxu0 0.0
    %v6681 = vand.u32 %v6300, 4294901760
    %v6682 = vsub.f32 %v6300, %v6681
    %v6683 = vand.u32 %v6682, 4294901760
    %6684 = vmatmul.mubr.f32.gmra.mxu0 %v6683
    %v6685 = vpop.f32.mrf.mxu0
    %v6686 = vadd.f32 %v6590, %v6685
    %v6687 = vpop.f32.mrf.mxu0
    %6688 = vmatprep.mubr.f32.mxu0 0.0
    %v6689 = vand.u32 %v6303, 4294901760
    %v6690 = vsub.f32 %v6303, %v6689
    %v6691 = vand.u32 %v6690, 4294901760
    %6692 = vmatmul.mubr.f32.gmra.mxu0 %v6691
    %v6693 = vpop.f32.mrf.mxu0
    %v6694 = vadd.f32 %v6597, %v6693
    %v6695 = vpop.f32.mrf.mxu0
    %6696 = vmatprep.mubr.f32.mxu0 0.0
    %v6697 = vand.u32 %v6306, 4294901760
    %v6698 = vsub.f32 %v6306, %v6697
    %v6699 = vand.u32 %v6698, 4294901760
    %6700 = vmatmul.mubr.f32.gmra.mxu0 %v6699
    %v6701 = vpop.f32.mrf.mxu0
    %v6702 = vadd.f32 %v6604, %v6701
    %v6703 = vpop.f32.mrf.mxu0
    %6704 = vdwg.mxu0
    %6705 = vmatprep.subr.mxu0 0.0
    %6706 = vmatpush1.msra.mxu0 0.0
    %6707 = vmatprep.subr.mxu0 0.0
    %6708 = vmatpush1.msra.mxu0 0.0
    %6709 = vmatprep.subr.mxu0 0.0
    %6710 = vmatpush1.msra.mxu0 0.0
    %6711 = vmatprep.subr.mxu0 0.0
    %6712 = vmatpush1.msra.mxu0 0.0
    %6713 = vmatprep.subr.mxu0 0.0
    %6714 = vmatpush1.msra.mxu0 0.0
    %6715 = vmatprep.subr.mxu0 0.0
    %6716 = vmatpush1.msra.mxu0 0.0
    %6717 = vmatprep.subr.mxu0 0.0
    %6718 = vmatpush1.msra.mxu0 0.0
    %6719 = vmatprep.subr.mxu0 0.0
    %6720 = vmatpush1.msra.mxu0 0.0
    %6721 = vmatprep.subr.mxu0 0.0
    %6722 = vmatpush1.msra.mxu0 0.0
    %6723 = vmatprep.subr.mxu0 0.0
    %6724 = vmatpush1.msra.mxu0 0.0
    %6725 = vmatprep.subr.mxu0 0.0
    %6726 = vmatpush1.msra.mxu0 0.0
    %6727 = vmatprep.subr.mxu0 0.0
    %6728 = vmatpush1.msra.mxu0 0.0
    %6729 = vmatprep.subr.mxu0 0.0
    %6730 = vmatpush1.msra.mxu0 0.0
    %6731 = vmatprep.subr.mxu0 0.0
    %6732 = vmatpush1.msra.mxu0 0.0
    %6733 = vmatprep.subr.mxu0 0.0
    %6734 = vmatpush1.msra.mxu0 0.0
    %6735 = vmatprep.subr.mxu0 0.0
    %v6736 = vand.u32 %v6310, 4294901760
    %v6737 = vsub.f32 %v6310, %v6736
    %v6738 = vand.u32 %v6737, 4294901760
    %6739 = vmatpush1.msra.mxu0 %v6738
    %6740 = vmatprep.subr.mxu0 0.0
    %6741 = vmatpush2.msra.mxu0 0.0
    %6742 = vmatprep.subr.mxu0 0.0
    %6743 = vmatpush2.msra.mxu0 0.0
    %6744 = vmatprep.subr.mxu0 0.0
    %6745 = vmatpush2.msra.mxu0 0.0
    %6746 = vmatprep.subr.mxu0 0.0
    %6747 = vmatpush2.msra.mxu0 0.0
    %6748 = vmatprep.subr.mxu0 0.0
    %6749 = vmatpush2.msra.mxu0 0.0
    %6750 = vmatprep.subr.mxu0 0.0
    %6751 = vmatpush2.msra.mxu0 0.0
    %6752 = vmatprep.subr.mxu0 0.0
    %6753 = vmatpush2.msra.mxu0 0.0
    %6754 = vmatprep.subr.mxu0 0.0
    %6755 = vmatpush2.msra.mxu0 0.0
    %6756 = vmatprep.subr.mxu0 0.0
    %6757 = vmatpush2.msra.mxu0 0.0
    %6758 = vmatprep.subr.mxu0 0.0
    %6759 = vmatpush2.msra.mxu0 0.0
    %6760 = vmatprep.subr.mxu0 0.0
    %6761 = vmatpush2.msra.mxu0 0.0
    %6762 = vmatprep.subr.mxu0 0.0
    %6763 = vmatpush2.msra.mxu0 0.0
    %6764 = vmatprep.subr.mxu0 0.0
    %6765 = vmatpush2.msra.mxu0 0.0
    %6766 = vmatprep.subr.mxu0 0.0
    %6767 = vmatpush2.msra.mxu0 0.0
    %6768 = vmatprep.subr.mxu0 0.0
    %6769 = vmatpush2.msra.mxu0 0.0
    %6770 = vmatprep.subr.mxu0 0.0
    %6771 = vmatpush2.msra.mxu0 0.0
    %6772 = vmatprep.mubr.f32.mxu0 0.0
    %v6773 = vand.u32 %v6297, 4294901760
    %6774 = vmatmul.mubr.f32.gmra.mxu0 %v6773
    %v6775 = vpop.f32.mrf.mxu0
    %v6776 = vadd.f32 %v6678, %v6775
    %v6777 = vpop.f32.mrf.mxu0
    %6778 = vmatprep.mubr.f32.mxu0 0.0
    %v6779 = vand.u32 %v6300, 4294901760
    %6780 = vmatmul.mubr.f32.gmra.mxu0 %v6779
    %v6781 = vpop.f32.mrf.mxu0
    %v6782 = vadd.f32 %v6686, %v6781
    %v6783 = vpop.f32.mrf.mxu0
    %6784 = vmatprep.mubr.f32.mxu0 0.0
    %v6785 = vand.u32 %v6303, 4294901760
    %6786 = vmatmul.mubr.f32.gmra.mxu0 %v6785
    %v6787 = vpop.f32.mrf.mxu0
    %v6788 = vadd.f32 %v6694, %v6787
    %v6789 = vpop.f32.mrf.mxu0
    %6790 = vmatprep.mubr.f32.mxu0 0.0
    %v6791 = vand.u32 %v6306, 4294901760
    %6792 = vmatmul.mubr.f32.gmra.mxu0 %v6791
    %v6793 = vpop.f32.mrf.mxu0
    %v6794 = vadd.f32 %v6702, %v6793
    %v6795 = vpop.f32.mrf.mxu0
    %6796 = vdwg.mxu0
    %6797 = vmatprep.subr.mxu0 0.0
    %6798 = vmatpush1.msra.mxu0 0.0
    %6799 = vmatprep.subr.mxu0 0.0
    %6800 = vmatpush1.msra.mxu0 0.0
    %6801 = vmatprep.subr.mxu0 0.0
    %6802 = vmatpush1.msra.mxu0 0.0
    %6803 = vmatprep.subr.mxu0 0.0
    %6804 = vmatpush1.msra.mxu0 0.0
    %6805 = vmatprep.subr.mxu0 0.0
    %6806 = vmatpush1.msra.mxu0 0.0
    %6807 = vmatprep.subr.mxu0 0.0
    %6808 = vmatpush1.msra.mxu0 0.0
    %6809 = vmatprep.subr.mxu0 0.0
    %6810 = vmatpush1.msra.mxu0 0.0
    %6811 = vmatprep.subr.mxu0 0.0
    %6812 = vmatpush1.msra.mxu0 0.0
    %6813 = vmatprep.subr.mxu0 0.0
    %6814 = vmatpush1.msra.mxu0 0.0
    %6815 = vmatprep.subr.mxu0 0.0
    %6816 = vmatpush1.msra.mxu0 0.0
    %6817 = vmatprep.subr.mxu0 0.0
    %6818 = vmatpush1.msra.mxu0 0.0
    %6819 = vmatprep.subr.mxu0 0.0
    %6820 = vmatpush1.msra.mxu0 0.0
    %6821 = vmatprep.subr.mxu0 0.0
    %6822 = vmatpush1.msra.mxu0 0.0
    %6823 = vmatprep.subr.mxu0 0.0
    %6824 = vmatpush1.msra.mxu0 0.0
    %6825 = vmatprep.subr.mxu0 0.0
    %6826 = vmatpush1.msra.mxu0 0.0
    %6827 = vmatprep.subr.mxu0 0.0
    %v6828 = vand.u32 %v6310, 4294901760
    %6829 = vmatpush1.msra.mxu0 %v6828
    %6830 = vmatprep.subr.mxu0 0.0
    %6831 = vmatpush2.msra.mxu0 0.0
    %6832 = vmatprep.subr.mxu0 0.0
    %6833 = vmatpush2.msra.mxu0 0.0
    %6834 = vmatprep.subr.mxu0 0.0
    %6835 = vmatpush2.msra.mxu0 0.0
    %6836 = vmatprep.subr.mxu0 0.0
    %6837 = vmatpush2.msra.mxu0 0.0
    %6838 = vmatprep.subr.mxu0 0.0
    %6839 = vmatpush2.msra.mxu0 0.0
    %6840 = vmatprep.subr.mxu0 0.0
    %6841 = vmatpush2.msra.mxu0 0.0
    %6842 = vmatprep.subr.mxu0 0.0
    %6843 = vmatpush2.msra.mxu0 0.0
    %6844 = vmatprep.subr.mxu0 0.0
    %6845 = vmatpush2.msra.mxu0 0.0
    %6846 = vmatprep.subr.mxu0 0.0
    %6847 = vmatpush2.msra.mxu0 0.0
    %6848 = vmatprep.subr.mxu0 0.0
    %6849 = vmatpush2.msra.mxu0 0.0
    %6850 = vmatprep.subr.mxu0 0.0
    %6851 = vmatpush2.msra.mxu0 0.0
    %6852 = vmatprep.subr.mxu0 0.0
    %6853 = vmatpush2.msra.mxu0 0.0
    %6854 = vmatprep.subr.mxu0 0.0
    %6855 = vmatpush2.msra.mxu0 0.0
    %6856 = vmatprep.subr.mxu0 0.0
    %6857 = vmatpush2.msra.mxu0 0.0
    %6858 = vmatprep.subr.mxu0 0.0
    %6859 = vmatpush2.msra.mxu0 0.0
    %6860 = vmatprep.subr.mxu0 0.0
    %6861 = vmatpush2.msra.mxu0 0.0
    %6862 = vmatprep.mubr.f32.mxu0 0.0
    %v6863 = vand.u32 %v6297, 4294901760
    %6864 = vmatmul.mubr.f32.gmra.mxu0 %v6863
    %v6865 = vpop.f32.mrf.mxu0
    %v6866 = vadd.f32 %v6776, %v6865
    %v6867 = vpop.f32.mrf.mxu0
    %6868 = vmatprep.mubr.f32.mxu0 0.0
    %v6869 = vand.u32 %v6300, 4294901760
    %6870 = vmatmul.mubr.f32.gmra.mxu0 %v6869
    %v6871 = vpop.f32.mrf.mxu0
    %v6872 = vadd.f32 %v6782, %v6871
    %v6873 = vpop.f32.mrf.mxu0
    %6874 = vmatprep.mubr.f32.mxu0 0.0
    %v6875 = vand.u32 %v6303, 4294901760
    %6876 = vmatmul.mubr.f32.gmra.mxu0 %v6875
    %v6877 = vpop.f32.mrf.mxu0
    %v6878 = vadd.f32 %v6788, %v6877
    %v6879 = vpop.f32.mrf.mxu0
    %6880 = vmatprep.mubr.f32.mxu0 0.0
    %v6881 = vand.u32 %v6306, 4294901760
    %6882 = vmatmul.mubr.f32.gmra.mxu0 %v6881
    %v6883 = vpop.f32.mrf.mxu0
    %v6884 = vadd.f32 %v6794, %v6883
    %v6885 = vpop.f32.mrf.mxu0
    %6886 = vdwg.mxu0
    %v6887 = vsub.f32 0.0, %v6866
    %v6888 = vsub.f32 0.0, %v6872
    %v6889 = vsub.f32 0.0, %v6878
    %v6890 = vsub.f32 0.0, %v6884
    %v6891 = vmul.f32 %v6887, 1.442695
    %v6892 = vpow.pop %v6891
    %v6893 = vmul.f32 %v6888, 1.442695
    %v6894 = vpow.pop %v6893
    %v6895 = vmul.f32 %v6889, 1.442695
    %v6896 = vpow.pop %v6895
    %v6897 = vmul.f32 %v6890, 1.442695
    %v6898 = vpow.pop %v6897
    %v6899 = vadd.f32 %v6892, 1.0
    %v6900 = vadd.f32 %v6894, 1.0
    %v6901 = vadd.f32 %v6896, 1.0
    %v6902 = vadd.f32 %v6898, 1.0
    %v6903 = vrcp.pop %v6899
    %v6904 = vmul.f32 1.0, %v6903
    %v6905 = vrcp.pop %v6900
    %v6906 = vmul.f32 1.0, %v6905
    %v6907 = vrcp.pop %v6901
    %v6908 = vmul.f32 1.0, %v6907
    %v6909 = vrcp.pop %v6902
    %v6910 = vmul.f32 1.0, %v6909
    %v6912 = vsel %vm2729, %v6904, 0
    %v6915 = vsel %vm2729, %v6906, 0
    %v6918 = vsel %vm2729, %v6908, 0
    %v6921 = vsel %vm2729, %v6910, 0
    %6923 = vmatprep.subr.mxu0 0.0
    %6924 = vmatpush1.msra.mxu0 0.0
    %6925 = vmatprep.subr.mxu0 0.0
    %6926 = vmatpush1.msra.mxu0 0.0
    %6927 = vmatprep.subr.mxu0 0.0
    %6928 = vmatpush1.msra.mxu0 0.0
    %6929 = vmatprep.subr.mxu0 0.0
    %6930 = vmatpush1.msra.mxu0 0.0
    %6931 = vmatprep.subr.mxu0 0.0
    %6932 = vmatpush1.msra.mxu0 0.0
    %6933 = vmatprep.subr.mxu0 0.0
    %6934 = vmatpush1.msra.mxu0 0.0
    %6935 = vmatprep.subr.mxu0 0.0
    %6936 = vmatpush1.msra.mxu0 0.0
    %6937 = vmatprep.subr.mxu0 0.0
    %6938 = vmatpush1.msra.mxu0 0.0
    %6939 = vmatprep.subr.mxu0 0.0
    %6940 = vmatpush1.msra.mxu0 0.0
    %6941 = vmatprep.subr.mxu0 0.0
    %6942 = vmatpush1.msra.mxu0 0.0
    %6943 = vmatprep.subr.mxu0 0.0
    %6944 = vmatpush1.msra.mxu0 0.0
    %6945 = vmatprep.subr.mxu0 0.0
    %6946 = vmatpush1.msra.mxu0 0.0
    %6947 = vmatprep.subr.mxu0 0.0
    %6948 = vmatpush1.msra.mxu0 0.0
    %6949 = vmatprep.subr.mxu0 0.0
    %6950 = vmatpush1.msra.mxu0 0.0
    %6951 = vmatprep.subr.mxu0 0.0
    %6952 = vmatpush1.msra.mxu0 0.0
    %6953 = vmatprep.subr.mxu0 0.0
    %6954 = vmatpush1.msra.mxu0 %v2050
    %6955 = vmatprep.subr.mxu0 0.0
    %6956 = vmatpush2.msra.mxu0 0.0
    %6957 = vmatprep.subr.mxu0 0.0
    %6958 = vmatpush2.msra.mxu0 0.0
    %6959 = vmatprep.subr.mxu0 0.0
    %6960 = vmatpush2.msra.mxu0 0.0
    %6961 = vmatprep.subr.mxu0 0.0
    %6962 = vmatpush2.msra.mxu0 0.0
    %6963 = vmatprep.subr.mxu0 0.0
    %6964 = vmatpush2.msra.mxu0 0.0
    %6965 = vmatprep.subr.mxu0 0.0
    %6966 = vmatpush2.msra.mxu0 0.0
    %6967 = vmatprep.subr.mxu0 0.0
    %6968 = vmatpush2.msra.mxu0 0.0
    %6969 = vmatprep.subr.mxu0 0.0
    %6970 = vmatpush2.msra.mxu0 0.0
    %6971 = vmatprep.subr.mxu0 0.0
    %6972 = vmatpush2.msra.mxu0 0.0
    %6973 = vmatprep.subr.mxu0 0.0
    %6974 = vmatpush2.msra.mxu0 0.0
    %6975 = vmatprep.subr.mxu0 0.0
    %6976 = vmatpush2.msra.mxu0 0.0
    %6977 = vmatprep.subr.mxu0 0.0
    %6978 = vmatpush2.msra.mxu0 0.0
    %6979 = vmatprep.subr.mxu0 0.0
    %6980 = vmatpush2.msra.mxu0 0.0
    %6981 = vmatprep.subr.mxu0 0.0
    %6982 = vmatpush2.msra.mxu0 0.0
    %6983 = vmatprep.subr.mxu0 0.0
    %6984 = vmatpush2.msra.mxu0 0.0
    %6985 = vmatprep.subr.mxu0 0.0
    %6986 = vmatpush2.msra.mxu0 0.0
    %6987 = vmatprep.mubr.f32.mxu0 0.0
    %v6988 = vand.u32 %v6912, 4294901760
    %v6989 = vsub.f32 %v6912, %v6988
    %v6990 = vand.u32 %v6989, 4294901760
    %v6991 = vsub.f32 %v6989, %v6990
    %v6992 = vand.u32 %v6991, 4294901760
    %6993 = vmatmul.mubr.f32.gmra.mxu0 %v6992
    %v6994 = vpop.f32.mrf.mxu0
    %v6995 = vadd.f32 0.0, %v6994
    %v6996 = vpop.f32.mrf.mxu0
    %6997 = vmatprep.mubr.f32.mxu0 0.0
    %v6998 = vand.u32 %v6915, 4294901760
    %v6999 = vsub.f32 %v6915, %v6998
    %v7000 = vand.u32 %v6999, 4294901760
    %v7001 = vsub.f32 %v6999, %v7000
    %v7002 = vand.u32 %v7001, 4294901760
    %7003 = vmatmul.mubr.f32.gmra.mxu0 %v7002
    %v7004 = vpop.f32.mrf.mxu0
    %v7005 = vadd.f32 0.0, %v7004
    %v7006 = vpop.f32.mrf.mxu0
    %7007 = vmatprep.mubr.f32.mxu0 0.0
    %v7008 = vand.u32 %v6918, 4294901760
    %v7009 = vsub.f32 %v6918, %v7008
    %v7010 = vand.u32 %v7009, 4294901760
    %v7011 = vsub.f32 %v7009, %v7010
    %v7012 = vand.u32 %v7011, 4294901760
    %7013 = vmatmul.mubr.f32.gmra.mxu0 %v7012
    %v7014 = vpop.f32.mrf.mxu0
    %v7015 = vadd.f32 0.0, %v7014
    %v7016 = vpop.f32.mrf.mxu0
    %7017 = vmatprep.mubr.f32.mxu0 0.0
    %v7018 = vand.u32 %v6921, 4294901760
    %v7019 = vsub.f32 %v6921, %v7018
    %v7020 = vand.u32 %v7019, 4294901760
    %v7021 = vsub.f32 %v7019, %v7020
    %v7022 = vand.u32 %v7021, 4294901760
    %7023 = vmatmul.mubr.f32.gmra.mxu0 %v7022
    %v7024 = vpop.f32.mrf.mxu0
    %v7025 = vadd.f32 0.0, %v7024
    %v7026 = vpop.f32.mrf.mxu0
    %7027 = vdwg.mxu0
    %7028 = vmatprep.subr.mxu0 0.0
    %7029 = vmatpush1.msra.mxu0 0.0
    %7030 = vmatprep.subr.mxu0 0.0
    %7031 = vmatpush1.msra.mxu0 0.0
    %7032 = vmatprep.subr.mxu0 0.0
    %7033 = vmatpush1.msra.mxu0 0.0
    %7034 = vmatprep.subr.mxu0 0.0
    %7035 = vmatpush1.msra.mxu0 0.0
    %7036 = vmatprep.subr.mxu0 0.0
    %7037 = vmatpush1.msra.mxu0 0.0
    %7038 = vmatprep.subr.mxu0 0.0
    %7039 = vmatpush1.msra.mxu0 0.0
    %7040 = vmatprep.subr.mxu0 0.0
    %7041 = vmatpush1.msra.mxu0 0.0
    %7042 = vmatprep.subr.mxu0 0.0
    %7043 = vmatpush1.msra.mxu0 0.0
    %7044 = vmatprep.subr.mxu0 0.0
    %7045 = vmatpush1.msra.mxu0 0.0
    %7046 = vmatprep.subr.mxu0 0.0
    %7047 = vmatpush1.msra.mxu0 0.0
    %7048 = vmatprep.subr.mxu0 0.0
    %7049 = vmatpush1.msra.mxu0 0.0
    %7050 = vmatprep.subr.mxu0 0.0
    %7051 = vmatpush1.msra.mxu0 0.0
    %7052 = vmatprep.subr.mxu0 0.0
    %7053 = vmatpush1.msra.mxu0 0.0
    %7054 = vmatprep.subr.mxu0 0.0
    %7055 = vmatpush1.msra.mxu0 0.0
    %7056 = vmatprep.subr.mxu0 0.0
    %7057 = vmatpush1.msra.mxu0 0.0
    %7058 = vmatprep.subr.mxu0 0.0
    %v7059 = vsub.f32 %v2050, %v2050
    %v7060 = vand.u32 %v7059, 4294901760
    %v7061 = vsub.f32 %v7059, %v7060
    %v7062 = vand.u32 %v7061, 4294901760
    %7063 = vmatpush1.msra.mxu0 %v7062
    %7064 = vmatprep.subr.mxu0 0.0
    %7065 = vmatpush2.msra.mxu0 0.0
    %7066 = vmatprep.subr.mxu0 0.0
    %7067 = vmatpush2.msra.mxu0 0.0
    %7068 = vmatprep.subr.mxu0 0.0
    %7069 = vmatpush2.msra.mxu0 0.0
    %7070 = vmatprep.subr.mxu0 0.0
    %7071 = vmatpush2.msra.mxu0 0.0
    %7072 = vmatprep.subr.mxu0 0.0
    %7073 = vmatpush2.msra.mxu0 0.0
    %7074 = vmatprep.subr.mxu0 0.0
    %7075 = vmatpush2.msra.mxu0 0.0
    %7076 = vmatprep.subr.mxu0 0.0
    %7077 = vmatpush2.msra.mxu0 0.0
    %7078 = vmatprep.subr.mxu0 0.0
    %7079 = vmatpush2.msra.mxu0 0.0
    %7080 = vmatprep.subr.mxu0 0.0
    %7081 = vmatpush2.msra.mxu0 0.0
    %7082 = vmatprep.subr.mxu0 0.0
    %7083 = vmatpush2.msra.mxu0 0.0
    %7084 = vmatprep.subr.mxu0 0.0
    %7085 = vmatpush2.msra.mxu0 0.0
    %7086 = vmatprep.subr.mxu0 0.0
    %7087 = vmatpush2.msra.mxu0 0.0
    %7088 = vmatprep.subr.mxu0 0.0
    %7089 = vmatpush2.msra.mxu0 0.0
    %7090 = vmatprep.subr.mxu0 0.0
    %7091 = vmatpush2.msra.mxu0 0.0
    %7092 = vmatprep.subr.mxu0 0.0
    %7093 = vmatpush2.msra.mxu0 0.0
    %7094 = vmatprep.subr.mxu0 0.0
    %7095 = vmatpush2.msra.mxu0 0.0
    %7096 = vmatprep.mubr.f32.mxu0 0.0
    %v7097 = vand.u32 %v6912, 4294901760
    %7098 = vmatmul.mubr.f32.gmra.mxu0 %v7097
    %v7099 = vpop.f32.mrf.mxu0
    %v7100 = vadd.f32 %v6995, %v7099
    %v7101 = vpop.f32.mrf.mxu0
    %7102 = vmatprep.mubr.f32.mxu0 0.0
    %v7103 = vand.u32 %v6915, 4294901760
    %7104 = vmatmul.mubr.f32.gmra.mxu0 %v7103
    %v7105 = vpop.f32.mrf.mxu0
    %v7106 = vadd.f32 %v7005, %v7105
    %v7107 = vpop.f32.mrf.mxu0
    %7108 = vmatprep.mubr.f32.mxu0 0.0
    %v7109 = vand.u32 %v6918, 4294901760
    %7110 = vmatmul.mubr.f32.gmra.mxu0 %v7109
    %v7111 = vpop.f32.mrf.mxu0
    %v7112 = vadd.f32 %v7015, %v7111
    %v7113 = vpop.f32.mrf.mxu0
    %7114 = vmatprep.mubr.f32.mxu0 0.0
    %v7115 = vand.u32 %v6921, 4294901760
    %7116 = vmatmul.mubr.f32.gmra.mxu0 %v7115
    %v7117 = vpop.f32.mrf.mxu0
    %v7118 = vadd.f32 %v7025, %v7117
    %v7119 = vpop.f32.mrf.mxu0
    %7120 = vdwg.mxu0
    %7121 = vmatprep.subr.mxu0 0.0
    %7122 = vmatpush1.msra.mxu0 0.0
    %7123 = vmatprep.subr.mxu0 0.0
    %7124 = vmatpush1.msra.mxu0 0.0
    %7125 = vmatprep.subr.mxu0 0.0
    %7126 = vmatpush1.msra.mxu0 0.0
    %7127 = vmatprep.subr.mxu0 0.0
    %7128 = vmatpush1.msra.mxu0 0.0
    %7129 = vmatprep.subr.mxu0 0.0
    %7130 = vmatpush1.msra.mxu0 0.0
    %7131 = vmatprep.subr.mxu0 0.0
    %7132 = vmatpush1.msra.mxu0 0.0
    %7133 = vmatprep.subr.mxu0 0.0
    %7134 = vmatpush1.msra.mxu0 0.0
    %7135 = vmatprep.subr.mxu0 0.0
    %7136 = vmatpush1.msra.mxu0 0.0
    %7137 = vmatprep.subr.mxu0 0.0
    %7138 = vmatpush1.msra.mxu0 0.0
    %7139 = vmatprep.subr.mxu0 0.0
    %7140 = vmatpush1.msra.mxu0 0.0
    %7141 = vmatprep.subr.mxu0 0.0
    %7142 = vmatpush1.msra.mxu0 0.0
    %7143 = vmatprep.subr.mxu0 0.0
    %7144 = vmatpush1.msra.mxu0 0.0
    %7145 = vmatprep.subr.mxu0 0.0
    %7146 = vmatpush1.msra.mxu0 0.0
    %7147 = vmatprep.subr.mxu0 0.0
    %7148 = vmatpush1.msra.mxu0 0.0
    %7149 = vmatprep.subr.mxu0 0.0
    %7150 = vmatpush1.msra.mxu0 0.0
    %7151 = vmatprep.subr.mxu0 0.0
    %v7152 = vsub.f32 %v2050, %v2050
    %7153 = vmatpush1.msra.mxu0 %v7152
    %7154 = vmatprep.subr.mxu0 0.0
    %7155 = vmatpush2.msra.mxu0 0.0
    %7156 = vmatprep.subr.mxu0 0.0
    %7157 = vmatpush2.msra.mxu0 0.0
    %7158 = vmatprep.subr.mxu0 0.0
    %7159 = vmatpush2.msra.mxu0 0.0
    %7160 = vmatprep.subr.mxu0 0.0
    %7161 = vmatpush2.msra.mxu0 0.0
    %7162 = vmatprep.subr.mxu0 0.0
    %7163 = vmatpush2.msra.mxu0 0.0
    %7164 = vmatprep.subr.mxu0 0.0
    %7165 = vmatpush2.msra.mxu0 0.0
    %7166 = vmatprep.subr.mxu0 0.0
    %7167 = vmatpush2.msra.mxu0 0.0
    %7168 = vmatprep.subr.mxu0 0.0
    %7169 = vmatpush2.msra.mxu0 0.0
    %7170 = vmatprep.subr.mxu0 0.0
    %7171 = vmatpush2.msra.mxu0 0.0
    %7172 = vmatprep.subr.mxu0 0.0
    %7173 = vmatpush2.msra.mxu0 0.0
    %7174 = vmatprep.subr.mxu0 0.0
    %7175 = vmatpush2.msra.mxu0 0.0
    %7176 = vmatprep.subr.mxu0 0.0
    %7177 = vmatpush2.msra.mxu0 0.0
    %7178 = vmatprep.subr.mxu0 0.0
    %7179 = vmatpush2.msra.mxu0 0.0
    %7180 = vmatprep.subr.mxu0 0.0
    %7181 = vmatpush2.msra.mxu0 0.0
    %7182 = vmatprep.subr.mxu0 0.0
    %7183 = vmatpush2.msra.mxu0 0.0
    %7184 = vmatprep.subr.mxu0 0.0
    %7185 = vmatpush2.msra.mxu0 0.0
    %7186 = vmatprep.mubr.f32.mxu0 0.0
    %v7187 = vand.u32 %v6912, 4294901760
    %v7188 = vsub.f32 %v6912, %v7187
    %7189 = vmatmul.mubr.f32.gmra.mxu0 %v7188
    %v7190 = vpop.f32.mrf.mxu0
    %v7191 = vadd.f32 %v7100, %v7190
    %v7192 = vpop.f32.mrf.mxu0
    %7193 = vmatprep.mubr.f32.mxu0 0.0
    %v7194 = vand.u32 %v6915, 4294901760
    %v7195 = vsub.f32 %v6915, %v7194
    %7196 = vmatmul.mubr.f32.gmra.mxu0 %v7195
    %v7197 = vpop.f32.mrf.mxu0
    %v7198 = vadd.f32 %v7106, %v7197
    %v7199 = vpop.f32.mrf.mxu0
    %7200 = vmatprep.mubr.f32.mxu0 0.0
    %v7201 = vand.u32 %v6918, 4294901760
    %v7202 = vsub.f32 %v6918, %v7201
    %7203 = vmatmul.mubr.f32.gmra.mxu0 %v7202
    %v7204 = vpop.f32.mrf.mxu0
    %v7205 = vadd.f32 %v7112, %v7204
    %v7206 = vpop.f32.mrf.mxu0
    %7207 = vmatprep.mubr.f32.mxu0 0.0
    %v7208 = vand.u32 %v6921, 4294901760
    %v7209 = vsub.f32 %v6921, %v7208
    %7210 = vmatmul.mubr.f32.gmra.mxu0 %v7209
    %v7211 = vpop.f32.mrf.mxu0
    %v7212 = vadd.f32 %v7118, %v7211
    %v7213 = vpop.f32.mrf.mxu0
    %7214 = vdwg.mxu0
    %7215 = vmatprep.subr.mxu0 0.0
    %7216 = vmatpush1.msra.mxu0 0.0
    %7217 = vmatprep.subr.mxu0 0.0
    %7218 = vmatpush1.msra.mxu0 0.0
    %7219 = vmatprep.subr.mxu0 0.0
    %7220 = vmatpush1.msra.mxu0 0.0
    %7221 = vmatprep.subr.mxu0 0.0
    %7222 = vmatpush1.msra.mxu0 0.0
    %7223 = vmatprep.subr.mxu0 0.0
    %7224 = vmatpush1.msra.mxu0 0.0
    %7225 = vmatprep.subr.mxu0 0.0
    %7226 = vmatpush1.msra.mxu0 0.0
    %7227 = vmatprep.subr.mxu0 0.0
    %7228 = vmatpush1.msra.mxu0 0.0
    %7229 = vmatprep.subr.mxu0 0.0
    %7230 = vmatpush1.msra.mxu0 0.0
    %7231 = vmatprep.subr.mxu0 0.0
    %7232 = vmatpush1.msra.mxu0 0.0
    %7233 = vmatprep.subr.mxu0 0.0
    %7234 = vmatpush1.msra.mxu0 0.0
    %7235 = vmatprep.subr.mxu0 0.0
    %7236 = vmatpush1.msra.mxu0 0.0
    %7237 = vmatprep.subr.mxu0 0.0
    %7238 = vmatpush1.msra.mxu0 0.0
    %7239 = vmatprep.subr.mxu0 0.0
    %7240 = vmatpush1.msra.mxu0 0.0
    %7241 = vmatprep.subr.mxu0 0.0
    %7242 = vmatpush1.msra.mxu0 0.0
    %7243 = vmatprep.subr.mxu0 0.0
    %7244 = vmatpush1.msra.mxu0 0.0
    %7245 = vmatprep.subr.mxu0 0.0
    %7246 = vmatpush1.msra.mxu0 %v2050
    %7247 = vmatprep.subr.mxu0 0.0
    %7248 = vmatpush2.msra.mxu0 0.0
    %7249 = vmatprep.subr.mxu0 0.0
    %7250 = vmatpush2.msra.mxu0 0.0
    %7251 = vmatprep.subr.mxu0 0.0
    %7252 = vmatpush2.msra.mxu0 0.0
    %7253 = vmatprep.subr.mxu0 0.0
    %7254 = vmatpush2.msra.mxu0 0.0
    %7255 = vmatprep.subr.mxu0 0.0
    %7256 = vmatpush2.msra.mxu0 0.0
    %7257 = vmatprep.subr.mxu0 0.0
    %7258 = vmatpush2.msra.mxu0 0.0
    %7259 = vmatprep.subr.mxu0 0.0
    %7260 = vmatpush2.msra.mxu0 0.0
    %7261 = vmatprep.subr.mxu0 0.0
    %7262 = vmatpush2.msra.mxu0 0.0
    %7263 = vmatprep.subr.mxu0 0.0
    %7264 = vmatpush2.msra.mxu0 0.0
    %7265 = vmatprep.subr.mxu0 0.0
    %7266 = vmatpush2.msra.mxu0 0.0
    %7267 = vmatprep.subr.mxu0 0.0
    %7268 = vmatpush2.msra.mxu0 0.0
    %7269 = vmatprep.subr.mxu0 0.0
    %7270 = vmatpush2.msra.mxu0 0.0
    %7271 = vmatprep.subr.mxu0 0.0
    %7272 = vmatpush2.msra.mxu0 0.0
    %7273 = vmatprep.subr.mxu0 0.0
    %7274 = vmatpush2.msra.mxu0 0.0
    %7275 = vmatprep.subr.mxu0 0.0
    %7276 = vmatpush2.msra.mxu0 0.0
    %7277 = vmatprep.subr.mxu0 0.0
    %7278 = vmatpush2.msra.mxu0 0.0
    %7279 = vmatprep.mubr.f32.mxu0 0.0
    %v7280 = vand.u32 %v6912, 4294901760
    %v7281 = vsub.f32 %v6912, %v7280
    %v7282 = vand.u32 %v7281, 4294901760
    %7283 = vmatmul.mubr.f32.gmra.mxu0 %v7282
    %v7284 = vpop.f32.mrf.mxu0
    %v7285 = vadd.f32 %v7191, %v7284
    %v7286 = vpop.f32.mrf.mxu0
    %7287 = vmatprep.mubr.f32.mxu0 0.0
    %v7288 = vand.u32 %v6915, 4294901760
    %v7289 = vsub.f32 %v6915, %v7288
    %v7290 = vand.u32 %v7289, 4294901760
    %7291 = vmatmul.mubr.f32.gmra.mxu0 %v7290
    %v7292 = vpop.f32.mrf.mxu0
    %v7293 = vadd.f32 %v7198, %v7292
    %v7294 = vpop.f32.mrf.mxu0
    %7295 = vmatprep.mubr.f32.mxu0 0.0
    %v7296 = vand.u32 %v6918, 4294901760
    %v7297 = vsub.f32 %v6918, %v7296
    %v7298 = vand.u32 %v7297, 4294901760
    %7299 = vmatmul.mubr.f32.gmra.mxu0 %v7298
    %v7300 = vpop.f32.mrf.mxu0
    %v7301 = vadd.f32 %v7205, %v7300
    %v7302 = vpop.f32.mrf.mxu0
    %7303 = vmatprep.mubr.f32.mxu0 0.0
    %v7304 = vand.u32 %v6921, 4294901760
    %v7305 = vsub.f32 %v6921, %v7304
    %v7306 = vand.u32 %v7305, 4294901760
    %7307 = vmatmul.mubr.f32.gmra.mxu0 %v7306
    %v7308 = vpop.f32.mrf.mxu0
    %v7309 = vadd.f32 %v7212, %v7308
    %v7310 = vpop.f32.mrf.mxu0
    %7311 = vdwg.mxu0
    %7312 = vmatprep.subr.mxu0 0.0
    %7313 = vmatpush1.msra.mxu0 0.0
    %7314 = vmatprep.subr.mxu0 0.0
    %7315 = vmatpush1.msra.mxu0 0.0
    %7316 = vmatprep.subr.mxu0 0.0
    %7317 = vmatpush1.msra.mxu0 0.0
    %7318 = vmatprep.subr.mxu0 0.0
    %7319 = vmatpush1.msra.mxu0 0.0
    %7320 = vmatprep.subr.mxu0 0.0
    %7321 = vmatpush1.msra.mxu0 0.0
    %7322 = vmatprep.subr.mxu0 0.0
    %7323 = vmatpush1.msra.mxu0 0.0
    %7324 = vmatprep.subr.mxu0 0.0
    %7325 = vmatpush1.msra.mxu0 0.0
    %7326 = vmatprep.subr.mxu0 0.0
    %7327 = vmatpush1.msra.mxu0 0.0
    %7328 = vmatprep.subr.mxu0 0.0
    %7329 = vmatpush1.msra.mxu0 0.0
    %7330 = vmatprep.subr.mxu0 0.0
    %7331 = vmatpush1.msra.mxu0 0.0
    %7332 = vmatprep.subr.mxu0 0.0
    %7333 = vmatpush1.msra.mxu0 0.0
    %7334 = vmatprep.subr.mxu0 0.0
    %7335 = vmatpush1.msra.mxu0 0.0
    %7336 = vmatprep.subr.mxu0 0.0
    %7337 = vmatpush1.msra.mxu0 0.0
    %7338 = vmatprep.subr.mxu0 0.0
    %7339 = vmatpush1.msra.mxu0 0.0
    %7340 = vmatprep.subr.mxu0 0.0
    %7341 = vmatpush1.msra.mxu0 0.0
    %7342 = vmatprep.subr.mxu0 0.0
    %v7343 = vsub.f32 %v2050, %v2050
    %v7344 = vand.u32 %v7343, 4294901760
    %7345 = vmatpush1.msra.mxu0 %v7344
    %7346 = vmatprep.subr.mxu0 0.0
    %7347 = vmatpush2.msra.mxu0 0.0
    %7348 = vmatprep.subr.mxu0 0.0
    %7349 = vmatpush2.msra.mxu0 0.0
    %7350 = vmatprep.subr.mxu0 0.0
    %7351 = vmatpush2.msra.mxu0 0.0
    %7352 = vmatprep.subr.mxu0 0.0
    %7353 = vmatpush2.msra.mxu0 0.0
    %7354 = vmatprep.subr.mxu0 0.0
    %7355 = vmatpush2.msra.mxu0 0.0
    %7356 = vmatprep.subr.mxu0 0.0
    %7357 = vmatpush2.msra.mxu0 0.0
    %7358 = vmatprep.subr.mxu0 0.0
    %7359 = vmatpush2.msra.mxu0 0.0
    %7360 = vmatprep.subr.mxu0 0.0
    %7361 = vmatpush2.msra.mxu0 0.0
    %7362 = vmatprep.subr.mxu0 0.0
    %7363 = vmatpush2.msra.mxu0 0.0
    %7364 = vmatprep.subr.mxu0 0.0
    %7365 = vmatpush2.msra.mxu0 0.0
    %7366 = vmatprep.subr.mxu0 0.0
    %7367 = vmatpush2.msra.mxu0 0.0
    %7368 = vmatprep.subr.mxu0 0.0
    %7369 = vmatpush2.msra.mxu0 0.0
    %7370 = vmatprep.subr.mxu0 0.0
    %7371 = vmatpush2.msra.mxu0 0.0
    %7372 = vmatprep.subr.mxu0 0.0
    %7373 = vmatpush2.msra.mxu0 0.0
    %7374 = vmatprep.subr.mxu0 0.0
    %7375 = vmatpush2.msra.mxu0 0.0
    %7376 = vmatprep.subr.mxu0 0.0
    %7377 = vmatpush2.msra.mxu0 0.0
    %7378 = vmatprep.mubr.f32.mxu0 0.0
    %v7379 = vand.u32 %v6912, 4294901760
    %7380 = vmatmul.mubr.f32.gmra.mxu0 %v7379
    %v7381 = vpop.f32.mrf.mxu0
    %v7382 = vadd.f32 %v7285, %v7381
    %v7383 = vpop.f32.mrf.mxu0
    %7384 = vmatprep.mubr.f32.mxu0 0.0
    %v7385 = vand.u32 %v6915, 4294901760
    %7386 = vmatmul.mubr.f32.gmra.mxu0 %v7385
    %v7387 = vpop.f32.mrf.mxu0
    %v7388 = vadd.f32 %v7293, %v7387
    %v7389 = vpop.f32.mrf.mxu0
    %7390 = vmatprep.mubr.f32.mxu0 0.0
    %v7391 = vand.u32 %v6918, 4294901760
    %7392 = vmatmul.mubr.f32.gmra.mxu0 %v7391
    %v7393 = vpop.f32.mrf.mxu0
    %v7394 = vadd.f32 %v7301, %v7393
    %v7395 = vpop.f32.mrf.mxu0
    %7396 = vmatprep.mubr.f32.mxu0 0.0
    %v7397 = vand.u32 %v6921, 4294901760
    %7398 = vmatmul.mubr.f32.gmra.mxu0 %v7397
    %v7399 = vpop.f32.mrf.mxu0
    %v7400 = vadd.f32 %v7309, %v7399
    %v7401 = vpop.f32.mrf.mxu0
    %7402 = vdwg.mxu0
    %7403 = vmatprep.subr.mxu0 0.0
    %7404 = vmatpush1.msra.mxu0 0.0
    %7405 = vmatprep.subr.mxu0 0.0
    %7406 = vmatpush1.msra.mxu0 0.0
    %7407 = vmatprep.subr.mxu0 0.0
    %7408 = vmatpush1.msra.mxu0 0.0
    %7409 = vmatprep.subr.mxu0 0.0
    %7410 = vmatpush1.msra.mxu0 0.0
    %7411 = vmatprep.subr.mxu0 0.0
    %7412 = vmatpush1.msra.mxu0 0.0
    %7413 = vmatprep.subr.mxu0 0.0
    %7414 = vmatpush1.msra.mxu0 0.0
    %7415 = vmatprep.subr.mxu0 0.0
    %7416 = vmatpush1.msra.mxu0 0.0
    %7417 = vmatprep.subr.mxu0 0.0
    %7418 = vmatpush1.msra.mxu0 0.0
    %7419 = vmatprep.subr.mxu0 0.0
    %7420 = vmatpush1.msra.mxu0 0.0
    %7421 = vmatprep.subr.mxu0 0.0
    %7422 = vmatpush1.msra.mxu0 0.0
    %7423 = vmatprep.subr.mxu0 0.0
    %7424 = vmatpush1.msra.mxu0 0.0
    %7425 = vmatprep.subr.mxu0 0.0
    %7426 = vmatpush1.msra.mxu0 0.0
    %7427 = vmatprep.subr.mxu0 0.0
    %7428 = vmatpush1.msra.mxu0 0.0
    %7429 = vmatprep.subr.mxu0 0.0
    %7430 = vmatpush1.msra.mxu0 0.0
    %7431 = vmatprep.subr.mxu0 0.0
    %7432 = vmatpush1.msra.mxu0 0.0
    %7433 = vmatprep.subr.mxu0 0.0
    %7434 = vmatpush1.msra.mxu0 %v2050
    %7435 = vmatprep.subr.mxu0 0.0
    %7436 = vmatpush2.msra.mxu0 0.0
    %7437 = vmatprep.subr.mxu0 0.0
    %7438 = vmatpush2.msra.mxu0 0.0
    %7439 = vmatprep.subr.mxu0 0.0
    %7440 = vmatpush2.msra.mxu0 0.0
    %7441 = vmatprep.subr.mxu0 0.0
    %7442 = vmatpush2.msra.mxu0 0.0
    %7443 = vmatprep.subr.mxu0 0.0
    %7444 = vmatpush2.msra.mxu0 0.0
    %7445 = vmatprep.subr.mxu0 0.0
    %7446 = vmatpush2.msra.mxu0 0.0
    %7447 = vmatprep.subr.mxu0 0.0
    %7448 = vmatpush2.msra.mxu0 0.0
    %7449 = vmatprep.subr.mxu0 0.0
    %7450 = vmatpush2.msra.mxu0 0.0
    %7451 = vmatprep.subr.mxu0 0.0
    %7452 = vmatpush2.msra.mxu0 0.0
    %7453 = vmatprep.subr.mxu0 0.0
    %7454 = vmatpush2.msra.mxu0 0.0
    %7455 = vmatprep.subr.mxu0 0.0
    %7456 = vmatpush2.msra.mxu0 0.0
    %7457 = vmatprep.subr.mxu0 0.0
    %7458 = vmatpush2.msra.mxu0 0.0
    %7459 = vmatprep.subr.mxu0 0.0
    %7460 = vmatpush2.msra.mxu0 0.0
    %7461 = vmatprep.subr.mxu0 0.0
    %7462 = vmatpush2.msra.mxu0 0.0
    %7463 = vmatprep.subr.mxu0 0.0
    %7464 = vmatpush2.msra.mxu0 0.0
    %7465 = vmatprep.subr.mxu0 0.0
    %7466 = vmatpush2.msra.mxu0 0.0
    %7467 = vmatprep.mubr.f32.mxu0 0.0
    %v7468 = vand.u32 %v6912, 4294901760
    %7469 = vmatmul.mubr.f32.gmra.mxu0 %v7468
    %v7470 = vpop.f32.mrf.mxu0
    %v7471 = vadd.f32 %v7382, %v7470
    %v7472 = vpop.f32.mrf.mxu0
    %7473 = vmatprep.mubr.f32.mxu0 0.0
    %v7474 = vand.u32 %v6915, 4294901760
    %7475 = vmatmul.mubr.f32.gmra.mxu0 %v7474
    %v7476 = vpop.f32.mrf.mxu0
    %v7477 = vadd.f32 %v7388, %v7476
    %v7478 = vpop.f32.mrf.mxu0
    %7479 = vmatprep.mubr.f32.mxu0 0.0
    %v7480 = vand.u32 %v6918, 4294901760
    %7481 = vmatmul.mubr.f32.gmra.mxu0 %v7480
    %v7482 = vpop.f32.mrf.mxu0
    %v7483 = vadd.f32 %v7394, %v7482
    %v7484 = vpop.f32.mrf.mxu0
    %7485 = vmatprep.mubr.f32.mxu0 0.0
    %v7486 = vand.u32 %v6921, 4294901760
    %7487 = vmatmul.mubr.f32.gmra.mxu0 %v7486
    %v7488 = vpop.f32.mrf.mxu0
    %v7489 = vadd.f32 %v7400, %v7488
    %v7490 = vpop.f32.mrf.mxu0
    %7491 = vdwg.mxu0
    %v7492 = vmul.f32 %v5089, %v7471
    %v7493 = vmul.f32 %v5090, %v7477
    %v7494 = vmul.f32 %v5091, %v7483
    %v7495 = vmul.f32 %v5092, %v7489
    %v7496 = vadd.f32 %v7492, %v81
    %v7497 = vadd.f32 %v7493, %v82
    %v7498 = vadd.f32 %v7494, %v83
    %v7499 = vadd.f32 %v7495, %v84
    %7500 = vst [vmem:[#allocation2] sm:$0xff] %v7496
    %7501 = vst [vmem:[#allocation2 + $0x8] sm:$0xff] %v7497
    %7502 = vst [vmem:[#allocation2 + $0x10] sm:$0xff] %v7498
    %7503 = vst [vmem:[#allocation2 + $0x18] sm:$0xff] %v7499
    // Predicated region
    $region62: #{tpu_custom_call.1} parent=1 // pred_check
      _
    $region63: #{tpu_custom_call.1} parent=1 // pred_check_branch
      %7505 = sbr.rel (0) target = $region65
    $region64: #{tpu_custom_call.1} parent=1 // pred_region
      %s7507 = ssub.s32 512, 512
      %7508 = vsyncadd [#allocation3], %s7507
      %s7509 = sshll.u32 [#allocation2], 4
      %s7510 = int_to_ptr.vmem [resolvable:$true] %s7509
      %7515 = dma.vmem_to_hbm [thread:$0]  %s7510, 512, %s15, [#allocation3], 128, 128, 8
    $region65: #{tpu_custom_call.1} parent=1 // pred_fallthru
      _
    // Predicated region
    $region66: #{tpu_custom_call.1} parent=1 // pred_check
      _
    $region67: #{tpu_custom_call.1} parent=1 // pred_check_branch
      %7517 = sbr.rel (0) target = $region69
    $region68: #{tpu_custom_call.1} parent=1 // pred_region
      %7518 = dma.done [#allocation3], 512
    $region69: #{tpu_custom_call.1} parent=1 // pred_fallthru
      _
    %7519 = vsyncpa [#allocation3], 1

</llo_original>
